<compile_context>
chip_gen: v7x
topology: tpu7x:2x2x1
jax: 0.10.0
libtpu: 0.0.40
codegen_flags: <defaults>
</compile_context>

<pallas_src>
import jax
import jax.numpy as jnp
from jax.experimental import pallas as pl
from jax.experimental.pallas import tpu as pltpu

IN_SHAPE = 64 * 64 * 3     # 12288
N_HIDDEN = 100
OUT_SHAPE = 6
MAX_TB = 128               # batch tile when B is large (multiple of 8, MXU-shaped)


def _mlp_kernel(x_ref, w1_ref, b1_ref, w2_ref, b2_ref, o_ref):
    # First Linear: (TB, 12288) bf16 @ (12288, 100) bf16 -> f32 on the MXU.
    h = jnp.dot(x_ref[...], w1_ref[...], preferred_element_type=jnp.float32)
    # Bias + ReLU in f32 (v5e VPU has no bf16 path; epilogue is tiny anyway).
    h = jnp.maximum(h + b1_ref[...], 0.0)
    # Second Linear: (TB, 100) @ (100, 6) + bias, all f32.
    logits = jnp.dot(h, w2_ref[...], preferred_element_type=jnp.float32)
    o_ref[...] = (logits + b2_ref[...]).astype(o_ref.dtype)


def mlp_classifier_forward(x, w1, b1, w2, b2):
    """x: (B, 3, 64, 64) float32 -> logits (B, 6) float32."""
    B = x.shape[0]
    x_flat = x.reshape(B, IN_SHAPE)             # same ordering as torch .view

    # Halve streamed bytes of the bandwidth-bound first matmul.
    x_bf = x_flat.astype(jnp.bfloat16)
    w1_bf = w1.astype(jnp.bfloat16)

    # Batch tiling: full batch in one tile for small B, 128-row tiles otherwise.
    tb = B if B <= MAX_TB else MAX_TB
    nb = pl.cdiv(B, tb)

    grid_spec = pltpu.PrefetchScalarGridSpec(
        num_scalar_prefetch=0,
        grid=(nb,),
        in_specs=[
            pl.BlockSpec((tb, IN_SHAPE), lambda i: (i, 0)),          # x batch tile (bf16)
            pl.BlockSpec((IN_SHAPE, N_HIDDEN), lambda i: (0, 0)),    # W1 fully resident (bf16)
            pl.BlockSpec((1, N_HIDDEN), lambda i: (0, 0)),           # b1 (f32)
            pl.BlockSpec((N_HIDDEN, OUT_SHAPE), lambda i: (0, 0)),   # W2 (f32)
            pl.BlockSpec((1, OUT_SHAPE), lambda i: (0, 0)),          # b2 (f32)
        ],
        out_specs=pl.BlockSpec((tb, OUT_SHAPE), lambda i: (i, 0)),
    )

    flops = 2 * B * IN_SHAPE * N_HIDDEN + 2 * B * N_HIDDEN * OUT_SHAPE
    bytes_accessed = (
        B * IN_SHAPE * 2                 # x (bf16)
        + IN_SHAPE * N_HIDDEN * 2        # W1 (bf16)
        + N_HIDDEN * 4                   # b1
        + N_HIDDEN * OUT_SHAPE * 4       # W2
        + OUT_SHAPE * 4                  # b2
        + B * OUT_SHAPE * 4              # out
    )

    return pl.pallas_call(
        _mlp_kernel,
        out_shape=jax.ShapeDtypeStruct((B, OUT_SHAPE), jnp.float32),
        grid_spec=grid_spec,
        compiler_params=pltpu.CompilerParams(
            dimension_semantics=("parallel",)    # batch axis -> both v7x TCs
        ),
        cost_estimate=pl.CostEstimate(
            flops=flops, transcendentals=0, bytes_accessed=bytes_accessed
        ),
    )(x_bf, w1_bf, b1, w2, b2)


def init_params(key):
    """Deterministic init mimicking torch.nn.Linear default U(-1/sqrt(fan_in), 1/sqrt(fan_in))."""
    k1, k2, k3, k4 = jax.random.split(key, 4)
    bound1 = 1.0 / jnp.sqrt(jnp.float32(IN_SHAPE))
    bound2 = 1.0 / jnp.sqrt(jnp.float32(N_HIDDEN))
    # Stored as (in_features, out_features) so kernel does x @ W.
    w1 = jax.random.uniform(k1, (IN_SHAPE, N_HIDDEN), jnp.float32, -bound1, bound1)
    b1 = jax.random.uniform(k2, (1, N_HIDDEN), jnp.float32, -bound1, bound1)
    w2 = jax.random.uniform(k3, (N_HIDDEN, OUT_SHAPE), jnp.float32, -bound2, bound2)
    b2 = jax.random.uniform(k4, (1, OUT_SHAPE), jnp.float32, -bound2, bound2)
    return w1, b1, w2, b2


if __name__ == "__main__":
    key = jax.random.PRNGKey(0)
    kx, kp = jax.random.split(key)

    B = 2
    x = jax.random.normal(kx, (B, 3, 64, 64), jnp.float32)
    w1, b1, w2, b2 = init_params(kp)

    logits = mlp_classifier_forward(x, w1, b1, w2, b2)
    logits = jax.block_until_ready(logits)
    assert logits.shape == (B, OUT_SHAPE)

    # Tight reference: emulate the kernel's bf16 inputs / f32 accumulation.
    x_flat = x.reshape(B, IN_SHAPE)
    x_bf = x_flat.astype(jnp.bfloat16).astype(jnp.float32)
    w1_bf = w1.astype(jnp.bfloat16).astype(jnp.float32)
    h_ref = jnp.maximum(
        jnp.dot(x_bf, w1_bf, precision=jax.lax.Precision.HIGHEST) + b1, 0.0
    )
    ref_bf16 = jnp.dot(h_ref, w2, precision=jax.lax.Precision.HIGHEST) + b2
    assert jnp.allclose(logits, ref_bf16, atol=1e-4, rtol=1e-4)

    # Loose sanity check against the full-f32 reference (bf16 weight quant noise only).
    h_f32 = jnp.maximum(
        jnp.dot(x_flat, w1, precision=jax.lax.Precision.HIGHEST) + b1, 0.0
    )
    ref_f32 = jnp.dot(h_f32, w2, precision=jax.lax.Precision.HIGHEST) + b2
    assert jnp.allclose(logits, ref_f32, atol=3e-2, rtol=3e-2)

    print("KERNEL_OK")
</pallas_src>

<mosaic_0001>
module attributes {stable_mosaic.version = 11 : i64} {
  func.func @_mlp_kernel(%arg0: i32, %arg1: memref<2x12288xbf16, #tpu.memory_space<vmem>>, %arg2: memref<12288x100xbf16, #tpu.memory_space<vmem>>, %arg3: memref<1x100xf32, #tpu.memory_space<vmem>>, %arg4: memref<100x6xf32, #tpu.memory_space<vmem>>, %arg5: memref<1x6xf32, #tpu.memory_space<vmem>>, %arg6: memref<2x6xf32, #tpu.memory_space<vmem>>) attributes {dimension_semantics = [#tpu.dimension_semantics<parallel>], iteration_bounds = array<i64: 1>, scalar_prefetch = 0 : i64, scratch_operands = 0 : i64, tpu.core_type = #tpu.core_type<tc>, window_params = [{transform_indices = @transform_0, window_bounds = array<i64: 2, 12288>}, {pipeline_mode = #tpu.pipeline_mode<synchronous>, transform_indices = @transform_1, window_bounds = array<i64: 12288, 100>}, {pipeline_mode = #tpu.pipeline_mode<synchronous>, transform_indices = @transform_2, window_bounds = array<i64: 1, 100>}, {pipeline_mode = #tpu.pipeline_mode<synchronous>, transform_indices = @transform_3, window_bounds = array<i64: 100, 6>}, {pipeline_mode = #tpu.pipeline_mode<synchronous>, transform_indices = @transform_4, window_bounds = array<i64: 1, 6>}, {transform_indices = @transform_5, window_bounds = array<i64: 2, 6>}]} {
    %c0 = arith.constant 0 : index
    %c0_0 = arith.constant 0 : index
    %0 = vector.load %arg1[%c0, %c0_0] : memref<2x12288xbf16, #tpu.memory_space<vmem>>, vector<2x12288xbf16>
    %c0_1 = arith.constant 0 : index
    %c0_2 = arith.constant 0 : index
    %1 = vector.load %arg2[%c0_1, %c0_2] : memref<12288x100xbf16, #tpu.memory_space<vmem>>, vector<12288x100xbf16>
    %cst = arith.constant dense<0.000000e+00> : vector<2x100xf32>
    %2 = tpu.matmul %0, %1, %cst {dimension_numbers = #tpu.dot_dimension_numbers<[1], [0], [0], [1], [0, 0, 1, 1], [], []>} : vector<2x12288xbf16>, vector<12288x100xbf16>, vector<2x100xf32> -> vector<2x100xf32>
    %c0_3 = arith.constant 0 : index
    %c0_4 = arith.constant 0 : index
    %3 = vector.load %arg3[%c0_3, %c0_4] : memref<1x100xf32, #tpu.memory_space<vmem>>, vector<1x100xf32>
    %4 = vector.broadcast %3 : vector<1x100xf32> to vector<2x100xf32>
    %5 = arith.addf %2, %4 : vector<2x100xf32>
    %cst_5 = arith.constant 0.000000e+00 : f32
    %6 = vector.broadcast %cst_5 : f32 to vector<2x100xf32>
    %7 = arith.maximumf %5, %6 : vector<2x100xf32>
    %c0_6 = arith.constant 0 : index
    %c0_7 = arith.constant 0 : index
    %8 = vector.load %arg4[%c0_6, %c0_7] : memref<100x6xf32, #tpu.memory_space<vmem>>, vector<100x6xf32>
    %cst_8 = arith.constant dense<0.000000e+00> : vector<2x6xf32>
    %9 = tpu.matmul %7, %8, %cst_8 {dimension_numbers = #tpu.dot_dimension_numbers<[1], [0], [0], [1], [0, 0, 1, 1], [], []>} : vector<2x100xf32>, vector<100x6xf32>, vector<2x6xf32> -> vector<2x6xf32>
    %c0_9 = arith.constant 0 : index
    %c0_10 = arith.constant 0 : index
    %10 = vector.load %arg5[%c0_9, %c0_10] : memref<1x6xf32, #tpu.memory_space<vmem>>, vector<1x6xf32>
    %11 = vector.broadcast %10 : vector<1x6xf32> to vector<2x6xf32>
    %12 = arith.addf %9, %11 : vector<2x6xf32>
    %c0_11 = arith.constant 0 : index
    %c0_12 = arith.constant 0 : index
    %13 = vector.load %arg6[%c0_11, %c0_12] : memref<2x6xf32, #tpu.memory_space<vmem>>, vector<2x6xf32>
    tpu.vector_store %arg6[%c0_11, %c0_12], %12 {strides = array<i32>} : memref<2x6xf32, #tpu.memory_space<vmem>>, vector<2x6xf32>,
    return
  }
  func.func @transform_0(%arg0: i32) -> (i32, i32) {
    %c0_i32 = arith.constant 0 : i32
    %c0_i32_0 = arith.constant 0 : i32
    return %arg0, %c0_i32 : i32, i32
  }
  func.func @transform_1(%arg0: i32) -> (i32, i32) {
    %c0_i32 = arith.constant 0 : i32
    %c0_i32_0 = arith.constant 0 : i32
    %c0_i32_1 = arith.constant 0 : i32
    return %c0_i32, %c0_i32_0 : i32, i32
  }
  func.func @transform_2(%arg0: i32) -> (i32, i32) {
    %c0_i32 = arith.constant 0 : i32
    %c0_i32_0 = arith.constant 0 : i32
    %c0_i32_1 = arith.constant 0 : i32
    return %c0_i32, %c0_i32_0 : i32, i32
  }
  func.func @transform_3(%arg0: i32) -> (i32, i32) {
    %c0_i32 = arith.constant 0 : i32
    %c0_i32_0 = arith.constant 0 : i32
    %c0_i32_1 = arith.constant 0 : i32
    return %c0_i32, %c0_i32_0 : i32, i32
  }
  func.func @transform_4(%arg0: i32) -> (i32, i32) {
    %c0_i32 = arith.constant 0 : i32
    %c0_i32_0 = arith.constant 0 : i32
    %c0_i32_1 = arith.constant 0 : i32
    return %c0_i32, %c0_i32_0 : i32, i32
  }
  func.func @transform_5(%arg0: i32) -> (i32, i32) {
    %c0_i32 = arith.constant 0 : i32
    %c0_i32_0 = arith.constant 0 : i32
    return %arg0, %c0_i32 : i32, i32
  }
}

</mosaic_0001>

<llo_original>
// kernel: tpu_custom_call.1
$region0: #{tpu_custom_call.1}
  #allocation0 [shape = 'u32[]', space=smem, size = 0x4, offset = 0x4, fixed_abs, tag = 'smem constant byte address 0x4 - core index']
  #allocation1 [shape = 'u32[144,128]{1,0:T(1,128)}', space=vmem, size = 0x12000, scoped, tag = 'internal scratch']
  %s0 = inlined_call_operand.vmem [shape: bf16[2,12288], index: 0, kind: input, shape index: {}]
  %s1 = inlined_call_operand.vmem [shape: bf16[12288,100], index: 1, kind: input, shape index: {}]
  %s2 = inlined_call_operand.vmem [shape: f32[1,100], index: 2, kind: input, shape index: {}]
  %s3 = inlined_call_operand.vmem [shape: f32[100,6], index: 3, kind: input, shape index: {}]
  %s4 = inlined_call_operand.vmem [shape: f32[1,6], index: 4, kind: input, shape index: {}]
  %s5 = inlined_call_operand.hbm [shape: f32[2,6], index: 5, kind: output, shape index: {}]
  %s6 = sld [smem:[#allocation0]]
  $region30: #{tpu_custom_call.1} parent=0
    _
  %s8 = ssub.s32 1, %s6
  %s9 = scalar_select 0, %s8, %s6
  $region1: #{tpu_custom_call.1} parent=0
    #allocation2 [shape = 'u8[1024]{0}', space=vmem, size = 0x400, scoped, tag = 'output window, operand 0, single buffered']
    #allocation3 [shape = 's32[1]{0}', space=sflag, size = 0x4, scoped, tag = 'scoped memory for tpu_custom_call.1']
    %10 = vsyncpa [#allocation3], 0
    // Predicated region
    $region2: #{tpu_custom_call.1} parent=1 // pred_check
      _
    $region3: #{tpu_custom_call.1} parent=1 // pred_check_branch
      %12 = sbr.rel (0) target = $region5
    $region4: #{tpu_custom_call.1} parent=1 // pred_region
      _
    $region5: #{tpu_custom_call.1} parent=1 // pred_fallthru
      _
    // Predicated region
    $region6: #{tpu_custom_call.1} parent=1 // pred_check
      _
    $region7: #{tpu_custom_call.1} parent=1 // pred_check_branch
      %14 = sbr.rel (0) target = $region9
    $region8: #{tpu_custom_call.1} parent=1 // pred_region
      _
    $region9: #{tpu_custom_call.1} parent=1 // pred_fallthru
      _
    // Predicated region
    $region10: #{tpu_custom_call.1} parent=1 // pred_check
      _
    $region11: #{tpu_custom_call.1} parent=1 // pred_check_branch
      %16 = sbr.rel (0) target = $region13
    $region12: #{tpu_custom_call.1} parent=1 // pred_region
      _
    $region13: #{tpu_custom_call.1} parent=1 // pred_fallthru
      _
    // Predicated region
    $region14: #{tpu_custom_call.1} parent=1 // pred_check
      _
    $region15: #{tpu_custom_call.1} parent=1 // pred_check_branch
      %18 = sbr.rel (0) target = $region17
    $region16: #{tpu_custom_call.1} parent=1 // pred_region
      _
    $region17: #{tpu_custom_call.1} parent=1 // pred_fallthru
      _
    // Predicated region
    $region18: #{tpu_custom_call.1} parent=1 // pred_check
      _
    $region19: #{tpu_custom_call.1} parent=1 // pred_check_branch
      %20 = sbr.rel (0) target = $region21
    $region20: #{tpu_custom_call.1} parent=1 // pred_region
      _
    $region21: #{tpu_custom_call.1} parent=1 // pred_fallthru
      _
    %v22 = vld [vmem:[%s0] sm:$0xff]
    %v23 = vld [vmem:[%s0 + $0x8] sm:$0xff]
    %v24 = vld [vmem:[%s0 + $0x10] sm:$0xff]
    %v25 = vld [vmem:[%s0 + $0x18] sm:$0xff]
    %v26 = vld [vmem:[%s0 + $0x20] sm:$0xff]
    %v27 = vld [vmem:[%s0 + $0x28] sm:$0xff]
    %v28 = vld [vmem:[%s0 + $0x30] sm:$0xff]
    %v29 = vld [vmem:[%s0 + $0x38] sm:$0xff]
    %v30 = vld [vmem:[%s0 + $0x40] sm:$0xff]
    %v31 = vld [vmem:[%s0 + $0x48] sm:$0xff]
    %v32 = vld [vmem:[%s0 + $0x50] sm:$0xff]
    %v33 = vld [vmem:[%s0 + $0x58] sm:$0xff]
    %v34 = vld [vmem:[%s1] sm:$0xf]
    %v35 = vld [vmem:[%s1 + $0x4] sm:$0xf]
    %v36 = vld [vmem:[%s1 + $0x8] sm:$0xf]
    %v37 = vld [vmem:[%s1 + $0xc] sm:$0xf]
    %v38 = vld [vmem:[%s1 + $0x10] sm:$0xf]
    %v39 = vld [vmem:[%s1 + $0x14] sm:$0xf]
    %v40 = vld [vmem:[%s1 + $0x18] sm:$0xf]
    %v41 = vld [vmem:[%s1 + $0x1c] sm:$0xf]
    %v42 = vld [vmem:[%s1 + $0x20] sm:$0xf]
    %v43 = vld [vmem:[%s1 + $0x24] sm:$0xf]
    %v44 = vld [vmem:[%s1 + $0x28] sm:$0xf]
    %v45 = vld [vmem:[%s1 + $0x2c] sm:$0xf]
    %v46 = vld [vmem:[%s1 + $0x30] sm:$0xf]
    %v47 = vld [vmem:[%s1 + $0x34] sm:$0xf]
    %v48 = vld [vmem:[%s1 + $0x38] sm:$0xf]
    %v49 = vld [vmem:[%s1 + $0x3c] sm:$0xf]
    %v50 = vld [vmem:[%s1 + $0x40] sm:$0xf]
    %v51 = vld [vmem:[%s1 + $0x44] sm:$0xf]
    %v52 = vld [vmem:[%s1 + $0x48] sm:$0xf]
    %v53 = vld [vmem:[%s1 + $0x4c] sm:$0xf]
    %v54 = vld [vmem:[%s1 + $0x50] sm:$0xf]
    %v55 = vld [vmem:[%s1 + $0x54] sm:$0xf]
    %v56 = vld [vmem:[%s1 + $0x58] sm:$0xf]
    %v57 = vld [vmem:[%s1 + $0x5c] sm:$0xf]
    %v58 = vld [vmem:[%s1 + $0x60] sm:$0xf]
    %v59 = vld [vmem:[%s1 + $0x64] sm:$0xf]
    %v60 = vld [vmem:[%s1 + $0x68] sm:$0xf]
    %v61 = vld [vmem:[%s1 + $0x6c] sm:$0xf]
    %v62 = vld [vmem:[%s1 + $0x70] sm:$0xf]
    %v63 = vld [vmem:[%s1 + $0x74] sm:$0xf]
    %v64 = vld [vmem:[%s1 + $0x78] sm:$0xf]
    %v65 = vld [vmem:[%s1 + $0x7c] sm:$0xf]
    %v66 = vld [vmem:[%s1 + $0x80] sm:$0xf]
    %v67 = vld [vmem:[%s1 + $0x84] sm:$0xf]
    %v68 = vld [vmem:[%s1 + $0x88] sm:$0xf]
    %v69 = vld [vmem:[%s1 + $0x8c] sm:$0xf]
    %v70 = vld [vmem:[%s1 + $0x90] sm:$0xf]
    %v71 = vld [vmem:[%s1 + $0x94] sm:$0xf]
    %v72 = vld [vmem:[%s1 + $0x98] sm:$0xf]
    %v73 = vld [vmem:[%s1 + $0x9c] sm:$0xf]
    %v74 = vld [vmem:[%s1 + $0xa0] sm:$0xf]
    %v75 = vld [vmem:[%s1 + $0xa4] sm:$0xf]
    %v76 = vld [vmem:[%s1 + $0xa8] sm:$0xf]
    %v77 = vld [vmem:[%s1 + $0xac] sm:$0xf]
    %v78 = vld [vmem:[%s1 + $0xb0] sm:$0xf]
    %v79 = vld [vmem:[%s1 + $0xb4] sm:$0xf]
    %v80 = vld [vmem:[%s1 + $0xb8] sm:$0xf]
    %v81 = vld [vmem:[%s1 + $0xbc] sm:$0xf]
    %v82 = vld [vmem:[%s1 + $0xc0] sm:$0xf]
    %v83 = vld [vmem:[%s1 + $0xc4] sm:$0xf]
    %v84 = vld [vmem:[%s1 + $0xc8] sm:$0xf]
    %v85 = vld [vmem:[%s1 + $0xcc] sm:$0xf]
    %v86 = vld [vmem:[%s1 + $0xd0] sm:$0xf]
    %v87 = vld [vmem:[%s1 + $0xd4] sm:$0xf]
    %v88 = vld [vmem:[%s1 + $0xd8] sm:$0xf]
    %v89 = vld [vmem:[%s1 + $0xdc] sm:$0xf]
    %v90 = vld [vmem:[%s1 + $0xe0] sm:$0xf]
    %v91 = vld [vmem:[%s1 + $0xe4] sm:$0xf]
    %v92 = vld [vmem:[%s1 + $0xe8] sm:$0xf]
    %v93 = vld [vmem:[%s1 + $0xec] sm:$0xf]
    %v94 = vld [vmem:[%s1 + $0xf0] sm:$0xf]
    %v95 = vld [vmem:[%s1 + $0xf4] sm:$0xf]
    %v96 = vld [vmem:[%s1 + $0xf8] sm:$0xf]
    %v97 = vld [vmem:[%s1 + $0xfc] sm:$0xf]
    %v98 = vld [vmem:[%s1 + $0x100] sm:$0xf]
    %v99 = vld [vmem:[%s1 + $0x104] sm:$0xf]
    %v100 = vld [vmem:[%s1 + $0x108] sm:$0xf]
    %v101 = vld [vmem:[%s1 + $0x10c] sm:$0xf]
    %v102 = vld [vmem:[%s1 + $0x110] sm:$0xf]
    %v103 = vld [vmem:[%s1 + $0x114] sm:$0xf]
    %v104 = vld [vmem:[%s1 + $0x118] sm:$0xf]
    %v105 = vld [vmem:[%s1 + $0x11c] sm:$0xf]
    %v106 = vld [vmem:[%s1 + $0x120] sm:$0xf]
    %v107 = vld [vmem:[%s1 + $0x124] sm:$0xf]
    %v108 = vld [vmem:[%s1 + $0x128] sm:$0xf]
    %v109 = vld [vmem:[%s1 + $0x12c] sm:$0xf]
    %v110 = vld [vmem:[%s1 + $0x130] sm:$0xf]
    %v111 = vld [vmem:[%s1 + $0x134] sm:$0xf]
    %v112 = vld [vmem:[%s1 + $0x138] sm:$0xf]
    %v113 = vld [vmem:[%s1 + $0x13c] sm:$0xf]
    %v114 = vld [vmem:[%s1 + $0x140] sm:$0xf]
    %v115 = vld [vmem:[%s1 + $0x144] sm:$0xf]
    %v116 = vld [vmem:[%s1 + $0x148] sm:$0xf]
    %v117 = vld [vmem:[%s1 + $0x14c] sm:$0xf]
    %v118 = vld [vmem:[%s1 + $0x150] sm:$0xf]
    %v119 = vld [vmem:[%s1 + $0x154] sm:$0xf]
    %v120 = vld [vmem:[%s1 + $0x158] sm:$0xf]
    %v121 = vld [vmem:[%s1 + $0x15c] sm:$0xf]
    %v122 = vld [vmem:[%s1 + $0x160] sm:$0xf]
    %v123 = vld [vmem:[%s1 + $0x164] sm:$0xf]
    %v124 = vld [vmem:[%s1 + $0x168] sm:$0xf]
    %v125 = vld [vmem:[%s1 + $0x16c] sm:$0xf]
    %v126 = vld [vmem:[%s1 + $0x170] sm:$0xf]
    %v127 = vld [vmem:[%s1 + $0x174] sm:$0xf]
    %v128 = vld [vmem:[%s1 + $0x178] sm:$0xf]
    %v129 = vld [vmem:[%s1 + $0x17c] sm:$0xf]
    %v130 = vld [vmem:[%s1 + $0x180] sm:$0xf]
    %v131 = vld [vmem:[%s1 + $0x184] sm:$0xf]
    %v132 = vld [vmem:[%s1 + $0x188] sm:$0xf]
    %v133 = vld [vmem:[%s1 + $0x18c] sm:$0xf]
    %v134 = vld [vmem:[%s1 + $0x190] sm:$0xf]
    %v135 = vld [vmem:[%s1 + $0x194] sm:$0xf]
    %v136 = vld [vmem:[%s1 + $0x198] sm:$0xf]
    %v137 = vld [vmem:[%s1 + $0x19c] sm:$0xf]
    %v138 = vld [vmem:[%s1 + $0x1a0] sm:$0xf]
    %v139 = vld [vmem:[%s1 + $0x1a4] sm:$0xf]
    %v140 = vld [vmem:[%s1 + $0x1a8] sm:$0xf]
    %v141 = vld [vmem:[%s1 + $0x1ac] sm:$0xf]
    %v142 = vld [vmem:[%s1 + $0x1b0] sm:$0xf]
    %v143 = vld [vmem:[%s1 + $0x1b4] sm:$0xf]
    %v144 = vld [vmem:[%s1 + $0x1b8] sm:$0xf]
    %v145 = vld [vmem:[%s1 + $0x1bc] sm:$0xf]
    %v146 = vld [vmem:[%s1 + $0x1c0] sm:$0xf]
    %v147 = vld [vmem:[%s1 + $0x1c4] sm:$0xf]
    %v148 = vld [vmem:[%s1 + $0x1c8] sm:$0xf]
    %v149 = vld [vmem:[%s1 + $0x1cc] sm:$0xf]
    %v150 = vld [vmem:[%s1 + $0x1d0] sm:$0xf]
    %v151 = vld [vmem:[%s1 + $0x1d4] sm:$0xf]
    %v152 = vld [vmem:[%s1 + $0x1d8] sm:$0xf]
    %v153 = vld [vmem:[%s1 + $0x1dc] sm:$0xf]
    %v154 = vld [vmem:[%s1 + $0x1e0] sm:$0xf]
    %v155 = vld [vmem:[%s1 + $0x1e4] sm:$0xf]
    %v156 = vld [vmem:[%s1 + $0x1e8] sm:$0xf]
    %v157 = vld [vmem:[%s1 + $0x1ec] sm:$0xf]
    %v158 = vld [vmem:[%s1 + $0x1f0] sm:$0xf]
    %v159 = vld [vmem:[%s1 + $0x1f4] sm:$0xf]
    %v160 = vld [vmem:[%s1 + $0x1f8] sm:$0xf]
    %v161 = vld [vmem:[%s1 + $0x1fc] sm:$0xf]
    %v162 = vld [vmem:[%s1 + $0x200] sm:$0xf]
    %v163 = vld [vmem:[%s1 + $0x204] sm:$0xf]
    %v164 = vld [vmem:[%s1 + $0x208] sm:$0xf]
    %v165 = vld [vmem:[%s1 + $0x20c] sm:$0xf]
    %v166 = vld [vmem:[%s1 + $0x210] sm:$0xf]
    %v167 = vld [vmem:[%s1 + $0x214] sm:$0xf]
    %v168 = vld [vmem:[%s1 + $0x218] sm:$0xf]
    %v169 = vld [vmem:[%s1 + $0x21c] sm:$0xf]
    %v170 = vld [vmem:[%s1 + $0x220] sm:$0xf]
    %v171 = vld [vmem:[%s1 + $0x224] sm:$0xf]
    %v172 = vld [vmem:[%s1 + $0x228] sm:$0xf]
    %v173 = vld [vmem:[%s1 + $0x22c] sm:$0xf]
    %v174 = vld [vmem:[%s1 + $0x230] sm:$0xf]
    %v175 = vld [vmem:[%s1 + $0x234] sm:$0xf]
    %v176 = vld [vmem:[%s1 + $0x238] sm:$0xf]
    %v177 = vld [vmem:[%s1 + $0x23c] sm:$0xf]
    %v178 = vld [vmem:[%s1 + $0x240] sm:$0xf]
    %v179 = vld [vmem:[%s1 + $0x244] sm:$0xf]
    %v180 = vld [vmem:[%s1 + $0x248] sm:$0xf]
    %v181 = vld [vmem:[%s1 + $0x24c] sm:$0xf]
    %v182 = vld [vmem:[%s1 + $0x250] sm:$0xf]
    %v183 = vld [vmem:[%s1 + $0x254] sm:$0xf]
    %v184 = vld [vmem:[%s1 + $0x258] sm:$0xf]
    %v185 = vld [vmem:[%s1 + $0x25c] sm:$0xf]
    %v186 = vld [vmem:[%s1 + $0x260] sm:$0xf]
    %v187 = vld [vmem:[%s1 + $0x264] sm:$0xf]
    %v188 = vld [vmem:[%s1 + $0x268] sm:$0xf]
    %v189 = vld [vmem:[%s1 + $0x26c] sm:$0xf]
    %v190 = vld [vmem:[%s1 + $0x270] sm:$0xf]
    %v191 = vld [vmem:[%s1 + $0x274] sm:$0xf]
    %v192 = vld [vmem:[%s1 + $0x278] sm:$0xf]
    %v193 = vld [vmem:[%s1 + $0x27c] sm:$0xf]
    %v194 = vld [vmem:[%s1 + $0x280] sm:$0xf]
    %v195 = vld [vmem:[%s1 + $0x284] sm:$0xf]
    %v196 = vld [vmem:[%s1 + $0x288] sm:$0xf]
    %v197 = vld [vmem:[%s1 + $0x28c] sm:$0xf]
    %v198 = vld [vmem:[%s1 + $0x290] sm:$0xf]
    %v199 = vld [vmem:[%s1 + $0x294] sm:$0xf]
    %v200 = vld [vmem:[%s1 + $0x298] sm:$0xf]
    %v201 = vld [vmem:[%s1 + $0x29c] sm:$0xf]
    %v202 = vld [vmem:[%s1 + $0x2a0] sm:$0xf]
    %v203 = vld [vmem:[%s1 + $0x2a4] sm:$0xf]
    %v204 = vld [vmem:[%s1 + $0x2a8] sm:$0xf]
    %v205 = vld [vmem:[%s1 + $0x2ac] sm:$0xf]
    %v206 = vld [vmem:[%s1 + $0x2b0] sm:$0xf]
    %v207 = vld [vmem:[%s1 + $0x2b4] sm:$0xf]
    %v208 = vld [vmem:[%s1 + $0x2b8] sm:$0xf]
    %v209 = vld [vmem:[%s1 + $0x2bc] sm:$0xf]
    %v210 = vld [vmem:[%s1 + $0x2c0] sm:$0xf]
    %v211 = vld [vmem:[%s1 + $0x2c4] sm:$0xf]
    %v212 = vld [vmem:[%s1 + $0x2c8] sm:$0xf]
    %v213 = vld [vmem:[%s1 + $0x2cc] sm:$0xf]
    %v214 = vld [vmem:[%s1 + $0x2d0] sm:$0xf]
    %v215 = vld [vmem:[%s1 + $0x2d4] sm:$0xf]
    %v216 = vld [vmem:[%s1 + $0x2d8] sm:$0xf]
    %v217 = vld [vmem:[%s1 + $0x2dc] sm:$0xf]
    %v218 = vld [vmem:[%s1 + $0x2e0] sm:$0xf]
    %v219 = vld [vmem:[%s1 + $0x2e4] sm:$0xf]
    %v220 = vld [vmem:[%s1 + $0x2e8] sm:$0xf]
    %v221 = vld [vmem:[%s1 + $0x2ec] sm:$0xf]
    %v222 = vld [vmem:[%s1 + $0x2f0] sm:$0xf]
    %v223 = vld [vmem:[%s1 + $0x2f4] sm:$0xf]
    %v224 = vld [vmem:[%s1 + $0x2f8] sm:$0xf]
    %v225 = vld [vmem:[%s1 + $0x2fc] sm:$0xf]
    %v226 = vld [vmem:[%s1 + $0x300] sm:$0xf]
    %v227 = vld [vmem:[%s1 + $0x304] sm:$0xf]
    %v228 = vld [vmem:[%s1 + $0x308] sm:$0xf]
    %v229 = vld [vmem:[%s1 + $0x30c] sm:$0xf]
    %v230 = vld [vmem:[%s1 + $0x310] sm:$0xf]
    %v231 = vld [vmem:[%s1 + $0x314] sm:$0xf]
    %v232 = vld [vmem:[%s1 + $0x318] sm:$0xf]
    %v233 = vld [vmem:[%s1 + $0x31c] sm:$0xf]
    %v234 = vld [vmem:[%s1 + $0x320] sm:$0xf]
    %v235 = vld [vmem:[%s1 + $0x324] sm:$0xf]
    %v236 = vld [vmem:[%s1 + $0x328] sm:$0xf]
    %v237 = vld [vmem:[%s1 + $0x32c] sm:$0xf]
    %v238 = vld [vmem:[%s1 + $0x330] sm:$0xf]
    %v239 = vld [vmem:[%s1 + $0x334] sm:$0xf]
    %v240 = vld [vmem:[%s1 + $0x338] sm:$0xf]
    %v241 = vld [vmem:[%s1 + $0x33c] sm:$0xf]
    %v242 = vld [vmem:[%s1 + $0x340] sm:$0xf]
    %v243 = vld [vmem:[%s1 + $0x344] sm:$0xf]
    %v244 = vld [vmem:[%s1 + $0x348] sm:$0xf]
    %v245 = vld [vmem:[%s1 + $0x34c] sm:$0xf]
    %v246 = vld [vmem:[%s1 + $0x350] sm:$0xf]
    %v247 = vld [vmem:[%s1 + $0x354] sm:$0xf]
    %v248 = vld [vmem:[%s1 + $0x358] sm:$0xf]
    %v249 = vld [vmem:[%s1 + $0x35c] sm:$0xf]
    %v250 = vld [vmem:[%s1 + $0x360] sm:$0xf]
    %v251 = vld [vmem:[%s1 + $0x364] sm:$0xf]
    %v252 = vld [vmem:[%s1 + $0x368] sm:$0xf]
    %v253 = vld [vmem:[%s1 + $0x36c] sm:$0xf]
    %v254 = vld [vmem:[%s1 + $0x370] sm:$0xf]
    %v255 = vld [vmem:[%s1 + $0x374] sm:$0xf]
    %v256 = vld [vmem:[%s1 + $0x378] sm:$0xf]
    %v257 = vld [vmem:[%s1 + $0x37c] sm:$0xf]
    %v258 = vld [vmem:[%s1 + $0x380] sm:$0xf]
    %v259 = vld [vmem:[%s1 + $0x384] sm:$0xf]
    %v260 = vld [vmem:[%s1 + $0x388] sm:$0xf]
    %v261 = vld [vmem:[%s1 + $0x38c] sm:$0xf]
    %v262 = vld [vmem:[%s1 + $0x390] sm:$0xf]
    %v263 = vld [vmem:[%s1 + $0x394] sm:$0xf]
    %v264 = vld [vmem:[%s1 + $0x398] sm:$0xf]
    %v265 = vld [vmem:[%s1 + $0x39c] sm:$0xf]
    %v266 = vld [vmem:[%s1 + $0x3a0] sm:$0xf]
    %v267 = vld [vmem:[%s1 + $0x3a4] sm:$0xf]
    %v268 = vld [vmem:[%s1 + $0x3a8] sm:$0xf]
    %v269 = vld [vmem:[%s1 + $0x3ac] sm:$0xf]
    %v270 = vld [vmem:[%s1 + $0x3b0] sm:$0xf]
    %v271 = vld [vmem:[%s1 + $0x3b4] sm:$0xf]
    %v272 = vld [vmem:[%s1 + $0x3b8] sm:$0xf]
    %v273 = vld [vmem:[%s1 + $0x3bc] sm:$0xf]
    %v274 = vld [vmem:[%s1 + $0x3c0] sm:$0xf]
    %v275 = vld [vmem:[%s1 + $0x3c4] sm:$0xf]
    %v276 = vld [vmem:[%s1 + $0x3c8] sm:$0xf]
    %v277 = vld [vmem:[%s1 + $0x3cc] sm:$0xf]
    %v278 = vld [vmem:[%s1 + $0x3d0] sm:$0xf]
    %v279 = vld [vmem:[%s1 + $0x3d4] sm:$0xf]
    %v280 = vld [vmem:[%s1 + $0x3d8] sm:$0xf]
    %v281 = vld [vmem:[%s1 + $0x3dc] sm:$0xf]
    %v282 = vld [vmem:[%s1 + $0x3e0] sm:$0xf]
    %v283 = vld [vmem:[%s1 + $0x3e4] sm:$0xf]
    %v284 = vld [vmem:[%s1 + $0x3e8] sm:$0xf]
    %v285 = vld [vmem:[%s1 + $0x3ec] sm:$0xf]
    %v286 = vld [vmem:[%s1 + $0x3f0] sm:$0xf]
    %v287 = vld [vmem:[%s1 + $0x3f4] sm:$0xf]
    %v288 = vld [vmem:[%s1 + $0x3f8] sm:$0xf]
    %v289 = vld [vmem:[%s1 + $0x3fc] sm:$0xf]
    %v290 = vld [vmem:[%s1 + $0x400] sm:$0xf]
    %v291 = vld [vmem:[%s1 + $0x404] sm:$0xf]
    %v292 = vld [vmem:[%s1 + $0x408] sm:$0xf]
    %v293 = vld [vmem:[%s1 + $0x40c] sm:$0xf]
    %v294 = vld [vmem:[%s1 + $0x410] sm:$0xf]
    %v295 = vld [vmem:[%s1 + $0x414] sm:$0xf]
    %v296 = vld [vmem:[%s1 + $0x418] sm:$0xf]
    %v297 = vld [vmem:[%s1 + $0x41c] sm:$0xf]
    %v298 = vld [vmem:[%s1 + $0x420] sm:$0xf]
    %v299 = vld [vmem:[%s1 + $0x424] sm:$0xf]
    %v300 = vld [vmem:[%s1 + $0x428] sm:$0xf]
    %v301 = vld [vmem:[%s1 + $0x42c] sm:$0xf]
    %v302 = vld [vmem:[%s1 + $0x430] sm:$0xf]
    %v303 = vld [vmem:[%s1 + $0x434] sm:$0xf]
    %v304 = vld [vmem:[%s1 + $0x438] sm:$0xf]
    %v305 = vld [vmem:[%s1 + $0x43c] sm:$0xf]
    %v306 = vld [vmem:[%s1 + $0x440] sm:$0xf]
    %v307 = vld [vmem:[%s1 + $0x444] sm:$0xf]
    %v308 = vld [vmem:[%s1 + $0x448] sm:$0xf]
    %v309 = vld [vmem:[%s1 + $0x44c] sm:$0xf]
    %v310 = vld [vmem:[%s1 + $0x450] sm:$0xf]
    %v311 = vld [vmem:[%s1 + $0x454] sm:$0xf]
    %v312 = vld [vmem:[%s1 + $0x458] sm:$0xf]
    %v313 = vld [vmem:[%s1 + $0x45c] sm:$0xf]
    %v314 = vld [vmem:[%s1 + $0x460] sm:$0xf]
    %v315 = vld [vmem:[%s1 + $0x464] sm:$0xf]
    %v316 = vld [vmem:[%s1 + $0x468] sm:$0xf]
    %v317 = vld [vmem:[%s1 + $0x46c] sm:$0xf]
    %v318 = vld [vmem:[%s1 + $0x470] sm:$0xf]
    %v319 = vld [vmem:[%s1 + $0x474] sm:$0xf]
    %v320 = vld [vmem:[%s1 + $0x478] sm:$0xf]
    %v321 = vld [vmem:[%s1 + $0x47c] sm:$0xf]
    %v322 = vld [vmem:[%s1 + $0x480] sm:$0xf]
    %v323 = vld [vmem:[%s1 + $0x484] sm:$0xf]
    %v324 = vld [vmem:[%s1 + $0x488] sm:$0xf]
    %v325 = vld [vmem:[%s1 + $0x48c] sm:$0xf]
    %v326 = vld [vmem:[%s1 + $0x490] sm:$0xf]
    %v327 = vld [vmem:[%s1 + $0x494] sm:$0xf]
    %v328 = vld [vmem:[%s1 + $0x498] sm:$0xf]
    %v329 = vld [vmem:[%s1 + $0x49c] sm:$0xf]
    %v330 = vld [vmem:[%s1 + $0x4a0] sm:$0xf]
    %v331 = vld [vmem:[%s1 + $0x4a4] sm:$0xf]
    %v332 = vld [vmem:[%s1 + $0x4a8] sm:$0xf]
    %v333 = vld [vmem:[%s1 + $0x4ac] sm:$0xf]
    %v334 = vld [vmem:[%s1 + $0x4b0] sm:$0xf]
    %v335 = vld [vmem:[%s1 + $0x4b4] sm:$0xf]
    %v336 = vld [vmem:[%s1 + $0x4b8] sm:$0xf]
    %v337 = vld [vmem:[%s1 + $0x4bc] sm:$0xf]
    %v338 = vld [vmem:[%s1 + $0x4c0] sm:$0xf]
    %v339 = vld [vmem:[%s1 + $0x4c4] sm:$0xf]
    %v340 = vld [vmem:[%s1 + $0x4c8] sm:$0xf]
    %v341 = vld [vmem:[%s1 + $0x4cc] sm:$0xf]
    %v342 = vld [vmem:[%s1 + $0x4d0] sm:$0xf]
    %v343 = vld [vmem:[%s1 + $0x4d4] sm:$0xf]
    %v344 = vld [vmem:[%s1 + $0x4d8] sm:$0xf]
    %v345 = vld [vmem:[%s1 + $0x4dc] sm:$0xf]
    %v346 = vld [vmem:[%s1 + $0x4e0] sm:$0xf]
    %v347 = vld [vmem:[%s1 + $0x4e4] sm:$0xf]
    %v348 = vld [vmem:[%s1 + $0x4e8] sm:$0xf]
    %v349 = vld [vmem:[%s1 + $0x4ec] sm:$0xf]
    %v350 = vld [vmem:[%s1 + $0x4f0] sm:$0xf]
    %v351 = vld [vmem:[%s1 + $0x4f4] sm:$0xf]
    %v352 = vld [vmem:[%s1 + $0x4f8] sm:$0xf]
    %v353 = vld [vmem:[%s1 + $0x4fc] sm:$0xf]
    %v354 = vld [vmem:[%s1 + $0x500] sm:$0xf]
    %v355 = vld [vmem:[%s1 + $0x504] sm:$0xf]
    %v356 = vld [vmem:[%s1 + $0x508] sm:$0xf]
    %v357 = vld [vmem:[%s1 + $0x50c] sm:$0xf]
    %v358 = vld [vmem:[%s1 + $0x510] sm:$0xf]
    %v359 = vld [vmem:[%s1 + $0x514] sm:$0xf]
    %v360 = vld [vmem:[%s1 + $0x518] sm:$0xf]
    %v361 = vld [vmem:[%s1 + $0x51c] sm:$0xf]
    %v362 = vld [vmem:[%s1 + $0x520] sm:$0xf]
    %v363 = vld [vmem:[%s1 + $0x524] sm:$0xf]
    %v364 = vld [vmem:[%s1 + $0x528] sm:$0xf]
    %v365 = vld [vmem:[%s1 + $0x52c] sm:$0xf]
    %v366 = vld [vmem:[%s1 + $0x530] sm:$0xf]
    %v367 = vld [vmem:[%s1 + $0x534] sm:$0xf]
    %v368 = vld [vmem:[%s1 + $0x538] sm:$0xf]
    %v369 = vld [vmem:[%s1 + $0x53c] sm:$0xf]
    %v370 = vld [vmem:[%s1 + $0x540] sm:$0xf]
    %v371 = vld [vmem:[%s1 + $0x544] sm:$0xf]
    %v372 = vld [vmem:[%s1 + $0x548] sm:$0xf]
    %v373 = vld [vmem:[%s1 + $0x54c] sm:$0xf]
    %v374 = vld [vmem:[%s1 + $0x550] sm:$0xf]
    %v375 = vld [vmem:[%s1 + $0x554] sm:$0xf]
    %v376 = vld [vmem:[%s1 + $0x558] sm:$0xf]
    %v377 = vld [vmem:[%s1 + $0x55c] sm:$0xf]
    %v378 = vld [vmem:[%s1 + $0x560] sm:$0xf]
    %v379 = vld [vmem:[%s1 + $0x564] sm:$0xf]
    %v380 = vld [vmem:[%s1 + $0x568] sm:$0xf]
    %v381 = vld [vmem:[%s1 + $0x56c] sm:$0xf]
    %v382 = vld [vmem:[%s1 + $0x570] sm:$0xf]
    %v383 = vld [vmem:[%s1 + $0x574] sm:$0xf]
    %v384 = vld [vmem:[%s1 + $0x578] sm:$0xf]
    %v385 = vld [vmem:[%s1 + $0x57c] sm:$0xf]
    %v386 = vld [vmem:[%s1 + $0x580] sm:$0xf]
    %v387 = vld [vmem:[%s1 + $0x584] sm:$0xf]
    %v388 = vld [vmem:[%s1 + $0x588] sm:$0xf]
    %v389 = vld [vmem:[%s1 + $0x58c] sm:$0xf]
    %v390 = vld [vmem:[%s1 + $0x590] sm:$0xf]
    %v391 = vld [vmem:[%s1 + $0x594] sm:$0xf]
    %v392 = vld [vmem:[%s1 + $0x598] sm:$0xf]
    %v393 = vld [vmem:[%s1 + $0x59c] sm:$0xf]
    %v394 = vld [vmem:[%s1 + $0x5a0] sm:$0xf]
    %v395 = vld [vmem:[%s1 + $0x5a4] sm:$0xf]
    %v396 = vld [vmem:[%s1 + $0x5a8] sm:$0xf]
    %v397 = vld [vmem:[%s1 + $0x5ac] sm:$0xf]
    %v398 = vld [vmem:[%s1 + $0x5b0] sm:$0xf]
    %v399 = vld [vmem:[%s1 + $0x5b4] sm:$0xf]
    %v400 = vld [vmem:[%s1 + $0x5b8] sm:$0xf]
    %v401 = vld [vmem:[%s1 + $0x5bc] sm:$0xf]
    %v402 = vld [vmem:[%s1 + $0x5c0] sm:$0xf]
    %v403 = vld [vmem:[%s1 + $0x5c4] sm:$0xf]
    %v404 = vld [vmem:[%s1 + $0x5c8] sm:$0xf]
    %v405 = vld [vmem:[%s1 + $0x5cc] sm:$0xf]
    %v406 = vld [vmem:[%s1 + $0x5d0] sm:$0xf]
    %v407 = vld [vmem:[%s1 + $0x5d4] sm:$0xf]
    %v408 = vld [vmem:[%s1 + $0x5d8] sm:$0xf]
    %v409 = vld [vmem:[%s1 + $0x5dc] sm:$0xf]
    %v410 = vld [vmem:[%s1 + $0x5e0] sm:$0xf]
    %v411 = vld [vmem:[%s1 + $0x5e4] sm:$0xf]
    %v412 = vld [vmem:[%s1 + $0x5e8] sm:$0xf]
    %v413 = vld [vmem:[%s1 + $0x5ec] sm:$0xf]
    %v414 = vld [vmem:[%s1 + $0x5f0] sm:$0xf]
    %v415 = vld [vmem:[%s1 + $0x5f4] sm:$0xf]
    %v416 = vld [vmem:[%s1 + $0x5f8] sm:$0xf]
    %v417 = vld [vmem:[%s1 + $0x5fc] sm:$0xf]
    %v418 = vld [vmem:[%s1 + $0x600] sm:$0xf]
    %v419 = vld [vmem:[%s1 + $0x604] sm:$0xf]
    %v420 = vld [vmem:[%s1 + $0x608] sm:$0xf]
    %v421 = vld [vmem:[%s1 + $0x60c] sm:$0xf]
    %v422 = vld [vmem:[%s1 + $0x610] sm:$0xf]
    %v423 = vld [vmem:[%s1 + $0x614] sm:$0xf]
    %v424 = vld [vmem:[%s1 + $0x618] sm:$0xf]
    %v425 = vld [vmem:[%s1 + $0x61c] sm:$0xf]
    %v426 = vld [vmem:[%s1 + $0x620] sm:$0xf]
    %v427 = vld [vmem:[%s1 + $0x624] sm:$0xf]
    %v428 = vld [vmem:[%s1 + $0x628] sm:$0xf]
    %v429 = vld [vmem:[%s1 + $0x62c] sm:$0xf]
    %v430 = vld [vmem:[%s1 + $0x630] sm:$0xf]
    %v431 = vld [vmem:[%s1 + $0x634] sm:$0xf]
    %v432 = vld [vmem:[%s1 + $0x638] sm:$0xf]
    %v433 = vld [vmem:[%s1 + $0x63c] sm:$0xf]
    %v434 = vld [vmem:[%s1 + $0x640] sm:$0xf]
    %v435 = vld [vmem:[%s1 + $0x644] sm:$0xf]
    %v436 = vld [vmem:[%s1 + $0x648] sm:$0xf]
    %v437 = vld [vmem:[%s1 + $0x64c] sm:$0xf]
    %v438 = vld [vmem:[%s1 + $0x650] sm:$0xf]
    %v439 = vld [vmem:[%s1 + $0x654] sm:$0xf]
    %v440 = vld [vmem:[%s1 + $0x658] sm:$0xf]
    %v441 = vld [vmem:[%s1 + $0x65c] sm:$0xf]
    %v442 = vld [vmem:[%s1 + $0x660] sm:$0xf]
    %v443 = vld [vmem:[%s1 + $0x664] sm:$0xf]
    %v444 = vld [vmem:[%s1 + $0x668] sm:$0xf]
    %v445 = vld [vmem:[%s1 + $0x66c] sm:$0xf]
    %v446 = vld [vmem:[%s1 + $0x670] sm:$0xf]
    %v447 = vld [vmem:[%s1 + $0x674] sm:$0xf]
    %v448 = vld [vmem:[%s1 + $0x678] sm:$0xf]
    %v449 = vld [vmem:[%s1 + $0x67c] sm:$0xf]
    %v450 = vld [vmem:[%s1 + $0x680] sm:$0xf]
    %v451 = vld [vmem:[%s1 + $0x684] sm:$0xf]
    %v452 = vld [vmem:[%s1 + $0x688] sm:$0xf]
    %v453 = vld [vmem:[%s1 + $0x68c] sm:$0xf]
    %v454 = vld [vmem:[%s1 + $0x690] sm:$0xf]
    %v455 = vld [vmem:[%s1 + $0x694] sm:$0xf]
    %v456 = vld [vmem:[%s1 + $0x698] sm:$0xf]
    %v457 = vld [vmem:[%s1 + $0x69c] sm:$0xf]
    %v458 = vld [vmem:[%s1 + $0x6a0] sm:$0xf]
    %v459 = vld [vmem:[%s1 + $0x6a4] sm:$0xf]
    %v460 = vld [vmem:[%s1 + $0x6a8] sm:$0xf]
    %v461 = vld [vmem:[%s1 + $0x6ac] sm:$0xf]
    %v462 = vld [vmem:[%s1 + $0x6b0] sm:$0xf]
    %v463 = vld [vmem:[%s1 + $0x6b4] sm:$0xf]
    %v464 = vld [vmem:[%s1 + $0x6b8] sm:$0xf]
    %v465 = vld [vmem:[%s1 + $0x6bc] sm:$0xf]
    %v466 = vld [vmem:[%s1 + $0x6c0] sm:$0xf]
    %v467 = vld [vmem:[%s1 + $0x6c4] sm:$0xf]
    %v468 = vld [vmem:[%s1 + $0x6c8] sm:$0xf]
    %v469 = vld [vmem:[%s1 + $0x6cc] sm:$0xf]
    %v470 = vld [vmem:[%s1 + $0x6d0] sm:$0xf]
    %v471 = vld [vmem:[%s1 + $0x6d4] sm:$0xf]
    %v472 = vld [vmem:[%s1 + $0x6d8] sm:$0xf]
    %v473 = vld [vmem:[%s1 + $0x6dc] sm:$0xf]
    %v474 = vld [vmem:[%s1 + $0x6e0] sm:$0xf]
    %v475 = vld [vmem:[%s1 + $0x6e4] sm:$0xf]
    %v476 = vld [vmem:[%s1 + $0x6e8] sm:$0xf]
    %v477 = vld [vmem:[%s1 + $0x6ec] sm:$0xf]
    %v478 = vld [vmem:[%s1 + $0x6f0] sm:$0xf]
    %v479 = vld [vmem:[%s1 + $0x6f4] sm:$0xf]
    %v480 = vld [vmem:[%s1 + $0x6f8] sm:$0xf]
    %v481 = vld [vmem:[%s1 + $0x6fc] sm:$0xf]
    %v482 = vld [vmem:[%s1 + $0x700] sm:$0xf]
    %v483 = vld [vmem:[%s1 + $0x704] sm:$0xf]
    %v484 = vld [vmem:[%s1 + $0x708] sm:$0xf]
    %v485 = vld [vmem:[%s1 + $0x70c] sm:$0xf]
    %v486 = vld [vmem:[%s1 + $0x710] sm:$0xf]
    %v487 = vld [vmem:[%s1 + $0x714] sm:$0xf]
    %v488 = vld [vmem:[%s1 + $0x718] sm:$0xf]
    %v489 = vld [vmem:[%s1 + $0x71c] sm:$0xf]
    %v490 = vld [vmem:[%s1 + $0x720] sm:$0xf]
    %v491 = vld [vmem:[%s1 + $0x724] sm:$0xf]
    %v492 = vld [vmem:[%s1 + $0x728] sm:$0xf]
    %v493 = vld [vmem:[%s1 + $0x72c] sm:$0xf]
    %v494 = vld [vmem:[%s1 + $0x730] sm:$0xf]
    %v495 = vld [vmem:[%s1 + $0x734] sm:$0xf]
    %v496 = vld [vmem:[%s1 + $0x738] sm:$0xf]
    %v497 = vld [vmem:[%s1 + $0x73c] sm:$0xf]
    %v498 = vld [vmem:[%s1 + $0x740] sm:$0xf]
    %v499 = vld [vmem:[%s1 + $0x744] sm:$0xf]
    %v500 = vld [vmem:[%s1 + $0x748] sm:$0xf]
    %v501 = vld [vmem:[%s1 + $0x74c] sm:$0xf]
    %v502 = vld [vmem:[%s1 + $0x750] sm:$0xf]
    %v503 = vld [vmem:[%s1 + $0x754] sm:$0xf]
    %v504 = vld [vmem:[%s1 + $0x758] sm:$0xf]
    %v505 = vld [vmem:[%s1 + $0x75c] sm:$0xf]
    %v506 = vld [vmem:[%s1 + $0x760] sm:$0xf]
    %v507 = vld [vmem:[%s1 + $0x764] sm:$0xf]
    %v508 = vld [vmem:[%s1 + $0x768] sm:$0xf]
    %v509 = vld [vmem:[%s1 + $0x76c] sm:$0xf]
    %v510 = vld [vmem:[%s1 + $0x770] sm:$0xf]
    %v511 = vld [vmem:[%s1 + $0x774] sm:$0xf]
    %v512 = vld [vmem:[%s1 + $0x778] sm:$0xf]
    %v513 = vld [vmem:[%s1 + $0x77c] sm:$0xf]
    %v514 = vld [vmem:[%s1 + $0x780] sm:$0xf]
    %v515 = vld [vmem:[%s1 + $0x784] sm:$0xf]
    %v516 = vld [vmem:[%s1 + $0x788] sm:$0xf]
    %v517 = vld [vmem:[%s1 + $0x78c] sm:$0xf]
    %v518 = vld [vmem:[%s1 + $0x790] sm:$0xf]
    %v519 = vld [vmem:[%s1 + $0x794] sm:$0xf]
    %v520 = vld [vmem:[%s1 + $0x798] sm:$0xf]
    %v521 = vld [vmem:[%s1 + $0x79c] sm:$0xf]
    %v522 = vld [vmem:[%s1 + $0x7a0] sm:$0xf]
    %v523 = vld [vmem:[%s1 + $0x7a4] sm:$0xf]
    %v524 = vld [vmem:[%s1 + $0x7a8] sm:$0xf]
    %v525 = vld [vmem:[%s1 + $0x7ac] sm:$0xf]
    %v526 = vld [vmem:[%s1 + $0x7b0] sm:$0xf]
    %v527 = vld [vmem:[%s1 + $0x7b4] sm:$0xf]
    %v528 = vld [vmem:[%s1 + $0x7b8] sm:$0xf]
    %v529 = vld [vmem:[%s1 + $0x7bc] sm:$0xf]
    %v530 = vld [vmem:[%s1 + $0x7c0] sm:$0xf]
    %v531 = vld [vmem:[%s1 + $0x7c4] sm:$0xf]
    %v532 = vld [vmem:[%s1 + $0x7c8] sm:$0xf]
    %v533 = vld [vmem:[%s1 + $0x7cc] sm:$0xf]
    %v534 = vld [vmem:[%s1 + $0x7d0] sm:$0xf]
    %v535 = vld [vmem:[%s1 + $0x7d4] sm:$0xf]
    %v536 = vld [vmem:[%s1 + $0x7d8] sm:$0xf]
    %v537 = vld [vmem:[%s1 + $0x7dc] sm:$0xf]
    %v538 = vld [vmem:[%s1 + $0x7e0] sm:$0xf]
    %v539 = vld [vmem:[%s1 + $0x7e4] sm:$0xf]
    %v540 = vld [vmem:[%s1 + $0x7e8] sm:$0xf]
    %v541 = vld [vmem:[%s1 + $0x7ec] sm:$0xf]
    %v542 = vld [vmem:[%s1 + $0x7f0] sm:$0xf]
    %v543 = vld [vmem:[%s1 + $0x7f4] sm:$0xf]
    %v544 = vld [vmem:[%s1 + $0x7f8] sm:$0xf]
    %v545 = vld [vmem:[%s1 + $0x7fc] sm:$0xf]
    %v546 = vld [vmem:[%s1 + $0x800] sm:$0xf]
    %v547 = vld [vmem:[%s1 + $0x804] sm:$0xf]
    %v548 = vld [vmem:[%s1 + $0x808] sm:$0xf]
    %v549 = vld [vmem:[%s1 + $0x80c] sm:$0xf]
    %v550 = vld [vmem:[%s1 + $0x810] sm:$0xf]
    %v551 = vld [vmem:[%s1 + $0x814] sm:$0xf]
    %v552 = vld [vmem:[%s1 + $0x818] sm:$0xf]
    %v553 = vld [vmem:[%s1 + $0x81c] sm:$0xf]
    %v554 = vld [vmem:[%s1 + $0x820] sm:$0xf]
    %v555 = vld [vmem:[%s1 + $0x824] sm:$0xf]
    %v556 = vld [vmem:[%s1 + $0x828] sm:$0xf]
    %v557 = vld [vmem:[%s1 + $0x82c] sm:$0xf]
    %v558 = vld [vmem:[%s1 + $0x830] sm:$0xf]
    %v559 = vld [vmem:[%s1 + $0x834] sm:$0xf]
    %v560 = vld [vmem:[%s1 + $0x838] sm:$0xf]
    %v561 = vld [vmem:[%s1 + $0x83c] sm:$0xf]
    %v562 = vld [vmem:[%s1 + $0x840] sm:$0xf]
    %v563 = vld [vmem:[%s1 + $0x844] sm:$0xf]
    %v564 = vld [vmem:[%s1 + $0x848] sm:$0xf]
    %v565 = vld [vmem:[%s1 + $0x84c] sm:$0xf]
    %v566 = vld [vmem:[%s1 + $0x850] sm:$0xf]
    %v567 = vld [vmem:[%s1 + $0x854] sm:$0xf]
    %v568 = vld [vmem:[%s1 + $0x858] sm:$0xf]
    %v569 = vld [vmem:[%s1 + $0x85c] sm:$0xf]
    %v570 = vld [vmem:[%s1 + $0x860] sm:$0xf]
    %v571 = vld [vmem:[%s1 + $0x864] sm:$0xf]
    %v572 = vld [vmem:[%s1 + $0x868] sm:$0xf]
    %v573 = vld [vmem:[%s1 + $0x86c] sm:$0xf]
    %v574 = vld [vmem:[%s1 + $0x870] sm:$0xf]
    %v575 = vld [vmem:[%s1 + $0x874] sm:$0xf]
    %v576 = vld [vmem:[%s1 + $0x878] sm:$0xf]
    %v577 = vld [vmem:[%s1 + $0x87c] sm:$0xf]
    %v578 = vld [vmem:[%s1 + $0x880] sm:$0xf]
    %v579 = vld [vmem:[%s1 + $0x884] sm:$0xf]
    %v580 = vld [vmem:[%s1 + $0x888] sm:$0xf]
    %v581 = vld [vmem:[%s1 + $0x88c] sm:$0xf]
    %v582 = vld [vmem:[%s1 + $0x890] sm:$0xf]
    %v583 = vld [vmem:[%s1 + $0x894] sm:$0xf]
    %v584 = vld [vmem:[%s1 + $0x898] sm:$0xf]
    %v585 = vld [vmem:[%s1 + $0x89c] sm:$0xf]
    %v586 = vld [vmem:[%s1 + $0x8a0] sm:$0xf]
    %v587 = vld [vmem:[%s1 + $0x8a4] sm:$0xf]
    %v588 = vld [vmem:[%s1 + $0x8a8] sm:$0xf]
    %v589 = vld [vmem:[%s1 + $0x8ac] sm:$0xf]
    %v590 = vld [vmem:[%s1 + $0x8b0] sm:$0xf]
    %v591 = vld [vmem:[%s1 + $0x8b4] sm:$0xf]
    %v592 = vld [vmem:[%s1 + $0x8b8] sm:$0xf]
    %v593 = vld [vmem:[%s1 + $0x8bc] sm:$0xf]
    %v594 = vld [vmem:[%s1 + $0x8c0] sm:$0xf]
    %v595 = vld [vmem:[%s1 + $0x8c4] sm:$0xf]
    %v596 = vld [vmem:[%s1 + $0x8c8] sm:$0xf]
    %v597 = vld [vmem:[%s1 + $0x8cc] sm:$0xf]
    %v598 = vld [vmem:[%s1 + $0x8d0] sm:$0xf]
    %v599 = vld [vmem:[%s1 + $0x8d4] sm:$0xf]
    %v600 = vld [vmem:[%s1 + $0x8d8] sm:$0xf]
    %v601 = vld [vmem:[%s1 + $0x8dc] sm:$0xf]
    %v602 = vld [vmem:[%s1 + $0x8e0] sm:$0xf]
    %v603 = vld [vmem:[%s1 + $0x8e4] sm:$0xf]
    %v604 = vld [vmem:[%s1 + $0x8e8] sm:$0xf]
    %v605 = vld [vmem:[%s1 + $0x8ec] sm:$0xf]
    %v606 = vld [vmem:[%s1 + $0x8f0] sm:$0xf]
    %v607 = vld [vmem:[%s1 + $0x8f4] sm:$0xf]
    %v608 = vld [vmem:[%s1 + $0x8f8] sm:$0xf]
    %v609 = vld [vmem:[%s1 + $0x8fc] sm:$0xf]
    %v610 = vld [vmem:[%s1 + $0x900] sm:$0xf]
    %v611 = vld [vmem:[%s1 + $0x904] sm:$0xf]
    %v612 = vld [vmem:[%s1 + $0x908] sm:$0xf]
    %v613 = vld [vmem:[%s1 + $0x90c] sm:$0xf]
    %v614 = vld [vmem:[%s1 + $0x910] sm:$0xf]
    %v615 = vld [vmem:[%s1 + $0x914] sm:$0xf]
    %v616 = vld [vmem:[%s1 + $0x918] sm:$0xf]
    %v617 = vld [vmem:[%s1 + $0x91c] sm:$0xf]
    %v618 = vld [vmem:[%s1 + $0x920] sm:$0xf]
    %v619 = vld [vmem:[%s1 + $0x924] sm:$0xf]
    %v620 = vld [vmem:[%s1 + $0x928] sm:$0xf]
    %v621 = vld [vmem:[%s1 + $0x92c] sm:$0xf]
    %v622 = vld [vmem:[%s1 + $0x930] sm:$0xf]
    %v623 = vld [vmem:[%s1 + $0x934] sm:$0xf]
    %v624 = vld [vmem:[%s1 + $0x938] sm:$0xf]
    %v625 = vld [vmem:[%s1 + $0x93c] sm:$0xf]
    %v626 = vld [vmem:[%s1 + $0x940] sm:$0xf]
    %v627 = vld [vmem:[%s1 + $0x944] sm:$0xf]
    %v628 = vld [vmem:[%s1 + $0x948] sm:$0xf]
    %v629 = vld [vmem:[%s1 + $0x94c] sm:$0xf]
    %v630 = vld [vmem:[%s1 + $0x950] sm:$0xf]
    %v631 = vld [vmem:[%s1 + $0x954] sm:$0xf]
    %v632 = vld [vmem:[%s1 + $0x958] sm:$0xf]
    %v633 = vld [vmem:[%s1 + $0x95c] sm:$0xf]
    %v634 = vld [vmem:[%s1 + $0x960] sm:$0xf]
    %v635 = vld [vmem:[%s1 + $0x964] sm:$0xf]
    %v636 = vld [vmem:[%s1 + $0x968] sm:$0xf]
    %v637 = vld [vmem:[%s1 + $0x96c] sm:$0xf]
    %v638 = vld [vmem:[%s1 + $0x970] sm:$0xf]
    %v639 = vld [vmem:[%s1 + $0x974] sm:$0xf]
    %v640 = vld [vmem:[%s1 + $0x978] sm:$0xf]
    %v641 = vld [vmem:[%s1 + $0x97c] sm:$0xf]
    %v642 = vld [vmem:[%s1 + $0x980] sm:$0xf]
    %v643 = vld [vmem:[%s1 + $0x984] sm:$0xf]
    %v644 = vld [vmem:[%s1 + $0x988] sm:$0xf]
    %v645 = vld [vmem:[%s1 + $0x98c] sm:$0xf]
    %v646 = vld [vmem:[%s1 + $0x990] sm:$0xf]
    %v647 = vld [vmem:[%s1 + $0x994] sm:$0xf]
    %v648 = vld [vmem:[%s1 + $0x998] sm:$0xf]
    %v649 = vld [vmem:[%s1 + $0x99c] sm:$0xf]
    %v650 = vld [vmem:[%s1 + $0x9a0] sm:$0xf]
    %v651 = vld [vmem:[%s1 + $0x9a4] sm:$0xf]
    %v652 = vld [vmem:[%s1 + $0x9a8] sm:$0xf]
    %v653 = vld [vmem:[%s1 + $0x9ac] sm:$0xf]
    %v654 = vld [vmem:[%s1 + $0x9b0] sm:$0xf]
    %v655 = vld [vmem:[%s1 + $0x9b4] sm:$0xf]
    %v656 = vld [vmem:[%s1 + $0x9b8] sm:$0xf]
    %v657 = vld [vmem:[%s1 + $0x9bc] sm:$0xf]
    %v658 = vld [vmem:[%s1 + $0x9c0] sm:$0xf]
    %v659 = vld [vmem:[%s1 + $0x9c4] sm:$0xf]
    %v660 = vld [vmem:[%s1 + $0x9c8] sm:$0xf]
    %v661 = vld [vmem:[%s1 + $0x9cc] sm:$0xf]
    %v662 = vld [vmem:[%s1 + $0x9d0] sm:$0xf]
    %v663 = vld [vmem:[%s1 + $0x9d4] sm:$0xf]
    %v664 = vld [vmem:[%s1 + $0x9d8] sm:$0xf]
    %v665 = vld [vmem:[%s1 + $0x9dc] sm:$0xf]
    %v666 = vld [vmem:[%s1 + $0x9e0] sm:$0xf]
    %v667 = vld [vmem:[%s1 + $0x9e4] sm:$0xf]
    %v668 = vld [vmem:[%s1 + $0x9e8] sm:$0xf]
    %v669 = vld [vmem:[%s1 + $0x9ec] sm:$0xf]
    %v670 = vld [vmem:[%s1 + $0x9f0] sm:$0xf]
    %v671 = vld [vmem:[%s1 + $0x9f4] sm:$0xf]
    %v672 = vld [vmem:[%s1 + $0x9f8] sm:$0xf]
    %v673 = vld [vmem:[%s1 + $0x9fc] sm:$0xf]
    %v674 = vld [vmem:[%s1 + $0xa00] sm:$0xf]
    %v675 = vld [vmem:[%s1 + $0xa04] sm:$0xf]
    %v676 = vld [vmem:[%s1 + $0xa08] sm:$0xf]
    %v677 = vld [vmem:[%s1 + $0xa0c] sm:$0xf]
    %v678 = vld [vmem:[%s1 + $0xa10] sm:$0xf]
    %v679 = vld [vmem:[%s1 + $0xa14] sm:$0xf]
    %v680 = vld [vmem:[%s1 + $0xa18] sm:$0xf]
    %v681 = vld [vmem:[%s1 + $0xa1c] sm:$0xf]
    %v682 = vld [vmem:[%s1 + $0xa20] sm:$0xf]
    %v683 = vld [vmem:[%s1 + $0xa24] sm:$0xf]
    %v684 = vld [vmem:[%s1 + $0xa28] sm:$0xf]
    %v685 = vld [vmem:[%s1 + $0xa2c] sm:$0xf]
    %v686 = vld [vmem:[%s1 + $0xa30] sm:$0xf]
    %v687 = vld [vmem:[%s1 + $0xa34] sm:$0xf]
    %v688 = vld [vmem:[%s1 + $0xa38] sm:$0xf]
    %v689 = vld [vmem:[%s1 + $0xa3c] sm:$0xf]
    %v690 = vld [vmem:[%s1 + $0xa40] sm:$0xf]
    %v691 = vld [vmem:[%s1 + $0xa44] sm:$0xf]
    %v692 = vld [vmem:[%s1 + $0xa48] sm:$0xf]
    %v693 = vld [vmem:[%s1 + $0xa4c] sm:$0xf]
    %v694 = vld [vmem:[%s1 + $0xa50] sm:$0xf]
    %v695 = vld [vmem:[%s1 + $0xa54] sm:$0xf]
    %v696 = vld [vmem:[%s1 + $0xa58] sm:$0xf]
    %v697 = vld [vmem:[%s1 + $0xa5c] sm:$0xf]
    %v698 = vld [vmem:[%s1 + $0xa60] sm:$0xf]
    %v699 = vld [vmem:[%s1 + $0xa64] sm:$0xf]
    %v700 = vld [vmem:[%s1 + $0xa68] sm:$0xf]
    %v701 = vld [vmem:[%s1 + $0xa6c] sm:$0xf]
    %v702 = vld [vmem:[%s1 + $0xa70] sm:$0xf]
    %v703 = vld [vmem:[%s1 + $0xa74] sm:$0xf]
    %v704 = vld [vmem:[%s1 + $0xa78] sm:$0xf]
    %v705 = vld [vmem:[%s1 + $0xa7c] sm:$0xf]
    %v706 = vld [vmem:[%s1 + $0xa80] sm:$0xf]
    %v707 = vld [vmem:[%s1 + $0xa84] sm:$0xf]
    %v708 = vld [vmem:[%s1 + $0xa88] sm:$0xf]
    %v709 = vld [vmem:[%s1 + $0xa8c] sm:$0xf]
    %v710 = vld [vmem:[%s1 + $0xa90] sm:$0xf]
    %v711 = vld [vmem:[%s1 + $0xa94] sm:$0xf]
    %v712 = vld [vmem:[%s1 + $0xa98] sm:$0xf]
    %v713 = vld [vmem:[%s1 + $0xa9c] sm:$0xf]
    %v714 = vld [vmem:[%s1 + $0xaa0] sm:$0xf]
    %v715 = vld [vmem:[%s1 + $0xaa4] sm:$0xf]
    %v716 = vld [vmem:[%s1 + $0xaa8] sm:$0xf]
    %v717 = vld [vmem:[%s1 + $0xaac] sm:$0xf]
    %v718 = vld [vmem:[%s1 + $0xab0] sm:$0xf]
    %v719 = vld [vmem:[%s1 + $0xab4] sm:$0xf]
    %v720 = vld [vmem:[%s1 + $0xab8] sm:$0xf]
    %v721 = vld [vmem:[%s1 + $0xabc] sm:$0xf]
    %v722 = vld [vmem:[%s1 + $0xac0] sm:$0xf]
    %v723 = vld [vmem:[%s1 + $0xac4] sm:$0xf]
    %v724 = vld [vmem:[%s1 + $0xac8] sm:$0xf]
    %v725 = vld [vmem:[%s1 + $0xacc] sm:$0xf]
    %v726 = vld [vmem:[%s1 + $0xad0] sm:$0xf]
    %v727 = vld [vmem:[%s1 + $0xad4] sm:$0xf]
    %v728 = vld [vmem:[%s1 + $0xad8] sm:$0xf]
    %v729 = vld [vmem:[%s1 + $0xadc] sm:$0xf]
    %v730 = vld [vmem:[%s1 + $0xae0] sm:$0xf]
    %v731 = vld [vmem:[%s1 + $0xae4] sm:$0xf]
    %v732 = vld [vmem:[%s1 + $0xae8] sm:$0xf]
    %v733 = vld [vmem:[%s1 + $0xaec] sm:$0xf]
    %v734 = vld [vmem:[%s1 + $0xaf0] sm:$0xf]
    %v735 = vld [vmem:[%s1 + $0xaf4] sm:$0xf]
    %v736 = vld [vmem:[%s1 + $0xaf8] sm:$0xf]
    %v737 = vld [vmem:[%s1 + $0xafc] sm:$0xf]
    %v738 = vld [vmem:[%s1 + $0xb00] sm:$0xf]
    %v739 = vld [vmem:[%s1 + $0xb04] sm:$0xf]
    %v740 = vld [vmem:[%s1 + $0xb08] sm:$0xf]
    %v741 = vld [vmem:[%s1 + $0xb0c] sm:$0xf]
    %v742 = vld [vmem:[%s1 + $0xb10] sm:$0xf]
    %v743 = vld [vmem:[%s1 + $0xb14] sm:$0xf]
    %v744 = vld [vmem:[%s1 + $0xb18] sm:$0xf]
    %v745 = vld [vmem:[%s1 + $0xb1c] sm:$0xf]
    %v746 = vld [vmem:[%s1 + $0xb20] sm:$0xf]
    %v747 = vld [vmem:[%s1 + $0xb24] sm:$0xf]
    %v748 = vld [vmem:[%s1 + $0xb28] sm:$0xf]
    %v749 = vld [vmem:[%s1 + $0xb2c] sm:$0xf]
    %v750 = vld [vmem:[%s1 + $0xb30] sm:$0xf]
    %v751 = vld [vmem:[%s1 + $0xb34] sm:$0xf]
    %v752 = vld [vmem:[%s1 + $0xb38] sm:$0xf]
    %v753 = vld [vmem:[%s1 + $0xb3c] sm:$0xf]
    %v754 = vld [vmem:[%s1 + $0xb40] sm:$0xf]
    %v755 = vld [vmem:[%s1 + $0xb44] sm:$0xf]
    %v756 = vld [vmem:[%s1 + $0xb48] sm:$0xf]
    %v757 = vld [vmem:[%s1 + $0xb4c] sm:$0xf]
    %v758 = vld [vmem:[%s1 + $0xb50] sm:$0xf]
    %v759 = vld [vmem:[%s1 + $0xb54] sm:$0xf]
    %v760 = vld [vmem:[%s1 + $0xb58] sm:$0xf]
    %v761 = vld [vmem:[%s1 + $0xb5c] sm:$0xf]
    %v762 = vld [vmem:[%s1 + $0xb60] sm:$0xf]
    %v763 = vld [vmem:[%s1 + $0xb64] sm:$0xf]
    %v764 = vld [vmem:[%s1 + $0xb68] sm:$0xf]
    %v765 = vld [vmem:[%s1 + $0xb6c] sm:$0xf]
    %v766 = vld [vmem:[%s1 + $0xb70] sm:$0xf]
    %v767 = vld [vmem:[%s1 + $0xb74] sm:$0xf]
    %v768 = vld [vmem:[%s1 + $0xb78] sm:$0xf]
    %v769 = vld [vmem:[%s1 + $0xb7c] sm:$0xf]
    %v770 = vld [vmem:[%s1 + $0xb80] sm:$0xf]
    %v771 = vld [vmem:[%s1 + $0xb84] sm:$0xf]
    %v772 = vld [vmem:[%s1 + $0xb88] sm:$0xf]
    %v773 = vld [vmem:[%s1 + $0xb8c] sm:$0xf]
    %v774 = vld [vmem:[%s1 + $0xb90] sm:$0xf]
    %v775 = vld [vmem:[%s1 + $0xb94] sm:$0xf]
    %v776 = vld [vmem:[%s1 + $0xb98] sm:$0xf]
    %v777 = vld [vmem:[%s1 + $0xb9c] sm:$0xf]
    %v778 = vld [vmem:[%s1 + $0xba0] sm:$0xf]
    %v779 = vld [vmem:[%s1 + $0xba4] sm:$0xf]
    %v780 = vld [vmem:[%s1 + $0xba8] sm:$0xf]
    %v781 = vld [vmem:[%s1 + $0xbac] sm:$0xf]
    %v782 = vld [vmem:[%s1 + $0xbb0] sm:$0xf]
    %v783 = vld [vmem:[%s1 + $0xbb4] sm:$0xf]
    %v784 = vld [vmem:[%s1 + $0xbb8] sm:$0xf]
    %v785 = vld [vmem:[%s1 + $0xbbc] sm:$0xf]
    %v786 = vld [vmem:[%s1 + $0xbc0] sm:$0xf]
    %v787 = vld [vmem:[%s1 + $0xbc4] sm:$0xf]
    %v788 = vld [vmem:[%s1 + $0xbc8] sm:$0xf]
    %v789 = vld [vmem:[%s1 + $0xbcc] sm:$0xf]
    %v790 = vld [vmem:[%s1 + $0xbd0] sm:$0xf]
    %v791 = vld [vmem:[%s1 + $0xbd4] sm:$0xf]
    %v792 = vld [vmem:[%s1 + $0xbd8] sm:$0xf]
    %v793 = vld [vmem:[%s1 + $0xbdc] sm:$0xf]
    %v794 = vld [vmem:[%s1 + $0xbe0] sm:$0xf]
    %v795 = vld [vmem:[%s1 + $0xbe4] sm:$0xf]
    %v796 = vld [vmem:[%s1 + $0xbe8] sm:$0xf]
    %v797 = vld [vmem:[%s1 + $0xbec] sm:$0xf]
    %v798 = vld [vmem:[%s1 + $0xbf0] sm:$0xf]
    %v799 = vld [vmem:[%s1 + $0xbf4] sm:$0xf]
    %v800 = vld [vmem:[%s1 + $0xbf8] sm:$0xf]
    %v801 = vld [vmem:[%s1 + $0xbfc] sm:$0xf]
    %v802 = vld [vmem:[%s1 + $0xc00] sm:$0xf]
    %v803 = vld [vmem:[%s1 + $0xc04] sm:$0xf]
    %v804 = vld [vmem:[%s1 + $0xc08] sm:$0xf]
    %v805 = vld [vmem:[%s1 + $0xc0c] sm:$0xf]
    %v806 = vld [vmem:[%s1 + $0xc10] sm:$0xf]
    %v807 = vld [vmem:[%s1 + $0xc14] sm:$0xf]
    %v808 = vld [vmem:[%s1 + $0xc18] sm:$0xf]
    %v809 = vld [vmem:[%s1 + $0xc1c] sm:$0xf]
    %v810 = vld [vmem:[%s1 + $0xc20] sm:$0xf]
    %v811 = vld [vmem:[%s1 + $0xc24] sm:$0xf]
    %v812 = vld [vmem:[%s1 + $0xc28] sm:$0xf]
    %v813 = vld [vmem:[%s1 + $0xc2c] sm:$0xf]
    %v814 = vld [vmem:[%s1 + $0xc30] sm:$0xf]
    %v815 = vld [vmem:[%s1 + $0xc34] sm:$0xf]
    %v816 = vld [vmem:[%s1 + $0xc38] sm:$0xf]
    %v817 = vld [vmem:[%s1 + $0xc3c] sm:$0xf]
    %v818 = vld [vmem:[%s1 + $0xc40] sm:$0xf]
    %v819 = vld [vmem:[%s1 + $0xc44] sm:$0xf]
    %v820 = vld [vmem:[%s1 + $0xc48] sm:$0xf]
    %v821 = vld [vmem:[%s1 + $0xc4c] sm:$0xf]
    %v822 = vld [vmem:[%s1 + $0xc50] sm:$0xf]
    %v823 = vld [vmem:[%s1 + $0xc54] sm:$0xf]
    %v824 = vld [vmem:[%s1 + $0xc58] sm:$0xf]
    %v825 = vld [vmem:[%s1 + $0xc5c] sm:$0xf]
    %v826 = vld [vmem:[%s1 + $0xc60] sm:$0xf]
    %v827 = vld [vmem:[%s1 + $0xc64] sm:$0xf]
    %v828 = vld [vmem:[%s1 + $0xc68] sm:$0xf]
    %v829 = vld [vmem:[%s1 + $0xc6c] sm:$0xf]
    %v830 = vld [vmem:[%s1 + $0xc70] sm:$0xf]
    %v831 = vld [vmem:[%s1 + $0xc74] sm:$0xf]
    %v832 = vld [vmem:[%s1 + $0xc78] sm:$0xf]
    %v833 = vld [vmem:[%s1 + $0xc7c] sm:$0xf]
    %v834 = vld [vmem:[%s1 + $0xc80] sm:$0xf]
    %v835 = vld [vmem:[%s1 + $0xc84] sm:$0xf]
    %v836 = vld [vmem:[%s1 + $0xc88] sm:$0xf]
    %v837 = vld [vmem:[%s1 + $0xc8c] sm:$0xf]
    %v838 = vld [vmem:[%s1 + $0xc90] sm:$0xf]
    %v839 = vld [vmem:[%s1 + $0xc94] sm:$0xf]
    %v840 = vld [vmem:[%s1 + $0xc98] sm:$0xf]
    %v841 = vld [vmem:[%s1 + $0xc9c] sm:$0xf]
    %v842 = vld [vmem:[%s1 + $0xca0] sm:$0xf]
    %v843 = vld [vmem:[%s1 + $0xca4] sm:$0xf]
    %v844 = vld [vmem:[%s1 + $0xca8] sm:$0xf]
    %v845 = vld [vmem:[%s1 + $0xcac] sm:$0xf]
    %v846 = vld [vmem:[%s1 + $0xcb0] sm:$0xf]
    %v847 = vld [vmem:[%s1 + $0xcb4] sm:$0xf]
    %v848 = vld [vmem:[%s1 + $0xcb8] sm:$0xf]
    %v849 = vld [vmem:[%s1 + $0xcbc] sm:$0xf]
    %v850 = vld [vmem:[%s1 + $0xcc0] sm:$0xf]
    %v851 = vld [vmem:[%s1 + $0xcc4] sm:$0xf]
    %v852 = vld [vmem:[%s1 + $0xcc8] sm:$0xf]
    %v853 = vld [vmem:[%s1 + $0xccc] sm:$0xf]
    %v854 = vld [vmem:[%s1 + $0xcd0] sm:$0xf]
    %v855 = vld [vmem:[%s1 + $0xcd4] sm:$0xf]
    %v856 = vld [vmem:[%s1 + $0xcd8] sm:$0xf]
    %v857 = vld [vmem:[%s1 + $0xcdc] sm:$0xf]
    %v858 = vld [vmem:[%s1 + $0xce0] sm:$0xf]
    %v859 = vld [vmem:[%s1 + $0xce4] sm:$0xf]
    %v860 = vld [vmem:[%s1 + $0xce8] sm:$0xf]
    %v861 = vld [vmem:[%s1 + $0xcec] sm:$0xf]
    %v862 = vld [vmem:[%s1 + $0xcf0] sm:$0xf]
    %v863 = vld [vmem:[%s1 + $0xcf4] sm:$0xf]
    %v864 = vld [vmem:[%s1 + $0xcf8] sm:$0xf]
    %v865 = vld [vmem:[%s1 + $0xcfc] sm:$0xf]
    %v866 = vld [vmem:[%s1 + $0xd00] sm:$0xf]
    %v867 = vld [vmem:[%s1 + $0xd04] sm:$0xf]
    %v868 = vld [vmem:[%s1 + $0xd08] sm:$0xf]
    %v869 = vld [vmem:[%s1 + $0xd0c] sm:$0xf]
    %v870 = vld [vmem:[%s1 + $0xd10] sm:$0xf]
    %v871 = vld [vmem:[%s1 + $0xd14] sm:$0xf]
    %v872 = vld [vmem:[%s1 + $0xd18] sm:$0xf]
    %v873 = vld [vmem:[%s1 + $0xd1c] sm:$0xf]
    %v874 = vld [vmem:[%s1 + $0xd20] sm:$0xf]
    %v875 = vld [vmem:[%s1 + $0xd24] sm:$0xf]
    %v876 = vld [vmem:[%s1 + $0xd28] sm:$0xf]
    %v877 = vld [vmem:[%s1 + $0xd2c] sm:$0xf]
    %v878 = vld [vmem:[%s1 + $0xd30] sm:$0xf]
    %v879 = vld [vmem:[%s1 + $0xd34] sm:$0xf]
    %v880 = vld [vmem:[%s1 + $0xd38] sm:$0xf]
    %v881 = vld [vmem:[%s1 + $0xd3c] sm:$0xf]
    %v882 = vld [vmem:[%s1 + $0xd40] sm:$0xf]
    %v883 = vld [vmem:[%s1 + $0xd44] sm:$0xf]
    %v884 = vld [vmem:[%s1 + $0xd48] sm:$0xf]
    %v885 = vld [vmem:[%s1 + $0xd4c] sm:$0xf]
    %v886 = vld [vmem:[%s1 + $0xd50] sm:$0xf]
    %v887 = vld [vmem:[%s1 + $0xd54] sm:$0xf]
    %v888 = vld [vmem:[%s1 + $0xd58] sm:$0xf]
    %v889 = vld [vmem:[%s1 + $0xd5c] sm:$0xf]
    %v890 = vld [vmem:[%s1 + $0xd60] sm:$0xf]
    %v891 = vld [vmem:[%s1 + $0xd64] sm:$0xf]
    %v892 = vld [vmem:[%s1 + $0xd68] sm:$0xf]
    %v893 = vld [vmem:[%s1 + $0xd6c] sm:$0xf]
    %v894 = vld [vmem:[%s1 + $0xd70] sm:$0xf]
    %v895 = vld [vmem:[%s1 + $0xd74] sm:$0xf]
    %v896 = vld [vmem:[%s1 + $0xd78] sm:$0xf]
    %v897 = vld [vmem:[%s1 + $0xd7c] sm:$0xf]
    %v898 = vld [vmem:[%s1 + $0xd80] sm:$0xf]
    %v899 = vld [vmem:[%s1 + $0xd84] sm:$0xf]
    %v900 = vld [vmem:[%s1 + $0xd88] sm:$0xf]
    %v901 = vld [vmem:[%s1 + $0xd8c] sm:$0xf]
    %v902 = vld [vmem:[%s1 + $0xd90] sm:$0xf]
    %v903 = vld [vmem:[%s1 + $0xd94] sm:$0xf]
    %v904 = vld [vmem:[%s1 + $0xd98] sm:$0xf]
    %v905 = vld [vmem:[%s1 + $0xd9c] sm:$0xf]
    %v906 = vld [vmem:[%s1 + $0xda0] sm:$0xf]
    %v907 = vld [vmem:[%s1 + $0xda4] sm:$0xf]
    %v908 = vld [vmem:[%s1 + $0xda8] sm:$0xf]
    %v909 = vld [vmem:[%s1 + $0xdac] sm:$0xf]
    %v910 = vld [vmem:[%s1 + $0xdb0] sm:$0xf]
    %v911 = vld [vmem:[%s1 + $0xdb4] sm:$0xf]
    %v912 = vld [vmem:[%s1 + $0xdb8] sm:$0xf]
    %v913 = vld [vmem:[%s1 + $0xdbc] sm:$0xf]
    %v914 = vld [vmem:[%s1 + $0xdc0] sm:$0xf]
    %v915 = vld [vmem:[%s1 + $0xdc4] sm:$0xf]
    %v916 = vld [vmem:[%s1 + $0xdc8] sm:$0xf]
    %v917 = vld [vmem:[%s1 + $0xdcc] sm:$0xf]
    %v918 = vld [vmem:[%s1 + $0xdd0] sm:$0xf]
    %v919 = vld [vmem:[%s1 + $0xdd4] sm:$0xf]
    %v920 = vld [vmem:[%s1 + $0xdd8] sm:$0xf]
    %v921 = vld [vmem:[%s1 + $0xddc] sm:$0xf]
    %v922 = vld [vmem:[%s1 + $0xde0] sm:$0xf]
    %v923 = vld [vmem:[%s1 + $0xde4] sm:$0xf]
    %v924 = vld [vmem:[%s1 + $0xde8] sm:$0xf]
    %v925 = vld [vmem:[%s1 + $0xdec] sm:$0xf]
    %v926 = vld [vmem:[%s1 + $0xdf0] sm:$0xf]
    %v927 = vld [vmem:[%s1 + $0xdf4] sm:$0xf]
    %v928 = vld [vmem:[%s1 + $0xdf8] sm:$0xf]
    %v929 = vld [vmem:[%s1 + $0xdfc] sm:$0xf]
    %v930 = vld [vmem:[%s1 + $0xe00] sm:$0xf]
    %v931 = vld [vmem:[%s1 + $0xe04] sm:$0xf]
    %v932 = vld [vmem:[%s1 + $0xe08] sm:$0xf]
    %v933 = vld [vmem:[%s1 + $0xe0c] sm:$0xf]
    %v934 = vld [vmem:[%s1 + $0xe10] sm:$0xf]
    %v935 = vld [vmem:[%s1 + $0xe14] sm:$0xf]
    %v936 = vld [vmem:[%s1 + $0xe18] sm:$0xf]
    %v937 = vld [vmem:[%s1 + $0xe1c] sm:$0xf]
    %v938 = vld [vmem:[%s1 + $0xe20] sm:$0xf]
    %v939 = vld [vmem:[%s1 + $0xe24] sm:$0xf]
    %v940 = vld [vmem:[%s1 + $0xe28] sm:$0xf]
    %v941 = vld [vmem:[%s1 + $0xe2c] sm:$0xf]
    %v942 = vld [vmem:[%s1 + $0xe30] sm:$0xf]
    %v943 = vld [vmem:[%s1 + $0xe34] sm:$0xf]
    %v944 = vld [vmem:[%s1 + $0xe38] sm:$0xf]
    %v945 = vld [vmem:[%s1 + $0xe3c] sm:$0xf]
    %v946 = vld [vmem:[%s1 + $0xe40] sm:$0xf]
    %v947 = vld [vmem:[%s1 + $0xe44] sm:$0xf]
    %v948 = vld [vmem:[%s1 + $0xe48] sm:$0xf]
    %v949 = vld [vmem:[%s1 + $0xe4c] sm:$0xf]
    %v950 = vld [vmem:[%s1 + $0xe50] sm:$0xf]
    %v951 = vld [vmem:[%s1 + $0xe54] sm:$0xf]
    %v952 = vld [vmem:[%s1 + $0xe58] sm:$0xf]
    %v953 = vld [vmem:[%s1 + $0xe5c] sm:$0xf]
    %v954 = vld [vmem:[%s1 + $0xe60] sm:$0xf]
    %v955 = vld [vmem:[%s1 + $0xe64] sm:$0xf]
    %v956 = vld [vmem:[%s1 + $0xe68] sm:$0xf]
    %v957 = vld [vmem:[%s1 + $0xe6c] sm:$0xf]
    %v958 = vld [vmem:[%s1 + $0xe70] sm:$0xf]
    %v959 = vld [vmem:[%s1 + $0xe74] sm:$0xf]
    %v960 = vld [vmem:[%s1 + $0xe78] sm:$0xf]
    %v961 = vld [vmem:[%s1 + $0xe7c] sm:$0xf]
    %v962 = vld [vmem:[%s1 + $0xe80] sm:$0xf]
    %v963 = vld [vmem:[%s1 + $0xe84] sm:$0xf]
    %v964 = vld [vmem:[%s1 + $0xe88] sm:$0xf]
    %v965 = vld [vmem:[%s1 + $0xe8c] sm:$0xf]
    %v966 = vld [vmem:[%s1 + $0xe90] sm:$0xf]
    %v967 = vld [vmem:[%s1 + $0xe94] sm:$0xf]
    %v968 = vld [vmem:[%s1 + $0xe98] sm:$0xf]
    %v969 = vld [vmem:[%s1 + $0xe9c] sm:$0xf]
    %v970 = vld [vmem:[%s1 + $0xea0] sm:$0xf]
    %v971 = vld [vmem:[%s1 + $0xea4] sm:$0xf]
    %v972 = vld [vmem:[%s1 + $0xea8] sm:$0xf]
    %v973 = vld [vmem:[%s1 + $0xeac] sm:$0xf]
    %v974 = vld [vmem:[%s1 + $0xeb0] sm:$0xf]
    %v975 = vld [vmem:[%s1 + $0xeb4] sm:$0xf]
    %v976 = vld [vmem:[%s1 + $0xeb8] sm:$0xf]
    %v977 = vld [vmem:[%s1 + $0xebc] sm:$0xf]
    %v978 = vld [vmem:[%s1 + $0xec0] sm:$0xf]
    %v979 = vld [vmem:[%s1 + $0xec4] sm:$0xf]
    %v980 = vld [vmem:[%s1 + $0xec8] sm:$0xf]
    %v981 = vld [vmem:[%s1 + $0xecc] sm:$0xf]
    %v982 = vld [vmem:[%s1 + $0xed0] sm:$0xf]
    %v983 = vld [vmem:[%s1 + $0xed4] sm:$0xf]
    %v984 = vld [vmem:[%s1 + $0xed8] sm:$0xf]
    %v985 = vld [vmem:[%s1 + $0xedc] sm:$0xf]
    %v986 = vld [vmem:[%s1 + $0xee0] sm:$0xf]
    %v987 = vld [vmem:[%s1 + $0xee4] sm:$0xf]
    %v988 = vld [vmem:[%s1 + $0xee8] sm:$0xf]
    %v989 = vld [vmem:[%s1 + $0xeec] sm:$0xf]
    %v990 = vld [vmem:[%s1 + $0xef0] sm:$0xf]
    %v991 = vld [vmem:[%s1 + $0xef4] sm:$0xf]
    %v992 = vld [vmem:[%s1 + $0xef8] sm:$0xf]
    %v993 = vld [vmem:[%s1 + $0xefc] sm:$0xf]
    %v994 = vld [vmem:[%s1 + $0xf00] sm:$0xf]
    %v995 = vld [vmem:[%s1 + $0xf04] sm:$0xf]
    %v996 = vld [vmem:[%s1 + $0xf08] sm:$0xf]
    %v997 = vld [vmem:[%s1 + $0xf0c] sm:$0xf]
    %v998 = vld [vmem:[%s1 + $0xf10] sm:$0xf]
    %v999 = vld [vmem:[%s1 + $0xf14] sm:$0xf]
    %v1000 = vld [vmem:[%s1 + $0xf18] sm:$0xf]
    %v1001 = vld [vmem:[%s1 + $0xf1c] sm:$0xf]
    %v1002 = vld [vmem:[%s1 + $0xf20] sm:$0xf]
    %v1003 = vld [vmem:[%s1 + $0xf24] sm:$0xf]
    %v1004 = vld [vmem:[%s1 + $0xf28] sm:$0xf]
    %v1005 = vld [vmem:[%s1 + $0xf2c] sm:$0xf]
    %v1006 = vld [vmem:[%s1 + $0xf30] sm:$0xf]
    %v1007 = vld [vmem:[%s1 + $0xf34] sm:$0xf]
    %v1008 = vld [vmem:[%s1 + $0xf38] sm:$0xf]
    %v1009 = vld [vmem:[%s1 + $0xf3c] sm:$0xf]
    %v1010 = vld [vmem:[%s1 + $0xf40] sm:$0xf]
    %v1011 = vld [vmem:[%s1 + $0xf44] sm:$0xf]
    %v1012 = vld [vmem:[%s1 + $0xf48] sm:$0xf]
    %v1013 = vld [vmem:[%s1 + $0xf4c] sm:$0xf]
    %v1014 = vld [vmem:[%s1 + $0xf50] sm:$0xf]
    %v1015 = vld [vmem:[%s1 + $0xf54] sm:$0xf]
    %v1016 = vld [vmem:[%s1 + $0xf58] sm:$0xf]
    %v1017 = vld [vmem:[%s1 + $0xf5c] sm:$0xf]
    %v1018 = vld [vmem:[%s1 + $0xf60] sm:$0xf]
    %v1019 = vld [vmem:[%s1 + $0xf64] sm:$0xf]
    %v1020 = vld [vmem:[%s1 + $0xf68] sm:$0xf]
    %v1021 = vld [vmem:[%s1 + $0xf6c] sm:$0xf]
    %v1022 = vld [vmem:[%s1 + $0xf70] sm:$0xf]
    %v1023 = vld [vmem:[%s1 + $0xf74] sm:$0xf]
    %v1024 = vld [vmem:[%s1 + $0xf78] sm:$0xf]
    %v1025 = vld [vmem:[%s1 + $0xf7c] sm:$0xf]
    %v1026 = vld [vmem:[%s1 + $0xf80] sm:$0xf]
    %v1027 = vld [vmem:[%s1 + $0xf84] sm:$0xf]
    %v1028 = vld [vmem:[%s1 + $0xf88] sm:$0xf]
    %v1029 = vld [vmem:[%s1 + $0xf8c] sm:$0xf]
    %v1030 = vld [vmem:[%s1 + $0xf90] sm:$0xf]
    %v1031 = vld [vmem:[%s1 + $0xf94] sm:$0xf]
    %v1032 = vld [vmem:[%s1 + $0xf98] sm:$0xf]
    %v1033 = vld [vmem:[%s1 + $0xf9c] sm:$0xf]
    %v1034 = vld [vmem:[%s1 + $0xfa0] sm:$0xf]
    %v1035 = vld [vmem:[%s1 + $0xfa4] sm:$0xf]
    %v1036 = vld [vmem:[%s1 + $0xfa8] sm:$0xf]
    %v1037 = vld [vmem:[%s1 + $0xfac] sm:$0xf]
    %v1038 = vld [vmem:[%s1 + $0xfb0] sm:$0xf]
    %v1039 = vld [vmem:[%s1 + $0xfb4] sm:$0xf]
    %v1040 = vld [vmem:[%s1 + $0xfb8] sm:$0xf]
    %v1041 = vld [vmem:[%s1 + $0xfbc] sm:$0xf]
    %v1042 = vld [vmem:[%s1 + $0xfc0] sm:$0xf]
    %v1043 = vld [vmem:[%s1 + $0xfc4] sm:$0xf]
    %v1044 = vld [vmem:[%s1 + $0xfc8] sm:$0xf]
    %v1045 = vld [vmem:[%s1 + $0xfcc] sm:$0xf]
    %v1046 = vld [vmem:[%s1 + $0xfd0] sm:$0xf]
    %v1047 = vld [vmem:[%s1 + $0xfd4] sm:$0xf]
    %v1048 = vld [vmem:[%s1 + $0xfd8] sm:$0xf]
    %v1049 = vld [vmem:[%s1 + $0xfdc] sm:$0xf]
    %v1050 = vld [vmem:[%s1 + $0xfe0] sm:$0xf]
    %v1051 = vld [vmem:[%s1 + $0xfe4] sm:$0xf]
    %v1052 = vld [vmem:[%s1 + $0xfe8] sm:$0xf]
    %v1053 = vld [vmem:[%s1 + $0xfec] sm:$0xf]
    %v1054 = vld [vmem:[%s1 + $0xff0] sm:$0xf]
    %v1055 = vld [vmem:[%s1 + $0xff4] sm:$0xf]
    %v1056 = vld [vmem:[%s1 + $0xff8] sm:$0xf]
    %v1057 = vld [vmem:[%s1 + $0xffc] sm:$0xf]
    %v1058 = vld [vmem:[%s1 + $0x1000] sm:$0xf]
    %v1059 = vld [vmem:[%s1 + $0x1004] sm:$0xf]
    %v1060 = vld [vmem:[%s1 + $0x1008] sm:$0xf]
    %v1061 = vld [vmem:[%s1 + $0x100c] sm:$0xf]
    %v1062 = vld [vmem:[%s1 + $0x1010] sm:$0xf]
    %v1063 = vld [vmem:[%s1 + $0x1014] sm:$0xf]
    %v1064 = vld [vmem:[%s1 + $0x1018] sm:$0xf]
    %v1065 = vld [vmem:[%s1 + $0x101c] sm:$0xf]
    %v1066 = vld [vmem:[%s1 + $0x1020] sm:$0xf]
    %v1067 = vld [vmem:[%s1 + $0x1024] sm:$0xf]
    %v1068 = vld [vmem:[%s1 + $0x1028] sm:$0xf]
    %v1069 = vld [vmem:[%s1 + $0x102c] sm:$0xf]
    %v1070 = vld [vmem:[%s1 + $0x1030] sm:$0xf]
    %v1071 = vld [vmem:[%s1 + $0x1034] sm:$0xf]
    %v1072 = vld [vmem:[%s1 + $0x1038] sm:$0xf]
    %v1073 = vld [vmem:[%s1 + $0x103c] sm:$0xf]
    %v1074 = vld [vmem:[%s1 + $0x1040] sm:$0xf]
    %v1075 = vld [vmem:[%s1 + $0x1044] sm:$0xf]
    %v1076 = vld [vmem:[%s1 + $0x1048] sm:$0xf]
    %v1077 = vld [vmem:[%s1 + $0x104c] sm:$0xf]
    %v1078 = vld [vmem:[%s1 + $0x1050] sm:$0xf]
    %v1079 = vld [vmem:[%s1 + $0x1054] sm:$0xf]
    %v1080 = vld [vmem:[%s1 + $0x1058] sm:$0xf]
    %v1081 = vld [vmem:[%s1 + $0x105c] sm:$0xf]
    %v1082 = vld [vmem:[%s1 + $0x1060] sm:$0xf]
    %v1083 = vld [vmem:[%s1 + $0x1064] sm:$0xf]
    %v1084 = vld [vmem:[%s1 + $0x1068] sm:$0xf]
    %v1085 = vld [vmem:[%s1 + $0x106c] sm:$0xf]
    %v1086 = vld [vmem:[%s1 + $0x1070] sm:$0xf]
    %v1087 = vld [vmem:[%s1 + $0x1074] sm:$0xf]
    %v1088 = vld [vmem:[%s1 + $0x1078] sm:$0xf]
    %v1089 = vld [vmem:[%s1 + $0x107c] sm:$0xf]
    %v1090 = vld [vmem:[%s1 + $0x1080] sm:$0xf]
    %v1091 = vld [vmem:[%s1 + $0x1084] sm:$0xf]
    %v1092 = vld [vmem:[%s1 + $0x1088] sm:$0xf]
    %v1093 = vld [vmem:[%s1 + $0x108c] sm:$0xf]
    %v1094 = vld [vmem:[%s1 + $0x1090] sm:$0xf]
    %v1095 = vld [vmem:[%s1 + $0x1094] sm:$0xf]
    %v1096 = vld [vmem:[%s1 + $0x1098] sm:$0xf]
    %v1097 = vld [vmem:[%s1 + $0x109c] sm:$0xf]
    %v1098 = vld [vmem:[%s1 + $0x10a0] sm:$0xf]
    %v1099 = vld [vmem:[%s1 + $0x10a4] sm:$0xf]
    %v1100 = vld [vmem:[%s1 + $0x10a8] sm:$0xf]
    %v1101 = vld [vmem:[%s1 + $0x10ac] sm:$0xf]
    %v1102 = vld [vmem:[%s1 + $0x10b0] sm:$0xf]
    %v1103 = vld [vmem:[%s1 + $0x10b4] sm:$0xf]
    %v1104 = vld [vmem:[%s1 + $0x10b8] sm:$0xf]
    %v1105 = vld [vmem:[%s1 + $0x10bc] sm:$0xf]
    %v1106 = vld [vmem:[%s1 + $0x10c0] sm:$0xf]
    %v1107 = vld [vmem:[%s1 + $0x10c4] sm:$0xf]
    %v1108 = vld [vmem:[%s1 + $0x10c8] sm:$0xf]
    %v1109 = vld [vmem:[%s1 + $0x10cc] sm:$0xf]
    %v1110 = vld [vmem:[%s1 + $0x10d0] sm:$0xf]
    %v1111 = vld [vmem:[%s1 + $0x10d4] sm:$0xf]
    %v1112 = vld [vmem:[%s1 + $0x10d8] sm:$0xf]
    %v1113 = vld [vmem:[%s1 + $0x10dc] sm:$0xf]
    %v1114 = vld [vmem:[%s1 + $0x10e0] sm:$0xf]
    %v1115 = vld [vmem:[%s1 + $0x10e4] sm:$0xf]
    %v1116 = vld [vmem:[%s1 + $0x10e8] sm:$0xf]
    %v1117 = vld [vmem:[%s1 + $0x10ec] sm:$0xf]
    %v1118 = vld [vmem:[%s1 + $0x10f0] sm:$0xf]
    %v1119 = vld [vmem:[%s1 + $0x10f4] sm:$0xf]
    %v1120 = vld [vmem:[%s1 + $0x10f8] sm:$0xf]
    %v1121 = vld [vmem:[%s1 + $0x10fc] sm:$0xf]
    %v1122 = vld [vmem:[%s1 + $0x1100] sm:$0xf]
    %v1123 = vld [vmem:[%s1 + $0x1104] sm:$0xf]
    %v1124 = vld [vmem:[%s1 + $0x1108] sm:$0xf]
    %v1125 = vld [vmem:[%s1 + $0x110c] sm:$0xf]
    %v1126 = vld [vmem:[%s1 + $0x1110] sm:$0xf]
    %v1127 = vld [vmem:[%s1 + $0x1114] sm:$0xf]
    %v1128 = vld [vmem:[%s1 + $0x1118] sm:$0xf]
    %v1129 = vld [vmem:[%s1 + $0x111c] sm:$0xf]
    %v1130 = vld [vmem:[%s1 + $0x1120] sm:$0xf]
    %v1131 = vld [vmem:[%s1 + $0x1124] sm:$0xf]
    %v1132 = vld [vmem:[%s1 + $0x1128] sm:$0xf]
    %v1133 = vld [vmem:[%s1 + $0x112c] sm:$0xf]
    %v1134 = vld [vmem:[%s1 + $0x1130] sm:$0xf]
    %v1135 = vld [vmem:[%s1 + $0x1134] sm:$0xf]
    %v1136 = vld [vmem:[%s1 + $0x1138] sm:$0xf]
    %v1137 = vld [vmem:[%s1 + $0x113c] sm:$0xf]
    %v1138 = vld [vmem:[%s1 + $0x1140] sm:$0xf]
    %v1139 = vld [vmem:[%s1 + $0x1144] sm:$0xf]
    %v1140 = vld [vmem:[%s1 + $0x1148] sm:$0xf]
    %v1141 = vld [vmem:[%s1 + $0x114c] sm:$0xf]
    %v1142 = vld [vmem:[%s1 + $0x1150] sm:$0xf]
    %v1143 = vld [vmem:[%s1 + $0x1154] sm:$0xf]
    %v1144 = vld [vmem:[%s1 + $0x1158] sm:$0xf]
    %v1145 = vld [vmem:[%s1 + $0x115c] sm:$0xf]
    %v1146 = vld [vmem:[%s1 + $0x1160] sm:$0xf]
    %v1147 = vld [vmem:[%s1 + $0x1164] sm:$0xf]
    %v1148 = vld [vmem:[%s1 + $0x1168] sm:$0xf]
    %v1149 = vld [vmem:[%s1 + $0x116c] sm:$0xf]
    %v1150 = vld [vmem:[%s1 + $0x1170] sm:$0xf]
    %v1151 = vld [vmem:[%s1 + $0x1174] sm:$0xf]
    %v1152 = vld [vmem:[%s1 + $0x1178] sm:$0xf]
    %v1153 = vld [vmem:[%s1 + $0x117c] sm:$0xf]
    %v1154 = vld [vmem:[%s1 + $0x1180] sm:$0xf]
    %v1155 = vld [vmem:[%s1 + $0x1184] sm:$0xf]
    %v1156 = vld [vmem:[%s1 + $0x1188] sm:$0xf]
    %v1157 = vld [vmem:[%s1 + $0x118c] sm:$0xf]
    %v1158 = vld [vmem:[%s1 + $0x1190] sm:$0xf]
    %v1159 = vld [vmem:[%s1 + $0x1194] sm:$0xf]
    %v1160 = vld [vmem:[%s1 + $0x1198] sm:$0xf]
    %v1161 = vld [vmem:[%s1 + $0x119c] sm:$0xf]
    %v1162 = vld [vmem:[%s1 + $0x11a0] sm:$0xf]
    %v1163 = vld [vmem:[%s1 + $0x11a4] sm:$0xf]
    %v1164 = vld [vmem:[%s1 + $0x11a8] sm:$0xf]
    %v1165 = vld [vmem:[%s1 + $0x11ac] sm:$0xf]
    %v1166 = vld [vmem:[%s1 + $0x11b0] sm:$0xf]
    %v1167 = vld [vmem:[%s1 + $0x11b4] sm:$0xf]
    %v1168 = vld [vmem:[%s1 + $0x11b8] sm:$0xf]
    %v1169 = vld [vmem:[%s1 + $0x11bc] sm:$0xf]
    %v1170 = vld [vmem:[%s1 + $0x11c0] sm:$0xf]
    %v1171 = vld [vmem:[%s1 + $0x11c4] sm:$0xf]
    %v1172 = vld [vmem:[%s1 + $0x11c8] sm:$0xf]
    %v1173 = vld [vmem:[%s1 + $0x11cc] sm:$0xf]
    %v1174 = vld [vmem:[%s1 + $0x11d0] sm:$0xf]
    %v1175 = vld [vmem:[%s1 + $0x11d4] sm:$0xf]
    %v1176 = vld [vmem:[%s1 + $0x11d8] sm:$0xf]
    %v1177 = vld [vmem:[%s1 + $0x11dc] sm:$0xf]
    %v1178 = vld [vmem:[%s1 + $0x11e0] sm:$0xf]
    %v1179 = vld [vmem:[%s1 + $0x11e4] sm:$0xf]
    %v1180 = vld [vmem:[%s1 + $0x11e8] sm:$0xf]
    %v1181 = vld [vmem:[%s1 + $0x11ec] sm:$0xf]
    %v1182 = vld [vmem:[%s1 + $0x11f0] sm:$0xf]
    %v1183 = vld [vmem:[%s1 + $0x11f4] sm:$0xf]
    %v1184 = vld [vmem:[%s1 + $0x11f8] sm:$0xf]
    %v1185 = vld [vmem:[%s1 + $0x11fc] sm:$0xf]
    %v1186 = vld [vmem:[%s1 + $0x1200] sm:$0xf]
    %v1187 = vld [vmem:[%s1 + $0x1204] sm:$0xf]
    %v1188 = vld [vmem:[%s1 + $0x1208] sm:$0xf]
    %v1189 = vld [vmem:[%s1 + $0x120c] sm:$0xf]
    %v1190 = vld [vmem:[%s1 + $0x1210] sm:$0xf]
    %v1191 = vld [vmem:[%s1 + $0x1214] sm:$0xf]
    %v1192 = vld [vmem:[%s1 + $0x1218] sm:$0xf]
    %v1193 = vld [vmem:[%s1 + $0x121c] sm:$0xf]
    %v1194 = vld [vmem:[%s1 + $0x1220] sm:$0xf]
    %v1195 = vld [vmem:[%s1 + $0x1224] sm:$0xf]
    %v1196 = vld [vmem:[%s1 + $0x1228] sm:$0xf]
    %v1197 = vld [vmem:[%s1 + $0x122c] sm:$0xf]
    %v1198 = vld [vmem:[%s1 + $0x1230] sm:$0xf]
    %v1199 = vld [vmem:[%s1 + $0x1234] sm:$0xf]
    %v1200 = vld [vmem:[%s1 + $0x1238] sm:$0xf]
    %v1201 = vld [vmem:[%s1 + $0x123c] sm:$0xf]
    %v1202 = vld [vmem:[%s1 + $0x1240] sm:$0xf]
    %v1203 = vld [vmem:[%s1 + $0x1244] sm:$0xf]
    %v1204 = vld [vmem:[%s1 + $0x1248] sm:$0xf]
    %v1205 = vld [vmem:[%s1 + $0x124c] sm:$0xf]
    %v1206 = vld [vmem:[%s1 + $0x1250] sm:$0xf]
    %v1207 = vld [vmem:[%s1 + $0x1254] sm:$0xf]
    %v1208 = vld [vmem:[%s1 + $0x1258] sm:$0xf]
    %v1209 = vld [vmem:[%s1 + $0x125c] sm:$0xf]
    %v1210 = vld [vmem:[%s1 + $0x1260] sm:$0xf]
    %v1211 = vld [vmem:[%s1 + $0x1264] sm:$0xf]
    %v1212 = vld [vmem:[%s1 + $0x1268] sm:$0xf]
    %v1213 = vld [vmem:[%s1 + $0x126c] sm:$0xf]
    %v1214 = vld [vmem:[%s1 + $0x1270] sm:$0xf]
    %v1215 = vld [vmem:[%s1 + $0x1274] sm:$0xf]
    %v1216 = vld [vmem:[%s1 + $0x1278] sm:$0xf]
    %v1217 = vld [vmem:[%s1 + $0x127c] sm:$0xf]
    %v1218 = vld [vmem:[%s1 + $0x1280] sm:$0xf]
    %v1219 = vld [vmem:[%s1 + $0x1284] sm:$0xf]
    %v1220 = vld [vmem:[%s1 + $0x1288] sm:$0xf]
    %v1221 = vld [vmem:[%s1 + $0x128c] sm:$0xf]
    %v1222 = vld [vmem:[%s1 + $0x1290] sm:$0xf]
    %v1223 = vld [vmem:[%s1 + $0x1294] sm:$0xf]
    %v1224 = vld [vmem:[%s1 + $0x1298] sm:$0xf]
    %v1225 = vld [vmem:[%s1 + $0x129c] sm:$0xf]
    %v1226 = vld [vmem:[%s1 + $0x12a0] sm:$0xf]
    %v1227 = vld [vmem:[%s1 + $0x12a4] sm:$0xf]
    %v1228 = vld [vmem:[%s1 + $0x12a8] sm:$0xf]
    %v1229 = vld [vmem:[%s1 + $0x12ac] sm:$0xf]
    %v1230 = vld [vmem:[%s1 + $0x12b0] sm:$0xf]
    %v1231 = vld [vmem:[%s1 + $0x12b4] sm:$0xf]
    %v1232 = vld [vmem:[%s1 + $0x12b8] sm:$0xf]
    %v1233 = vld [vmem:[%s1 + $0x12bc] sm:$0xf]
    %v1234 = vld [vmem:[%s1 + $0x12c0] sm:$0xf]
    %v1235 = vld [vmem:[%s1 + $0x12c4] sm:$0xf]
    %v1236 = vld [vmem:[%s1 + $0x12c8] sm:$0xf]
    %v1237 = vld [vmem:[%s1 + $0x12cc] sm:$0xf]
    %v1238 = vld [vmem:[%s1 + $0x12d0] sm:$0xf]
    %v1239 = vld [vmem:[%s1 + $0x12d4] sm:$0xf]
    %v1240 = vld [vmem:[%s1 + $0x12d8] sm:$0xf]
    %v1241 = vld [vmem:[%s1 + $0x12dc] sm:$0xf]
    %v1242 = vld [vmem:[%s1 + $0x12e0] sm:$0xf]
    %v1243 = vld [vmem:[%s1 + $0x12e4] sm:$0xf]
    %v1244 = vld [vmem:[%s1 + $0x12e8] sm:$0xf]
    %v1245 = vld [vmem:[%s1 + $0x12ec] sm:$0xf]
    %v1246 = vld [vmem:[%s1 + $0x12f0] sm:$0xf]
    %v1247 = vld [vmem:[%s1 + $0x12f4] sm:$0xf]
    %v1248 = vld [vmem:[%s1 + $0x12f8] sm:$0xf]
    %v1249 = vld [vmem:[%s1 + $0x12fc] sm:$0xf]
    %v1250 = vld [vmem:[%s1 + $0x1300] sm:$0xf]
    %v1251 = vld [vmem:[%s1 + $0x1304] sm:$0xf]
    %v1252 = vld [vmem:[%s1 + $0x1308] sm:$0xf]
    %v1253 = vld [vmem:[%s1 + $0x130c] sm:$0xf]
    %v1254 = vld [vmem:[%s1 + $0x1310] sm:$0xf]
    %v1255 = vld [vmem:[%s1 + $0x1314] sm:$0xf]
    %v1256 = vld [vmem:[%s1 + $0x1318] sm:$0xf]
    %v1257 = vld [vmem:[%s1 + $0x131c] sm:$0xf]
    %v1258 = vld [vmem:[%s1 + $0x1320] sm:$0xf]
    %v1259 = vld [vmem:[%s1 + $0x1324] sm:$0xf]
    %v1260 = vld [vmem:[%s1 + $0x1328] sm:$0xf]
    %v1261 = vld [vmem:[%s1 + $0x132c] sm:$0xf]
    %v1262 = vld [vmem:[%s1 + $0x1330] sm:$0xf]
    %v1263 = vld [vmem:[%s1 + $0x1334] sm:$0xf]
    %v1264 = vld [vmem:[%s1 + $0x1338] sm:$0xf]
    %v1265 = vld [vmem:[%s1 + $0x133c] sm:$0xf]
    %v1266 = vld [vmem:[%s1 + $0x1340] sm:$0xf]
    %v1267 = vld [vmem:[%s1 + $0x1344] sm:$0xf]
    %v1268 = vld [vmem:[%s1 + $0x1348] sm:$0xf]
    %v1269 = vld [vmem:[%s1 + $0x134c] sm:$0xf]
    %v1270 = vld [vmem:[%s1 + $0x1350] sm:$0xf]
    %v1271 = vld [vmem:[%s1 + $0x1354] sm:$0xf]
    %v1272 = vld [vmem:[%s1 + $0x1358] sm:$0xf]
    %v1273 = vld [vmem:[%s1 + $0x135c] sm:$0xf]
    %v1274 = vld [vmem:[%s1 + $0x1360] sm:$0xf]
    %v1275 = vld [vmem:[%s1 + $0x1364] sm:$0xf]
    %v1276 = vld [vmem:[%s1 + $0x1368] sm:$0xf]
    %v1277 = vld [vmem:[%s1 + $0x136c] sm:$0xf]
    %v1278 = vld [vmem:[%s1 + $0x1370] sm:$0xf]
    %v1279 = vld [vmem:[%s1 + $0x1374] sm:$0xf]
    %v1280 = vld [vmem:[%s1 + $0x1378] sm:$0xf]
    %v1281 = vld [vmem:[%s1 + $0x137c] sm:$0xf]
    %v1282 = vld [vmem:[%s1 + $0x1380] sm:$0xf]
    %v1283 = vld [vmem:[%s1 + $0x1384] sm:$0xf]
    %v1284 = vld [vmem:[%s1 + $0x1388] sm:$0xf]
    %v1285 = vld [vmem:[%s1 + $0x138c] sm:$0xf]
    %v1286 = vld [vmem:[%s1 + $0x1390] sm:$0xf]
    %v1287 = vld [vmem:[%s1 + $0x1394] sm:$0xf]
    %v1288 = vld [vmem:[%s1 + $0x1398] sm:$0xf]
    %v1289 = vld [vmem:[%s1 + $0x139c] sm:$0xf]
    %v1290 = vld [vmem:[%s1 + $0x13a0] sm:$0xf]
    %v1291 = vld [vmem:[%s1 + $0x13a4] sm:$0xf]
    %v1292 = vld [vmem:[%s1 + $0x13a8] sm:$0xf]
    %v1293 = vld [vmem:[%s1 + $0x13ac] sm:$0xf]
    %v1294 = vld [vmem:[%s1 + $0x13b0] sm:$0xf]
    %v1295 = vld [vmem:[%s1 + $0x13b4] sm:$0xf]
    %v1296 = vld [vmem:[%s1 + $0x13b8] sm:$0xf]
    %v1297 = vld [vmem:[%s1 + $0x13bc] sm:$0xf]
    %v1298 = vld [vmem:[%s1 + $0x13c0] sm:$0xf]
    %v1299 = vld [vmem:[%s1 + $0x13c4] sm:$0xf]
    %v1300 = vld [vmem:[%s1 + $0x13c8] sm:$0xf]
    %v1301 = vld [vmem:[%s1 + $0x13cc] sm:$0xf]
    %v1302 = vld [vmem:[%s1 + $0x13d0] sm:$0xf]
    %v1303 = vld [vmem:[%s1 + $0x13d4] sm:$0xf]
    %v1304 = vld [vmem:[%s1 + $0x13d8] sm:$0xf]
    %v1305 = vld [vmem:[%s1 + $0x13dc] sm:$0xf]
    %v1306 = vld [vmem:[%s1 + $0x13e0] sm:$0xf]
    %v1307 = vld [vmem:[%s1 + $0x13e4] sm:$0xf]
    %v1308 = vld [vmem:[%s1 + $0x13e8] sm:$0xf]
    %v1309 = vld [vmem:[%s1 + $0x13ec] sm:$0xf]
    %v1310 = vld [vmem:[%s1 + $0x13f0] sm:$0xf]
    %v1311 = vld [vmem:[%s1 + $0x13f4] sm:$0xf]
    %v1312 = vld [vmem:[%s1 + $0x13f8] sm:$0xf]
    %v1313 = vld [vmem:[%s1 + $0x13fc] sm:$0xf]
    %v1314 = vld [vmem:[%s1 + $0x1400] sm:$0xf]
    %v1315 = vld [vmem:[%s1 + $0x1404] sm:$0xf]
    %v1316 = vld [vmem:[%s1 + $0x1408] sm:$0xf]
    %v1317 = vld [vmem:[%s1 + $0x140c] sm:$0xf]
    %v1318 = vld [vmem:[%s1 + $0x1410] sm:$0xf]
    %v1319 = vld [vmem:[%s1 + $0x1414] sm:$0xf]
    %v1320 = vld [vmem:[%s1 + $0x1418] sm:$0xf]
    %v1321 = vld [vmem:[%s1 + $0x141c] sm:$0xf]
    %v1322 = vld [vmem:[%s1 + $0x1420] sm:$0xf]
    %v1323 = vld [vmem:[%s1 + $0x1424] sm:$0xf]
    %v1324 = vld [vmem:[%s1 + $0x1428] sm:$0xf]
    %v1325 = vld [vmem:[%s1 + $0x142c] sm:$0xf]
    %v1326 = vld [vmem:[%s1 + $0x1430] sm:$0xf]
    %v1327 = vld [vmem:[%s1 + $0x1434] sm:$0xf]
    %v1328 = vld [vmem:[%s1 + $0x1438] sm:$0xf]
    %v1329 = vld [vmem:[%s1 + $0x143c] sm:$0xf]
    %v1330 = vld [vmem:[%s1 + $0x1440] sm:$0xf]
    %v1331 = vld [vmem:[%s1 + $0x1444] sm:$0xf]
    %v1332 = vld [vmem:[%s1 + $0x1448] sm:$0xf]
    %v1333 = vld [vmem:[%s1 + $0x144c] sm:$0xf]
    %v1334 = vld [vmem:[%s1 + $0x1450] sm:$0xf]
    %v1335 = vld [vmem:[%s1 + $0x1454] sm:$0xf]
    %v1336 = vld [vmem:[%s1 + $0x1458] sm:$0xf]
    %v1337 = vld [vmem:[%s1 + $0x145c] sm:$0xf]
    %v1338 = vld [vmem:[%s1 + $0x1460] sm:$0xf]
    %v1339 = vld [vmem:[%s1 + $0x1464] sm:$0xf]
    %v1340 = vld [vmem:[%s1 + $0x1468] sm:$0xf]
    %v1341 = vld [vmem:[%s1 + $0x146c] sm:$0xf]
    %v1342 = vld [vmem:[%s1 + $0x1470] sm:$0xf]
    %v1343 = vld [vmem:[%s1 + $0x1474] sm:$0xf]
    %v1344 = vld [vmem:[%s1 + $0x1478] sm:$0xf]
    %v1345 = vld [vmem:[%s1 + $0x147c] sm:$0xf]
    %v1346 = vld [vmem:[%s1 + $0x1480] sm:$0xf]
    %v1347 = vld [vmem:[%s1 + $0x1484] sm:$0xf]
    %v1348 = vld [vmem:[%s1 + $0x1488] sm:$0xf]
    %v1349 = vld [vmem:[%s1 + $0x148c] sm:$0xf]
    %v1350 = vld [vmem:[%s1 + $0x1490] sm:$0xf]
    %v1351 = vld [vmem:[%s1 + $0x1494] sm:$0xf]
    %v1352 = vld [vmem:[%s1 + $0x1498] sm:$0xf]
    %v1353 = vld [vmem:[%s1 + $0x149c] sm:$0xf]
    %v1354 = vld [vmem:[%s1 + $0x14a0] sm:$0xf]
    %v1355 = vld [vmem:[%s1 + $0x14a4] sm:$0xf]
    %v1356 = vld [vmem:[%s1 + $0x14a8] sm:$0xf]
    %v1357 = vld [vmem:[%s1 + $0x14ac] sm:$0xf]
    %v1358 = vld [vmem:[%s1 + $0x14b0] sm:$0xf]
    %v1359 = vld [vmem:[%s1 + $0x14b4] sm:$0xf]
    %v1360 = vld [vmem:[%s1 + $0x14b8] sm:$0xf]
    %v1361 = vld [vmem:[%s1 + $0x14bc] sm:$0xf]
    %v1362 = vld [vmem:[%s1 + $0x14c0] sm:$0xf]
    %v1363 = vld [vmem:[%s1 + $0x14c4] sm:$0xf]
    %v1364 = vld [vmem:[%s1 + $0x14c8] sm:$0xf]
    %v1365 = vld [vmem:[%s1 + $0x14cc] sm:$0xf]
    %v1366 = vld [vmem:[%s1 + $0x14d0] sm:$0xf]
    %v1367 = vld [vmem:[%s1 + $0x14d4] sm:$0xf]
    %v1368 = vld [vmem:[%s1 + $0x14d8] sm:$0xf]
    %v1369 = vld [vmem:[%s1 + $0x14dc] sm:$0xf]
    %v1370 = vld [vmem:[%s1 + $0x14e0] sm:$0xf]
    %v1371 = vld [vmem:[%s1 + $0x14e4] sm:$0xf]
    %v1372 = vld [vmem:[%s1 + $0x14e8] sm:$0xf]
    %v1373 = vld [vmem:[%s1 + $0x14ec] sm:$0xf]
    %v1374 = vld [vmem:[%s1 + $0x14f0] sm:$0xf]
    %v1375 = vld [vmem:[%s1 + $0x14f4] sm:$0xf]
    %v1376 = vld [vmem:[%s1 + $0x14f8] sm:$0xf]
    %v1377 = vld [vmem:[%s1 + $0x14fc] sm:$0xf]
    %v1378 = vld [vmem:[%s1 + $0x1500] sm:$0xf]
    %v1379 = vld [vmem:[%s1 + $0x1504] sm:$0xf]
    %v1380 = vld [vmem:[%s1 + $0x1508] sm:$0xf]
    %v1381 = vld [vmem:[%s1 + $0x150c] sm:$0xf]
    %v1382 = vld [vmem:[%s1 + $0x1510] sm:$0xf]
    %v1383 = vld [vmem:[%s1 + $0x1514] sm:$0xf]
    %v1384 = vld [vmem:[%s1 + $0x1518] sm:$0xf]
    %v1385 = vld [vmem:[%s1 + $0x151c] sm:$0xf]
    %v1386 = vld [vmem:[%s1 + $0x1520] sm:$0xf]
    %v1387 = vld [vmem:[%s1 + $0x1524] sm:$0xf]
    %v1388 = vld [vmem:[%s1 + $0x1528] sm:$0xf]
    %v1389 = vld [vmem:[%s1 + $0x152c] sm:$0xf]
    %v1390 = vld [vmem:[%s1 + $0x1530] sm:$0xf]
    %v1391 = vld [vmem:[%s1 + $0x1534] sm:$0xf]
    %v1392 = vld [vmem:[%s1 + $0x1538] sm:$0xf]
    %v1393 = vld [vmem:[%s1 + $0x153c] sm:$0xf]
    %v1394 = vld [vmem:[%s1 + $0x1540] sm:$0xf]
    %v1395 = vld [vmem:[%s1 + $0x1544] sm:$0xf]
    %v1396 = vld [vmem:[%s1 + $0x1548] sm:$0xf]
    %v1397 = vld [vmem:[%s1 + $0x154c] sm:$0xf]
    %v1398 = vld [vmem:[%s1 + $0x1550] sm:$0xf]
    %v1399 = vld [vmem:[%s1 + $0x1554] sm:$0xf]
    %v1400 = vld [vmem:[%s1 + $0x1558] sm:$0xf]
    %v1401 = vld [vmem:[%s1 + $0x155c] sm:$0xf]
    %v1402 = vld [vmem:[%s1 + $0x1560] sm:$0xf]
    %v1403 = vld [vmem:[%s1 + $0x1564] sm:$0xf]
    %v1404 = vld [vmem:[%s1 + $0x1568] sm:$0xf]
    %v1405 = vld [vmem:[%s1 + $0x156c] sm:$0xf]
    %v1406 = vld [vmem:[%s1 + $0x1570] sm:$0xf]
    %v1407 = vld [vmem:[%s1 + $0x1574] sm:$0xf]
    %v1408 = vld [vmem:[%s1 + $0x1578] sm:$0xf]
    %v1409 = vld [vmem:[%s1 + $0x157c] sm:$0xf]
    %v1410 = vld [vmem:[%s1 + $0x1580] sm:$0xf]
    %v1411 = vld [vmem:[%s1 + $0x1584] sm:$0xf]
    %v1412 = vld [vmem:[%s1 + $0x1588] sm:$0xf]
    %v1413 = vld [vmem:[%s1 + $0x158c] sm:$0xf]
    %v1414 = vld [vmem:[%s1 + $0x1590] sm:$0xf]
    %v1415 = vld [vmem:[%s1 + $0x1594] sm:$0xf]
    %v1416 = vld [vmem:[%s1 + $0x1598] sm:$0xf]
    %v1417 = vld [vmem:[%s1 + $0x159c] sm:$0xf]
    %v1418 = vld [vmem:[%s1 + $0x15a0] sm:$0xf]
    %v1419 = vld [vmem:[%s1 + $0x15a4] sm:$0xf]
    %v1420 = vld [vmem:[%s1 + $0x15a8] sm:$0xf]
    %v1421 = vld [vmem:[%s1 + $0x15ac] sm:$0xf]
    %v1422 = vld [vmem:[%s1 + $0x15b0] sm:$0xf]
    %v1423 = vld [vmem:[%s1 + $0x15b4] sm:$0xf]
    %v1424 = vld [vmem:[%s1 + $0x15b8] sm:$0xf]
    %v1425 = vld [vmem:[%s1 + $0x15bc] sm:$0xf]
    %v1426 = vld [vmem:[%s1 + $0x15c0] sm:$0xf]
    %v1427 = vld [vmem:[%s1 + $0x15c4] sm:$0xf]
    %v1428 = vld [vmem:[%s1 + $0x15c8] sm:$0xf]
    %v1429 = vld [vmem:[%s1 + $0x15cc] sm:$0xf]
    %v1430 = vld [vmem:[%s1 + $0x15d0] sm:$0xf]
    %v1431 = vld [vmem:[%s1 + $0x15d4] sm:$0xf]
    %v1432 = vld [vmem:[%s1 + $0x15d8] sm:$0xf]
    %v1433 = vld [vmem:[%s1 + $0x15dc] sm:$0xf]
    %v1434 = vld [vmem:[%s1 + $0x15e0] sm:$0xf]
    %v1435 = vld [vmem:[%s1 + $0x15e4] sm:$0xf]
    %v1436 = vld [vmem:[%s1 + $0x15e8] sm:$0xf]
    %v1437 = vld [vmem:[%s1 + $0x15ec] sm:$0xf]
    %v1438 = vld [vmem:[%s1 + $0x15f0] sm:$0xf]
    %v1439 = vld [vmem:[%s1 + $0x15f4] sm:$0xf]
    %v1440 = vld [vmem:[%s1 + $0x15f8] sm:$0xf]
    %v1441 = vld [vmem:[%s1 + $0x15fc] sm:$0xf]
    %v1442 = vld [vmem:[%s1 + $0x1600] sm:$0xf]
    %v1443 = vld [vmem:[%s1 + $0x1604] sm:$0xf]
    %v1444 = vld [vmem:[%s1 + $0x1608] sm:$0xf]
    %v1445 = vld [vmem:[%s1 + $0x160c] sm:$0xf]
    %v1446 = vld [vmem:[%s1 + $0x1610] sm:$0xf]
    %v1447 = vld [vmem:[%s1 + $0x1614] sm:$0xf]
    %v1448 = vld [vmem:[%s1 + $0x1618] sm:$0xf]
    %v1449 = vld [vmem:[%s1 + $0x161c] sm:$0xf]
    %v1450 = vld [vmem:[%s1 + $0x1620] sm:$0xf]
    %v1451 = vld [vmem:[%s1 + $0x1624] sm:$0xf]
    %v1452 = vld [vmem:[%s1 + $0x1628] sm:$0xf]
    %v1453 = vld [vmem:[%s1 + $0x162c] sm:$0xf]
    %v1454 = vld [vmem:[%s1 + $0x1630] sm:$0xf]
    %v1455 = vld [vmem:[%s1 + $0x1634] sm:$0xf]
    %v1456 = vld [vmem:[%s1 + $0x1638] sm:$0xf]
    %v1457 = vld [vmem:[%s1 + $0x163c] sm:$0xf]
    %v1458 = vld [vmem:[%s1 + $0x1640] sm:$0xf]
    %v1459 = vld [vmem:[%s1 + $0x1644] sm:$0xf]
    %v1460 = vld [vmem:[%s1 + $0x1648] sm:$0xf]
    %v1461 = vld [vmem:[%s1 + $0x164c] sm:$0xf]
    %v1462 = vld [vmem:[%s1 + $0x1650] sm:$0xf]
    %v1463 = vld [vmem:[%s1 + $0x1654] sm:$0xf]
    %v1464 = vld [vmem:[%s1 + $0x1658] sm:$0xf]
    %v1465 = vld [vmem:[%s1 + $0x165c] sm:$0xf]
    %v1466 = vld [vmem:[%s1 + $0x1660] sm:$0xf]
    %v1467 = vld [vmem:[%s1 + $0x1664] sm:$0xf]
    %v1468 = vld [vmem:[%s1 + $0x1668] sm:$0xf]
    %v1469 = vld [vmem:[%s1 + $0x166c] sm:$0xf]
    %v1470 = vld [vmem:[%s1 + $0x1670] sm:$0xf]
    %v1471 = vld [vmem:[%s1 + $0x1674] sm:$0xf]
    %v1472 = vld [vmem:[%s1 + $0x1678] sm:$0xf]
    %v1473 = vld [vmem:[%s1 + $0x167c] sm:$0xf]
    %v1474 = vld [vmem:[%s1 + $0x1680] sm:$0xf]
    %v1475 = vld [vmem:[%s1 + $0x1684] sm:$0xf]
    %v1476 = vld [vmem:[%s1 + $0x1688] sm:$0xf]
    %v1477 = vld [vmem:[%s1 + $0x168c] sm:$0xf]
    %v1478 = vld [vmem:[%s1 + $0x1690] sm:$0xf]
    %v1479 = vld [vmem:[%s1 + $0x1694] sm:$0xf]
    %v1480 = vld [vmem:[%s1 + $0x1698] sm:$0xf]
    %v1481 = vld [vmem:[%s1 + $0x169c] sm:$0xf]
    %v1482 = vld [vmem:[%s1 + $0x16a0] sm:$0xf]
    %v1483 = vld [vmem:[%s1 + $0x16a4] sm:$0xf]
    %v1484 = vld [vmem:[%s1 + $0x16a8] sm:$0xf]
    %v1485 = vld [vmem:[%s1 + $0x16ac] sm:$0xf]
    %v1486 = vld [vmem:[%s1 + $0x16b0] sm:$0xf]
    %v1487 = vld [vmem:[%s1 + $0x16b4] sm:$0xf]
    %v1488 = vld [vmem:[%s1 + $0x16b8] sm:$0xf]
    %v1489 = vld [vmem:[%s1 + $0x16bc] sm:$0xf]
    %v1490 = vld [vmem:[%s1 + $0x16c0] sm:$0xf]
    %v1491 = vld [vmem:[%s1 + $0x16c4] sm:$0xf]
    %v1492 = vld [vmem:[%s1 + $0x16c8] sm:$0xf]
    %v1493 = vld [vmem:[%s1 + $0x16cc] sm:$0xf]
    %v1494 = vld [vmem:[%s1 + $0x16d0] sm:$0xf]
    %v1495 = vld [vmem:[%s1 + $0x16d4] sm:$0xf]
    %v1496 = vld [vmem:[%s1 + $0x16d8] sm:$0xf]
    %v1497 = vld [vmem:[%s1 + $0x16dc] sm:$0xf]
    %v1498 = vld [vmem:[%s1 + $0x16e0] sm:$0xf]
    %v1499 = vld [vmem:[%s1 + $0x16e4] sm:$0xf]
    %v1500 = vld [vmem:[%s1 + $0x16e8] sm:$0xf]
    %v1501 = vld [vmem:[%s1 + $0x16ec] sm:$0xf]
    %v1502 = vld [vmem:[%s1 + $0x16f0] sm:$0xf]
    %v1503 = vld [vmem:[%s1 + $0x16f4] sm:$0xf]
    %v1504 = vld [vmem:[%s1 + $0x16f8] sm:$0xf]
    %v1505 = vld [vmem:[%s1 + $0x16fc] sm:$0xf]
    %v1506 = vld [vmem:[%s1 + $0x1700] sm:$0xf]
    %v1507 = vld [vmem:[%s1 + $0x1704] sm:$0xf]
    %v1508 = vld [vmem:[%s1 + $0x1708] sm:$0xf]
    %v1509 = vld [vmem:[%s1 + $0x170c] sm:$0xf]
    %v1510 = vld [vmem:[%s1 + $0x1710] sm:$0xf]
    %v1511 = vld [vmem:[%s1 + $0x1714] sm:$0xf]
    %v1512 = vld [vmem:[%s1 + $0x1718] sm:$0xf]
    %v1513 = vld [vmem:[%s1 + $0x171c] sm:$0xf]
    %v1514 = vld [vmem:[%s1 + $0x1720] sm:$0xf]
    %v1515 = vld [vmem:[%s1 + $0x1724] sm:$0xf]
    %v1516 = vld [vmem:[%s1 + $0x1728] sm:$0xf]
    %v1517 = vld [vmem:[%s1 + $0x172c] sm:$0xf]
    %v1518 = vld [vmem:[%s1 + $0x1730] sm:$0xf]
    %v1519 = vld [vmem:[%s1 + $0x1734] sm:$0xf]
    %v1520 = vld [vmem:[%s1 + $0x1738] sm:$0xf]
    %v1521 = vld [vmem:[%s1 + $0x173c] sm:$0xf]
    %v1522 = vld [vmem:[%s1 + $0x1740] sm:$0xf]
    %v1523 = vld [vmem:[%s1 + $0x1744] sm:$0xf]
    %v1524 = vld [vmem:[%s1 + $0x1748] sm:$0xf]
    %v1525 = vld [vmem:[%s1 + $0x174c] sm:$0xf]
    %v1526 = vld [vmem:[%s1 + $0x1750] sm:$0xf]
    %v1527 = vld [vmem:[%s1 + $0x1754] sm:$0xf]
    %v1528 = vld [vmem:[%s1 + $0x1758] sm:$0xf]
    %v1529 = vld [vmem:[%s1 + $0x175c] sm:$0xf]
    %v1530 = vld [vmem:[%s1 + $0x1760] sm:$0xf]
    %v1531 = vld [vmem:[%s1 + $0x1764] sm:$0xf]
    %v1532 = vld [vmem:[%s1 + $0x1768] sm:$0xf]
    %v1533 = vld [vmem:[%s1 + $0x176c] sm:$0xf]
    %v1534 = vld [vmem:[%s1 + $0x1770] sm:$0xf]
    %v1535 = vld [vmem:[%s1 + $0x1774] sm:$0xf]
    %v1536 = vld [vmem:[%s1 + $0x1778] sm:$0xf]
    %v1537 = vld [vmem:[%s1 + $0x177c] sm:$0xf]
    %v1538 = vld [vmem:[%s1 + $0x1780] sm:$0xf]
    %v1539 = vld [vmem:[%s1 + $0x1784] sm:$0xf]
    %v1540 = vld [vmem:[%s1 + $0x1788] sm:$0xf]
    %v1541 = vld [vmem:[%s1 + $0x178c] sm:$0xf]
    %v1542 = vld [vmem:[%s1 + $0x1790] sm:$0xf]
    %v1543 = vld [vmem:[%s1 + $0x1794] sm:$0xf]
    %v1544 = vld [vmem:[%s1 + $0x1798] sm:$0xf]
    %v1545 = vld [vmem:[%s1 + $0x179c] sm:$0xf]
    %v1546 = vld [vmem:[%s1 + $0x17a0] sm:$0xf]
    %v1547 = vld [vmem:[%s1 + $0x17a4] sm:$0xf]
    %v1548 = vld [vmem:[%s1 + $0x17a8] sm:$0xf]
    %v1549 = vld [vmem:[%s1 + $0x17ac] sm:$0xf]
    %v1550 = vld [vmem:[%s1 + $0x17b0] sm:$0xf]
    %v1551 = vld [vmem:[%s1 + $0x17b4] sm:$0xf]
    %v1552 = vld [vmem:[%s1 + $0x17b8] sm:$0xf]
    %v1553 = vld [vmem:[%s1 + $0x17bc] sm:$0xf]
    %v1554 = vld [vmem:[%s1 + $0x17c0] sm:$0xf]
    %v1555 = vld [vmem:[%s1 + $0x17c4] sm:$0xf]
    %v1556 = vld [vmem:[%s1 + $0x17c8] sm:$0xf]
    %v1557 = vld [vmem:[%s1 + $0x17cc] sm:$0xf]
    %v1558 = vld [vmem:[%s1 + $0x17d0] sm:$0xf]
    %v1559 = vld [vmem:[%s1 + $0x17d4] sm:$0xf]
    %v1560 = vld [vmem:[%s1 + $0x17d8] sm:$0xf]
    %v1561 = vld [vmem:[%s1 + $0x17dc] sm:$0xf]
    %v1562 = vld [vmem:[%s1 + $0x17e0] sm:$0xf]
    %v1563 = vld [vmem:[%s1 + $0x17e4] sm:$0xf]
    %v1564 = vld [vmem:[%s1 + $0x17e8] sm:$0xf]
    %v1565 = vld [vmem:[%s1 + $0x17ec] sm:$0xf]
    %v1566 = vld [vmem:[%s1 + $0x17f0] sm:$0xf]
    %v1567 = vld [vmem:[%s1 + $0x17f4] sm:$0xf]
    %v1568 = vld [vmem:[%s1 + $0x17f8] sm:$0xf]
    %v1569 = vld [vmem:[%s1 + $0x17fc] sm:$0xf]
    %v1570 = vld [vmem:[%s2] sm:$0x1]
    %v1572 = vlaneseq
    %v1573 = vshrl.u32 %v1572, 7
    %v1574 = vsub.s32 0, %v1573
    %v1575 = vrot.slane %v1570, %v1574
    %v1589 = vcombine.high %v22, %v22
    %v1591 = vunpack.c.l.s4 1966171168
    %v1592 = vunpack.c.0.s8 %v1591
    %v1593 = vlaneseq
    %v1594 = vshrl.u32 %v1593, 7
    %v1595 = vsub.s32 %v1592, %v1594
    %v1596 = vrot.slane %v22, %v1595
    %v1598 = vunpack.c.l.s4 1966171168
    %v1599 = vunpack.c.0.s8 %v1598
    %v1600 = vlaneseq
    %v1601 = vshrl.u32 %v1600, 7
    %v1602 = vsub.s32 %v1599, %v1601
    %v1603 = vrot.slane %v1589, %v1602
    %v1604 = vcombine.high %v1596, %v1596
    %v1605 = vcombine.high %v1603, %v1603
    %v1607 = vunpack.c.l.s4 1966171168
    %v1608 = vunpack.c.0.s8 %v1607
    %v1609 = vlaneseq
    %v1610 = vshrl.u32 %v1609, 7
    %v1611 = vsub.s32 %v1608, %v1610
    %v1612 = vrot.slane %v1596, %v1611
    %v1614 = vunpack.c.l.s4 1966171168
    %v1615 = vunpack.c.0.s8 %v1614
    %v1616 = vlaneseq
    %v1617 = vshrl.u32 %v1616, 7
    %v1618 = vsub.s32 %v1615, %v1617
    %v1619 = vrot.slane %v1603, %v1618
    %v1621 = vunpack.c.l.s4 1966171168
    %v1622 = vunpack.c.0.s8 %v1621
    %v1623 = vlaneseq
    %v1624 = vshrl.u32 %v1623, 7
    %v1625 = vsub.s32 %v1622, %v1624
    %v1626 = vrot.slane %v1604, %v1625
    %v1628 = vunpack.c.l.s4 1966171168
    %v1629 = vunpack.c.0.s8 %v1628
    %v1630 = vlaneseq
    %v1631 = vshrl.u32 %v1630, 7
    %v1632 = vsub.s32 %v1629, %v1631
    %v1633 = vrot.slane %v1605, %v1632
    %v1634 = vcombine.high %v1612, %v1612
    %v1635 = vcombine.high %v1619, %v1619
    %v1636 = vcombine.high %v1626, %v1626
    %v1637 = vcombine.high %v1633, %v1633
    %v1638 = vcombine.high %v23, %v23
    %v1640 = vunpack.c.l.s4 1966171168
    %v1641 = vunpack.c.0.s8 %v1640
    %v1642 = vlaneseq
    %v1643 = vshrl.u32 %v1642, 7
    %v1644 = vsub.s32 %v1641, %v1643
    %v1645 = vrot.slane %v23, %v1644
    %v1647 = vunpack.c.l.s4 1966171168
    %v1648 = vunpack.c.0.s8 %v1647
    %v1649 = vlaneseq
    %v1650 = vshrl.u32 %v1649, 7
    %v1651 = vsub.s32 %v1648, %v1650
    %v1652 = vrot.slane %v1638, %v1651
    %v1653 = vcombine.high %v1645, %v1645
    %v1654 = vcombine.high %v1652, %v1652
    %v1656 = vunpack.c.l.s4 1966171168
    %v1657 = vunpack.c.0.s8 %v1656
    %v1658 = vlaneseq
    %v1659 = vshrl.u32 %v1658, 7
    %v1660 = vsub.s32 %v1657, %v1659
    %v1661 = vrot.slane %v1645, %v1660
    %v1663 = vunpack.c.l.s4 1966171168
    %v1664 = vunpack.c.0.s8 %v1663
    %v1665 = vlaneseq
    %v1666 = vshrl.u32 %v1665, 7
    %v1667 = vsub.s32 %v1664, %v1666
    %v1668 = vrot.slane %v1652, %v1667
    %v1670 = vunpack.c.l.s4 1966171168
    %v1671 = vunpack.c.0.s8 %v1670
    %v1672 = vlaneseq
    %v1673 = vshrl.u32 %v1672, 7
    %v1674 = vsub.s32 %v1671, %v1673
    %v1675 = vrot.slane %v1653, %v1674
    %v1677 = vunpack.c.l.s4 1966171168
    %v1678 = vunpack.c.0.s8 %v1677
    %v1679 = vlaneseq
    %v1680 = vshrl.u32 %v1679, 7
    %v1681 = vsub.s32 %v1678, %v1680
    %v1682 = vrot.slane %v1654, %v1681
    %v1683 = vcombine.high %v1661, %v1661
    %v1684 = vcombine.high %v1668, %v1668
    %v1685 = vcombine.high %v1675, %v1675
    %v1686 = vcombine.high %v1682, %v1682
    %v1687 = vcombine.high %v24, %v24
    %v1689 = vunpack.c.l.s4 1966171168
    %v1690 = vunpack.c.0.s8 %v1689
    %v1691 = vlaneseq
    %v1692 = vshrl.u32 %v1691, 7
    %v1693 = vsub.s32 %v1690, %v1692
    %v1694 = vrot.slane %v24, %v1693
    %v1696 = vunpack.c.l.s4 1966171168
    %v1697 = vunpack.c.0.s8 %v1696
    %v1698 = vlaneseq
    %v1699 = vshrl.u32 %v1698, 7
    %v1700 = vsub.s32 %v1697, %v1699
    %v1701 = vrot.slane %v1687, %v1700
    %v1702 = vcombine.high %v1694, %v1694
    %v1703 = vcombine.high %v1701, %v1701
    %v1705 = vunpack.c.l.s4 1966171168
    %v1706 = vunpack.c.0.s8 %v1705
    %v1707 = vlaneseq
    %v1708 = vshrl.u32 %v1707, 7
    %v1709 = vsub.s32 %v1706, %v1708
    %v1710 = vrot.slane %v1694, %v1709
    %v1712 = vunpack.c.l.s4 1966171168
    %v1713 = vunpack.c.0.s8 %v1712
    %v1714 = vlaneseq
    %v1715 = vshrl.u32 %v1714, 7
    %v1716 = vsub.s32 %v1713, %v1715
    %v1717 = vrot.slane %v1701, %v1716
    %v1719 = vunpack.c.l.s4 1966171168
    %v1720 = vunpack.c.0.s8 %v1719
    %v1721 = vlaneseq
    %v1722 = vshrl.u32 %v1721, 7
    %v1723 = vsub.s32 %v1720, %v1722
    %v1724 = vrot.slane %v1702, %v1723
    %v1726 = vunpack.c.l.s4 1966171168
    %v1727 = vunpack.c.0.s8 %v1726
    %v1728 = vlaneseq
    %v1729 = vshrl.u32 %v1728, 7
    %v1730 = vsub.s32 %v1727, %v1729
    %v1731 = vrot.slane %v1703, %v1730
    %v1732 = vcombine.high %v1710, %v1710
    %v1733 = vcombine.high %v1717, %v1717
    %v1734 = vcombine.high %v1724, %v1724
    %v1735 = vcombine.high %v1731, %v1731
    %v1736 = vcombine.high %v25, %v25
    %v1738 = vunpack.c.l.s4 1966171168
    %v1739 = vunpack.c.0.s8 %v1738
    %v1740 = vlaneseq
    %v1741 = vshrl.u32 %v1740, 7
    %v1742 = vsub.s32 %v1739, %v1741
    %v1743 = vrot.slane %v25, %v1742
    %v1745 = vunpack.c.l.s4 1966171168
    %v1746 = vunpack.c.0.s8 %v1745
    %v1747 = vlaneseq
    %v1748 = vshrl.u32 %v1747, 7
    %v1749 = vsub.s32 %v1746, %v1748
    %v1750 = vrot.slane %v1736, %v1749
    %v1751 = vcombine.high %v1743, %v1743
    %v1752 = vcombine.high %v1750, %v1750
    %v1754 = vunpack.c.l.s4 1966171168
    %v1755 = vunpack.c.0.s8 %v1754
    %v1756 = vlaneseq
    %v1757 = vshrl.u32 %v1756, 7
    %v1758 = vsub.s32 %v1755, %v1757
    %v1759 = vrot.slane %v1743, %v1758
    %v1761 = vunpack.c.l.s4 1966171168
    %v1762 = vunpack.c.0.s8 %v1761
    %v1763 = vlaneseq
    %v1764 = vshrl.u32 %v1763, 7
    %v1765 = vsub.s32 %v1762, %v1764
    %v1766 = vrot.slane %v1750, %v1765
    %v1768 = vunpack.c.l.s4 1966171168
    %v1769 = vunpack.c.0.s8 %v1768
    %v1770 = vlaneseq
    %v1771 = vshrl.u32 %v1770, 7
    %v1772 = vsub.s32 %v1769, %v1771
    %v1773 = vrot.slane %v1751, %v1772
    %v1775 = vunpack.c.l.s4 1966171168
    %v1776 = vunpack.c.0.s8 %v1775
    %v1777 = vlaneseq
    %v1778 = vshrl.u32 %v1777, 7
    %v1779 = vsub.s32 %v1776, %v1778
    %v1780 = vrot.slane %v1752, %v1779
    %v1781 = vcombine.high %v1759, %v1759
    %v1782 = vcombine.high %v1766, %v1766
    %v1783 = vcombine.high %v1773, %v1773
    %v1784 = vcombine.high %v1780, %v1780
    %v1785 = vcombine.high %v26, %v26
    %v1787 = vunpack.c.l.s4 1966171168
    %v1788 = vunpack.c.0.s8 %v1787
    %v1789 = vlaneseq
    %v1790 = vshrl.u32 %v1789, 7
    %v1791 = vsub.s32 %v1788, %v1790
    %v1792 = vrot.slane %v26, %v1791
    %v1794 = vunpack.c.l.s4 1966171168
    %v1795 = vunpack.c.0.s8 %v1794
    %v1796 = vlaneseq
    %v1797 = vshrl.u32 %v1796, 7
    %v1798 = vsub.s32 %v1795, %v1797
    %v1799 = vrot.slane %v1785, %v1798
    %v1800 = vcombine.high %v1792, %v1792
    %v1801 = vcombine.high %v1799, %v1799
    %v1803 = vunpack.c.l.s4 1966171168
    %v1804 = vunpack.c.0.s8 %v1803
    %v1805 = vlaneseq
    %v1806 = vshrl.u32 %v1805, 7
    %v1807 = vsub.s32 %v1804, %v1806
    %v1808 = vrot.slane %v1792, %v1807
    %v1810 = vunpack.c.l.s4 1966171168
    %v1811 = vunpack.c.0.s8 %v1810
    %v1812 = vlaneseq
    %v1813 = vshrl.u32 %v1812, 7
    %v1814 = vsub.s32 %v1811, %v1813
    %v1815 = vrot.slane %v1799, %v1814
    %v1817 = vunpack.c.l.s4 1966171168
    %v1818 = vunpack.c.0.s8 %v1817
    %v1819 = vlaneseq
    %v1820 = vshrl.u32 %v1819, 7
    %v1821 = vsub.s32 %v1818, %v1820
    %v1822 = vrot.slane %v1800, %v1821
    %v1824 = vunpack.c.l.s4 1966171168
    %v1825 = vunpack.c.0.s8 %v1824
    %v1826 = vlaneseq
    %v1827 = vshrl.u32 %v1826, 7
    %v1828 = vsub.s32 %v1825, %v1827
    %v1829 = vrot.slane %v1801, %v1828
    %v1830 = vcombine.high %v1808, %v1808
    %v1831 = vcombine.high %v1815, %v1815
    %v1832 = vcombine.high %v1822, %v1822
    %v1833 = vcombine.high %v1829, %v1829
    %v1834 = vcombine.high %v27, %v27
    %v1836 = vunpack.c.l.s4 1966171168
    %v1837 = vunpack.c.0.s8 %v1836
    %v1838 = vlaneseq
    %v1839 = vshrl.u32 %v1838, 7
    %v1840 = vsub.s32 %v1837, %v1839
    %v1841 = vrot.slane %v27, %v1840
    %v1843 = vunpack.c.l.s4 1966171168
    %v1844 = vunpack.c.0.s8 %v1843
    %v1845 = vlaneseq
    %v1846 = vshrl.u32 %v1845, 7
    %v1847 = vsub.s32 %v1844, %v1846
    %v1848 = vrot.slane %v1834, %v1847
    %v1849 = vcombine.high %v1841, %v1841
    %v1850 = vcombine.high %v1848, %v1848
    %v1852 = vunpack.c.l.s4 1966171168
    %v1853 = vunpack.c.0.s8 %v1852
    %v1854 = vlaneseq
    %v1855 = vshrl.u32 %v1854, 7
    %v1856 = vsub.s32 %v1853, %v1855
    %v1857 = vrot.slane %v1841, %v1856
    %v1859 = vunpack.c.l.s4 1966171168
    %v1860 = vunpack.c.0.s8 %v1859
    %v1861 = vlaneseq
    %v1862 = vshrl.u32 %v1861, 7
    %v1863 = vsub.s32 %v1860, %v1862
    %v1864 = vrot.slane %v1848, %v1863
    %v1866 = vunpack.c.l.s4 1966171168
    %v1867 = vunpack.c.0.s8 %v1866
    %v1868 = vlaneseq
    %v1869 = vshrl.u32 %v1868, 7
    %v1870 = vsub.s32 %v1867, %v1869
    %v1871 = vrot.slane %v1849, %v1870
    %v1873 = vunpack.c.l.s4 1966171168
    %v1874 = vunpack.c.0.s8 %v1873
    %v1875 = vlaneseq
    %v1876 = vshrl.u32 %v1875, 7
    %v1877 = vsub.s32 %v1874, %v1876
    %v1878 = vrot.slane %v1850, %v1877
    %v1879 = vcombine.high %v1857, %v1857
    %v1880 = vcombine.high %v1864, %v1864
    %v1881 = vcombine.high %v1871, %v1871
    %v1882 = vcombine.high %v1878, %v1878
    %v1883 = vcombine.high %v28, %v28
    %v1885 = vunpack.c.l.s4 1966171168
    %v1886 = vunpack.c.0.s8 %v1885
    %v1887 = vlaneseq
    %v1888 = vshrl.u32 %v1887, 7
    %v1889 = vsub.s32 %v1886, %v1888
    %v1890 = vrot.slane %v28, %v1889
    %v1892 = vunpack.c.l.s4 1966171168
    %v1893 = vunpack.c.0.s8 %v1892
    %v1894 = vlaneseq
    %v1895 = vshrl.u32 %v1894, 7
    %v1896 = vsub.s32 %v1893, %v1895
    %v1897 = vrot.slane %v1883, %v1896
    %v1898 = vcombine.high %v1890, %v1890
    %v1899 = vcombine.high %v1897, %v1897
    %v1901 = vunpack.c.l.s4 1966171168
    %v1902 = vunpack.c.0.s8 %v1901
    %v1903 = vlaneseq
    %v1904 = vshrl.u32 %v1903, 7
    %v1905 = vsub.s32 %v1902, %v1904
    %v1906 = vrot.slane %v1890, %v1905
    %v1908 = vunpack.c.l.s4 1966171168
    %v1909 = vunpack.c.0.s8 %v1908
    %v1910 = vlaneseq
    %v1911 = vshrl.u32 %v1910, 7
    %v1912 = vsub.s32 %v1909, %v1911
    %v1913 = vrot.slane %v1897, %v1912
    %v1915 = vunpack.c.l.s4 1966171168
    %v1916 = vunpack.c.0.s8 %v1915
    %v1917 = vlaneseq
    %v1918 = vshrl.u32 %v1917, 7
    %v1919 = vsub.s32 %v1916, %v1918
    %v1920 = vrot.slane %v1898, %v1919
    %v1922 = vunpack.c.l.s4 1966171168
    %v1923 = vunpack.c.0.s8 %v1922
    %v1924 = vlaneseq
    %v1925 = vshrl.u32 %v1924, 7
    %v1926 = vsub.s32 %v1923, %v1925
    %v1927 = vrot.slane %v1899, %v1926
    %v1928 = vcombine.high %v1906, %v1906
    %v1929 = vcombine.high %v1913, %v1913
    %v1930 = vcombine.high %v1920, %v1920
    %v1931 = vcombine.high %v1927, %v1927
    %v1932 = vcombine.high %v29, %v29
    %v1934 = vunpack.c.l.s4 1966171168
    %v1935 = vunpack.c.0.s8 %v1934
    %v1936 = vlaneseq
    %v1937 = vshrl.u32 %v1936, 7
    %v1938 = vsub.s32 %v1935, %v1937
    %v1939 = vrot.slane %v29, %v1938
    %v1941 = vunpack.c.l.s4 1966171168
    %v1942 = vunpack.c.0.s8 %v1941
    %v1943 = vlaneseq
    %v1944 = vshrl.u32 %v1943, 7
    %v1945 = vsub.s32 %v1942, %v1944
    %v1946 = vrot.slane %v1932, %v1945
    %v1947 = vcombine.high %v1939, %v1939
    %v1948 = vcombine.high %v1946, %v1946
    %v1950 = vunpack.c.l.s4 1966171168
    %v1951 = vunpack.c.0.s8 %v1950
    %v1952 = vlaneseq
    %v1953 = vshrl.u32 %v1952, 7
    %v1954 = vsub.s32 %v1951, %v1953
    %v1955 = vrot.slane %v1939, %v1954
    %v1957 = vunpack.c.l.s4 1966171168
    %v1958 = vunpack.c.0.s8 %v1957
    %v1959 = vlaneseq
    %v1960 = vshrl.u32 %v1959, 7
    %v1961 = vsub.s32 %v1958, %v1960
    %v1962 = vrot.slane %v1946, %v1961
    %v1964 = vunpack.c.l.s4 1966171168
    %v1965 = vunpack.c.0.s8 %v1964
    %v1966 = vlaneseq
    %v1967 = vshrl.u32 %v1966, 7
    %v1968 = vsub.s32 %v1965, %v1967
    %v1969 = vrot.slane %v1947, %v1968
    %v1971 = vunpack.c.l.s4 1966171168
    %v1972 = vunpack.c.0.s8 %v1971
    %v1973 = vlaneseq
    %v1974 = vshrl.u32 %v1973, 7
    %v1975 = vsub.s32 %v1972, %v1974
    %v1976 = vrot.slane %v1948, %v1975
    %v1977 = vcombine.high %v1955, %v1955
    %v1978 = vcombine.high %v1962, %v1962
    %v1979 = vcombine.high %v1969, %v1969
    %v1980 = vcombine.high %v1976, %v1976
    %v1981 = vcombine.high %v30, %v30
    %v1983 = vunpack.c.l.s4 1966171168
    %v1984 = vunpack.c.0.s8 %v1983
    %v1985 = vlaneseq
    %v1986 = vshrl.u32 %v1985, 7
    %v1987 = vsub.s32 %v1984, %v1986
    %v1988 = vrot.slane %v30, %v1987
    %v1990 = vunpack.c.l.s4 1966171168
    %v1991 = vunpack.c.0.s8 %v1990
    %v1992 = vlaneseq
    %v1993 = vshrl.u32 %v1992, 7
    %v1994 = vsub.s32 %v1991, %v1993
    %v1995 = vrot.slane %v1981, %v1994
    %v1996 = vcombine.high %v1988, %v1988
    %v1997 = vcombine.high %v1995, %v1995
    %v1999 = vunpack.c.l.s4 1966171168
    %v2000 = vunpack.c.0.s8 %v1999
    %v2001 = vlaneseq
    %v2002 = vshrl.u32 %v2001, 7
    %v2003 = vsub.s32 %v2000, %v2002
    %v2004 = vrot.slane %v1988, %v2003
    %v2006 = vunpack.c.l.s4 1966171168
    %v2007 = vunpack.c.0.s8 %v2006
    %v2008 = vlaneseq
    %v2009 = vshrl.u32 %v2008, 7
    %v2010 = vsub.s32 %v2007, %v2009
    %v2011 = vrot.slane %v1995, %v2010
    %v2013 = vunpack.c.l.s4 1966171168
    %v2014 = vunpack.c.0.s8 %v2013
    %v2015 = vlaneseq
    %v2016 = vshrl.u32 %v2015, 7
    %v2017 = vsub.s32 %v2014, %v2016
    %v2018 = vrot.slane %v1996, %v2017
    %v2020 = vunpack.c.l.s4 1966171168
    %v2021 = vunpack.c.0.s8 %v2020
    %v2022 = vlaneseq
    %v2023 = vshrl.u32 %v2022, 7
    %v2024 = vsub.s32 %v2021, %v2023
    %v2025 = vrot.slane %v1997, %v2024
    %v2026 = vcombine.high %v2004, %v2004
    %v2027 = vcombine.high %v2011, %v2011
    %v2028 = vcombine.high %v2018, %v2018
    %v2029 = vcombine.high %v2025, %v2025
    %v2030 = vcombine.high %v31, %v31
    %v2032 = vunpack.c.l.s4 1966171168
    %v2033 = vunpack.c.0.s8 %v2032
    %v2034 = vlaneseq
    %v2035 = vshrl.u32 %v2034, 7
    %v2036 = vsub.s32 %v2033, %v2035
    %v2037 = vrot.slane %v31, %v2036
    %v2039 = vunpack.c.l.s4 1966171168
    %v2040 = vunpack.c.0.s8 %v2039
    %v2041 = vlaneseq
    %v2042 = vshrl.u32 %v2041, 7
    %v2043 = vsub.s32 %v2040, %v2042
    %v2044 = vrot.slane %v2030, %v2043
    %v2045 = vcombine.high %v2037, %v2037
    %v2046 = vcombine.high %v2044, %v2044
    %v2048 = vunpack.c.l.s4 1966171168
    %v2049 = vunpack.c.0.s8 %v2048
    %v2050 = vlaneseq
    %v2051 = vshrl.u32 %v2050, 7
    %v2052 = vsub.s32 %v2049, %v2051
    %v2053 = vrot.slane %v2037, %v2052
    %v2055 = vunpack.c.l.s4 1966171168
    %v2056 = vunpack.c.0.s8 %v2055
    %v2057 = vlaneseq
    %v2058 = vshrl.u32 %v2057, 7
    %v2059 = vsub.s32 %v2056, %v2058
    %v2060 = vrot.slane %v2044, %v2059
    %v2062 = vunpack.c.l.s4 1966171168
    %v2063 = vunpack.c.0.s8 %v2062
    %v2064 = vlaneseq
    %v2065 = vshrl.u32 %v2064, 7
    %v2066 = vsub.s32 %v2063, %v2065
    %v2067 = vrot.slane %v2045, %v2066
    %v2069 = vunpack.c.l.s4 1966171168
    %v2070 = vunpack.c.0.s8 %v2069
    %v2071 = vlaneseq
    %v2072 = vshrl.u32 %v2071, 7
    %v2073 = vsub.s32 %v2070, %v2072
    %v2074 = vrot.slane %v2046, %v2073
    %v2075 = vcombine.high %v2053, %v2053
    %v2076 = vcombine.high %v2060, %v2060
    %v2077 = vcombine.high %v2067, %v2067
    %v2078 = vcombine.high %v2074, %v2074
    %v2079 = vcombine.high %v32, %v32
    %v2081 = vunpack.c.l.s4 1966171168
    %v2082 = vunpack.c.0.s8 %v2081
    %v2083 = vlaneseq
    %v2084 = vshrl.u32 %v2083, 7
    %v2085 = vsub.s32 %v2082, %v2084
    %v2086 = vrot.slane %v32, %v2085
    %v2088 = vunpack.c.l.s4 1966171168
    %v2089 = vunpack.c.0.s8 %v2088
    %v2090 = vlaneseq
    %v2091 = vshrl.u32 %v2090, 7
    %v2092 = vsub.s32 %v2089, %v2091
    %v2093 = vrot.slane %v2079, %v2092
    %v2094 = vcombine.high %v2086, %v2086
    %v2095 = vcombine.high %v2093, %v2093
    %v2097 = vunpack.c.l.s4 1966171168
    %v2098 = vunpack.c.0.s8 %v2097
    %v2099 = vlaneseq
    %v2100 = vshrl.u32 %v2099, 7
    %v2101 = vsub.s32 %v2098, %v2100
    %v2102 = vrot.slane %v2086, %v2101
    %v2104 = vunpack.c.l.s4 1966171168
    %v2105 = vunpack.c.0.s8 %v2104
    %v2106 = vlaneseq
    %v2107 = vshrl.u32 %v2106, 7
    %v2108 = vsub.s32 %v2105, %v2107
    %v2109 = vrot.slane %v2093, %v2108
    %v2111 = vunpack.c.l.s4 1966171168
    %v2112 = vunpack.c.0.s8 %v2111
    %v2113 = vlaneseq
    %v2114 = vshrl.u32 %v2113, 7
    %v2115 = vsub.s32 %v2112, %v2114
    %v2116 = vrot.slane %v2094, %v2115
    %v2118 = vunpack.c.l.s4 1966171168
    %v2119 = vunpack.c.0.s8 %v2118
    %v2120 = vlaneseq
    %v2121 = vshrl.u32 %v2120, 7
    %v2122 = vsub.s32 %v2119, %v2121
    %v2123 = vrot.slane %v2095, %v2122
    %v2124 = vcombine.high %v2102, %v2102
    %v2125 = vcombine.high %v2109, %v2109
    %v2126 = vcombine.high %v2116, %v2116
    %v2127 = vcombine.high %v2123, %v2123
    %v2128 = vcombine.high %v33, %v33
    %v2130 = vunpack.c.l.s4 1966171168
    %v2131 = vunpack.c.0.s8 %v2130
    %v2132 = vlaneseq
    %v2133 = vshrl.u32 %v2132, 7
    %v2134 = vsub.s32 %v2131, %v2133
    %v2135 = vrot.slane %v33, %v2134
    %v2137 = vunpack.c.l.s4 1966171168
    %v2138 = vunpack.c.0.s8 %v2137
    %v2139 = vlaneseq
    %v2140 = vshrl.u32 %v2139, 7
    %v2141 = vsub.s32 %v2138, %v2140
    %v2142 = vrot.slane %v2128, %v2141
    %v2143 = vcombine.high %v2135, %v2135
    %v2144 = vcombine.high %v2142, %v2142
    %v2146 = vunpack.c.l.s4 1966171168
    %v2147 = vunpack.c.0.s8 %v2146
    %v2148 = vlaneseq
    %v2149 = vshrl.u32 %v2148, 7
    %v2150 = vsub.s32 %v2147, %v2149
    %v2151 = vrot.slane %v2135, %v2150
    %v2153 = vunpack.c.l.s4 1966171168
    %v2154 = vunpack.c.0.s8 %v2153
    %v2155 = vlaneseq
    %v2156 = vshrl.u32 %v2155, 7
    %v2157 = vsub.s32 %v2154, %v2156
    %v2158 = vrot.slane %v2142, %v2157
    %v2160 = vunpack.c.l.s4 1966171168
    %v2161 = vunpack.c.0.s8 %v2160
    %v2162 = vlaneseq
    %v2163 = vshrl.u32 %v2162, 7
    %v2164 = vsub.s32 %v2161, %v2163
    %v2165 = vrot.slane %v2143, %v2164
    %v2167 = vunpack.c.l.s4 1966171168
    %v2168 = vunpack.c.0.s8 %v2167
    %v2169 = vlaneseq
    %v2170 = vshrl.u32 %v2169, 7
    %v2171 = vsub.s32 %v2168, %v2170
    %v2172 = vrot.slane %v2144, %v2171
    %v2173 = vcombine.high %v2151, %v2151
    %v2174 = vcombine.high %v2158, %v2158
    %v2175 = vcombine.high %v2165, %v2165
    %v2176 = vcombine.high %v2172, %v2172
    %v3809 = vunpack.c.l.b16 %v34
    %v3810 = vunpack.c.l.b16 %v35
    %v3811 = vunpack.c.l.b16 %v36
    %v3812 = vunpack.c.l.b16 %v37
    %v3813 = vunpack.c.l.b16 %v38
    %v3814 = vunpack.c.l.b16 %v39
    %v3815 = vunpack.c.l.b16 %v40
    %v3816 = vunpack.c.l.b16 %v41
    %v3817 = vunpack.c.l.b16 %v42
    %v3818 = vunpack.c.l.b16 %v43
    %v3819 = vunpack.c.l.b16 %v44
    %v3820 = vunpack.c.l.b16 %v45
    %v3821 = vunpack.c.l.b16 %v46
    %v3822 = vunpack.c.l.b16 %v47
    %v3823 = vunpack.c.l.b16 %v48
    %v3824 = vunpack.c.l.b16 %v49
    %v3825 = vunpack.c.l.b16 %v50
    %v3826 = vunpack.c.l.b16 %v51
    %v3827 = vunpack.c.l.b16 %v52
    %v3828 = vunpack.c.l.b16 %v53
    %v3829 = vunpack.c.l.b16 %v54
    %v3830 = vunpack.c.l.b16 %v55
    %v3831 = vunpack.c.l.b16 %v56
    %v3832 = vunpack.c.l.b16 %v57
    %v3833 = vunpack.c.l.b16 %v58
    %v3834 = vunpack.c.l.b16 %v59
    %v3835 = vunpack.c.l.b16 %v60
    %v3836 = vunpack.c.l.b16 %v61
    %v3837 = vunpack.c.l.b16 %v62
    %v3838 = vunpack.c.l.b16 %v63
    %v3839 = vunpack.c.l.b16 %v64
    %v3840 = vunpack.c.l.b16 %v65
    %v3841 = vunpack.c.l.b16 %v66
    %v3842 = vunpack.c.l.b16 %v67
    %v3843 = vunpack.c.l.b16 %v68
    %v3844 = vunpack.c.l.b16 %v69
    %v3845 = vunpack.c.l.b16 %v70
    %v3846 = vunpack.c.l.b16 %v71
    %v3847 = vunpack.c.l.b16 %v72
    %v3848 = vunpack.c.l.b16 %v73
    %v3849 = vunpack.c.l.b16 %v74
    %v3850 = vunpack.c.l.b16 %v75
    %v3851 = vunpack.c.l.b16 %v76
    %v3852 = vunpack.c.l.b16 %v77
    %v3853 = vunpack.c.l.b16 %v78
    %v3854 = vunpack.c.l.b16 %v79
    %v3855 = vunpack.c.l.b16 %v80
    %v3856 = vunpack.c.l.b16 %v81
    %v3857 = vunpack.c.l.b16 %v82
    %v3858 = vunpack.c.l.b16 %v83
    %v3859 = vunpack.c.l.b16 %v84
    %v3860 = vunpack.c.l.b16 %v85
    %v3861 = vunpack.c.l.b16 %v86
    %v3862 = vunpack.c.l.b16 %v87
    %v3863 = vunpack.c.l.b16 %v88
    %v3864 = vunpack.c.l.b16 %v89
    %v3865 = vunpack.c.l.b16 %v90
    %v3866 = vunpack.c.l.b16 %v91
    %v3867 = vunpack.c.l.b16 %v92
    %v3868 = vunpack.c.l.b16 %v93
    %v3869 = vunpack.c.l.b16 %v94
    %v3870 = vunpack.c.l.b16 %v95
    %v3871 = vunpack.c.l.b16 %v96
    %v3872 = vunpack.c.l.b16 %v97
    %v3873 = vunpack.c.l.b16 %v98
    %v3874 = vunpack.c.l.b16 %v99
    %v3875 = vunpack.c.l.b16 %v100
    %v3876 = vunpack.c.l.b16 %v101
    %v3877 = vunpack.c.l.b16 %v102
    %v3878 = vunpack.c.l.b16 %v103
    %v3879 = vunpack.c.l.b16 %v104
    %v3880 = vunpack.c.l.b16 %v105
    %v3881 = vunpack.c.l.b16 %v106
    %v3882 = vunpack.c.l.b16 %v107
    %v3883 = vunpack.c.l.b16 %v108
    %v3884 = vunpack.c.l.b16 %v109
    %v3885 = vunpack.c.l.b16 %v110
    %v3886 = vunpack.c.l.b16 %v111
    %v3887 = vunpack.c.l.b16 %v112
    %v3888 = vunpack.c.l.b16 %v113
    %v3889 = vunpack.c.l.b16 %v114
    %v3890 = vunpack.c.l.b16 %v115
    %v3891 = vunpack.c.l.b16 %v116
    %v3892 = vunpack.c.l.b16 %v117
    %v3893 = vunpack.c.l.b16 %v118
    %v3894 = vunpack.c.l.b16 %v119
    %v3895 = vunpack.c.l.b16 %v120
    %v3896 = vunpack.c.l.b16 %v121
    %v3897 = vunpack.c.l.b16 %v122
    %v3898 = vunpack.c.l.b16 %v123
    %v3899 = vunpack.c.l.b16 %v124
    %v3900 = vunpack.c.l.b16 %v125
    %v3901 = vunpack.c.l.b16 %v126
    %v3902 = vunpack.c.l.b16 %v127
    %v3903 = vunpack.c.l.b16 %v128
    %v3904 = vunpack.c.l.b16 %v129
    %v3905 = vunpack.c.l.b16 %v130
    %v3906 = vunpack.c.l.b16 %v131
    %v3907 = vunpack.c.l.b16 %v132
    %v3908 = vunpack.c.l.b16 %v133
    %v3909 = vunpack.c.l.b16 %v134
    %v3910 = vunpack.c.l.b16 %v135
    %v3911 = vunpack.c.l.b16 %v136
    %v3912 = vunpack.c.l.b16 %v137
    %v3913 = vunpack.c.l.b16 %v138
    %v3914 = vunpack.c.l.b16 %v139
    %v3915 = vunpack.c.l.b16 %v140
    %v3916 = vunpack.c.l.b16 %v141
    %v3917 = vunpack.c.l.b16 %v142
    %v3918 = vunpack.c.l.b16 %v143
    %v3919 = vunpack.c.l.b16 %v144
    %v3920 = vunpack.c.l.b16 %v145
    %v3921 = vunpack.c.l.b16 %v146
    %v3922 = vunpack.c.l.b16 %v147
    %v3923 = vunpack.c.l.b16 %v148
    %v3924 = vunpack.c.l.b16 %v149
    %v3925 = vunpack.c.l.b16 %v150
    %v3926 = vunpack.c.l.b16 %v151
    %v3927 = vunpack.c.l.b16 %v152
    %v3928 = vunpack.c.l.b16 %v153
    %v3929 = vunpack.c.l.b16 %v154
    %v3930 = vunpack.c.l.b16 %v155
    %v3931 = vunpack.c.l.b16 %v156
    %v3932 = vunpack.c.l.b16 %v157
    %v3933 = vunpack.c.l.b16 %v158
    %v3934 = vunpack.c.l.b16 %v159
    %v3935 = vunpack.c.l.b16 %v160
    %v3936 = vunpack.c.l.b16 %v161
    %v3937 = vunpack.c.l.b16 %v162
    %v3938 = vunpack.c.l.b16 %v163
    %v3939 = vunpack.c.l.b16 %v164
    %v3940 = vunpack.c.l.b16 %v165
    %v3941 = vunpack.c.l.b16 %v166
    %v3942 = vunpack.c.l.b16 %v167
    %v3943 = vunpack.c.l.b16 %v168
    %v3944 = vunpack.c.l.b16 %v169
    %v3945 = vunpack.c.l.b16 %v170
    %v3946 = vunpack.c.l.b16 %v171
    %v3947 = vunpack.c.l.b16 %v172
    %v3948 = vunpack.c.l.b16 %v173
    %v3949 = vunpack.c.l.b16 %v174
    %v3950 = vunpack.c.l.b16 %v175
    %v3951 = vunpack.c.l.b16 %v176
    %v3952 = vunpack.c.l.b16 %v177
    %v3953 = vunpack.c.l.b16 %v178
    %v3954 = vunpack.c.l.b16 %v179
    %v3955 = vunpack.c.l.b16 %v180
    %v3956 = vunpack.c.l.b16 %v181
    %v3957 = vunpack.c.l.b16 %v182
    %v3958 = vunpack.c.l.b16 %v183
    %v3959 = vunpack.c.l.b16 %v184
    %v3960 = vunpack.c.l.b16 %v185
    %v3961 = vunpack.c.l.b16 %v186
    %v3962 = vunpack.c.l.b16 %v187
    %v3963 = vunpack.c.l.b16 %v188
    %v3964 = vunpack.c.l.b16 %v189
    %v3965 = vunpack.c.l.b16 %v190
    %v3966 = vunpack.c.l.b16 %v191
    %v3967 = vunpack.c.l.b16 %v192
    %v3968 = vunpack.c.l.b16 %v193
    %v3969 = vunpack.c.l.b16 %v194
    %v3970 = vunpack.c.l.b16 %v195
    %v3971 = vunpack.c.l.b16 %v196
    %v3972 = vunpack.c.l.b16 %v197
    %v3973 = vunpack.c.l.b16 %v198
    %v3974 = vunpack.c.l.b16 %v199
    %v3975 = vunpack.c.l.b16 %v200
    %v3976 = vunpack.c.l.b16 %v201
    %v3977 = vunpack.c.l.b16 %v202
    %v3978 = vunpack.c.l.b16 %v203
    %v3979 = vunpack.c.l.b16 %v204
    %v3980 = vunpack.c.l.b16 %v205
    %v3981 = vunpack.c.l.b16 %v206
    %v3982 = vunpack.c.l.b16 %v207
    %v3983 = vunpack.c.l.b16 %v208
    %v3984 = vunpack.c.l.b16 %v209
    %v3985 = vunpack.c.l.b16 %v210
    %v3986 = vunpack.c.l.b16 %v211
    %v3987 = vunpack.c.l.b16 %v212
    %v3988 = vunpack.c.l.b16 %v213
    %v3989 = vunpack.c.l.b16 %v214
    %v3990 = vunpack.c.l.b16 %v215
    %v3991 = vunpack.c.l.b16 %v216
    %v3992 = vunpack.c.l.b16 %v217
    %v3993 = vunpack.c.l.b16 %v218
    %v3994 = vunpack.c.l.b16 %v219
    %v3995 = vunpack.c.l.b16 %v220
    %v3996 = vunpack.c.l.b16 %v221
    %v3997 = vunpack.c.l.b16 %v222
    %v3998 = vunpack.c.l.b16 %v223
    %v3999 = vunpack.c.l.b16 %v224
    %v4000 = vunpack.c.l.b16 %v225
    %v4001 = vunpack.c.l.b16 %v226
    %v4002 = vunpack.c.l.b16 %v227
    %v4003 = vunpack.c.l.b16 %v228
    %v4004 = vunpack.c.l.b16 %v229
    %v4005 = vunpack.c.l.b16 %v230
    %v4006 = vunpack.c.l.b16 %v231
    %v4007 = vunpack.c.l.b16 %v232
    %v4008 = vunpack.c.l.b16 %v233
    %v4009 = vunpack.c.l.b16 %v234
    %v4010 = vunpack.c.l.b16 %v235
    %v4011 = vunpack.c.l.b16 %v236
    %v4012 = vunpack.c.l.b16 %v237
    %v4013 = vunpack.c.l.b16 %v238
    %v4014 = vunpack.c.l.b16 %v239
    %v4015 = vunpack.c.l.b16 %v240
    %v4016 = vunpack.c.l.b16 %v241
    %v4017 = vunpack.c.l.b16 %v242
    %v4018 = vunpack.c.l.b16 %v243
    %v4019 = vunpack.c.l.b16 %v244
    %v4020 = vunpack.c.l.b16 %v245
    %v4021 = vunpack.c.l.b16 %v246
    %v4022 = vunpack.c.l.b16 %v247
    %v4023 = vunpack.c.l.b16 %v248
    %v4024 = vunpack.c.l.b16 %v249
    %v4025 = vunpack.c.l.b16 %v250
    %v4026 = vunpack.c.l.b16 %v251
    %v4027 = vunpack.c.l.b16 %v252
    %v4028 = vunpack.c.l.b16 %v253
    %v4029 = vunpack.c.l.b16 %v254
    %v4030 = vunpack.c.l.b16 %v255
    %v4031 = vunpack.c.l.b16 %v256
    %v4032 = vunpack.c.l.b16 %v257
    %v4033 = vunpack.c.l.b16 %v258
    %v4034 = vunpack.c.l.b16 %v259
    %v4035 = vunpack.c.l.b16 %v260
    %v4036 = vunpack.c.l.b16 %v261
    %v4037 = vunpack.c.l.b16 %v262
    %v4038 = vunpack.c.l.b16 %v263
    %v4039 = vunpack.c.l.b16 %v264
    %v4040 = vunpack.c.l.b16 %v265
    %v4041 = vunpack.c.l.b16 %v266
    %v4042 = vunpack.c.l.b16 %v267
    %v4043 = vunpack.c.l.b16 %v268
    %v4044 = vunpack.c.l.b16 %v269
    %v4045 = vunpack.c.l.b16 %v270
    %v4046 = vunpack.c.l.b16 %v271
    %v4047 = vunpack.c.l.b16 %v272
    %v4048 = vunpack.c.l.b16 %v273
    %v4049 = vunpack.c.l.b16 %v274
    %v4050 = vunpack.c.l.b16 %v275
    %v4051 = vunpack.c.l.b16 %v276
    %v4052 = vunpack.c.l.b16 %v277
    %v4053 = vunpack.c.l.b16 %v278
    %v4054 = vunpack.c.l.b16 %v279
    %v4055 = vunpack.c.l.b16 %v280
    %v4056 = vunpack.c.l.b16 %v281
    %v4057 = vunpack.c.l.b16 %v282
    %v4058 = vunpack.c.l.b16 %v283
    %v4059 = vunpack.c.l.b16 %v284
    %v4060 = vunpack.c.l.b16 %v285
    %v4061 = vunpack.c.l.b16 %v286
    %v4062 = vunpack.c.l.b16 %v287
    %v4063 = vunpack.c.l.b16 %v288
    %v4064 = vunpack.c.l.b16 %v289
    %v4065 = vunpack.c.l.b16 %v290
    %v4066 = vunpack.c.l.b16 %v291
    %v4067 = vunpack.c.l.b16 %v292
    %v4068 = vunpack.c.l.b16 %v293
    %v4069 = vunpack.c.l.b16 %v294
    %v4070 = vunpack.c.l.b16 %v295
    %v4071 = vunpack.c.l.b16 %v296
    %v4072 = vunpack.c.l.b16 %v297
    %v4073 = vunpack.c.l.b16 %v298
    %v4074 = vunpack.c.l.b16 %v299
    %v4075 = vunpack.c.l.b16 %v300
    %v4076 = vunpack.c.l.b16 %v301
    %v4077 = vunpack.c.l.b16 %v302
    %v4078 = vunpack.c.l.b16 %v303
    %v4079 = vunpack.c.l.b16 %v304
    %v4080 = vunpack.c.l.b16 %v305
    %v4081 = vunpack.c.l.b16 %v306
    %v4082 = vunpack.c.l.b16 %v307
    %v4083 = vunpack.c.l.b16 %v308
    %v4084 = vunpack.c.l.b16 %v309
    %v4085 = vunpack.c.l.b16 %v310
    %v4086 = vunpack.c.l.b16 %v311
    %v4087 = vunpack.c.l.b16 %v312
    %v4088 = vunpack.c.l.b16 %v313
    %v4089 = vunpack.c.l.b16 %v314
    %v4090 = vunpack.c.l.b16 %v315
    %v4091 = vunpack.c.l.b16 %v316
    %v4092 = vunpack.c.l.b16 %v317
    %v4093 = vunpack.c.l.b16 %v318
    %v4094 = vunpack.c.l.b16 %v319
    %v4095 = vunpack.c.l.b16 %v320
    %v4096 = vunpack.c.l.b16 %v321
    %v4097 = vunpack.c.l.b16 %v322
    %v4098 = vunpack.c.l.b16 %v323
    %v4099 = vunpack.c.l.b16 %v324
    %v4100 = vunpack.c.l.b16 %v325
    %v4101 = vunpack.c.l.b16 %v326
    %v4102 = vunpack.c.l.b16 %v327
    %v4103 = vunpack.c.l.b16 %v328
    %v4104 = vunpack.c.l.b16 %v329
    %v4105 = vunpack.c.l.b16 %v330
    %v4106 = vunpack.c.l.b16 %v331
    %v4107 = vunpack.c.l.b16 %v332
    %v4108 = vunpack.c.l.b16 %v333
    %v4109 = vunpack.c.l.b16 %v334
    %v4110 = vunpack.c.l.b16 %v335
    %v4111 = vunpack.c.l.b16 %v336
    %v4112 = vunpack.c.l.b16 %v337
    %v4113 = vunpack.c.l.b16 %v338
    %v4114 = vunpack.c.l.b16 %v339
    %v4115 = vunpack.c.l.b16 %v340
    %v4116 = vunpack.c.l.b16 %v341
    %v4117 = vunpack.c.l.b16 %v342
    %v4118 = vunpack.c.l.b16 %v343
    %v4119 = vunpack.c.l.b16 %v344
    %v4120 = vunpack.c.l.b16 %v345
    %v4121 = vunpack.c.l.b16 %v346
    %v4122 = vunpack.c.l.b16 %v347
    %v4123 = vunpack.c.l.b16 %v348
    %v4124 = vunpack.c.l.b16 %v349
    %v4125 = vunpack.c.l.b16 %v350
    %v4126 = vunpack.c.l.b16 %v351
    %v4127 = vunpack.c.l.b16 %v352
    %v4128 = vunpack.c.l.b16 %v353
    %v4129 = vunpack.c.l.b16 %v354
    %v4130 = vunpack.c.l.b16 %v355
    %v4131 = vunpack.c.l.b16 %v356
    %v4132 = vunpack.c.l.b16 %v357
    %v4133 = vunpack.c.l.b16 %v358
    %v4134 = vunpack.c.l.b16 %v359
    %v4135 = vunpack.c.l.b16 %v360
    %v4136 = vunpack.c.l.b16 %v361
    %v4137 = vunpack.c.l.b16 %v362
    %v4138 = vunpack.c.l.b16 %v363
    %v4139 = vunpack.c.l.b16 %v364
    %v4140 = vunpack.c.l.b16 %v365
    %v4141 = vunpack.c.l.b16 %v366
    %v4142 = vunpack.c.l.b16 %v367
    %v4143 = vunpack.c.l.b16 %v368
    %v4144 = vunpack.c.l.b16 %v369
    %v4145 = vunpack.c.l.b16 %v370
    %v4146 = vunpack.c.l.b16 %v371
    %v4147 = vunpack.c.l.b16 %v372
    %v4148 = vunpack.c.l.b16 %v373
    %v4149 = vunpack.c.l.b16 %v374
    %v4150 = vunpack.c.l.b16 %v375
    %v4151 = vunpack.c.l.b16 %v376
    %v4152 = vunpack.c.l.b16 %v377
    %v4153 = vunpack.c.l.b16 %v378
    %v4154 = vunpack.c.l.b16 %v379
    %v4155 = vunpack.c.l.b16 %v380
    %v4156 = vunpack.c.l.b16 %v381
    %v4157 = vunpack.c.l.b16 %v382
    %v4158 = vunpack.c.l.b16 %v383
    %v4159 = vunpack.c.l.b16 %v384
    %v4160 = vunpack.c.l.b16 %v385
    %v4161 = vunpack.c.l.b16 %v386
    %v4162 = vunpack.c.l.b16 %v387
    %v4163 = vunpack.c.l.b16 %v388
    %v4164 = vunpack.c.l.b16 %v389
    %v4165 = vunpack.c.l.b16 %v390
    %v4166 = vunpack.c.l.b16 %v391
    %v4167 = vunpack.c.l.b16 %v392
    %v4168 = vunpack.c.l.b16 %v393
    %v4169 = vunpack.c.l.b16 %v394
    %v4170 = vunpack.c.l.b16 %v395
    %v4171 = vunpack.c.l.b16 %v396
    %v4172 = vunpack.c.l.b16 %v397
    %v4173 = vunpack.c.l.b16 %v398
    %v4174 = vunpack.c.l.b16 %v399
    %v4175 = vunpack.c.l.b16 %v400
    %v4176 = vunpack.c.l.b16 %v401
    %v4177 = vunpack.c.l.b16 %v402
    %v4178 = vunpack.c.l.b16 %v403
    %v4179 = vunpack.c.l.b16 %v404
    %v4180 = vunpack.c.l.b16 %v405
    %v4181 = vunpack.c.l.b16 %v406
    %v4182 = vunpack.c.l.b16 %v407
    %v4183 = vunpack.c.l.b16 %v408
    %v4184 = vunpack.c.l.b16 %v409
    %v4185 = vunpack.c.l.b16 %v410
    %v4186 = vunpack.c.l.b16 %v411
    %v4187 = vunpack.c.l.b16 %v412
    %v4188 = vunpack.c.l.b16 %v413
    %v4189 = vunpack.c.l.b16 %v414
    %v4190 = vunpack.c.l.b16 %v415
    %v4191 = vunpack.c.l.b16 %v416
    %v4192 = vunpack.c.l.b16 %v417
    %v4193 = vunpack.c.l.b16 %v418
    %v4194 = vunpack.c.l.b16 %v419
    %v4195 = vunpack.c.l.b16 %v420
    %v4196 = vunpack.c.l.b16 %v421
    %v4197 = vunpack.c.l.b16 %v422
    %v4198 = vunpack.c.l.b16 %v423
    %v4199 = vunpack.c.l.b16 %v424
    %v4200 = vunpack.c.l.b16 %v425
    %v4201 = vunpack.c.l.b16 %v426
    %v4202 = vunpack.c.l.b16 %v427
    %v4203 = vunpack.c.l.b16 %v428
    %v4204 = vunpack.c.l.b16 %v429
    %v4205 = vunpack.c.l.b16 %v430
    %v4206 = vunpack.c.l.b16 %v431
    %v4207 = vunpack.c.l.b16 %v432
    %v4208 = vunpack.c.l.b16 %v433
    %v4209 = vunpack.c.l.b16 %v434
    %v4210 = vunpack.c.l.b16 %v435
    %v4211 = vunpack.c.l.b16 %v436
    %v4212 = vunpack.c.l.b16 %v437
    %v4213 = vunpack.c.l.b16 %v438
    %v4214 = vunpack.c.l.b16 %v439
    %v4215 = vunpack.c.l.b16 %v440
    %v4216 = vunpack.c.l.b16 %v441
    %v4217 = vunpack.c.l.b16 %v442
    %v4218 = vunpack.c.l.b16 %v443
    %v4219 = vunpack.c.l.b16 %v444
    %v4220 = vunpack.c.l.b16 %v445
    %v4221 = vunpack.c.l.b16 %v446
    %v4222 = vunpack.c.l.b16 %v447
    %v4223 = vunpack.c.l.b16 %v448
    %v4224 = vunpack.c.l.b16 %v449
    %v4225 = vunpack.c.l.b16 %v450
    %v4226 = vunpack.c.l.b16 %v451
    %v4227 = vunpack.c.l.b16 %v452
    %v4228 = vunpack.c.l.b16 %v453
    %v4229 = vunpack.c.l.b16 %v454
    %v4230 = vunpack.c.l.b16 %v455
    %v4231 = vunpack.c.l.b16 %v456
    %v4232 = vunpack.c.l.b16 %v457
    %v4233 = vunpack.c.l.b16 %v458
    %v4234 = vunpack.c.l.b16 %v459
    %v4235 = vunpack.c.l.b16 %v460
    %v4236 = vunpack.c.l.b16 %v461
    %v4237 = vunpack.c.l.b16 %v462
    %v4238 = vunpack.c.l.b16 %v463
    %v4239 = vunpack.c.l.b16 %v464
    %v4240 = vunpack.c.l.b16 %v465
    %v4241 = vunpack.c.l.b16 %v466
    %v4242 = vunpack.c.l.b16 %v467
    %v4243 = vunpack.c.l.b16 %v468
    %v4244 = vunpack.c.l.b16 %v469
    %v4245 = vunpack.c.l.b16 %v470
    %v4246 = vunpack.c.l.b16 %v471
    %v4247 = vunpack.c.l.b16 %v472
    %v4248 = vunpack.c.l.b16 %v473
    %v4249 = vunpack.c.l.b16 %v474
    %v4250 = vunpack.c.l.b16 %v475
    %v4251 = vunpack.c.l.b16 %v476
    %v4252 = vunpack.c.l.b16 %v477
    %v4253 = vunpack.c.l.b16 %v478
    %v4254 = vunpack.c.l.b16 %v479
    %v4255 = vunpack.c.l.b16 %v480
    %v4256 = vunpack.c.l.b16 %v481
    %v4257 = vunpack.c.l.b16 %v482
    %v4258 = vunpack.c.l.b16 %v483
    %v4259 = vunpack.c.l.b16 %v484
    %v4260 = vunpack.c.l.b16 %v485
    %v4261 = vunpack.c.l.b16 %v486
    %v4262 = vunpack.c.l.b16 %v487
    %v4263 = vunpack.c.l.b16 %v488
    %v4264 = vunpack.c.l.b16 %v489
    %v4265 = vunpack.c.l.b16 %v490
    %v4266 = vunpack.c.l.b16 %v491
    %v4267 = vunpack.c.l.b16 %v492
    %v4268 = vunpack.c.l.b16 %v493
    %v4269 = vunpack.c.l.b16 %v494
    %v4270 = vunpack.c.l.b16 %v495
    %v4271 = vunpack.c.l.b16 %v496
    %v4272 = vunpack.c.l.b16 %v497
    %v4273 = vunpack.c.l.b16 %v498
    %v4274 = vunpack.c.l.b16 %v499
    %v4275 = vunpack.c.l.b16 %v500
    %v4276 = vunpack.c.l.b16 %v501
    %v4277 = vunpack.c.l.b16 %v502
    %v4278 = vunpack.c.l.b16 %v503
    %v4279 = vunpack.c.l.b16 %v504
    %v4280 = vunpack.c.l.b16 %v505
    %v4281 = vunpack.c.l.b16 %v506
    %v4282 = vunpack.c.l.b16 %v507
    %v4283 = vunpack.c.l.b16 %v508
    %v4284 = vunpack.c.l.b16 %v509
    %v4285 = vunpack.c.l.b16 %v510
    %v4286 = vunpack.c.l.b16 %v511
    %v4287 = vunpack.c.l.b16 %v512
    %v4288 = vunpack.c.l.b16 %v513
    %v4289 = vunpack.c.l.b16 %v514
    %v4290 = vunpack.c.l.b16 %v515
    %v4291 = vunpack.c.l.b16 %v516
    %v4292 = vunpack.c.l.b16 %v517
    %v4293 = vunpack.c.l.b16 %v518
    %v4294 = vunpack.c.l.b16 %v519
    %v4295 = vunpack.c.l.b16 %v520
    %v4296 = vunpack.c.l.b16 %v521
    %v4297 = vunpack.c.l.b16 %v522
    %v4298 = vunpack.c.l.b16 %v523
    %v4299 = vunpack.c.l.b16 %v524
    %v4300 = vunpack.c.l.b16 %v525
    %v4301 = vunpack.c.l.b16 %v526
    %v4302 = vunpack.c.l.b16 %v527
    %v4303 = vunpack.c.l.b16 %v528
    %v4304 = vunpack.c.l.b16 %v529
    %v4305 = vunpack.c.l.b16 %v530
    %v4306 = vunpack.c.l.b16 %v531
    %v4307 = vunpack.c.l.b16 %v532
    %v4308 = vunpack.c.l.b16 %v533
    %v4309 = vunpack.c.l.b16 %v534
    %v4310 = vunpack.c.l.b16 %v535
    %v4311 = vunpack.c.l.b16 %v536
    %v4312 = vunpack.c.l.b16 %v537
    %v4313 = vunpack.c.l.b16 %v538
    %v4314 = vunpack.c.l.b16 %v539
    %v4315 = vunpack.c.l.b16 %v540
    %v4316 = vunpack.c.l.b16 %v541
    %v4317 = vunpack.c.l.b16 %v542
    %v4318 = vunpack.c.l.b16 %v543
    %v4319 = vunpack.c.l.b16 %v544
    %v4320 = vunpack.c.l.b16 %v545
    %v4321 = vunpack.c.l.b16 %v546
    %v4322 = vunpack.c.l.b16 %v547
    %v4323 = vunpack.c.l.b16 %v548
    %v4324 = vunpack.c.l.b16 %v549
    %v4325 = vunpack.c.l.b16 %v550
    %v4326 = vunpack.c.l.b16 %v551
    %v4327 = vunpack.c.l.b16 %v552
    %v4328 = vunpack.c.l.b16 %v553
    %v4329 = vunpack.c.l.b16 %v554
    %v4330 = vunpack.c.l.b16 %v555
    %v4331 = vunpack.c.l.b16 %v556
    %v4332 = vunpack.c.l.b16 %v557
    %v4333 = vunpack.c.l.b16 %v558
    %v4334 = vunpack.c.l.b16 %v559
    %v4335 = vunpack.c.l.b16 %v560
    %v4336 = vunpack.c.l.b16 %v561
    %v4337 = vunpack.c.l.b16 %v562
    %v4338 = vunpack.c.l.b16 %v563
    %v4339 = vunpack.c.l.b16 %v564
    %v4340 = vunpack.c.l.b16 %v565
    %v4341 = vunpack.c.l.b16 %v566
    %v4342 = vunpack.c.l.b16 %v567
    %v4343 = vunpack.c.l.b16 %v568
    %v4344 = vunpack.c.l.b16 %v569
    %v4345 = vunpack.c.l.b16 %v570
    %v4346 = vunpack.c.l.b16 %v571
    %v4347 = vunpack.c.l.b16 %v572
    %v4348 = vunpack.c.l.b16 %v573
    %v4349 = vunpack.c.l.b16 %v574
    %v4350 = vunpack.c.l.b16 %v575
    %v4351 = vunpack.c.l.b16 %v576
    %v4352 = vunpack.c.l.b16 %v577
    %v4353 = vunpack.c.l.b16 %v578
    %v4354 = vunpack.c.l.b16 %v579
    %v4355 = vunpack.c.l.b16 %v580
    %v4356 = vunpack.c.l.b16 %v581
    %v4357 = vunpack.c.l.b16 %v582
    %v4358 = vunpack.c.l.b16 %v583
    %v4359 = vunpack.c.l.b16 %v584
    %v4360 = vunpack.c.l.b16 %v585
    %v4361 = vunpack.c.l.b16 %v586
    %v4362 = vunpack.c.l.b16 %v587
    %v4363 = vunpack.c.l.b16 %v588
    %v4364 = vunpack.c.l.b16 %v589
    %v4365 = vunpack.c.l.b16 %v590
    %v4366 = vunpack.c.l.b16 %v591
    %v4367 = vunpack.c.l.b16 %v592
    %v4368 = vunpack.c.l.b16 %v593
    %v4369 = vunpack.c.l.b16 %v594
    %v4370 = vunpack.c.l.b16 %v595
    %v4371 = vunpack.c.l.b16 %v596
    %v4372 = vunpack.c.l.b16 %v597
    %v4373 = vunpack.c.l.b16 %v598
    %v4374 = vunpack.c.l.b16 %v599
    %v4375 = vunpack.c.l.b16 %v600
    %v4376 = vunpack.c.l.b16 %v601
    %v4377 = vunpack.c.l.b16 %v602
    %v4378 = vunpack.c.l.b16 %v603
    %v4379 = vunpack.c.l.b16 %v604
    %v4380 = vunpack.c.l.b16 %v605
    %v4381 = vunpack.c.l.b16 %v606
    %v4382 = vunpack.c.l.b16 %v607
    %v4383 = vunpack.c.l.b16 %v608
    %v4384 = vunpack.c.l.b16 %v609
    %v4385 = vunpack.c.l.b16 %v610
    %v4386 = vunpack.c.l.b16 %v611
    %v4387 = vunpack.c.l.b16 %v612
    %v4388 = vunpack.c.l.b16 %v613
    %v4389 = vunpack.c.l.b16 %v614
    %v4390 = vunpack.c.l.b16 %v615
    %v4391 = vunpack.c.l.b16 %v616
    %v4392 = vunpack.c.l.b16 %v617
    %v4393 = vunpack.c.l.b16 %v618
    %v4394 = vunpack.c.l.b16 %v619
    %v4395 = vunpack.c.l.b16 %v620
    %v4396 = vunpack.c.l.b16 %v621
    %v4397 = vunpack.c.l.b16 %v622
    %v4398 = vunpack.c.l.b16 %v623
    %v4399 = vunpack.c.l.b16 %v624
    %v4400 = vunpack.c.l.b16 %v625
    %v4401 = vunpack.c.l.b16 %v626
    %v4402 = vunpack.c.l.b16 %v627
    %v4403 = vunpack.c.l.b16 %v628
    %v4404 = vunpack.c.l.b16 %v629
    %v4405 = vunpack.c.l.b16 %v630
    %v4406 = vunpack.c.l.b16 %v631
    %v4407 = vunpack.c.l.b16 %v632
    %v4408 = vunpack.c.l.b16 %v633
    %v4409 = vunpack.c.l.b16 %v634
    %v4410 = vunpack.c.l.b16 %v635
    %v4411 = vunpack.c.l.b16 %v636
    %v4412 = vunpack.c.l.b16 %v637
    %v4413 = vunpack.c.l.b16 %v638
    %v4414 = vunpack.c.l.b16 %v639
    %v4415 = vunpack.c.l.b16 %v640
    %v4416 = vunpack.c.l.b16 %v641
    %v4417 = vunpack.c.l.b16 %v642
    %v4418 = vunpack.c.l.b16 %v643
    %v4419 = vunpack.c.l.b16 %v644
    %v4420 = vunpack.c.l.b16 %v645
    %v4421 = vunpack.c.l.b16 %v646
    %v4422 = vunpack.c.l.b16 %v647
    %v4423 = vunpack.c.l.b16 %v648
    %v4424 = vunpack.c.l.b16 %v649
    %v4425 = vunpack.c.l.b16 %v650
    %v4426 = vunpack.c.l.b16 %v651
    %v4427 = vunpack.c.l.b16 %v652
    %v4428 = vunpack.c.l.b16 %v653
    %v4429 = vunpack.c.l.b16 %v654
    %v4430 = vunpack.c.l.b16 %v655
    %v4431 = vunpack.c.l.b16 %v656
    %v4432 = vunpack.c.l.b16 %v657
    %v4433 = vunpack.c.l.b16 %v658
    %v4434 = vunpack.c.l.b16 %v659
    %v4435 = vunpack.c.l.b16 %v660
    %v4436 = vunpack.c.l.b16 %v661
    %v4437 = vunpack.c.l.b16 %v662
    %v4438 = vunpack.c.l.b16 %v663
    %v4439 = vunpack.c.l.b16 %v664
    %v4440 = vunpack.c.l.b16 %v665
    %v4441 = vunpack.c.l.b16 %v666
    %v4442 = vunpack.c.l.b16 %v667
    %v4443 = vunpack.c.l.b16 %v668
    %v4444 = vunpack.c.l.b16 %v669
    %v4445 = vunpack.c.l.b16 %v670
    %v4446 = vunpack.c.l.b16 %v671
    %v4447 = vunpack.c.l.b16 %v672
    %v4448 = vunpack.c.l.b16 %v673
    %v4449 = vunpack.c.l.b16 %v674
    %v4450 = vunpack.c.l.b16 %v675
    %v4451 = vunpack.c.l.b16 %v676
    %v4452 = vunpack.c.l.b16 %v677
    %v4453 = vunpack.c.l.b16 %v678
    %v4454 = vunpack.c.l.b16 %v679
    %v4455 = vunpack.c.l.b16 %v680
    %v4456 = vunpack.c.l.b16 %v681
    %v4457 = vunpack.c.l.b16 %v682
    %v4458 = vunpack.c.l.b16 %v683
    %v4459 = vunpack.c.l.b16 %v684
    %v4460 = vunpack.c.l.b16 %v685
    %v4461 = vunpack.c.l.b16 %v686
    %v4462 = vunpack.c.l.b16 %v687
    %v4463 = vunpack.c.l.b16 %v688
    %v4464 = vunpack.c.l.b16 %v689
    %v4465 = vunpack.c.l.b16 %v690
    %v4466 = vunpack.c.l.b16 %v691
    %v4467 = vunpack.c.l.b16 %v692
    %v4468 = vunpack.c.l.b16 %v693
    %v4469 = vunpack.c.l.b16 %v694
    %v4470 = vunpack.c.l.b16 %v695
    %v4471 = vunpack.c.l.b16 %v696
    %v4472 = vunpack.c.l.b16 %v697
    %v4473 = vunpack.c.l.b16 %v698
    %v4474 = vunpack.c.l.b16 %v699
    %v4475 = vunpack.c.l.b16 %v700
    %v4476 = vunpack.c.l.b16 %v701
    %v4477 = vunpack.c.l.b16 %v702
    %v4478 = vunpack.c.l.b16 %v703
    %v4479 = vunpack.c.l.b16 %v704
    %v4480 = vunpack.c.l.b16 %v705
    %v4481 = vunpack.c.l.b16 %v706
    %v4482 = vunpack.c.l.b16 %v707
    %v4483 = vunpack.c.l.b16 %v708
    %v4484 = vunpack.c.l.b16 %v709
    %v4485 = vunpack.c.l.b16 %v710
    %v4486 = vunpack.c.l.b16 %v711
    %v4487 = vunpack.c.l.b16 %v712
    %v4488 = vunpack.c.l.b16 %v713
    %v4489 = vunpack.c.l.b16 %v714
    %v4490 = vunpack.c.l.b16 %v715
    %v4491 = vunpack.c.l.b16 %v716
    %v4492 = vunpack.c.l.b16 %v717
    %v4493 = vunpack.c.l.b16 %v718
    %v4494 = vunpack.c.l.b16 %v719
    %v4495 = vunpack.c.l.b16 %v720
    %v4496 = vunpack.c.l.b16 %v721
    %v4497 = vunpack.c.l.b16 %v722
    %v4498 = vunpack.c.l.b16 %v723
    %v4499 = vunpack.c.l.b16 %v724
    %v4500 = vunpack.c.l.b16 %v725
    %v4501 = vunpack.c.l.b16 %v726
    %v4502 = vunpack.c.l.b16 %v727
    %v4503 = vunpack.c.l.b16 %v728
    %v4504 = vunpack.c.l.b16 %v729
    %v4505 = vunpack.c.l.b16 %v730
    %v4506 = vunpack.c.l.b16 %v731
    %v4507 = vunpack.c.l.b16 %v732
    %v4508 = vunpack.c.l.b16 %v733
    %v4509 = vunpack.c.l.b16 %v734
    %v4510 = vunpack.c.l.b16 %v735
    %v4511 = vunpack.c.l.b16 %v736
    %v4512 = vunpack.c.l.b16 %v737
    %v4513 = vunpack.c.l.b16 %v738
    %v4514 = vunpack.c.l.b16 %v739
    %v4515 = vunpack.c.l.b16 %v740
    %v4516 = vunpack.c.l.b16 %v741
    %v4517 = vunpack.c.l.b16 %v742
    %v4518 = vunpack.c.l.b16 %v743
    %v4519 = vunpack.c.l.b16 %v744
    %v4520 = vunpack.c.l.b16 %v745
    %v4521 = vunpack.c.l.b16 %v746
    %v4522 = vunpack.c.l.b16 %v747
    %v4523 = vunpack.c.l.b16 %v748
    %v4524 = vunpack.c.l.b16 %v749
    %v4525 = vunpack.c.l.b16 %v750
    %v4526 = vunpack.c.l.b16 %v751
    %v4527 = vunpack.c.l.b16 %v752
    %v4528 = vunpack.c.l.b16 %v753
    %v4529 = vunpack.c.l.b16 %v754
    %v4530 = vunpack.c.l.b16 %v755
    %v4531 = vunpack.c.l.b16 %v756
    %v4532 = vunpack.c.l.b16 %v757
    %v4533 = vunpack.c.l.b16 %v758
    %v4534 = vunpack.c.l.b16 %v759
    %v4535 = vunpack.c.l.b16 %v760
    %v4536 = vunpack.c.l.b16 %v761
    %v4537 = vunpack.c.l.b16 %v762
    %v4538 = vunpack.c.l.b16 %v763
    %v4539 = vunpack.c.l.b16 %v764
    %v4540 = vunpack.c.l.b16 %v765
    %v4541 = vunpack.c.l.b16 %v766
    %v4542 = vunpack.c.l.b16 %v767
    %v4543 = vunpack.c.l.b16 %v768
    %v4544 = vunpack.c.l.b16 %v769
    %v4545 = vunpack.c.l.b16 %v770
    %v4546 = vunpack.c.l.b16 %v771
    %v4547 = vunpack.c.l.b16 %v772
    %v4548 = vunpack.c.l.b16 %v773
    %v4549 = vunpack.c.l.b16 %v774
    %v4550 = vunpack.c.l.b16 %v775
    %v4551 = vunpack.c.l.b16 %v776
    %v4552 = vunpack.c.l.b16 %v777
    %v4553 = vunpack.c.l.b16 %v778
    %v4554 = vunpack.c.l.b16 %v779
    %v4555 = vunpack.c.l.b16 %v780
    %v4556 = vunpack.c.l.b16 %v781
    %v4557 = vunpack.c.l.b16 %v782
    %v4558 = vunpack.c.l.b16 %v783
    %v4559 = vunpack.c.l.b16 %v784
    %v4560 = vunpack.c.l.b16 %v785
    %v4561 = vunpack.c.l.b16 %v786
    %v4562 = vunpack.c.l.b16 %v787
    %v4563 = vunpack.c.l.b16 %v788
    %v4564 = vunpack.c.l.b16 %v789
    %v4565 = vunpack.c.l.b16 %v790
    %v4566 = vunpack.c.l.b16 %v791
    %v4567 = vunpack.c.l.b16 %v792
    %v4568 = vunpack.c.l.b16 %v793
    %v4569 = vunpack.c.l.b16 %v794
    %v4570 = vunpack.c.l.b16 %v795
    %v4571 = vunpack.c.l.b16 %v796
    %v4572 = vunpack.c.l.b16 %v797
    %v4573 = vunpack.c.l.b16 %v798
    %v4574 = vunpack.c.l.b16 %v799
    %v4575 = vunpack.c.l.b16 %v800
    %v4576 = vunpack.c.l.b16 %v801
    %v4577 = vunpack.c.l.b16 %v802
    %v4578 = vunpack.c.l.b16 %v803
    %v4579 = vunpack.c.l.b16 %v804
    %v4580 = vunpack.c.l.b16 %v805
    %v4581 = vunpack.c.l.b16 %v806
    %v4582 = vunpack.c.l.b16 %v807
    %v4583 = vunpack.c.l.b16 %v808
    %v4584 = vunpack.c.l.b16 %v809
    %v4585 = vunpack.c.l.b16 %v810
    %v4586 = vunpack.c.l.b16 %v811
    %v4587 = vunpack.c.l.b16 %v812
    %v4588 = vunpack.c.l.b16 %v813
    %v4589 = vunpack.c.l.b16 %v814
    %v4590 = vunpack.c.l.b16 %v815
    %v4591 = vunpack.c.l.b16 %v816
    %v4592 = vunpack.c.l.b16 %v817
    %v4593 = vunpack.c.l.b16 %v818
    %v4594 = vunpack.c.l.b16 %v819
    %v4595 = vunpack.c.l.b16 %v820
    %v4596 = vunpack.c.l.b16 %v821
    %v4597 = vunpack.c.l.b16 %v822
    %v4598 = vunpack.c.l.b16 %v823
    %v4599 = vunpack.c.l.b16 %v824
    %v4600 = vunpack.c.l.b16 %v825
    %v4601 = vunpack.c.l.b16 %v826
    %v4602 = vunpack.c.l.b16 %v827
    %v4603 = vunpack.c.l.b16 %v828
    %v4604 = vunpack.c.l.b16 %v829
    %v4605 = vunpack.c.l.b16 %v830
    %v4606 = vunpack.c.l.b16 %v831
    %v4607 = vunpack.c.l.b16 %v832
    %v4608 = vunpack.c.l.b16 %v833
    %v4609 = vunpack.c.l.b16 %v834
    %v4610 = vunpack.c.l.b16 %v835
    %v4611 = vunpack.c.l.b16 %v836
    %v4612 = vunpack.c.l.b16 %v837
    %v4613 = vunpack.c.l.b16 %v838
    %v4614 = vunpack.c.l.b16 %v839
    %v4615 = vunpack.c.l.b16 %v840
    %v4616 = vunpack.c.l.b16 %v841
    %v4617 = vunpack.c.l.b16 %v842
    %v4618 = vunpack.c.l.b16 %v843
    %v4619 = vunpack.c.l.b16 %v844
    %v4620 = vunpack.c.l.b16 %v845
    %v4621 = vunpack.c.l.b16 %v846
    %v4622 = vunpack.c.l.b16 %v847
    %v4623 = vunpack.c.l.b16 %v848
    %v4624 = vunpack.c.l.b16 %v849
    %v4625 = vunpack.c.l.b16 %v850
    %v4626 = vunpack.c.l.b16 %v851
    %v4627 = vunpack.c.l.b16 %v852
    %v4628 = vunpack.c.l.b16 %v853
    %v4629 = vunpack.c.l.b16 %v854
    %v4630 = vunpack.c.l.b16 %v855
    %v4631 = vunpack.c.l.b16 %v856
    %v4632 = vunpack.c.l.b16 %v857
    %v4633 = vunpack.c.l.b16 %v858
    %v4634 = vunpack.c.l.b16 %v859
    %v4635 = vunpack.c.l.b16 %v860
    %v4636 = vunpack.c.l.b16 %v861
    %v4637 = vunpack.c.l.b16 %v862
    %v4638 = vunpack.c.l.b16 %v863
    %v4639 = vunpack.c.l.b16 %v864
    %v4640 = vunpack.c.l.b16 %v865
    %v4641 = vunpack.c.l.b16 %v866
    %v4642 = vunpack.c.l.b16 %v867
    %v4643 = vunpack.c.l.b16 %v868
    %v4644 = vunpack.c.l.b16 %v869
    %v4645 = vunpack.c.l.b16 %v870
    %v4646 = vunpack.c.l.b16 %v871
    %v4647 = vunpack.c.l.b16 %v872
    %v4648 = vunpack.c.l.b16 %v873
    %v4649 = vunpack.c.l.b16 %v874
    %v4650 = vunpack.c.l.b16 %v875
    %v4651 = vunpack.c.l.b16 %v876
    %v4652 = vunpack.c.l.b16 %v877
    %v4653 = vunpack.c.l.b16 %v878
    %v4654 = vunpack.c.l.b16 %v879
    %v4655 = vunpack.c.l.b16 %v880
    %v4656 = vunpack.c.l.b16 %v881
    %v4657 = vunpack.c.l.b16 %v882
    %v4658 = vunpack.c.l.b16 %v883
    %v4659 = vunpack.c.l.b16 %v884
    %v4660 = vunpack.c.l.b16 %v885
    %v4661 = vunpack.c.l.b16 %v886
    %v4662 = vunpack.c.l.b16 %v887
    %v4663 = vunpack.c.l.b16 %v888
    %v4664 = vunpack.c.l.b16 %v889
    %v4665 = vunpack.c.l.b16 %v890
    %v4666 = vunpack.c.l.b16 %v891
    %v4667 = vunpack.c.l.b16 %v892
    %v4668 = vunpack.c.l.b16 %v893
    %v4669 = vunpack.c.l.b16 %v894
    %v4670 = vunpack.c.l.b16 %v895
    %v4671 = vunpack.c.l.b16 %v896
    %v4672 = vunpack.c.l.b16 %v897
    %v4673 = vunpack.c.l.b16 %v898
    %v4674 = vunpack.c.l.b16 %v899
    %v4675 = vunpack.c.l.b16 %v900
    %v4676 = vunpack.c.l.b16 %v901
    %v4677 = vunpack.c.l.b16 %v902
    %v4678 = vunpack.c.l.b16 %v903
    %v4679 = vunpack.c.l.b16 %v904
    %v4680 = vunpack.c.l.b16 %v905
    %v4681 = vunpack.c.l.b16 %v906
    %v4682 = vunpack.c.l.b16 %v907
    %v4683 = vunpack.c.l.b16 %v908
    %v4684 = vunpack.c.l.b16 %v909
    %v4685 = vunpack.c.l.b16 %v910
    %v4686 = vunpack.c.l.b16 %v911
    %v4687 = vunpack.c.l.b16 %v912
    %v4688 = vunpack.c.l.b16 %v913
    %v4689 = vunpack.c.l.b16 %v914
    %v4690 = vunpack.c.l.b16 %v915
    %v4691 = vunpack.c.l.b16 %v916
    %v4692 = vunpack.c.l.b16 %v917
    %v4693 = vunpack.c.l.b16 %v918
    %v4694 = vunpack.c.l.b16 %v919
    %v4695 = vunpack.c.l.b16 %v920
    %v4696 = vunpack.c.l.b16 %v921
    %v4697 = vunpack.c.l.b16 %v922
    %v4698 = vunpack.c.l.b16 %v923
    %v4699 = vunpack.c.l.b16 %v924
    %v4700 = vunpack.c.l.b16 %v925
    %v4701 = vunpack.c.l.b16 %v926
    %v4702 = vunpack.c.l.b16 %v927
    %v4703 = vunpack.c.l.b16 %v928
    %v4704 = vunpack.c.l.b16 %v929
    %v4705 = vunpack.c.l.b16 %v930
    %v4706 = vunpack.c.l.b16 %v931
    %v4707 = vunpack.c.l.b16 %v932
    %v4708 = vunpack.c.l.b16 %v933
    %v4709 = vunpack.c.l.b16 %v934
    %v4710 = vunpack.c.l.b16 %v935
    %v4711 = vunpack.c.l.b16 %v936
    %v4712 = vunpack.c.l.b16 %v937
    %v4713 = vunpack.c.l.b16 %v938
    %v4714 = vunpack.c.l.b16 %v939
    %v4715 = vunpack.c.l.b16 %v940
    %v4716 = vunpack.c.l.b16 %v941
    %v4717 = vunpack.c.l.b16 %v942
    %v4718 = vunpack.c.l.b16 %v943
    %v4719 = vunpack.c.l.b16 %v944
    %v4720 = vunpack.c.l.b16 %v945
    %v4721 = vunpack.c.l.b16 %v946
    %v4722 = vunpack.c.l.b16 %v947
    %v4723 = vunpack.c.l.b16 %v948
    %v4724 = vunpack.c.l.b16 %v949
    %v4725 = vunpack.c.l.b16 %v950
    %v4726 = vunpack.c.l.b16 %v951
    %v4727 = vunpack.c.l.b16 %v952
    %v4728 = vunpack.c.l.b16 %v953
    %v4729 = vunpack.c.l.b16 %v954
    %v4730 = vunpack.c.l.b16 %v955
    %v4731 = vunpack.c.l.b16 %v956
    %v4732 = vunpack.c.l.b16 %v957
    %v4733 = vunpack.c.l.b16 %v958
    %v4734 = vunpack.c.l.b16 %v959
    %v4735 = vunpack.c.l.b16 %v960
    %v4736 = vunpack.c.l.b16 %v961
    %v4737 = vunpack.c.l.b16 %v962
    %v4738 = vunpack.c.l.b16 %v963
    %v4739 = vunpack.c.l.b16 %v964
    %v4740 = vunpack.c.l.b16 %v965
    %v4741 = vunpack.c.l.b16 %v966
    %v4742 = vunpack.c.l.b16 %v967
    %v4743 = vunpack.c.l.b16 %v968
    %v4744 = vunpack.c.l.b16 %v969
    %v4745 = vunpack.c.l.b16 %v970
    %v4746 = vunpack.c.l.b16 %v971
    %v4747 = vunpack.c.l.b16 %v972
    %v4748 = vunpack.c.l.b16 %v973
    %v4749 = vunpack.c.l.b16 %v974
    %v4750 = vunpack.c.l.b16 %v975
    %v4751 = vunpack.c.l.b16 %v976
    %v4752 = vunpack.c.l.b16 %v977
    %v4753 = vunpack.c.l.b16 %v978
    %v4754 = vunpack.c.l.b16 %v979
    %v4755 = vunpack.c.l.b16 %v980
    %v4756 = vunpack.c.l.b16 %v981
    %v4757 = vunpack.c.l.b16 %v982
    %v4758 = vunpack.c.l.b16 %v983
    %v4759 = vunpack.c.l.b16 %v984
    %v4760 = vunpack.c.l.b16 %v985
    %v4761 = vunpack.c.l.b16 %v986
    %v4762 = vunpack.c.l.b16 %v987
    %v4763 = vunpack.c.l.b16 %v988
    %v4764 = vunpack.c.l.b16 %v989
    %v4765 = vunpack.c.l.b16 %v990
    %v4766 = vunpack.c.l.b16 %v991
    %v4767 = vunpack.c.l.b16 %v992
    %v4768 = vunpack.c.l.b16 %v993
    %v4769 = vunpack.c.l.b16 %v994
    %v4770 = vunpack.c.l.b16 %v995
    %v4771 = vunpack.c.l.b16 %v996
    %v4772 = vunpack.c.l.b16 %v997
    %v4773 = vunpack.c.l.b16 %v998
    %v4774 = vunpack.c.l.b16 %v999
    %v4775 = vunpack.c.l.b16 %v1000
    %v4776 = vunpack.c.l.b16 %v1001
    %v4777 = vunpack.c.l.b16 %v1002
    %v4778 = vunpack.c.l.b16 %v1003
    %v4779 = vunpack.c.l.b16 %v1004
    %v4780 = vunpack.c.l.b16 %v1005
    %v4781 = vunpack.c.l.b16 %v1006
    %v4782 = vunpack.c.l.b16 %v1007
    %v4783 = vunpack.c.l.b16 %v1008
    %v4784 = vunpack.c.l.b16 %v1009
    %v4785 = vunpack.c.l.b16 %v1010
    %v4786 = vunpack.c.l.b16 %v1011
    %v4787 = vunpack.c.l.b16 %v1012
    %v4788 = vunpack.c.l.b16 %v1013
    %v4789 = vunpack.c.l.b16 %v1014
    %v4790 = vunpack.c.l.b16 %v1015
    %v4791 = vunpack.c.l.b16 %v1016
    %v4792 = vunpack.c.l.b16 %v1017
    %v4793 = vunpack.c.l.b16 %v1018
    %v4794 = vunpack.c.l.b16 %v1019
    %v4795 = vunpack.c.l.b16 %v1020
    %v4796 = vunpack.c.l.b16 %v1021
    %v4797 = vunpack.c.l.b16 %v1022
    %v4798 = vunpack.c.l.b16 %v1023
    %v4799 = vunpack.c.l.b16 %v1024
    %v4800 = vunpack.c.l.b16 %v1025
    %v4801 = vunpack.c.l.b16 %v1026
    %v4802 = vunpack.c.l.b16 %v1027
    %v4803 = vunpack.c.l.b16 %v1028
    %v4804 = vunpack.c.l.b16 %v1029
    %v4805 = vunpack.c.l.b16 %v1030
    %v4806 = vunpack.c.l.b16 %v1031
    %v4807 = vunpack.c.l.b16 %v1032
    %v4808 = vunpack.c.l.b16 %v1033
    %v4809 = vunpack.c.l.b16 %v1034
    %v4810 = vunpack.c.l.b16 %v1035
    %v4811 = vunpack.c.l.b16 %v1036
    %v4812 = vunpack.c.l.b16 %v1037
    %v4813 = vunpack.c.l.b16 %v1038
    %v4814 = vunpack.c.l.b16 %v1039
    %v4815 = vunpack.c.l.b16 %v1040
    %v4816 = vunpack.c.l.b16 %v1041
    %v4817 = vunpack.c.l.b16 %v1042
    %v4818 = vunpack.c.l.b16 %v1043
    %v4819 = vunpack.c.l.b16 %v1044
    %v4820 = vunpack.c.l.b16 %v1045
    %v4821 = vunpack.c.l.b16 %v1046
    %v4822 = vunpack.c.l.b16 %v1047
    %v4823 = vunpack.c.l.b16 %v1048
    %v4824 = vunpack.c.l.b16 %v1049
    %v4825 = vunpack.c.l.b16 %v1050
    %v4826 = vunpack.c.l.b16 %v1051
    %v4827 = vunpack.c.l.b16 %v1052
    %v4828 = vunpack.c.l.b16 %v1053
    %v4829 = vunpack.c.l.b16 %v1054
    %v4830 = vunpack.c.l.b16 %v1055
    %v4831 = vunpack.c.l.b16 %v1056
    %v4832 = vunpack.c.l.b16 %v1057
    %v4833 = vunpack.c.l.b16 %v1058
    %v4834 = vunpack.c.l.b16 %v1059
    %v4835 = vunpack.c.l.b16 %v1060
    %v4836 = vunpack.c.l.b16 %v1061
    %v4837 = vunpack.c.l.b16 %v1062
    %v4838 = vunpack.c.l.b16 %v1063
    %v4839 = vunpack.c.l.b16 %v1064
    %v4840 = vunpack.c.l.b16 %v1065
    %v4841 = vunpack.c.l.b16 %v1066
    %v4842 = vunpack.c.l.b16 %v1067
    %v4843 = vunpack.c.l.b16 %v1068
    %v4844 = vunpack.c.l.b16 %v1069
    %v4845 = vunpack.c.l.b16 %v1070
    %v4846 = vunpack.c.l.b16 %v1071
    %v4847 = vunpack.c.l.b16 %v1072
    %v4848 = vunpack.c.l.b16 %v1073
    %v4849 = vunpack.c.l.b16 %v1074
    %v4850 = vunpack.c.l.b16 %v1075
    %v4851 = vunpack.c.l.b16 %v1076
    %v4852 = vunpack.c.l.b16 %v1077
    %v4853 = vunpack.c.l.b16 %v1078
    %v4854 = vunpack.c.l.b16 %v1079
    %v4855 = vunpack.c.l.b16 %v1080
    %v4856 = vunpack.c.l.b16 %v1081
    %v4857 = vunpack.c.l.b16 %v1082
    %v4858 = vunpack.c.l.b16 %v1083
    %v4859 = vunpack.c.l.b16 %v1084
    %v4860 = vunpack.c.l.b16 %v1085
    %v4861 = vunpack.c.l.b16 %v1086
    %v4862 = vunpack.c.l.b16 %v1087
    %v4863 = vunpack.c.l.b16 %v1088
    %v4864 = vunpack.c.l.b16 %v1089
    %v4865 = vunpack.c.l.b16 %v1090
    %v4866 = vunpack.c.l.b16 %v1091
    %v4867 = vunpack.c.l.b16 %v1092
    %v4868 = vunpack.c.l.b16 %v1093
    %v4869 = vunpack.c.l.b16 %v1094
    %v4870 = vunpack.c.l.b16 %v1095
    %v4871 = vunpack.c.l.b16 %v1096
    %v4872 = vunpack.c.l.b16 %v1097
    %v4873 = vunpack.c.l.b16 %v1098
    %v4874 = vunpack.c.l.b16 %v1099
    %v4875 = vunpack.c.l.b16 %v1100
    %v4876 = vunpack.c.l.b16 %v1101
    %v4877 = vunpack.c.l.b16 %v1102
    %v4878 = vunpack.c.l.b16 %v1103
    %v4879 = vunpack.c.l.b16 %v1104
    %v4880 = vunpack.c.l.b16 %v1105
    %v4881 = vunpack.c.l.b16 %v1106
    %v4882 = vunpack.c.l.b16 %v1107
    %v4883 = vunpack.c.l.b16 %v1108
    %v4884 = vunpack.c.l.b16 %v1109
    %v4885 = vunpack.c.l.b16 %v1110
    %v4886 = vunpack.c.l.b16 %v1111
    %v4887 = vunpack.c.l.b16 %v1112
    %v4888 = vunpack.c.l.b16 %v1113
    %v4889 = vunpack.c.l.b16 %v1114
    %v4890 = vunpack.c.l.b16 %v1115
    %v4891 = vunpack.c.l.b16 %v1116
    %v4892 = vunpack.c.l.b16 %v1117
    %v4893 = vunpack.c.l.b16 %v1118
    %v4894 = vunpack.c.l.b16 %v1119
    %v4895 = vunpack.c.l.b16 %v1120
    %v4896 = vunpack.c.l.b16 %v1121
    %v4897 = vunpack.c.l.b16 %v1122
    %v4898 = vunpack.c.l.b16 %v1123
    %v4899 = vunpack.c.l.b16 %v1124
    %v4900 = vunpack.c.l.b16 %v1125
    %v4901 = vunpack.c.l.b16 %v1126
    %v4902 = vunpack.c.l.b16 %v1127
    %v4903 = vunpack.c.l.b16 %v1128
    %v4904 = vunpack.c.l.b16 %v1129
    %v4905 = vunpack.c.l.b16 %v1130
    %v4906 = vunpack.c.l.b16 %v1131
    %v4907 = vunpack.c.l.b16 %v1132
    %v4908 = vunpack.c.l.b16 %v1133
    %v4909 = vunpack.c.l.b16 %v1134
    %v4910 = vunpack.c.l.b16 %v1135
    %v4911 = vunpack.c.l.b16 %v1136
    %v4912 = vunpack.c.l.b16 %v1137
    %v4913 = vunpack.c.l.b16 %v1138
    %v4914 = vunpack.c.l.b16 %v1139
    %v4915 = vunpack.c.l.b16 %v1140
    %v4916 = vunpack.c.l.b16 %v1141
    %v4917 = vunpack.c.l.b16 %v1142
    %v4918 = vunpack.c.l.b16 %v1143
    %v4919 = vunpack.c.l.b16 %v1144
    %v4920 = vunpack.c.l.b16 %v1145
    %v4921 = vunpack.c.l.b16 %v1146
    %v4922 = vunpack.c.l.b16 %v1147
    %v4923 = vunpack.c.l.b16 %v1148
    %v4924 = vunpack.c.l.b16 %v1149
    %v4925 = vunpack.c.l.b16 %v1150
    %v4926 = vunpack.c.l.b16 %v1151
    %v4927 = vunpack.c.l.b16 %v1152
    %v4928 = vunpack.c.l.b16 %v1153
    %v4929 = vunpack.c.l.b16 %v1154
    %v4930 = vunpack.c.l.b16 %v1155
    %v4931 = vunpack.c.l.b16 %v1156
    %v4932 = vunpack.c.l.b16 %v1157
    %v4933 = vunpack.c.l.b16 %v1158
    %v4934 = vunpack.c.l.b16 %v1159
    %v4935 = vunpack.c.l.b16 %v1160
    %v4936 = vunpack.c.l.b16 %v1161
    %v4937 = vunpack.c.l.b16 %v1162
    %v4938 = vunpack.c.l.b16 %v1163
    %v4939 = vunpack.c.l.b16 %v1164
    %v4940 = vunpack.c.l.b16 %v1165
    %v4941 = vunpack.c.l.b16 %v1166
    %v4942 = vunpack.c.l.b16 %v1167
    %v4943 = vunpack.c.l.b16 %v1168
    %v4944 = vunpack.c.l.b16 %v1169
    %v4945 = vunpack.c.l.b16 %v1170
    %v4946 = vunpack.c.l.b16 %v1171
    %v4947 = vunpack.c.l.b16 %v1172
    %v4948 = vunpack.c.l.b16 %v1173
    %v4949 = vunpack.c.l.b16 %v1174
    %v4950 = vunpack.c.l.b16 %v1175
    %v4951 = vunpack.c.l.b16 %v1176
    %v4952 = vunpack.c.l.b16 %v1177
    %v4953 = vunpack.c.l.b16 %v1178
    %v4954 = vunpack.c.l.b16 %v1179
    %v4955 = vunpack.c.l.b16 %v1180
    %v4956 = vunpack.c.l.b16 %v1181
    %v4957 = vunpack.c.l.b16 %v1182
    %v4958 = vunpack.c.l.b16 %v1183
    %v4959 = vunpack.c.l.b16 %v1184
    %v4960 = vunpack.c.l.b16 %v1185
    %v4961 = vunpack.c.l.b16 %v1186
    %v4962 = vunpack.c.l.b16 %v1187
    %v4963 = vunpack.c.l.b16 %v1188
    %v4964 = vunpack.c.l.b16 %v1189
    %v4965 = vunpack.c.l.b16 %v1190
    %v4966 = vunpack.c.l.b16 %v1191
    %v4967 = vunpack.c.l.b16 %v1192
    %v4968 = vunpack.c.l.b16 %v1193
    %v4969 = vunpack.c.l.b16 %v1194
    %v4970 = vunpack.c.l.b16 %v1195
    %v4971 = vunpack.c.l.b16 %v1196
    %v4972 = vunpack.c.l.b16 %v1197
    %v4973 = vunpack.c.l.b16 %v1198
    %v4974 = vunpack.c.l.b16 %v1199
    %v4975 = vunpack.c.l.b16 %v1200
    %v4976 = vunpack.c.l.b16 %v1201
    %v4977 = vunpack.c.l.b16 %v1202
    %v4978 = vunpack.c.l.b16 %v1203
    %v4979 = vunpack.c.l.b16 %v1204
    %v4980 = vunpack.c.l.b16 %v1205
    %v4981 = vunpack.c.l.b16 %v1206
    %v4982 = vunpack.c.l.b16 %v1207
    %v4983 = vunpack.c.l.b16 %v1208
    %v4984 = vunpack.c.l.b16 %v1209
    %v4985 = vunpack.c.l.b16 %v1210
    %v4986 = vunpack.c.l.b16 %v1211
    %v4987 = vunpack.c.l.b16 %v1212
    %v4988 = vunpack.c.l.b16 %v1213
    %v4989 = vunpack.c.l.b16 %v1214
    %v4990 = vunpack.c.l.b16 %v1215
    %v4991 = vunpack.c.l.b16 %v1216
    %v4992 = vunpack.c.l.b16 %v1217
    %v4993 = vunpack.c.l.b16 %v1218
    %v4994 = vunpack.c.l.b16 %v1219
    %v4995 = vunpack.c.l.b16 %v1220
    %v4996 = vunpack.c.l.b16 %v1221
    %v4997 = vunpack.c.l.b16 %v1222
    %v4998 = vunpack.c.l.b16 %v1223
    %v4999 = vunpack.c.l.b16 %v1224
    %v5000 = vunpack.c.l.b16 %v1225
    %v5001 = vunpack.c.l.b16 %v1226
    %v5002 = vunpack.c.l.b16 %v1227
    %v5003 = vunpack.c.l.b16 %v1228
    %v5004 = vunpack.c.l.b16 %v1229
    %v5005 = vunpack.c.l.b16 %v1230
    %v5006 = vunpack.c.l.b16 %v1231
    %v5007 = vunpack.c.l.b16 %v1232
    %v5008 = vunpack.c.l.b16 %v1233
    %v5009 = vunpack.c.l.b16 %v1234
    %v5010 = vunpack.c.l.b16 %v1235
    %v5011 = vunpack.c.l.b16 %v1236
    %v5012 = vunpack.c.l.b16 %v1237
    %v5013 = vunpack.c.l.b16 %v1238
    %v5014 = vunpack.c.l.b16 %v1239
    %v5015 = vunpack.c.l.b16 %v1240
    %v5016 = vunpack.c.l.b16 %v1241
    %v5017 = vunpack.c.l.b16 %v1242
    %v5018 = vunpack.c.l.b16 %v1243
    %v5019 = vunpack.c.l.b16 %v1244
    %v5020 = vunpack.c.l.b16 %v1245
    %v5021 = vunpack.c.l.b16 %v1246
    %v5022 = vunpack.c.l.b16 %v1247
    %v5023 = vunpack.c.l.b16 %v1248
    %v5024 = vunpack.c.l.b16 %v1249
    %v5025 = vunpack.c.l.b16 %v1250
    %v5026 = vunpack.c.l.b16 %v1251
    %v5027 = vunpack.c.l.b16 %v1252
    %v5028 = vunpack.c.l.b16 %v1253
    %v5029 = vunpack.c.l.b16 %v1254
    %v5030 = vunpack.c.l.b16 %v1255
    %v5031 = vunpack.c.l.b16 %v1256
    %v5032 = vunpack.c.l.b16 %v1257
    %v5033 = vunpack.c.l.b16 %v1258
    %v5034 = vunpack.c.l.b16 %v1259
    %v5035 = vunpack.c.l.b16 %v1260
    %v5036 = vunpack.c.l.b16 %v1261
    %v5037 = vunpack.c.l.b16 %v1262
    %v5038 = vunpack.c.l.b16 %v1263
    %v5039 = vunpack.c.l.b16 %v1264
    %v5040 = vunpack.c.l.b16 %v1265
    %v5041 = vunpack.c.l.b16 %v1266
    %v5042 = vunpack.c.l.b16 %v1267
    %v5043 = vunpack.c.l.b16 %v1268
    %v5044 = vunpack.c.l.b16 %v1269
    %v5045 = vunpack.c.l.b16 %v1270
    %v5046 = vunpack.c.l.b16 %v1271
    %v5047 = vunpack.c.l.b16 %v1272
    %v5048 = vunpack.c.l.b16 %v1273
    %v5049 = vunpack.c.l.b16 %v1274
    %v5050 = vunpack.c.l.b16 %v1275
    %v5051 = vunpack.c.l.b16 %v1276
    %v5052 = vunpack.c.l.b16 %v1277
    %v5053 = vunpack.c.l.b16 %v1278
    %v5054 = vunpack.c.l.b16 %v1279
    %v5055 = vunpack.c.l.b16 %v1280
    %v5056 = vunpack.c.l.b16 %v1281
    %v5057 = vunpack.c.l.b16 %v1282
    %v5058 = vunpack.c.l.b16 %v1283
    %v5059 = vunpack.c.l.b16 %v1284
    %v5060 = vunpack.c.l.b16 %v1285
    %v5061 = vunpack.c.l.b16 %v1286
    %v5062 = vunpack.c.l.b16 %v1287
    %v5063 = vunpack.c.l.b16 %v1288
    %v5064 = vunpack.c.l.b16 %v1289
    %v5065 = vunpack.c.l.b16 %v1290
    %v5066 = vunpack.c.l.b16 %v1291
    %v5067 = vunpack.c.l.b16 %v1292
    %v5068 = vunpack.c.l.b16 %v1293
    %v5069 = vunpack.c.l.b16 %v1294
    %v5070 = vunpack.c.l.b16 %v1295
    %v5071 = vunpack.c.l.b16 %v1296
    %v5072 = vunpack.c.l.b16 %v1297
    %v5073 = vunpack.c.l.b16 %v1298
    %v5074 = vunpack.c.l.b16 %v1299
    %v5075 = vunpack.c.l.b16 %v1300
    %v5076 = vunpack.c.l.b16 %v1301
    %v5077 = vunpack.c.l.b16 %v1302
    %v5078 = vunpack.c.l.b16 %v1303
    %v5079 = vunpack.c.l.b16 %v1304
    %v5080 = vunpack.c.l.b16 %v1305
    %v5081 = vunpack.c.l.b16 %v1306
    %v5082 = vunpack.c.l.b16 %v1307
    %v5083 = vunpack.c.l.b16 %v1308
    %v5084 = vunpack.c.l.b16 %v1309
    %v5085 = vunpack.c.l.b16 %v1310
    %v5086 = vunpack.c.l.b16 %v1311
    %v5087 = vunpack.c.l.b16 %v1312
    %v5088 = vunpack.c.l.b16 %v1313
    %v5089 = vunpack.c.l.b16 %v1314
    %v5090 = vunpack.c.l.b16 %v1315
    %v5091 = vunpack.c.l.b16 %v1316
    %v5092 = vunpack.c.l.b16 %v1317
    %v5093 = vunpack.c.l.b16 %v1318
    %v5094 = vunpack.c.l.b16 %v1319
    %v5095 = vunpack.c.l.b16 %v1320
    %v5096 = vunpack.c.l.b16 %v1321
    %v5097 = vunpack.c.l.b16 %v1322
    %v5098 = vunpack.c.l.b16 %v1323
    %v5099 = vunpack.c.l.b16 %v1324
    %v5100 = vunpack.c.l.b16 %v1325
    %v5101 = vunpack.c.l.b16 %v1326
    %v5102 = vunpack.c.l.b16 %v1327
    %v5103 = vunpack.c.l.b16 %v1328
    %v5104 = vunpack.c.l.b16 %v1329
    %v5105 = vunpack.c.l.b16 %v1330
    %v5106 = vunpack.c.l.b16 %v1331
    %v5107 = vunpack.c.l.b16 %v1332
    %v5108 = vunpack.c.l.b16 %v1333
    %v5109 = vunpack.c.l.b16 %v1334
    %v5110 = vunpack.c.l.b16 %v1335
    %v5111 = vunpack.c.l.b16 %v1336
    %v5112 = vunpack.c.l.b16 %v1337
    %v5113 = vunpack.c.l.b16 %v1338
    %v5114 = vunpack.c.l.b16 %v1339
    %v5115 = vunpack.c.l.b16 %v1340
    %v5116 = vunpack.c.l.b16 %v1341
    %v5117 = vunpack.c.l.b16 %v1342
    %v5118 = vunpack.c.l.b16 %v1343
    %v5119 = vunpack.c.l.b16 %v1344
    %v5120 = vunpack.c.l.b16 %v1345
    %v5121 = vunpack.c.l.b16 %v1346
    %v5122 = vunpack.c.l.b16 %v1347
    %v5123 = vunpack.c.l.b16 %v1348
    %v5124 = vunpack.c.l.b16 %v1349
    %v5125 = vunpack.c.l.b16 %v1350
    %v5126 = vunpack.c.l.b16 %v1351
    %v5127 = vunpack.c.l.b16 %v1352
    %v5128 = vunpack.c.l.b16 %v1353
    %v5129 = vunpack.c.l.b16 %v1354
    %v5130 = vunpack.c.l.b16 %v1355
    %v5131 = vunpack.c.l.b16 %v1356
    %v5132 = vunpack.c.l.b16 %v1357
    %v5133 = vunpack.c.l.b16 %v1358
    %v5134 = vunpack.c.l.b16 %v1359
    %v5135 = vunpack.c.l.b16 %v1360
    %v5136 = vunpack.c.l.b16 %v1361
    %v5137 = vunpack.c.l.b16 %v1362
    %v5138 = vunpack.c.l.b16 %v1363
    %v5139 = vunpack.c.l.b16 %v1364
    %v5140 = vunpack.c.l.b16 %v1365
    %v5141 = vunpack.c.l.b16 %v1366
    %v5142 = vunpack.c.l.b16 %v1367
    %v5143 = vunpack.c.l.b16 %v1368
    %v5144 = vunpack.c.l.b16 %v1369
    %v5145 = vunpack.c.l.b16 %v1370
    %v5146 = vunpack.c.l.b16 %v1371
    %v5147 = vunpack.c.l.b16 %v1372
    %v5148 = vunpack.c.l.b16 %v1373
    %v5149 = vunpack.c.l.b16 %v1374
    %v5150 = vunpack.c.l.b16 %v1375
    %v5151 = vunpack.c.l.b16 %v1376
    %v5152 = vunpack.c.l.b16 %v1377
    %v5153 = vunpack.c.l.b16 %v1378
    %v5154 = vunpack.c.l.b16 %v1379
    %v5155 = vunpack.c.l.b16 %v1380
    %v5156 = vunpack.c.l.b16 %v1381
    %v5157 = vunpack.c.l.b16 %v1382
    %v5158 = vunpack.c.l.b16 %v1383
    %v5159 = vunpack.c.l.b16 %v1384
    %v5160 = vunpack.c.l.b16 %v1385
    %v5161 = vunpack.c.l.b16 %v1386
    %v5162 = vunpack.c.l.b16 %v1387
    %v5163 = vunpack.c.l.b16 %v1388
    %v5164 = vunpack.c.l.b16 %v1389
    %v5165 = vunpack.c.l.b16 %v1390
    %v5166 = vunpack.c.l.b16 %v1391
    %v5167 = vunpack.c.l.b16 %v1392
    %v5168 = vunpack.c.l.b16 %v1393
    %v5169 = vunpack.c.l.b16 %v1394
    %v5170 = vunpack.c.l.b16 %v1395
    %v5171 = vunpack.c.l.b16 %v1396
    %v5172 = vunpack.c.l.b16 %v1397
    %v5173 = vunpack.c.l.b16 %v1398
    %v5174 = vunpack.c.l.b16 %v1399
    %v5175 = vunpack.c.l.b16 %v1400
    %v5176 = vunpack.c.l.b16 %v1401
    %v5177 = vunpack.c.l.b16 %v1402
    %v5178 = vunpack.c.l.b16 %v1403
    %v5179 = vunpack.c.l.b16 %v1404
    %v5180 = vunpack.c.l.b16 %v1405
    %v5181 = vunpack.c.l.b16 %v1406
    %v5182 = vunpack.c.l.b16 %v1407
    %v5183 = vunpack.c.l.b16 %v1408
    %v5184 = vunpack.c.l.b16 %v1409
    %v5185 = vunpack.c.l.b16 %v1410
    %v5186 = vunpack.c.l.b16 %v1411
    %v5187 = vunpack.c.l.b16 %v1412
    %v5188 = vunpack.c.l.b16 %v1413
    %v5189 = vunpack.c.l.b16 %v1414
    %v5190 = vunpack.c.l.b16 %v1415
    %v5191 = vunpack.c.l.b16 %v1416
    %v5192 = vunpack.c.l.b16 %v1417
    %v5193 = vunpack.c.l.b16 %v1418
    %v5194 = vunpack.c.l.b16 %v1419
    %v5195 = vunpack.c.l.b16 %v1420
    %v5196 = vunpack.c.l.b16 %v1421
    %v5197 = vunpack.c.l.b16 %v1422
    %v5198 = vunpack.c.l.b16 %v1423
    %v5199 = vunpack.c.l.b16 %v1424
    %v5200 = vunpack.c.l.b16 %v1425
    %v5201 = vunpack.c.l.b16 %v1426
    %v5202 = vunpack.c.l.b16 %v1427
    %v5203 = vunpack.c.l.b16 %v1428
    %v5204 = vunpack.c.l.b16 %v1429
    %v5205 = vunpack.c.l.b16 %v1430
    %v5206 = vunpack.c.l.b16 %v1431
    %v5207 = vunpack.c.l.b16 %v1432
    %v5208 = vunpack.c.l.b16 %v1433
    %v5209 = vunpack.c.l.b16 %v1434
    %v5210 = vunpack.c.l.b16 %v1435
    %v5211 = vunpack.c.l.b16 %v1436
    %v5212 = vunpack.c.l.b16 %v1437
    %v5213 = vunpack.c.l.b16 %v1438
    %v5214 = vunpack.c.l.b16 %v1439
    %v5215 = vunpack.c.l.b16 %v1440
    %v5216 = vunpack.c.l.b16 %v1441
    %v5217 = vunpack.c.l.b16 %v1442
    %v5218 = vunpack.c.l.b16 %v1443
    %v5219 = vunpack.c.l.b16 %v1444
    %v5220 = vunpack.c.l.b16 %v1445
    %v5221 = vunpack.c.l.b16 %v1446
    %v5222 = vunpack.c.l.b16 %v1447
    %v5223 = vunpack.c.l.b16 %v1448
    %v5224 = vunpack.c.l.b16 %v1449
    %v5225 = vunpack.c.l.b16 %v1450
    %v5226 = vunpack.c.l.b16 %v1451
    %v5227 = vunpack.c.l.b16 %v1452
    %v5228 = vunpack.c.l.b16 %v1453
    %v5229 = vunpack.c.l.b16 %v1454
    %v5230 = vunpack.c.l.b16 %v1455
    %v5231 = vunpack.c.l.b16 %v1456
    %v5232 = vunpack.c.l.b16 %v1457
    %v5233 = vunpack.c.l.b16 %v1458
    %v5234 = vunpack.c.l.b16 %v1459
    %v5235 = vunpack.c.l.b16 %v1460
    %v5236 = vunpack.c.l.b16 %v1461
    %v5237 = vunpack.c.l.b16 %v1462
    %v5238 = vunpack.c.l.b16 %v1463
    %v5239 = vunpack.c.l.b16 %v1464
    %v5240 = vunpack.c.l.b16 %v1465
    %v5241 = vunpack.c.l.b16 %v1466
    %v5242 = vunpack.c.l.b16 %v1467
    %v5243 = vunpack.c.l.b16 %v1468
    %v5244 = vunpack.c.l.b16 %v1469
    %v5245 = vunpack.c.l.b16 %v1470
    %v5246 = vunpack.c.l.b16 %v1471
    %v5247 = vunpack.c.l.b16 %v1472
    %v5248 = vunpack.c.l.b16 %v1473
    %v5249 = vunpack.c.l.b16 %v1474
    %v5250 = vunpack.c.l.b16 %v1475
    %v5251 = vunpack.c.l.b16 %v1476
    %v5252 = vunpack.c.l.b16 %v1477
    %v5253 = vunpack.c.l.b16 %v1478
    %v5254 = vunpack.c.l.b16 %v1479
    %v5255 = vunpack.c.l.b16 %v1480
    %v5256 = vunpack.c.l.b16 %v1481
    %v5257 = vunpack.c.l.b16 %v1482
    %v5258 = vunpack.c.l.b16 %v1483
    %v5259 = vunpack.c.l.b16 %v1484
    %v5260 = vunpack.c.l.b16 %v1485
    %v5261 = vunpack.c.l.b16 %v1486
    %v5262 = vunpack.c.l.b16 %v1487
    %v5263 = vunpack.c.l.b16 %v1488
    %v5264 = vunpack.c.l.b16 %v1489
    %v5265 = vunpack.c.l.b16 %v1490
    %v5266 = vunpack.c.l.b16 %v1491
    %v5267 = vunpack.c.l.b16 %v1492
    %v5268 = vunpack.c.l.b16 %v1493
    %v5269 = vunpack.c.l.b16 %v1494
    %v5270 = vunpack.c.l.b16 %v1495
    %v5271 = vunpack.c.l.b16 %v1496
    %v5272 = vunpack.c.l.b16 %v1497
    %v5273 = vunpack.c.l.b16 %v1498
    %v5274 = vunpack.c.l.b16 %v1499
    %v5275 = vunpack.c.l.b16 %v1500
    %v5276 = vunpack.c.l.b16 %v1501
    %v5277 = vunpack.c.l.b16 %v1502
    %v5278 = vunpack.c.l.b16 %v1503
    %v5279 = vunpack.c.l.b16 %v1504
    %v5280 = vunpack.c.l.b16 %v1505
    %v5281 = vunpack.c.l.b16 %v1506
    %v5282 = vunpack.c.l.b16 %v1507
    %v5283 = vunpack.c.l.b16 %v1508
    %v5284 = vunpack.c.l.b16 %v1509
    %v5285 = vunpack.c.l.b16 %v1510
    %v5286 = vunpack.c.l.b16 %v1511
    %v5287 = vunpack.c.l.b16 %v1512
    %v5288 = vunpack.c.l.b16 %v1513
    %v5289 = vunpack.c.l.b16 %v1514
    %v5290 = vunpack.c.l.b16 %v1515
    %v5291 = vunpack.c.l.b16 %v1516
    %v5292 = vunpack.c.l.b16 %v1517
    %v5293 = vunpack.c.l.b16 %v1518
    %v5294 = vunpack.c.l.b16 %v1519
    %v5295 = vunpack.c.l.b16 %v1520
    %v5296 = vunpack.c.l.b16 %v1521
    %v5297 = vunpack.c.l.b16 %v1522
    %v5298 = vunpack.c.l.b16 %v1523
    %v5299 = vunpack.c.l.b16 %v1524
    %v5300 = vunpack.c.l.b16 %v1525
    %v5301 = vunpack.c.l.b16 %v1526
    %v5302 = vunpack.c.l.b16 %v1527
    %v5303 = vunpack.c.l.b16 %v1528
    %v5304 = vunpack.c.l.b16 %v1529
    %v5305 = vunpack.c.l.b16 %v1530
    %v5306 = vunpack.c.l.b16 %v1531
    %v5307 = vunpack.c.l.b16 %v1532
    %v5308 = vunpack.c.l.b16 %v1533
    %v5309 = vunpack.c.l.b16 %v1534
    %v5310 = vunpack.c.l.b16 %v1535
    %v5311 = vunpack.c.l.b16 %v1536
    %v5312 = vunpack.c.l.b16 %v1537
    %v5313 = vunpack.c.l.b16 %v1538
    %v5314 = vunpack.c.l.b16 %v1539
    %v5315 = vunpack.c.l.b16 %v1540
    %v5316 = vunpack.c.l.b16 %v1541
    %v5317 = vunpack.c.l.b16 %v1542
    %v5318 = vunpack.c.l.b16 %v1543
    %v5319 = vunpack.c.l.b16 %v1544
    %v5320 = vunpack.c.l.b16 %v1545
    %v5321 = vunpack.c.l.b16 %v1546
    %v5322 = vunpack.c.l.b16 %v1547
    %v5323 = vunpack.c.l.b16 %v1548
    %v5324 = vunpack.c.l.b16 %v1549
    %v5325 = vunpack.c.l.b16 %v1550
    %v5326 = vunpack.c.l.b16 %v1551
    %v5327 = vunpack.c.l.b16 %v1552
    %v5328 = vunpack.c.l.b16 %v1553
    %v5329 = vunpack.c.l.b16 %v1554
    %v5330 = vunpack.c.l.b16 %v1555
    %v5331 = vunpack.c.l.b16 %v1556
    %v5332 = vunpack.c.l.b16 %v1557
    %v5333 = vunpack.c.l.b16 %v1558
    %v5334 = vunpack.c.l.b16 %v1559
    %v5335 = vunpack.c.l.b16 %v1560
    %v5336 = vunpack.c.l.b16 %v1561
    %v5337 = vunpack.c.l.b16 %v1562
    %v5338 = vunpack.c.l.b16 %v1563
    %v5339 = vunpack.c.l.b16 %v1564
    %v5340 = vunpack.c.l.b16 %v1565
    %v5341 = vunpack.c.l.b16 %v1566
    %v5342 = vunpack.c.l.b16 %v1567
    %v5343 = vunpack.c.l.b16 %v1568
    %v5344 = vunpack.c.l.b16 %v1569
    %v5345 = vpack.c.b16 %v3810, %v3809
    %v5346 = vpack.c.b16 %v3812, %v3811
    %v5347 = vpack.c.b16 %v3814, %v3813
    %v5348 = vpack.c.b16 %v3816, %v3815
    %v5349 = vpack.c.b16 %v3818, %v3817
    %v5350 = vpack.c.b16 %v3820, %v3819
    %v5351 = vpack.c.b16 %v3822, %v3821
    %v5352 = vpack.c.b16 %v3824, %v3823
    %v5353 = vpack.c.b16 %v3826, %v3825
    %v5354 = vpack.c.b16 %v3828, %v3827
    %v5355 = vpack.c.b16 %v3830, %v3829
    %v5356 = vpack.c.b16 %v3832, %v3831
    %v5357 = vpack.c.b16 %v3834, %v3833
    %v5358 = vpack.c.b16 %v3836, %v3835
    %v5359 = vpack.c.b16 %v3838, %v3837
    %v5360 = vpack.c.b16 %v3840, %v3839
    %v5361 = vpack.c.b16 %v3842, %v3841
    %v5362 = vpack.c.b16 %v3844, %v3843
    %v5363 = vpack.c.b16 %v3846, %v3845
    %v5364 = vpack.c.b16 %v3848, %v3847
    %v5365 = vpack.c.b16 %v3850, %v3849
    %v5366 = vpack.c.b16 %v3852, %v3851
    %v5367 = vpack.c.b16 %v3854, %v3853
    %v5368 = vpack.c.b16 %v3856, %v3855
    %v5369 = vpack.c.b16 %v3858, %v3857
    %v5370 = vpack.c.b16 %v3860, %v3859
    %v5371 = vpack.c.b16 %v3862, %v3861
    %v5372 = vpack.c.b16 %v3864, %v3863
    %v5373 = vpack.c.b16 %v3866, %v3865
    %v5374 = vpack.c.b16 %v3868, %v3867
    %v5375 = vpack.c.b16 %v3870, %v3869
    %v5376 = vpack.c.b16 %v3872, %v3871
    %v5377 = vpack.c.b16 %v3874, %v3873
    %v5378 = vpack.c.b16 %v3876, %v3875
    %v5379 = vpack.c.b16 %v3878, %v3877
    %v5380 = vpack.c.b16 %v3880, %v3879
    %v5381 = vpack.c.b16 %v3882, %v3881
    %v5382 = vpack.c.b16 %v3884, %v3883
    %v5383 = vpack.c.b16 %v3886, %v3885
    %v5384 = vpack.c.b16 %v3888, %v3887
    %v5385 = vpack.c.b16 %v3890, %v3889
    %v5386 = vpack.c.b16 %v3892, %v3891
    %v5387 = vpack.c.b16 %v3894, %v3893
    %v5388 = vpack.c.b16 %v3896, %v3895
    %v5389 = vpack.c.b16 %v3898, %v3897
    %v5390 = vpack.c.b16 %v3900, %v3899
    %v5391 = vpack.c.b16 %v3902, %v3901
    %v5392 = vpack.c.b16 %v3904, %v3903
    %v5393 = vpack.c.b16 %v3906, %v3905
    %v5394 = vpack.c.b16 %v3908, %v3907
    %v5395 = vpack.c.b16 %v3910, %v3909
    %v5396 = vpack.c.b16 %v3912, %v3911
    %v5397 = vpack.c.b16 %v3914, %v3913
    %v5398 = vpack.c.b16 %v3916, %v3915
    %v5399 = vpack.c.b16 %v3918, %v3917
    %v5400 = vpack.c.b16 %v3920, %v3919
    %v5401 = vpack.c.b16 %v3922, %v3921
    %v5402 = vpack.c.b16 %v3924, %v3923
    %v5403 = vpack.c.b16 %v3926, %v3925
    %v5404 = vpack.c.b16 %v3928, %v3927
    %v5405 = vpack.c.b16 %v3930, %v3929
    %v5406 = vpack.c.b16 %v3932, %v3931
    %v5407 = vpack.c.b16 %v3934, %v3933
    %v5408 = vpack.c.b16 %v3936, %v3935
    %v5409 = vpack.c.b16 %v3938, %v3937
    %v5410 = vpack.c.b16 %v3940, %v3939
    %v5411 = vpack.c.b16 %v3942, %v3941
    %v5412 = vpack.c.b16 %v3944, %v3943
    %v5413 = vpack.c.b16 %v3946, %v3945
    %v5414 = vpack.c.b16 %v3948, %v3947
    %v5415 = vpack.c.b16 %v3950, %v3949
    %v5416 = vpack.c.b16 %v3952, %v3951
    %v5417 = vpack.c.b16 %v3954, %v3953
    %v5418 = vpack.c.b16 %v3956, %v3955
    %v5419 = vpack.c.b16 %v3958, %v3957
    %v5420 = vpack.c.b16 %v3960, %v3959
    %v5421 = vpack.c.b16 %v3962, %v3961
    %v5422 = vpack.c.b16 %v3964, %v3963
    %v5423 = vpack.c.b16 %v3966, %v3965
    %v5424 = vpack.c.b16 %v3968, %v3967
    %v5425 = vpack.c.b16 %v3970, %v3969
    %v5426 = vpack.c.b16 %v3972, %v3971
    %v5427 = vpack.c.b16 %v3974, %v3973
    %v5428 = vpack.c.b16 %v3976, %v3975
    %v5429 = vpack.c.b16 %v3978, %v3977
    %v5430 = vpack.c.b16 %v3980, %v3979
    %v5431 = vpack.c.b16 %v3982, %v3981
    %v5432 = vpack.c.b16 %v3984, %v3983
    %v5433 = vpack.c.b16 %v3986, %v3985
    %v5434 = vpack.c.b16 %v3988, %v3987
    %v5435 = vpack.c.b16 %v3990, %v3989
    %v5436 = vpack.c.b16 %v3992, %v3991
    %v5437 = vpack.c.b16 %v3994, %v3993
    %v5438 = vpack.c.b16 %v3996, %v3995
    %v5439 = vpack.c.b16 %v3998, %v3997
    %v5440 = vpack.c.b16 %v4000, %v3999
    %v5441 = vpack.c.b16 %v4002, %v4001
    %v5442 = vpack.c.b16 %v4004, %v4003
    %v5443 = vpack.c.b16 %v4006, %v4005
    %v5444 = vpack.c.b16 %v4008, %v4007
    %v5445 = vpack.c.b16 %v4010, %v4009
    %v5446 = vpack.c.b16 %v4012, %v4011
    %v5447 = vpack.c.b16 %v4014, %v4013
    %v5448 = vpack.c.b16 %v4016, %v4015
    %v5449 = vpack.c.b16 %v4018, %v4017
    %v5450 = vpack.c.b16 %v4020, %v4019
    %v5451 = vpack.c.b16 %v4022, %v4021
    %v5452 = vpack.c.b16 %v4024, %v4023
    %v5453 = vpack.c.b16 %v4026, %v4025
    %v5454 = vpack.c.b16 %v4028, %v4027
    %v5455 = vpack.c.b16 %v4030, %v4029
    %v5456 = vpack.c.b16 %v4032, %v4031
    %v5457 = vpack.c.b16 %v4034, %v4033
    %v5458 = vpack.c.b16 %v4036, %v4035
    %v5459 = vpack.c.b16 %v4038, %v4037
    %v5460 = vpack.c.b16 %v4040, %v4039
    %v5461 = vpack.c.b16 %v4042, %v4041
    %v5462 = vpack.c.b16 %v4044, %v4043
    %v5463 = vpack.c.b16 %v4046, %v4045
    %v5464 = vpack.c.b16 %v4048, %v4047
    %v5465 = vpack.c.b16 %v4050, %v4049
    %v5466 = vpack.c.b16 %v4052, %v4051
    %v5467 = vpack.c.b16 %v4054, %v4053
    %v5468 = vpack.c.b16 %v4056, %v4055
    %v5469 = vpack.c.b16 %v4058, %v4057
    %v5470 = vpack.c.b16 %v4060, %v4059
    %v5471 = vpack.c.b16 %v4062, %v4061
    %v5472 = vpack.c.b16 %v4064, %v4063
    %v5473 = vpack.c.b16 %v4066, %v4065
    %v5474 = vpack.c.b16 %v4068, %v4067
    %v5475 = vpack.c.b16 %v4070, %v4069
    %v5476 = vpack.c.b16 %v4072, %v4071
    %v5477 = vpack.c.b16 %v4074, %v4073
    %v5478 = vpack.c.b16 %v4076, %v4075
    %v5479 = vpack.c.b16 %v4078, %v4077
    %v5480 = vpack.c.b16 %v4080, %v4079
    %v5481 = vpack.c.b16 %v4082, %v4081
    %v5482 = vpack.c.b16 %v4084, %v4083
    %v5483 = vpack.c.b16 %v4086, %v4085
    %v5484 = vpack.c.b16 %v4088, %v4087
    %v5485 = vpack.c.b16 %v4090, %v4089
    %v5486 = vpack.c.b16 %v4092, %v4091
    %v5487 = vpack.c.b16 %v4094, %v4093
    %v5488 = vpack.c.b16 %v4096, %v4095
    %v5489 = vpack.c.b16 %v4098, %v4097
    %v5490 = vpack.c.b16 %v4100, %v4099
    %v5491 = vpack.c.b16 %v4102, %v4101
    %v5492 = vpack.c.b16 %v4104, %v4103
    %v5493 = vpack.c.b16 %v4106, %v4105
    %v5494 = vpack.c.b16 %v4108, %v4107
    %v5495 = vpack.c.b16 %v4110, %v4109
    %v5496 = vpack.c.b16 %v4112, %v4111
    %v5497 = vpack.c.b16 %v4114, %v4113
    %v5498 = vpack.c.b16 %v4116, %v4115
    %v5499 = vpack.c.b16 %v4118, %v4117
    %v5500 = vpack.c.b16 %v4120, %v4119
    %v5501 = vpack.c.b16 %v4122, %v4121
    %v5502 = vpack.c.b16 %v4124, %v4123
    %v5503 = vpack.c.b16 %v4126, %v4125
    %v5504 = vpack.c.b16 %v4128, %v4127
    %v5505 = vpack.c.b16 %v4130, %v4129
    %v5506 = vpack.c.b16 %v4132, %v4131
    %v5507 = vpack.c.b16 %v4134, %v4133
    %v5508 = vpack.c.b16 %v4136, %v4135
    %v5509 = vpack.c.b16 %v4138, %v4137
    %v5510 = vpack.c.b16 %v4140, %v4139
    %v5511 = vpack.c.b16 %v4142, %v4141
    %v5512 = vpack.c.b16 %v4144, %v4143
    %v5513 = vpack.c.b16 %v4146, %v4145
    %v5514 = vpack.c.b16 %v4148, %v4147
    %v5515 = vpack.c.b16 %v4150, %v4149
    %v5516 = vpack.c.b16 %v4152, %v4151
    %v5517 = vpack.c.b16 %v4154, %v4153
    %v5518 = vpack.c.b16 %v4156, %v4155
    %v5519 = vpack.c.b16 %v4158, %v4157
    %v5520 = vpack.c.b16 %v4160, %v4159
    %v5521 = vpack.c.b16 %v4162, %v4161
    %v5522 = vpack.c.b16 %v4164, %v4163
    %v5523 = vpack.c.b16 %v4166, %v4165
    %v5524 = vpack.c.b16 %v4168, %v4167
    %v5525 = vpack.c.b16 %v4170, %v4169
    %v5526 = vpack.c.b16 %v4172, %v4171
    %v5527 = vpack.c.b16 %v4174, %v4173
    %v5528 = vpack.c.b16 %v4176, %v4175
    %v5529 = vpack.c.b16 %v4178, %v4177
    %v5530 = vpack.c.b16 %v4180, %v4179
    %v5531 = vpack.c.b16 %v4182, %v4181
    %v5532 = vpack.c.b16 %v4184, %v4183
    %v5533 = vpack.c.b16 %v4186, %v4185
    %v5534 = vpack.c.b16 %v4188, %v4187
    %v5535 = vpack.c.b16 %v4190, %v4189
    %v5536 = vpack.c.b16 %v4192, %v4191
    %v5537 = vpack.c.b16 %v4194, %v4193
    %v5538 = vpack.c.b16 %v4196, %v4195
    %v5539 = vpack.c.b16 %v4198, %v4197
    %v5540 = vpack.c.b16 %v4200, %v4199
    %v5541 = vpack.c.b16 %v4202, %v4201
    %v5542 = vpack.c.b16 %v4204, %v4203
    %v5543 = vpack.c.b16 %v4206, %v4205
    %v5544 = vpack.c.b16 %v4208, %v4207
    %v5545 = vpack.c.b16 %v4210, %v4209
    %v5546 = vpack.c.b16 %v4212, %v4211
    %v5547 = vpack.c.b16 %v4214, %v4213
    %v5548 = vpack.c.b16 %v4216, %v4215
    %v5549 = vpack.c.b16 %v4218, %v4217
    %v5550 = vpack.c.b16 %v4220, %v4219
    %v5551 = vpack.c.b16 %v4222, %v4221
    %v5552 = vpack.c.b16 %v4224, %v4223
    %v5553 = vpack.c.b16 %v4226, %v4225
    %v5554 = vpack.c.b16 %v4228, %v4227
    %v5555 = vpack.c.b16 %v4230, %v4229
    %v5556 = vpack.c.b16 %v4232, %v4231
    %v5557 = vpack.c.b16 %v4234, %v4233
    %v5558 = vpack.c.b16 %v4236, %v4235
    %v5559 = vpack.c.b16 %v4238, %v4237
    %v5560 = vpack.c.b16 %v4240, %v4239
    %v5561 = vpack.c.b16 %v4242, %v4241
    %v5562 = vpack.c.b16 %v4244, %v4243
    %v5563 = vpack.c.b16 %v4246, %v4245
    %v5564 = vpack.c.b16 %v4248, %v4247
    %v5565 = vpack.c.b16 %v4250, %v4249
    %v5566 = vpack.c.b16 %v4252, %v4251
    %v5567 = vpack.c.b16 %v4254, %v4253
    %v5568 = vpack.c.b16 %v4256, %v4255
    %v5569 = vpack.c.b16 %v4258, %v4257
    %v5570 = vpack.c.b16 %v4260, %v4259
    %v5571 = vpack.c.b16 %v4262, %v4261
    %v5572 = vpack.c.b16 %v4264, %v4263
    %v5573 = vpack.c.b16 %v4266, %v4265
    %v5574 = vpack.c.b16 %v4268, %v4267
    %v5575 = vpack.c.b16 %v4270, %v4269
    %v5576 = vpack.c.b16 %v4272, %v4271
    %v5577 = vpack.c.b16 %v4274, %v4273
    %v5578 = vpack.c.b16 %v4276, %v4275
    %v5579 = vpack.c.b16 %v4278, %v4277
    %v5580 = vpack.c.b16 %v4280, %v4279
    %v5581 = vpack.c.b16 %v4282, %v4281
    %v5582 = vpack.c.b16 %v4284, %v4283
    %v5583 = vpack.c.b16 %v4286, %v4285
    %v5584 = vpack.c.b16 %v4288, %v4287
    %v5585 = vpack.c.b16 %v4290, %v4289
    %v5586 = vpack.c.b16 %v4292, %v4291
    %v5587 = vpack.c.b16 %v4294, %v4293
    %v5588 = vpack.c.b16 %v4296, %v4295
    %v5589 = vpack.c.b16 %v4298, %v4297
    %v5590 = vpack.c.b16 %v4300, %v4299
    %v5591 = vpack.c.b16 %v4302, %v4301
    %v5592 = vpack.c.b16 %v4304, %v4303
    %v5593 = vpack.c.b16 %v4306, %v4305
    %v5594 = vpack.c.b16 %v4308, %v4307
    %v5595 = vpack.c.b16 %v4310, %v4309
    %v5596 = vpack.c.b16 %v4312, %v4311
    %v5597 = vpack.c.b16 %v4314, %v4313
    %v5598 = vpack.c.b16 %v4316, %v4315
    %v5599 = vpack.c.b16 %v4318, %v4317
    %v5600 = vpack.c.b16 %v4320, %v4319
    %v5601 = vpack.c.b16 %v4322, %v4321
    %v5602 = vpack.c.b16 %v4324, %v4323
    %v5603 = vpack.c.b16 %v4326, %v4325
    %v5604 = vpack.c.b16 %v4328, %v4327
    %v5605 = vpack.c.b16 %v4330, %v4329
    %v5606 = vpack.c.b16 %v4332, %v4331
    %v5607 = vpack.c.b16 %v4334, %v4333
    %v5608 = vpack.c.b16 %v4336, %v4335
    %v5609 = vpack.c.b16 %v4338, %v4337
    %v5610 = vpack.c.b16 %v4340, %v4339
    %v5611 = vpack.c.b16 %v4342, %v4341
    %v5612 = vpack.c.b16 %v4344, %v4343
    %v5613 = vpack.c.b16 %v4346, %v4345
    %v5614 = vpack.c.b16 %v4348, %v4347
    %v5615 = vpack.c.b16 %v4350, %v4349
    %v5616 = vpack.c.b16 %v4352, %v4351
    %v5617 = vpack.c.b16 %v4354, %v4353
    %v5618 = vpack.c.b16 %v4356, %v4355
    %v5619 = vpack.c.b16 %v4358, %v4357
    %v5620 = vpack.c.b16 %v4360, %v4359
    %v5621 = vpack.c.b16 %v4362, %v4361
    %v5622 = vpack.c.b16 %v4364, %v4363
    %v5623 = vpack.c.b16 %v4366, %v4365
    %v5624 = vpack.c.b16 %v4368, %v4367
    %v5625 = vpack.c.b16 %v4370, %v4369
    %v5626 = vpack.c.b16 %v4372, %v4371
    %v5627 = vpack.c.b16 %v4374, %v4373
    %v5628 = vpack.c.b16 %v4376, %v4375
    %v5629 = vpack.c.b16 %v4378, %v4377
    %v5630 = vpack.c.b16 %v4380, %v4379
    %v5631 = vpack.c.b16 %v4382, %v4381
    %v5632 = vpack.c.b16 %v4384, %v4383
    %v5633 = vpack.c.b16 %v4386, %v4385
    %v5634 = vpack.c.b16 %v4388, %v4387
    %v5635 = vpack.c.b16 %v4390, %v4389
    %v5636 = vpack.c.b16 %v4392, %v4391
    %v5637 = vpack.c.b16 %v4394, %v4393
    %v5638 = vpack.c.b16 %v4396, %v4395
    %v5639 = vpack.c.b16 %v4398, %v4397
    %v5640 = vpack.c.b16 %v4400, %v4399
    %v5641 = vpack.c.b16 %v4402, %v4401
    %v5642 = vpack.c.b16 %v4404, %v4403
    %v5643 = vpack.c.b16 %v4406, %v4405
    %v5644 = vpack.c.b16 %v4408, %v4407
    %v5645 = vpack.c.b16 %v4410, %v4409
    %v5646 = vpack.c.b16 %v4412, %v4411
    %v5647 = vpack.c.b16 %v4414, %v4413
    %v5648 = vpack.c.b16 %v4416, %v4415
    %v5649 = vpack.c.b16 %v4418, %v4417
    %v5650 = vpack.c.b16 %v4420, %v4419
    %v5651 = vpack.c.b16 %v4422, %v4421
    %v5652 = vpack.c.b16 %v4424, %v4423
    %v5653 = vpack.c.b16 %v4426, %v4425
    %v5654 = vpack.c.b16 %v4428, %v4427
    %v5655 = vpack.c.b16 %v4430, %v4429
    %v5656 = vpack.c.b16 %v4432, %v4431
    %v5657 = vpack.c.b16 %v4434, %v4433
    %v5658 = vpack.c.b16 %v4436, %v4435
    %v5659 = vpack.c.b16 %v4438, %v4437
    %v5660 = vpack.c.b16 %v4440, %v4439
    %v5661 = vpack.c.b16 %v4442, %v4441
    %v5662 = vpack.c.b16 %v4444, %v4443
    %v5663 = vpack.c.b16 %v4446, %v4445
    %v5664 = vpack.c.b16 %v4448, %v4447
    %v5665 = vpack.c.b16 %v4450, %v4449
    %v5666 = vpack.c.b16 %v4452, %v4451
    %v5667 = vpack.c.b16 %v4454, %v4453
    %v5668 = vpack.c.b16 %v4456, %v4455
    %v5669 = vpack.c.b16 %v4458, %v4457
    %v5670 = vpack.c.b16 %v4460, %v4459
    %v5671 = vpack.c.b16 %v4462, %v4461
    %v5672 = vpack.c.b16 %v4464, %v4463
    %v5673 = vpack.c.b16 %v4466, %v4465
    %v5674 = vpack.c.b16 %v4468, %v4467
    %v5675 = vpack.c.b16 %v4470, %v4469
    %v5676 = vpack.c.b16 %v4472, %v4471
    %v5677 = vpack.c.b16 %v4474, %v4473
    %v5678 = vpack.c.b16 %v4476, %v4475
    %v5679 = vpack.c.b16 %v4478, %v4477
    %v5680 = vpack.c.b16 %v4480, %v4479
    %v5681 = vpack.c.b16 %v4482, %v4481
    %v5682 = vpack.c.b16 %v4484, %v4483
    %v5683 = vpack.c.b16 %v4486, %v4485
    %v5684 = vpack.c.b16 %v4488, %v4487
    %v5685 = vpack.c.b16 %v4490, %v4489
    %v5686 = vpack.c.b16 %v4492, %v4491
    %v5687 = vpack.c.b16 %v4494, %v4493
    %v5688 = vpack.c.b16 %v4496, %v4495
    %v5689 = vpack.c.b16 %v4498, %v4497
    %v5690 = vpack.c.b16 %v4500, %v4499
    %v5691 = vpack.c.b16 %v4502, %v4501
    %v5692 = vpack.c.b16 %v4504, %v4503
    %v5693 = vpack.c.b16 %v4506, %v4505
    %v5694 = vpack.c.b16 %v4508, %v4507
    %v5695 = vpack.c.b16 %v4510, %v4509
    %v5696 = vpack.c.b16 %v4512, %v4511
    %v5697 = vpack.c.b16 %v4514, %v4513
    %v5698 = vpack.c.b16 %v4516, %v4515
    %v5699 = vpack.c.b16 %v4518, %v4517
    %v5700 = vpack.c.b16 %v4520, %v4519
    %v5701 = vpack.c.b16 %v4522, %v4521
    %v5702 = vpack.c.b16 %v4524, %v4523
    %v5703 = vpack.c.b16 %v4526, %v4525
    %v5704 = vpack.c.b16 %v4528, %v4527
    %v5705 = vpack.c.b16 %v4530, %v4529
    %v5706 = vpack.c.b16 %v4532, %v4531
    %v5707 = vpack.c.b16 %v4534, %v4533
    %v5708 = vpack.c.b16 %v4536, %v4535
    %v5709 = vpack.c.b16 %v4538, %v4537
    %v5710 = vpack.c.b16 %v4540, %v4539
    %v5711 = vpack.c.b16 %v4542, %v4541
    %v5712 = vpack.c.b16 %v4544, %v4543
    %v5713 = vpack.c.b16 %v4546, %v4545
    %v5714 = vpack.c.b16 %v4548, %v4547
    %v5715 = vpack.c.b16 %v4550, %v4549
    %v5716 = vpack.c.b16 %v4552, %v4551
    %v5717 = vpack.c.b16 %v4554, %v4553
    %v5718 = vpack.c.b16 %v4556, %v4555
    %v5719 = vpack.c.b16 %v4558, %v4557
    %v5720 = vpack.c.b16 %v4560, %v4559
    %v5721 = vpack.c.b16 %v4562, %v4561
    %v5722 = vpack.c.b16 %v4564, %v4563
    %v5723 = vpack.c.b16 %v4566, %v4565
    %v5724 = vpack.c.b16 %v4568, %v4567
    %v5725 = vpack.c.b16 %v4570, %v4569
    %v5726 = vpack.c.b16 %v4572, %v4571
    %v5727 = vpack.c.b16 %v4574, %v4573
    %v5728 = vpack.c.b16 %v4576, %v4575
    %v5729 = vpack.c.b16 %v4578, %v4577
    %v5730 = vpack.c.b16 %v4580, %v4579
    %v5731 = vpack.c.b16 %v4582, %v4581
    %v5732 = vpack.c.b16 %v4584, %v4583
    %v5733 = vpack.c.b16 %v4586, %v4585
    %v5734 = vpack.c.b16 %v4588, %v4587
    %v5735 = vpack.c.b16 %v4590, %v4589
    %v5736 = vpack.c.b16 %v4592, %v4591
    %v5737 = vpack.c.b16 %v4594, %v4593
    %v5738 = vpack.c.b16 %v4596, %v4595
    %v5739 = vpack.c.b16 %v4598, %v4597
    %v5740 = vpack.c.b16 %v4600, %v4599
    %v5741 = vpack.c.b16 %v4602, %v4601
    %v5742 = vpack.c.b16 %v4604, %v4603
    %v5743 = vpack.c.b16 %v4606, %v4605
    %v5744 = vpack.c.b16 %v4608, %v4607
    %v5745 = vpack.c.b16 %v4610, %v4609
    %v5746 = vpack.c.b16 %v4612, %v4611
    %v5747 = vpack.c.b16 %v4614, %v4613
    %v5748 = vpack.c.b16 %v4616, %v4615
    %v5749 = vpack.c.b16 %v4618, %v4617
    %v5750 = vpack.c.b16 %v4620, %v4619
    %v5751 = vpack.c.b16 %v4622, %v4621
    %v5752 = vpack.c.b16 %v4624, %v4623
    %v5753 = vpack.c.b16 %v4626, %v4625
    %v5754 = vpack.c.b16 %v4628, %v4627
    %v5755 = vpack.c.b16 %v4630, %v4629
    %v5756 = vpack.c.b16 %v4632, %v4631
    %v5757 = vpack.c.b16 %v4634, %v4633
    %v5758 = vpack.c.b16 %v4636, %v4635
    %v5759 = vpack.c.b16 %v4638, %v4637
    %v5760 = vpack.c.b16 %v4640, %v4639
    %v5761 = vpack.c.b16 %v4642, %v4641
    %v5762 = vpack.c.b16 %v4644, %v4643
    %v5763 = vpack.c.b16 %v4646, %v4645
    %v5764 = vpack.c.b16 %v4648, %v4647
    %v5765 = vpack.c.b16 %v4650, %v4649
    %v5766 = vpack.c.b16 %v4652, %v4651
    %v5767 = vpack.c.b16 %v4654, %v4653
    %v5768 = vpack.c.b16 %v4656, %v4655
    %v5769 = vpack.c.b16 %v4658, %v4657
    %v5770 = vpack.c.b16 %v4660, %v4659
    %v5771 = vpack.c.b16 %v4662, %v4661
    %v5772 = vpack.c.b16 %v4664, %v4663
    %v5773 = vpack.c.b16 %v4666, %v4665
    %v5774 = vpack.c.b16 %v4668, %v4667
    %v5775 = vpack.c.b16 %v4670, %v4669
    %v5776 = vpack.c.b16 %v4672, %v4671
    %v5777 = vpack.c.b16 %v4674, %v4673
    %v5778 = vpack.c.b16 %v4676, %v4675
    %v5779 = vpack.c.b16 %v4678, %v4677
    %v5780 = vpack.c.b16 %v4680, %v4679
    %v5781 = vpack.c.b16 %v4682, %v4681
    %v5782 = vpack.c.b16 %v4684, %v4683
    %v5783 = vpack.c.b16 %v4686, %v4685
    %v5784 = vpack.c.b16 %v4688, %v4687
    %v5785 = vpack.c.b16 %v4690, %v4689
    %v5786 = vpack.c.b16 %v4692, %v4691
    %v5787 = vpack.c.b16 %v4694, %v4693
    %v5788 = vpack.c.b16 %v4696, %v4695
    %v5789 = vpack.c.b16 %v4698, %v4697
    %v5790 = vpack.c.b16 %v4700, %v4699
    %v5791 = vpack.c.b16 %v4702, %v4701
    %v5792 = vpack.c.b16 %v4704, %v4703
    %v5793 = vpack.c.b16 %v4706, %v4705
    %v5794 = vpack.c.b16 %v4708, %v4707
    %v5795 = vpack.c.b16 %v4710, %v4709
    %v5796 = vpack.c.b16 %v4712, %v4711
    %v5797 = vpack.c.b16 %v4714, %v4713
    %v5798 = vpack.c.b16 %v4716, %v4715
    %v5799 = vpack.c.b16 %v4718, %v4717
    %v5800 = vpack.c.b16 %v4720, %v4719
    %v5801 = vpack.c.b16 %v4722, %v4721
    %v5802 = vpack.c.b16 %v4724, %v4723
    %v5803 = vpack.c.b16 %v4726, %v4725
    %v5804 = vpack.c.b16 %v4728, %v4727
    %v5805 = vpack.c.b16 %v4730, %v4729
    %v5806 = vpack.c.b16 %v4732, %v4731
    %v5807 = vpack.c.b16 %v4734, %v4733
    %v5808 = vpack.c.b16 %v4736, %v4735
    %v5809 = vpack.c.b16 %v4738, %v4737
    %v5810 = vpack.c.b16 %v4740, %v4739
    %v5811 = vpack.c.b16 %v4742, %v4741
    %v5812 = vpack.c.b16 %v4744, %v4743
    %v5813 = vpack.c.b16 %v4746, %v4745
    %v5814 = vpack.c.b16 %v4748, %v4747
    %v5815 = vpack.c.b16 %v4750, %v4749
    %v5816 = vpack.c.b16 %v4752, %v4751
    %v5817 = vpack.c.b16 %v4754, %v4753
    %v5818 = vpack.c.b16 %v4756, %v4755
    %v5819 = vpack.c.b16 %v4758, %v4757
    %v5820 = vpack.c.b16 %v4760, %v4759
    %v5821 = vpack.c.b16 %v4762, %v4761
    %v5822 = vpack.c.b16 %v4764, %v4763
    %v5823 = vpack.c.b16 %v4766, %v4765
    %v5824 = vpack.c.b16 %v4768, %v4767
    %v5825 = vpack.c.b16 %v4770, %v4769
    %v5826 = vpack.c.b16 %v4772, %v4771
    %v5827 = vpack.c.b16 %v4774, %v4773
    %v5828 = vpack.c.b16 %v4776, %v4775
    %v5829 = vpack.c.b16 %v4778, %v4777
    %v5830 = vpack.c.b16 %v4780, %v4779
    %v5831 = vpack.c.b16 %v4782, %v4781
    %v5832 = vpack.c.b16 %v4784, %v4783
    %v5833 = vpack.c.b16 %v4786, %v4785
    %v5834 = vpack.c.b16 %v4788, %v4787
    %v5835 = vpack.c.b16 %v4790, %v4789
    %v5836 = vpack.c.b16 %v4792, %v4791
    %v5837 = vpack.c.b16 %v4794, %v4793
    %v5838 = vpack.c.b16 %v4796, %v4795
    %v5839 = vpack.c.b16 %v4798, %v4797
    %v5840 = vpack.c.b16 %v4800, %v4799
    %v5841 = vpack.c.b16 %v4802, %v4801
    %v5842 = vpack.c.b16 %v4804, %v4803
    %v5843 = vpack.c.b16 %v4806, %v4805
    %v5844 = vpack.c.b16 %v4808, %v4807
    %v5845 = vpack.c.b16 %v4810, %v4809
    %v5846 = vpack.c.b16 %v4812, %v4811
    %v5847 = vpack.c.b16 %v4814, %v4813
    %v5848 = vpack.c.b16 %v4816, %v4815
    %v5849 = vpack.c.b16 %v4818, %v4817
    %v5850 = vpack.c.b16 %v4820, %v4819
    %v5851 = vpack.c.b16 %v4822, %v4821
    %v5852 = vpack.c.b16 %v4824, %v4823
    %v5853 = vpack.c.b16 %v4826, %v4825
    %v5854 = vpack.c.b16 %v4828, %v4827
    %v5855 = vpack.c.b16 %v4830, %v4829
    %v5856 = vpack.c.b16 %v4832, %v4831
    %v5857 = vpack.c.b16 %v4834, %v4833
    %v5858 = vpack.c.b16 %v4836, %v4835
    %v5859 = vpack.c.b16 %v4838, %v4837
    %v5860 = vpack.c.b16 %v4840, %v4839
    %v5861 = vpack.c.b16 %v4842, %v4841
    %v5862 = vpack.c.b16 %v4844, %v4843
    %v5863 = vpack.c.b16 %v4846, %v4845
    %v5864 = vpack.c.b16 %v4848, %v4847
    %v5865 = vpack.c.b16 %v4850, %v4849
    %v5866 = vpack.c.b16 %v4852, %v4851
    %v5867 = vpack.c.b16 %v4854, %v4853
    %v5868 = vpack.c.b16 %v4856, %v4855
    %v5869 = vpack.c.b16 %v4858, %v4857
    %v5870 = vpack.c.b16 %v4860, %v4859
    %v5871 = vpack.c.b16 %v4862, %v4861
    %v5872 = vpack.c.b16 %v4864, %v4863
    %v5873 = vpack.c.b16 %v4866, %v4865
    %v5874 = vpack.c.b16 %v4868, %v4867
    %v5875 = vpack.c.b16 %v4870, %v4869
    %v5876 = vpack.c.b16 %v4872, %v4871
    %v5877 = vpack.c.b16 %v4874, %v4873
    %v5878 = vpack.c.b16 %v4876, %v4875
    %v5879 = vpack.c.b16 %v4878, %v4877
    %v5880 = vpack.c.b16 %v4880, %v4879
    %v5881 = vpack.c.b16 %v4882, %v4881
    %v5882 = vpack.c.b16 %v4884, %v4883
    %v5883 = vpack.c.b16 %v4886, %v4885
    %v5884 = vpack.c.b16 %v4888, %v4887
    %v5885 = vpack.c.b16 %v4890, %v4889
    %v5886 = vpack.c.b16 %v4892, %v4891
    %v5887 = vpack.c.b16 %v4894, %v4893
    %v5888 = vpack.c.b16 %v4896, %v4895
    %v5889 = vpack.c.b16 %v4898, %v4897
    %v5890 = vpack.c.b16 %v4900, %v4899
    %v5891 = vpack.c.b16 %v4902, %v4901
    %v5892 = vpack.c.b16 %v4904, %v4903
    %v5893 = vpack.c.b16 %v4906, %v4905
    %v5894 = vpack.c.b16 %v4908, %v4907
    %v5895 = vpack.c.b16 %v4910, %v4909
    %v5896 = vpack.c.b16 %v4912, %v4911
    %v5897 = vpack.c.b16 %v4914, %v4913
    %v5898 = vpack.c.b16 %v4916, %v4915
    %v5899 = vpack.c.b16 %v4918, %v4917
    %v5900 = vpack.c.b16 %v4920, %v4919
    %v5901 = vpack.c.b16 %v4922, %v4921
    %v5902 = vpack.c.b16 %v4924, %v4923
    %v5903 = vpack.c.b16 %v4926, %v4925
    %v5904 = vpack.c.b16 %v4928, %v4927
    %v5905 = vpack.c.b16 %v4930, %v4929
    %v5906 = vpack.c.b16 %v4932, %v4931
    %v5907 = vpack.c.b16 %v4934, %v4933
    %v5908 = vpack.c.b16 %v4936, %v4935
    %v5909 = vpack.c.b16 %v4938, %v4937
    %v5910 = vpack.c.b16 %v4940, %v4939
    %v5911 = vpack.c.b16 %v4942, %v4941
    %v5912 = vpack.c.b16 %v4944, %v4943
    %v5913 = vpack.c.b16 %v4946, %v4945
    %v5914 = vpack.c.b16 %v4948, %v4947
    %v5915 = vpack.c.b16 %v4950, %v4949
    %v5916 = vpack.c.b16 %v4952, %v4951
    %v5917 = vpack.c.b16 %v4954, %v4953
    %v5918 = vpack.c.b16 %v4956, %v4955
    %v5919 = vpack.c.b16 %v4958, %v4957
    %v5920 = vpack.c.b16 %v4960, %v4959
    %v5921 = vpack.c.b16 %v4962, %v4961
    %v5922 = vpack.c.b16 %v4964, %v4963
    %v5923 = vpack.c.b16 %v4966, %v4965
    %v5924 = vpack.c.b16 %v4968, %v4967
    %v5925 = vpack.c.b16 %v4970, %v4969
    %v5926 = vpack.c.b16 %v4972, %v4971
    %v5927 = vpack.c.b16 %v4974, %v4973
    %v5928 = vpack.c.b16 %v4976, %v4975
    %v5929 = vpack.c.b16 %v4978, %v4977
    %v5930 = vpack.c.b16 %v4980, %v4979
    %v5931 = vpack.c.b16 %v4982, %v4981
    %v5932 = vpack.c.b16 %v4984, %v4983
    %v5933 = vpack.c.b16 %v4986, %v4985
    %v5934 = vpack.c.b16 %v4988, %v4987
    %v5935 = vpack.c.b16 %v4990, %v4989
    %v5936 = vpack.c.b16 %v4992, %v4991
    %v5937 = vpack.c.b16 %v4994, %v4993
    %v5938 = vpack.c.b16 %v4996, %v4995
    %v5939 = vpack.c.b16 %v4998, %v4997
    %v5940 = vpack.c.b16 %v5000, %v4999
    %v5941 = vpack.c.b16 %v5002, %v5001
    %v5942 = vpack.c.b16 %v5004, %v5003
    %v5943 = vpack.c.b16 %v5006, %v5005
    %v5944 = vpack.c.b16 %v5008, %v5007
    %v5945 = vpack.c.b16 %v5010, %v5009
    %v5946 = vpack.c.b16 %v5012, %v5011
    %v5947 = vpack.c.b16 %v5014, %v5013
    %v5948 = vpack.c.b16 %v5016, %v5015
    %v5949 = vpack.c.b16 %v5018, %v5017
    %v5950 = vpack.c.b16 %v5020, %v5019
    %v5951 = vpack.c.b16 %v5022, %v5021
    %v5952 = vpack.c.b16 %v5024, %v5023
    %v5953 = vpack.c.b16 %v5026, %v5025
    %v5954 = vpack.c.b16 %v5028, %v5027
    %v5955 = vpack.c.b16 %v5030, %v5029
    %v5956 = vpack.c.b16 %v5032, %v5031
    %v5957 = vpack.c.b16 %v5034, %v5033
    %v5958 = vpack.c.b16 %v5036, %v5035
    %v5959 = vpack.c.b16 %v5038, %v5037
    %v5960 = vpack.c.b16 %v5040, %v5039
    %v5961 = vpack.c.b16 %v5042, %v5041
    %v5962 = vpack.c.b16 %v5044, %v5043
    %v5963 = vpack.c.b16 %v5046, %v5045
    %v5964 = vpack.c.b16 %v5048, %v5047
    %v5965 = vpack.c.b16 %v5050, %v5049
    %v5966 = vpack.c.b16 %v5052, %v5051
    %v5967 = vpack.c.b16 %v5054, %v5053
    %v5968 = vpack.c.b16 %v5056, %v5055
    %v5969 = vpack.c.b16 %v5058, %v5057
    %v5970 = vpack.c.b16 %v5060, %v5059
    %v5971 = vpack.c.b16 %v5062, %v5061
    %v5972 = vpack.c.b16 %v5064, %v5063
    %v5973 = vpack.c.b16 %v5066, %v5065
    %v5974 = vpack.c.b16 %v5068, %v5067
    %v5975 = vpack.c.b16 %v5070, %v5069
    %v5976 = vpack.c.b16 %v5072, %v5071
    %v5977 = vpack.c.b16 %v5074, %v5073
    %v5978 = vpack.c.b16 %v5076, %v5075
    %v5979 = vpack.c.b16 %v5078, %v5077
    %v5980 = vpack.c.b16 %v5080, %v5079
    %v5981 = vpack.c.b16 %v5082, %v5081
    %v5982 = vpack.c.b16 %v5084, %v5083
    %v5983 = vpack.c.b16 %v5086, %v5085
    %v5984 = vpack.c.b16 %v5088, %v5087
    %v5985 = vpack.c.b16 %v5090, %v5089
    %v5986 = vpack.c.b16 %v5092, %v5091
    %v5987 = vpack.c.b16 %v5094, %v5093
    %v5988 = vpack.c.b16 %v5096, %v5095
    %v5989 = vpack.c.b16 %v5098, %v5097
    %v5990 = vpack.c.b16 %v5100, %v5099
    %v5991 = vpack.c.b16 %v5102, %v5101
    %v5992 = vpack.c.b16 %v5104, %v5103
    %v5993 = vpack.c.b16 %v5106, %v5105
    %v5994 = vpack.c.b16 %v5108, %v5107
    %v5995 = vpack.c.b16 %v5110, %v5109
    %v5996 = vpack.c.b16 %v5112, %v5111
    %v5997 = vpack.c.b16 %v5114, %v5113
    %v5998 = vpack.c.b16 %v5116, %v5115
    %v5999 = vpack.c.b16 %v5118, %v5117
    %v6000 = vpack.c.b16 %v5120, %v5119
    %v6001 = vpack.c.b16 %v5122, %v5121
    %v6002 = vpack.c.b16 %v5124, %v5123
    %v6003 = vpack.c.b16 %v5126, %v5125
    %v6004 = vpack.c.b16 %v5128, %v5127
    %v6005 = vpack.c.b16 %v5130, %v5129
    %v6006 = vpack.c.b16 %v5132, %v5131
    %v6007 = vpack.c.b16 %v5134, %v5133
    %v6008 = vpack.c.b16 %v5136, %v5135
    %v6009 = vpack.c.b16 %v5138, %v5137
    %v6010 = vpack.c.b16 %v5140, %v5139
    %v6011 = vpack.c.b16 %v5142, %v5141
    %v6012 = vpack.c.b16 %v5144, %v5143
    %v6013 = vpack.c.b16 %v5146, %v5145
    %v6014 = vpack.c.b16 %v5148, %v5147
    %v6015 = vpack.c.b16 %v5150, %v5149
    %v6016 = vpack.c.b16 %v5152, %v5151
    %v6017 = vpack.c.b16 %v5154, %v5153
    %v6018 = vpack.c.b16 %v5156, %v5155
    %v6019 = vpack.c.b16 %v5158, %v5157
    %v6020 = vpack.c.b16 %v5160, %v5159
    %v6021 = vpack.c.b16 %v5162, %v5161
    %v6022 = vpack.c.b16 %v5164, %v5163
    %v6023 = vpack.c.b16 %v5166, %v5165
    %v6024 = vpack.c.b16 %v5168, %v5167
    %v6025 = vpack.c.b16 %v5170, %v5169
    %v6026 = vpack.c.b16 %v5172, %v5171
    %v6027 = vpack.c.b16 %v5174, %v5173
    %v6028 = vpack.c.b16 %v5176, %v5175
    %v6029 = vpack.c.b16 %v5178, %v5177
    %v6030 = vpack.c.b16 %v5180, %v5179
    %v6031 = vpack.c.b16 %v5182, %v5181
    %v6032 = vpack.c.b16 %v5184, %v5183
    %v6033 = vpack.c.b16 %v5186, %v5185
    %v6034 = vpack.c.b16 %v5188, %v5187
    %v6035 = vpack.c.b16 %v5190, %v5189
    %v6036 = vpack.c.b16 %v5192, %v5191
    %v6037 = vpack.c.b16 %v5194, %v5193
    %v6038 = vpack.c.b16 %v5196, %v5195
    %v6039 = vpack.c.b16 %v5198, %v5197
    %v6040 = vpack.c.b16 %v5200, %v5199
    %v6041 = vpack.c.b16 %v5202, %v5201
    %v6042 = vpack.c.b16 %v5204, %v5203
    %v6043 = vpack.c.b16 %v5206, %v5205
    %v6044 = vpack.c.b16 %v5208, %v5207
    %v6045 = vpack.c.b16 %v5210, %v5209
    %v6046 = vpack.c.b16 %v5212, %v5211
    %v6047 = vpack.c.b16 %v5214, %v5213
    %v6048 = vpack.c.b16 %v5216, %v5215
    %v6049 = vpack.c.b16 %v5218, %v5217
    %v6050 = vpack.c.b16 %v5220, %v5219
    %v6051 = vpack.c.b16 %v5222, %v5221
    %v6052 = vpack.c.b16 %v5224, %v5223
    %v6053 = vpack.c.b16 %v5226, %v5225
    %v6054 = vpack.c.b16 %v5228, %v5227
    %v6055 = vpack.c.b16 %v5230, %v5229
    %v6056 = vpack.c.b16 %v5232, %v5231
    %v6057 = vpack.c.b16 %v5234, %v5233
    %v6058 = vpack.c.b16 %v5236, %v5235
    %v6059 = vpack.c.b16 %v5238, %v5237
    %v6060 = vpack.c.b16 %v5240, %v5239
    %v6061 = vpack.c.b16 %v5242, %v5241
    %v6062 = vpack.c.b16 %v5244, %v5243
    %v6063 = vpack.c.b16 %v5246, %v5245
    %v6064 = vpack.c.b16 %v5248, %v5247
    %v6065 = vpack.c.b16 %v5250, %v5249
    %v6066 = vpack.c.b16 %v5252, %v5251
    %v6067 = vpack.c.b16 %v5254, %v5253
    %v6068 = vpack.c.b16 %v5256, %v5255
    %v6069 = vpack.c.b16 %v5258, %v5257
    %v6070 = vpack.c.b16 %v5260, %v5259
    %v6071 = vpack.c.b16 %v5262, %v5261
    %v6072 = vpack.c.b16 %v5264, %v5263
    %v6073 = vpack.c.b16 %v5266, %v5265
    %v6074 = vpack.c.b16 %v5268, %v5267
    %v6075 = vpack.c.b16 %v5270, %v5269
    %v6076 = vpack.c.b16 %v5272, %v5271
    %v6077 = vpack.c.b16 %v5274, %v5273
    %v6078 = vpack.c.b16 %v5276, %v5275
    %v6079 = vpack.c.b16 %v5278, %v5277
    %v6080 = vpack.c.b16 %v5280, %v5279
    %v6081 = vpack.c.b16 %v5282, %v5281
    %v6082 = vpack.c.b16 %v5284, %v5283
    %v6083 = vpack.c.b16 %v5286, %v5285
    %v6084 = vpack.c.b16 %v5288, %v5287
    %v6085 = vpack.c.b16 %v5290, %v5289
    %v6086 = vpack.c.b16 %v5292, %v5291
    %v6087 = vpack.c.b16 %v5294, %v5293
    %v6088 = vpack.c.b16 %v5296, %v5295
    %v6089 = vpack.c.b16 %v5298, %v5297
    %v6090 = vpack.c.b16 %v5300, %v5299
    %v6091 = vpack.c.b16 %v5302, %v5301
    %v6092 = vpack.c.b16 %v5304, %v5303
    %v6093 = vpack.c.b16 %v5306, %v5305
    %v6094 = vpack.c.b16 %v5308, %v5307
    %v6095 = vpack.c.b16 %v5310, %v5309
    %v6096 = vpack.c.b16 %v5312, %v5311
    %v6097 = vpack.c.b16 %v5314, %v5313
    %v6098 = vpack.c.b16 %v5316, %v5315
    %v6099 = vpack.c.b16 %v5318, %v5317
    %v6100 = vpack.c.b16 %v5320, %v5319
    %v6101 = vpack.c.b16 %v5322, %v5321
    %v6102 = vpack.c.b16 %v5324, %v5323
    %v6103 = vpack.c.b16 %v5326, %v5325
    %v6104 = vpack.c.b16 %v5328, %v5327
    %v6105 = vpack.c.b16 %v5330, %v5329
    %v6106 = vpack.c.b16 %v5332, %v5331
    %v6107 = vpack.c.b16 %v5334, %v5333
    %v6108 = vpack.c.b16 %v5336, %v5335
    %v6109 = vpack.c.b16 %v5338, %v5337
    %v6110 = vpack.c.b16 %v5340, %v5339
    %v6111 = vpack.c.b16 %v5342, %v5341
    %v6112 = vpack.c.b16 %v5344, %v5343
    %6881 = vmatprep.subr.bf16.mxu0 0
    %6882 = vmatpush1.bf16.msra.mxu0 %v5345
    %6883 = vmatprep.subr.bf16.mxu0 0
    %6884 = vmatpush1.bf16.msra.mxu0 %v5346
    %6885 = vmatprep.subr.bf16.mxu0 0
    %6886 = vmatpush1.bf16.msra.mxu0 %v5347
    %6887 = vmatprep.subr.bf16.mxu0 0
    %6888 = vmatpush1.bf16.msra.mxu0 %v5348
    %6889 = vmatprep.subr.bf16.mxu0 0
    %6890 = vmatpush1.bf16.msra.mxu0 %v5349
    %6891 = vmatprep.subr.bf16.mxu0 0
    %6892 = vmatpush1.bf16.msra.mxu0 %v5350
    %6893 = vmatprep.subr.bf16.mxu0 0
    %6894 = vmatpush1.bf16.msra.mxu0 %v5351
    %6895 = vmatprep.subr.bf16.mxu0 0
    %6896 = vmatpush1.bf16.msra.mxu0 %v5352
    %6897 = vmatprep.subr.bf16.mxu0 0
    %6898 = vmatpush1.bf16.msra.mxu0 %v5353
    %6899 = vmatprep.subr.bf16.mxu0 0
    %6900 = vmatpush1.bf16.msra.mxu0 %v5354
    %6901 = vmatprep.subr.bf16.mxu0 0
    %6902 = vmatpush1.bf16.msra.mxu0 %v5355
    %6903 = vmatprep.subr.bf16.mxu0 0
    %6904 = vmatpush1.bf16.msra.mxu0 %v5356
    %6905 = vmatprep.subr.bf16.mxu0 0
    %6906 = vmatpush1.bf16.msra.mxu0 %v5357
    %6907 = vmatprep.subr.bf16.mxu0 0
    %6908 = vmatpush1.bf16.msra.mxu0 %v5358
    %6909 = vmatprep.subr.bf16.mxu0 0
    %6910 = vmatpush1.bf16.msra.mxu0 %v5359
    %6911 = vmatprep.subr.bf16.mxu0 0
    %6912 = vmatpush1.bf16.msra.mxu0 %v5360
    %6913 = vmatprep.mubr.bf16.mxu0 %v1626
    %6914 = vmatmul.mubr.bf16.gmra.mrb[0].mxu0 %v1612
    %v6915 = vpop.f32.mrb[0].mxu0
    %v6916 = vadd.f32 %v1575, %v6915
    %v6917 = vpop.f32.mrb[0].mxu0
    %v6918 = vpop.f32.mrb[0].mxu0
    %v6919 = vpop.f32.mrb[0].mxu0
    %6920 = vdwg.mxu0
    %6921 = vmatprep.subr.bf16.mxu0 0
    %6922 = vmatpush1.bf16.msra.mxu0 %v5361
    %6923 = vmatprep.subr.bf16.mxu0 0
    %6924 = vmatpush1.bf16.msra.mxu0 %v5362
    %6925 = vmatprep.subr.bf16.mxu0 0
    %6926 = vmatpush1.bf16.msra.mxu0 %v5363
    %6927 = vmatprep.subr.bf16.mxu0 0
    %6928 = vmatpush1.bf16.msra.mxu0 %v5364
    %6929 = vmatprep.subr.bf16.mxu0 0
    %6930 = vmatpush1.bf16.msra.mxu0 %v5365
    %6931 = vmatprep.subr.bf16.mxu0 0
    %6932 = vmatpush1.bf16.msra.mxu0 %v5366
    %6933 = vmatprep.subr.bf16.mxu0 0
    %6934 = vmatpush1.bf16.msra.mxu0 %v5367
    %6935 = vmatprep.subr.bf16.mxu0 0
    %6936 = vmatpush1.bf16.msra.mxu0 %v5368
    %6937 = vmatprep.subr.bf16.mxu0 0
    %6938 = vmatpush1.bf16.msra.mxu0 %v5369
    %6939 = vmatprep.subr.bf16.mxu0 0
    %6940 = vmatpush1.bf16.msra.mxu0 %v5370
    %6941 = vmatprep.subr.bf16.mxu0 0
    %6942 = vmatpush1.bf16.msra.mxu0 %v5371
    %6943 = vmatprep.subr.bf16.mxu0 0
    %6944 = vmatpush1.bf16.msra.mxu0 %v5372
    %6945 = vmatprep.subr.bf16.mxu0 0
    %6946 = vmatpush1.bf16.msra.mxu0 %v5373
    %6947 = vmatprep.subr.bf16.mxu0 0
    %6948 = vmatpush1.bf16.msra.mxu0 %v5374
    %6949 = vmatprep.subr.bf16.mxu0 0
    %6950 = vmatpush1.bf16.msra.mxu0 %v5375
    %6951 = vmatprep.subr.bf16.mxu0 0
    %6952 = vmatpush1.bf16.msra.mxu0 %v5376
    %6953 = vmatprep.mubr.bf16.mxu0 %v1636
    %6954 = vmatmul.mubr.bf16.gmra.mrb[0].mxu0 %v1634
    %v6955 = vpop.f32.mrb[0].mxu0
    %v6956 = vadd.f32 %v6916, %v6955
    %v6957 = vpop.f32.mrb[0].mxu0
    %v6958 = vpop.f32.mrb[0].mxu0
    %v6959 = vpop.f32.mrb[0].mxu0
    %6960 = vdwg.mxu0
    %6961 = vmatprep.subr.bf16.mxu0 0
    %6962 = vmatpush1.bf16.msra.mxu0 %v5377
    %6963 = vmatprep.subr.bf16.mxu0 0
    %6964 = vmatpush1.bf16.msra.mxu0 %v5378
    %6965 = vmatprep.subr.bf16.mxu0 0
    %6966 = vmatpush1.bf16.msra.mxu0 %v5379
    %6967 = vmatprep.subr.bf16.mxu0 0
    %6968 = vmatpush1.bf16.msra.mxu0 %v5380
    %6969 = vmatprep.subr.bf16.mxu0 0
    %6970 = vmatpush1.bf16.msra.mxu0 %v5381
    %6971 = vmatprep.subr.bf16.mxu0 0
    %6972 = vmatpush1.bf16.msra.mxu0 %v5382
    %6973 = vmatprep.subr.bf16.mxu0 0
    %6974 = vmatpush1.bf16.msra.mxu0 %v5383
    %6975 = vmatprep.subr.bf16.mxu0 0
    %6976 = vmatpush1.bf16.msra.mxu0 %v5384
    %6977 = vmatprep.subr.bf16.mxu0 0
    %6978 = vmatpush1.bf16.msra.mxu0 %v5385
    %6979 = vmatprep.subr.bf16.mxu0 0
    %6980 = vmatpush1.bf16.msra.mxu0 %v5386
    %6981 = vmatprep.subr.bf16.mxu0 0
    %6982 = vmatpush1.bf16.msra.mxu0 %v5387
    %6983 = vmatprep.subr.bf16.mxu0 0
    %6984 = vmatpush1.bf16.msra.mxu0 %v5388
    %6985 = vmatprep.subr.bf16.mxu0 0
    %6986 = vmatpush1.bf16.msra.mxu0 %v5389
    %6987 = vmatprep.subr.bf16.mxu0 0
    %6988 = vmatpush1.bf16.msra.mxu0 %v5390
    %6989 = vmatprep.subr.bf16.mxu0 0
    %6990 = vmatpush1.bf16.msra.mxu0 %v5391
    %6991 = vmatprep.subr.bf16.mxu0 0
    %6992 = vmatpush1.bf16.msra.mxu0 %v5392
    %6993 = vmatprep.mubr.bf16.mxu0 %v1633
    %6994 = vmatmul.mubr.bf16.gmra.mrb[0].mxu0 %v1619
    %v6995 = vpop.f32.mrb[0].mxu0
    %v6996 = vadd.f32 %v6956, %v6995
    %v6997 = vpop.f32.mrb[0].mxu0
    %v6998 = vpop.f32.mrb[0].mxu0
    %v6999 = vpop.f32.mrb[0].mxu0
    %7000 = vdwg.mxu0
    %7001 = vmatprep.subr.bf16.mxu0 0
    %7002 = vmatpush1.bf16.msra.mxu0 %v5393
    %7003 = vmatprep.subr.bf16.mxu0 0
    %7004 = vmatpush1.bf16.msra.mxu0 %v5394
    %7005 = vmatprep.subr.bf16.mxu0 0
    %7006 = vmatpush1.bf16.msra.mxu0 %v5395
    %7007 = vmatprep.subr.bf16.mxu0 0
    %7008 = vmatpush1.bf16.msra.mxu0 %v5396
    %7009 = vmatprep.subr.bf16.mxu0 0
    %7010 = vmatpush1.bf16.msra.mxu0 %v5397
    %7011 = vmatprep.subr.bf16.mxu0 0
    %7012 = vmatpush1.bf16.msra.mxu0 %v5398
    %7013 = vmatprep.subr.bf16.mxu0 0
    %7014 = vmatpush1.bf16.msra.mxu0 %v5399
    %7015 = vmatprep.subr.bf16.mxu0 0
    %7016 = vmatpush1.bf16.msra.mxu0 %v5400
    %7017 = vmatprep.subr.bf16.mxu0 0
    %7018 = vmatpush1.bf16.msra.mxu0 %v5401
    %7019 = vmatprep.subr.bf16.mxu0 0
    %7020 = vmatpush1.bf16.msra.mxu0 %v5402
    %7021 = vmatprep.subr.bf16.mxu0 0
    %7022 = vmatpush1.bf16.msra.mxu0 %v5403
    %7023 = vmatprep.subr.bf16.mxu0 0
    %7024 = vmatpush1.bf16.msra.mxu0 %v5404
    %7025 = vmatprep.subr.bf16.mxu0 0
    %7026 = vmatpush1.bf16.msra.mxu0 %v5405
    %7027 = vmatprep.subr.bf16.mxu0 0
    %7028 = vmatpush1.bf16.msra.mxu0 %v5406
    %7029 = vmatprep.subr.bf16.mxu0 0
    %7030 = vmatpush1.bf16.msra.mxu0 %v5407
    %7031 = vmatprep.subr.bf16.mxu0 0
    %7032 = vmatpush1.bf16.msra.mxu0 %v5408
    %7033 = vmatprep.mubr.bf16.mxu0 %v1637
    %7034 = vmatmul.mubr.bf16.gmra.mrb[0].mxu0 %v1635
    %v7035 = vpop.f32.mrb[0].mxu0
    %v7036 = vadd.f32 %v6996, %v7035
    %v7037 = vpop.f32.mrb[0].mxu0
    %v7038 = vpop.f32.mrb[0].mxu0
    %v7039 = vpop.f32.mrb[0].mxu0
    %7040 = vdwg.mxu0
    %7041 = vmatprep.subr.bf16.mxu0 0
    %7042 = vmatpush1.bf16.msra.mxu0 %v5409
    %7043 = vmatprep.subr.bf16.mxu0 0
    %7044 = vmatpush1.bf16.msra.mxu0 %v5410
    %7045 = vmatprep.subr.bf16.mxu0 0
    %7046 = vmatpush1.bf16.msra.mxu0 %v5411
    %7047 = vmatprep.subr.bf16.mxu0 0
    %7048 = vmatpush1.bf16.msra.mxu0 %v5412
    %7049 = vmatprep.subr.bf16.mxu0 0
    %7050 = vmatpush1.bf16.msra.mxu0 %v5413
    %7051 = vmatprep.subr.bf16.mxu0 0
    %7052 = vmatpush1.bf16.msra.mxu0 %v5414
    %7053 = vmatprep.subr.bf16.mxu0 0
    %7054 = vmatpush1.bf16.msra.mxu0 %v5415
    %7055 = vmatprep.subr.bf16.mxu0 0
    %7056 = vmatpush1.bf16.msra.mxu0 %v5416
    %7057 = vmatprep.subr.bf16.mxu0 0
    %7058 = vmatpush1.bf16.msra.mxu0 %v5417
    %7059 = vmatprep.subr.bf16.mxu0 0
    %7060 = vmatpush1.bf16.msra.mxu0 %v5418
    %7061 = vmatprep.subr.bf16.mxu0 0
    %7062 = vmatpush1.bf16.msra.mxu0 %v5419
    %7063 = vmatprep.subr.bf16.mxu0 0
    %7064 = vmatpush1.bf16.msra.mxu0 %v5420
    %7065 = vmatprep.subr.bf16.mxu0 0
    %7066 = vmatpush1.bf16.msra.mxu0 %v5421
    %7067 = vmatprep.subr.bf16.mxu0 0
    %7068 = vmatpush1.bf16.msra.mxu0 %v5422
    %7069 = vmatprep.subr.bf16.mxu0 0
    %7070 = vmatpush1.bf16.msra.mxu0 %v5423
    %7071 = vmatprep.subr.bf16.mxu0 0
    %7072 = vmatpush1.bf16.msra.mxu0 %v5424
    %7073 = vmatprep.mubr.bf16.mxu0 %v1675
    %7074 = vmatmul.mubr.bf16.gmra.mrb[0].mxu0 %v1661
    %v7075 = vpop.f32.mrb[0].mxu0
    %v7076 = vadd.f32 %v7036, %v7075
    %v7077 = vpop.f32.mrb[0].mxu0
    %v7078 = vpop.f32.mrb[0].mxu0
    %v7079 = vpop.f32.mrb[0].mxu0
    %7080 = vdwg.mxu0
    %7081 = vmatprep.subr.bf16.mxu0 0
    %7082 = vmatpush1.bf16.msra.mxu0 %v5425
    %7083 = vmatprep.subr.bf16.mxu0 0
    %7084 = vmatpush1.bf16.msra.mxu0 %v5426
    %7085 = vmatprep.subr.bf16.mxu0 0
    %7086 = vmatpush1.bf16.msra.mxu0 %v5427
    %7087 = vmatprep.subr.bf16.mxu0 0
    %7088 = vmatpush1.bf16.msra.mxu0 %v5428
    %7089 = vmatprep.subr.bf16.mxu0 0
    %7090 = vmatpush1.bf16.msra.mxu0 %v5429
    %7091 = vmatprep.subr.bf16.mxu0 0
    %7092 = vmatpush1.bf16.msra.mxu0 %v5430
    %7093 = vmatprep.subr.bf16.mxu0 0
    %7094 = vmatpush1.bf16.msra.mxu0 %v5431
    %7095 = vmatprep.subr.bf16.mxu0 0
    %7096 = vmatpush1.bf16.msra.mxu0 %v5432
    %7097 = vmatprep.subr.bf16.mxu0 0
    %7098 = vmatpush1.bf16.msra.mxu0 %v5433
    %7099 = vmatprep.subr.bf16.mxu0 0
    %7100 = vmatpush1.bf16.msra.mxu0 %v5434
    %7101 = vmatprep.subr.bf16.mxu0 0
    %7102 = vmatpush1.bf16.msra.mxu0 %v5435
    %7103 = vmatprep.subr.bf16.mxu0 0
    %7104 = vmatpush1.bf16.msra.mxu0 %v5436
    %7105 = vmatprep.subr.bf16.mxu0 0
    %7106 = vmatpush1.bf16.msra.mxu0 %v5437
    %7107 = vmatprep.subr.bf16.mxu0 0
    %7108 = vmatpush1.bf16.msra.mxu0 %v5438
    %7109 = vmatprep.subr.bf16.mxu0 0
    %7110 = vmatpush1.bf16.msra.mxu0 %v5439
    %7111 = vmatprep.subr.bf16.mxu0 0
    %7112 = vmatpush1.bf16.msra.mxu0 %v5440
    %7113 = vmatprep.mubr.bf16.mxu0 %v1685
    %7114 = vmatmul.mubr.bf16.gmra.mrb[0].mxu0 %v1683
    %v7115 = vpop.f32.mrb[0].mxu0
    %v7116 = vadd.f32 %v7076, %v7115
    %v7117 = vpop.f32.mrb[0].mxu0
    %v7118 = vpop.f32.mrb[0].mxu0
    %v7119 = vpop.f32.mrb[0].mxu0
    %7120 = vdwg.mxu0
    %7121 = vmatprep.subr.bf16.mxu0 0
    %7122 = vmatpush1.bf16.msra.mxu0 %v5441
    %7123 = vmatprep.subr.bf16.mxu0 0
    %7124 = vmatpush1.bf16.msra.mxu0 %v5442
    %7125 = vmatprep.subr.bf16.mxu0 0
    %7126 = vmatpush1.bf16.msra.mxu0 %v5443
    %7127 = vmatprep.subr.bf16.mxu0 0
    %7128 = vmatpush1.bf16.msra.mxu0 %v5444
    %7129 = vmatprep.subr.bf16.mxu0 0
    %7130 = vmatpush1.bf16.msra.mxu0 %v5445
    %7131 = vmatprep.subr.bf16.mxu0 0
    %7132 = vmatpush1.bf16.msra.mxu0 %v5446
    %7133 = vmatprep.subr.bf16.mxu0 0
    %7134 = vmatpush1.bf16.msra.mxu0 %v5447
    %7135 = vmatprep.subr.bf16.mxu0 0
    %7136 = vmatpush1.bf16.msra.mxu0 %v5448
    %7137 = vmatprep.subr.bf16.mxu0 0
    %7138 = vmatpush1.bf16.msra.mxu0 %v5449
    %7139 = vmatprep.subr.bf16.mxu0 0
    %7140 = vmatpush1.bf16.msra.mxu0 %v5450
    %7141 = vmatprep.subr.bf16.mxu0 0
    %7142 = vmatpush1.bf16.msra.mxu0 %v5451
    %7143 = vmatprep.subr.bf16.mxu0 0
    %7144 = vmatpush1.bf16.msra.mxu0 %v5452
    %7145 = vmatprep.subr.bf16.mxu0 0
    %7146 = vmatpush1.bf16.msra.mxu0 %v5453
    %7147 = vmatprep.subr.bf16.mxu0 0
    %7148 = vmatpush1.bf16.msra.mxu0 %v5454
    %7149 = vmatprep.subr.bf16.mxu0 0
    %7150 = vmatpush1.bf16.msra.mxu0 %v5455
    %7151 = vmatprep.subr.bf16.mxu0 0
    %7152 = vmatpush1.bf16.msra.mxu0 %v5456
    %7153 = vmatprep.mubr.bf16.mxu0 %v1682
    %7154 = vmatmul.mubr.bf16.gmra.mrb[0].mxu0 %v1668
    %v7155 = vpop.f32.mrb[0].mxu0
    %v7156 = vadd.f32 %v7116, %v7155
    %v7157 = vpop.f32.mrb[0].mxu0
    %v7158 = vpop.f32.mrb[0].mxu0
    %v7159 = vpop.f32.mrb[0].mxu0
    %7160 = vdwg.mxu0
    %7161 = vmatprep.subr.bf16.mxu0 0
    %7162 = vmatpush1.bf16.msra.mxu0 %v5457
    %7163 = vmatprep.subr.bf16.mxu0 0
    %7164 = vmatpush1.bf16.msra.mxu0 %v5458
    %7165 = vmatprep.subr.bf16.mxu0 0
    %7166 = vmatpush1.bf16.msra.mxu0 %v5459
    %7167 = vmatprep.subr.bf16.mxu0 0
    %7168 = vmatpush1.bf16.msra.mxu0 %v5460
    %7169 = vmatprep.subr.bf16.mxu0 0
    %7170 = vmatpush1.bf16.msra.mxu0 %v5461
    %7171 = vmatprep.subr.bf16.mxu0 0
    %7172 = vmatpush1.bf16.msra.mxu0 %v5462
    %7173 = vmatprep.subr.bf16.mxu0 0
    %7174 = vmatpush1.bf16.msra.mxu0 %v5463
    %7175 = vmatprep.subr.bf16.mxu0 0
    %7176 = vmatpush1.bf16.msra.mxu0 %v5464
    %7177 = vmatprep.subr.bf16.mxu0 0
    %7178 = vmatpush1.bf16.msra.mxu0 %v5465
    %7179 = vmatprep.subr.bf16.mxu0 0
    %7180 = vmatpush1.bf16.msra.mxu0 %v5466
    %7181 = vmatprep.subr.bf16.mxu0 0
    %7182 = vmatpush1.bf16.msra.mxu0 %v5467
    %7183 = vmatprep.subr.bf16.mxu0 0
    %7184 = vmatpush1.bf16.msra.mxu0 %v5468
    %7185 = vmatprep.subr.bf16.mxu0 0
    %7186 = vmatpush1.bf16.msra.mxu0 %v5469
    %7187 = vmatprep.subr.bf16.mxu0 0
    %7188 = vmatpush1.bf16.msra.mxu0 %v5470
    %7189 = vmatprep.subr.bf16.mxu0 0
    %7190 = vmatpush1.bf16.msra.mxu0 %v5471
    %7191 = vmatprep.subr.bf16.mxu0 0
    %7192 = vmatpush1.bf16.msra.mxu0 %v5472
    %7193 = vmatprep.mubr.bf16.mxu0 %v1686
    %7194 = vmatmul.mubr.bf16.gmra.mrb[0].mxu0 %v1684
    %v7195 = vpop.f32.mrb[0].mxu0
    %v7196 = vadd.f32 %v7156, %v7195
    %v7197 = vpop.f32.mrb[0].mxu0
    %v7198 = vpop.f32.mrb[0].mxu0
    %v7199 = vpop.f32.mrb[0].mxu0
    %7200 = vdwg.mxu0
    %7201 = vmatprep.subr.bf16.mxu0 0
    %7202 = vmatpush1.bf16.msra.mxu0 %v5473
    %7203 = vmatprep.subr.bf16.mxu0 0
    %7204 = vmatpush1.bf16.msra.mxu0 %v5474
    %7205 = vmatprep.subr.bf16.mxu0 0
    %7206 = vmatpush1.bf16.msra.mxu0 %v5475
    %7207 = vmatprep.subr.bf16.mxu0 0
    %7208 = vmatpush1.bf16.msra.mxu0 %v5476
    %7209 = vmatprep.subr.bf16.mxu0 0
    %7210 = vmatpush1.bf16.msra.mxu0 %v5477
    %7211 = vmatprep.subr.bf16.mxu0 0
    %7212 = vmatpush1.bf16.msra.mxu0 %v5478
    %7213 = vmatprep.subr.bf16.mxu0 0
    %7214 = vmatpush1.bf16.msra.mxu0 %v5479
    %7215 = vmatprep.subr.bf16.mxu0 0
    %7216 = vmatpush1.bf16.msra.mxu0 %v5480
    %7217 = vmatprep.subr.bf16.mxu0 0
    %7218 = vmatpush1.bf16.msra.mxu0 %v5481
    %7219 = vmatprep.subr.bf16.mxu0 0
    %7220 = vmatpush1.bf16.msra.mxu0 %v5482
    %7221 = vmatprep.subr.bf16.mxu0 0
    %7222 = vmatpush1.bf16.msra.mxu0 %v5483
    %7223 = vmatprep.subr.bf16.mxu0 0
    %7224 = vmatpush1.bf16.msra.mxu0 %v5484
    %7225 = vmatprep.subr.bf16.mxu0 0
    %7226 = vmatpush1.bf16.msra.mxu0 %v5485
    %7227 = vmatprep.subr.bf16.mxu0 0
    %7228 = vmatpush1.bf16.msra.mxu0 %v5486
    %7229 = vmatprep.subr.bf16.mxu0 0
    %7230 = vmatpush1.bf16.msra.mxu0 %v5487
    %7231 = vmatprep.subr.bf16.mxu0 0
    %7232 = vmatpush1.bf16.msra.mxu0 %v5488
    %7233 = vmatprep.mubr.bf16.mxu0 %v1724
    %7234 = vmatmul.mubr.bf16.gmra.mrb[0].mxu0 %v1710
    %v7235 = vpop.f32.mrb[0].mxu0
    %v7236 = vadd.f32 %v7196, %v7235
    %v7237 = vpop.f32.mrb[0].mxu0
    %v7238 = vpop.f32.mrb[0].mxu0
    %v7239 = vpop.f32.mrb[0].mxu0
    %7240 = vdwg.mxu0
    %7241 = vmatprep.subr.bf16.mxu0 0
    %7242 = vmatpush1.bf16.msra.mxu0 %v5489
    %7243 = vmatprep.subr.bf16.mxu0 0
    %7244 = vmatpush1.bf16.msra.mxu0 %v5490
    %7245 = vmatprep.subr.bf16.mxu0 0
    %7246 = vmatpush1.bf16.msra.mxu0 %v5491
    %7247 = vmatprep.subr.bf16.mxu0 0
    %7248 = vmatpush1.bf16.msra.mxu0 %v5492
    %7249 = vmatprep.subr.bf16.mxu0 0
    %7250 = vmatpush1.bf16.msra.mxu0 %v5493
    %7251 = vmatprep.subr.bf16.mxu0 0
    %7252 = vmatpush1.bf16.msra.mxu0 %v5494
    %7253 = vmatprep.subr.bf16.mxu0 0
    %7254 = vmatpush1.bf16.msra.mxu0 %v5495
    %7255 = vmatprep.subr.bf16.mxu0 0
    %7256 = vmatpush1.bf16.msra.mxu0 %v5496
    %7257 = vmatprep.subr.bf16.mxu0 0
    %7258 = vmatpush1.bf16.msra.mxu0 %v5497
    %7259 = vmatprep.subr.bf16.mxu0 0
    %7260 = vmatpush1.bf16.msra.mxu0 %v5498
    %7261 = vmatprep.subr.bf16.mxu0 0
    %7262 = vmatpush1.bf16.msra.mxu0 %v5499
    %7263 = vmatprep.subr.bf16.mxu0 0
    %7264 = vmatpush1.bf16.msra.mxu0 %v5500
    %7265 = vmatprep.subr.bf16.mxu0 0
    %7266 = vmatpush1.bf16.msra.mxu0 %v5501
    %7267 = vmatprep.subr.bf16.mxu0 0
    %7268 = vmatpush1.bf16.msra.mxu0 %v5502
    %7269 = vmatprep.subr.bf16.mxu0 0
    %7270 = vmatpush1.bf16.msra.mxu0 %v5503
    %7271 = vmatprep.subr.bf16.mxu0 0
    %7272 = vmatpush1.bf16.msra.mxu0 %v5504
    %7273 = vmatprep.mubr.bf16.mxu0 %v1734
    %7274 = vmatmul.mubr.bf16.gmra.mrb[0].mxu0 %v1732
    %v7275 = vpop.f32.mrb[0].mxu0
    %v7276 = vadd.f32 %v7236, %v7275
    %v7277 = vpop.f32.mrb[0].mxu0
    %v7278 = vpop.f32.mrb[0].mxu0
    %v7279 = vpop.f32.mrb[0].mxu0
    %7280 = vdwg.mxu0
    %7281 = vmatprep.subr.bf16.mxu0 0
    %7282 = vmatpush1.bf16.msra.mxu0 %v5505
    %7283 = vmatprep.subr.bf16.mxu0 0
    %7284 = vmatpush1.bf16.msra.mxu0 %v5506
    %7285 = vmatprep.subr.bf16.mxu0 0
    %7286 = vmatpush1.bf16.msra.mxu0 %v5507
    %7287 = vmatprep.subr.bf16.mxu0 0
    %7288 = vmatpush1.bf16.msra.mxu0 %v5508
    %7289 = vmatprep.subr.bf16.mxu0 0
    %7290 = vmatpush1.bf16.msra.mxu0 %v5509
    %7291 = vmatprep.subr.bf16.mxu0 0
    %7292 = vmatpush1.bf16.msra.mxu0 %v5510
    %7293 = vmatprep.subr.bf16.mxu0 0
    %7294 = vmatpush1.bf16.msra.mxu0 %v5511
    %7295 = vmatprep.subr.bf16.mxu0 0
    %7296 = vmatpush1.bf16.msra.mxu0 %v5512
    %7297 = vmatprep.subr.bf16.mxu0 0
    %7298 = vmatpush1.bf16.msra.mxu0 %v5513
    %7299 = vmatprep.subr.bf16.mxu0 0
    %7300 = vmatpush1.bf16.msra.mxu0 %v5514
    %7301 = vmatprep.subr.bf16.mxu0 0
    %7302 = vmatpush1.bf16.msra.mxu0 %v5515
    %7303 = vmatprep.subr.bf16.mxu0 0
    %7304 = vmatpush1.bf16.msra.mxu0 %v5516
    %7305 = vmatprep.subr.bf16.mxu0 0
    %7306 = vmatpush1.bf16.msra.mxu0 %v5517
    %7307 = vmatprep.subr.bf16.mxu0 0
    %7308 = vmatpush1.bf16.msra.mxu0 %v5518
    %7309 = vmatprep.subr.bf16.mxu0 0
    %7310 = vmatpush1.bf16.msra.mxu0 %v5519
    %7311 = vmatprep.subr.bf16.mxu0 0
    %7312 = vmatpush1.bf16.msra.mxu0 %v5520
    %7313 = vmatprep.mubr.bf16.mxu0 %v1731
    %7314 = vmatmul.mubr.bf16.gmra.mrb[0].mxu0 %v1717
    %v7315 = vpop.f32.mrb[0].mxu0
    %v7316 = vadd.f32 %v7276, %v7315
    %v7317 = vpop.f32.mrb[0].mxu0
    %v7318 = vpop.f32.mrb[0].mxu0
    %v7319 = vpop.f32.mrb[0].mxu0
    %7320 = vdwg.mxu0
    %7321 = vmatprep.subr.bf16.mxu0 0
    %7322 = vmatpush1.bf16.msra.mxu0 %v5521
    %7323 = vmatprep.subr.bf16.mxu0 0
    %7324 = vmatpush1.bf16.msra.mxu0 %v5522
    %7325 = vmatprep.subr.bf16.mxu0 0
    %7326 = vmatpush1.bf16.msra.mxu0 %v5523
    %7327 = vmatprep.subr.bf16.mxu0 0
    %7328 = vmatpush1.bf16.msra.mxu0 %v5524
    %7329 = vmatprep.subr.bf16.mxu0 0
    %7330 = vmatpush1.bf16.msra.mxu0 %v5525
    %7331 = vmatprep.subr.bf16.mxu0 0
    %7332 = vmatpush1.bf16.msra.mxu0 %v5526
    %7333 = vmatprep.subr.bf16.mxu0 0
    %7334 = vmatpush1.bf16.msra.mxu0 %v5527
    %7335 = vmatprep.subr.bf16.mxu0 0
    %7336 = vmatpush1.bf16.msra.mxu0 %v5528
    %7337 = vmatprep.subr.bf16.mxu0 0
    %7338 = vmatpush1.bf16.msra.mxu0 %v5529
    %7339 = vmatprep.subr.bf16.mxu0 0
    %7340 = vmatpush1.bf16.msra.mxu0 %v5530
    %7341 = vmatprep.subr.bf16.mxu0 0
    %7342 = vmatpush1.bf16.msra.mxu0 %v5531
    %7343 = vmatprep.subr.bf16.mxu0 0
    %7344 = vmatpush1.bf16.msra.mxu0 %v5532
    %7345 = vmatprep.subr.bf16.mxu0 0
    %7346 = vmatpush1.bf16.msra.mxu0 %v5533
    %7347 = vmatprep.subr.bf16.mxu0 0
    %7348 = vmatpush1.bf16.msra.mxu0 %v5534
    %7349 = vmatprep.subr.bf16.mxu0 0
    %7350 = vmatpush1.bf16.msra.mxu0 %v5535
    %7351 = vmatprep.subr.bf16.mxu0 0
    %7352 = vmatpush1.bf16.msra.mxu0 %v5536
    %7353 = vmatprep.mubr.bf16.mxu0 %v1735
    %7354 = vmatmul.mubr.bf16.gmra.mrb[0].mxu0 %v1733
    %v7355 = vpop.f32.mrb[0].mxu0
    %v7356 = vadd.f32 %v7316, %v7355
    %v7357 = vpop.f32.mrb[0].mxu0
    %v7358 = vpop.f32.mrb[0].mxu0
    %v7359 = vpop.f32.mrb[0].mxu0
    %7360 = vdwg.mxu0
    %7361 = vmatprep.subr.bf16.mxu0 0
    %7362 = vmatpush1.bf16.msra.mxu0 %v5537
    %7363 = vmatprep.subr.bf16.mxu0 0
    %7364 = vmatpush1.bf16.msra.mxu0 %v5538
    %7365 = vmatprep.subr.bf16.mxu0 0
    %7366 = vmatpush1.bf16.msra.mxu0 %v5539
    %7367 = vmatprep.subr.bf16.mxu0 0
    %7368 = vmatpush1.bf16.msra.mxu0 %v5540
    %7369 = vmatprep.subr.bf16.mxu0 0
    %7370 = vmatpush1.bf16.msra.mxu0 %v5541
    %7371 = vmatprep.subr.bf16.mxu0 0
    %7372 = vmatpush1.bf16.msra.mxu0 %v5542
    %7373 = vmatprep.subr.bf16.mxu0 0
    %7374 = vmatpush1.bf16.msra.mxu0 %v5543
    %7375 = vmatprep.subr.bf16.mxu0 0
    %7376 = vmatpush1.bf16.msra.mxu0 %v5544
    %7377 = vmatprep.subr.bf16.mxu0 0
    %7378 = vmatpush1.bf16.msra.mxu0 %v5545
    %7379 = vmatprep.subr.bf16.mxu0 0
    %7380 = vmatpush1.bf16.msra.mxu0 %v5546
    %7381 = vmatprep.subr.bf16.mxu0 0
    %7382 = vmatpush1.bf16.msra.mxu0 %v5547
    %7383 = vmatprep.subr.bf16.mxu0 0
    %7384 = vmatpush1.bf16.msra.mxu0 %v5548
    %7385 = vmatprep.subr.bf16.mxu0 0
    %7386 = vmatpush1.bf16.msra.mxu0 %v5549
    %7387 = vmatprep.subr.bf16.mxu0 0
    %7388 = vmatpush1.bf16.msra.mxu0 %v5550
    %7389 = vmatprep.subr.bf16.mxu0 0
    %7390 = vmatpush1.bf16.msra.mxu0 %v5551
    %7391 = vmatprep.subr.bf16.mxu0 0
    %7392 = vmatpush1.bf16.msra.mxu0 %v5552
    %7393 = vmatprep.mubr.bf16.mxu0 %v1773
    %7394 = vmatmul.mubr.bf16.gmra.mrb[0].mxu0 %v1759
    %v7395 = vpop.f32.mrb[0].mxu0
    %v7396 = vadd.f32 %v7356, %v7395
    %v7397 = vpop.f32.mrb[0].mxu0
    %v7398 = vpop.f32.mrb[0].mxu0
    %v7399 = vpop.f32.mrb[0].mxu0
    %7400 = vdwg.mxu0
    %7401 = vmatprep.subr.bf16.mxu0 0
    %7402 = vmatpush1.bf16.msra.mxu0 %v5553
    %7403 = vmatprep.subr.bf16.mxu0 0
    %7404 = vmatpush1.bf16.msra.mxu0 %v5554
    %7405 = vmatprep.subr.bf16.mxu0 0
    %7406 = vmatpush1.bf16.msra.mxu0 %v5555
    %7407 = vmatprep.subr.bf16.mxu0 0
    %7408 = vmatpush1.bf16.msra.mxu0 %v5556
    %7409 = vmatprep.subr.bf16.mxu0 0
    %7410 = vmatpush1.bf16.msra.mxu0 %v5557
    %7411 = vmatprep.subr.bf16.mxu0 0
    %7412 = vmatpush1.bf16.msra.mxu0 %v5558
    %7413 = vmatprep.subr.bf16.mxu0 0
    %7414 = vmatpush1.bf16.msra.mxu0 %v5559
    %7415 = vmatprep.subr.bf16.mxu0 0
    %7416 = vmatpush1.bf16.msra.mxu0 %v5560
    %7417 = vmatprep.subr.bf16.mxu0 0
    %7418 = vmatpush1.bf16.msra.mxu0 %v5561
    %7419 = vmatprep.subr.bf16.mxu0 0
    %7420 = vmatpush1.bf16.msra.mxu0 %v5562
    %7421 = vmatprep.subr.bf16.mxu0 0
    %7422 = vmatpush1.bf16.msra.mxu0 %v5563
    %7423 = vmatprep.subr.bf16.mxu0 0
    %7424 = vmatpush1.bf16.msra.mxu0 %v5564
    %7425 = vmatprep.subr.bf16.mxu0 0
    %7426 = vmatpush1.bf16.msra.mxu0 %v5565
    %7427 = vmatprep.subr.bf16.mxu0 0
    %7428 = vmatpush1.bf16.msra.mxu0 %v5566
    %7429 = vmatprep.subr.bf16.mxu0 0
    %7430 = vmatpush1.bf16.msra.mxu0 %v5567
    %7431 = vmatprep.subr.bf16.mxu0 0
    %7432 = vmatpush1.bf16.msra.mxu0 %v5568
    %7433 = vmatprep.mubr.bf16.mxu0 %v1783
    %7434 = vmatmul.mubr.bf16.gmra.mrb[0].mxu0 %v1781
    %v7435 = vpop.f32.mrb[0].mxu0
    %v7436 = vadd.f32 %v7396, %v7435
    %v7437 = vpop.f32.mrb[0].mxu0
    %v7438 = vpop.f32.mrb[0].mxu0
    %v7439 = vpop.f32.mrb[0].mxu0
    %7440 = vdwg.mxu0
    %7441 = vmatprep.subr.bf16.mxu0 0
    %7442 = vmatpush1.bf16.msra.mxu0 %v5569
    %7443 = vmatprep.subr.bf16.mxu0 0
    %7444 = vmatpush1.bf16.msra.mxu0 %v5570
    %7445 = vmatprep.subr.bf16.mxu0 0
    %7446 = vmatpush1.bf16.msra.mxu0 %v5571
    %7447 = vmatprep.subr.bf16.mxu0 0
    %7448 = vmatpush1.bf16.msra.mxu0 %v5572
    %7449 = vmatprep.subr.bf16.mxu0 0
    %7450 = vmatpush1.bf16.msra.mxu0 %v5573
    %7451 = vmatprep.subr.bf16.mxu0 0
    %7452 = vmatpush1.bf16.msra.mxu0 %v5574
    %7453 = vmatprep.subr.bf16.mxu0 0
    %7454 = vmatpush1.bf16.msra.mxu0 %v5575
    %7455 = vmatprep.subr.bf16.mxu0 0
    %7456 = vmatpush1.bf16.msra.mxu0 %v5576
    %7457 = vmatprep.subr.bf16.mxu0 0
    %7458 = vmatpush1.bf16.msra.mxu0 %v5577
    %7459 = vmatprep.subr.bf16.mxu0 0
    %7460 = vmatpush1.bf16.msra.mxu0 %v5578
    %7461 = vmatprep.subr.bf16.mxu0 0
    %7462 = vmatpush1.bf16.msra.mxu0 %v5579
    %7463 = vmatprep.subr.bf16.mxu0 0
    %7464 = vmatpush1.bf16.msra.mxu0 %v5580
    %7465 = vmatprep.subr.bf16.mxu0 0
    %7466 = vmatpush1.bf16.msra.mxu0 %v5581
    %7467 = vmatprep.subr.bf16.mxu0 0
    %7468 = vmatpush1.bf16.msra.mxu0 %v5582
    %7469 = vmatprep.subr.bf16.mxu0 0
    %7470 = vmatpush1.bf16.msra.mxu0 %v5583
    %7471 = vmatprep.subr.bf16.mxu0 0
    %7472 = vmatpush1.bf16.msra.mxu0 %v5584
    %7473 = vmatprep.mubr.bf16.mxu0 %v1780
    %7474 = vmatmul.mubr.bf16.gmra.mrb[0].mxu0 %v1766
    %v7475 = vpop.f32.mrb[0].mxu0
    %v7476 = vadd.f32 %v7436, %v7475
    %v7477 = vpop.f32.mrb[0].mxu0
    %v7478 = vpop.f32.mrb[0].mxu0
    %v7479 = vpop.f32.mrb[0].mxu0
    %7480 = vdwg.mxu0
    %7481 = vmatprep.subr.bf16.mxu0 0
    %7482 = vmatpush1.bf16.msra.mxu0 %v5585
    %7483 = vmatprep.subr.bf16.mxu0 0
    %7484 = vmatpush1.bf16.msra.mxu0 %v5586
    %7485 = vmatprep.subr.bf16.mxu0 0
    %7486 = vmatpush1.bf16.msra.mxu0 %v5587
    %7487 = vmatprep.subr.bf16.mxu0 0
    %7488 = vmatpush1.bf16.msra.mxu0 %v5588
    %7489 = vmatprep.subr.bf16.mxu0 0
    %7490 = vmatpush1.bf16.msra.mxu0 %v5589
    %7491 = vmatprep.subr.bf16.mxu0 0
    %7492 = vmatpush1.bf16.msra.mxu0 %v5590
    %7493 = vmatprep.subr.bf16.mxu0 0
    %7494 = vmatpush1.bf16.msra.mxu0 %v5591
    %7495 = vmatprep.subr.bf16.mxu0 0
    %7496 = vmatpush1.bf16.msra.mxu0 %v5592
    %7497 = vmatprep.subr.bf16.mxu0 0
    %7498 = vmatpush1.bf16.msra.mxu0 %v5593
    %7499 = vmatprep.subr.bf16.mxu0 0
    %7500 = vmatpush1.bf16.msra.mxu0 %v5594
    %7501 = vmatprep.subr.bf16.mxu0 0
    %7502 = vmatpush1.bf16.msra.mxu0 %v5595
    %7503 = vmatprep.subr.bf16.mxu0 0
    %7504 = vmatpush1.bf16.msra.mxu0 %v5596
    %7505 = vmatprep.subr.bf16.mxu0 0
    %7506 = vmatpush1.bf16.msra.mxu0 %v5597
    %7507 = vmatprep.subr.bf16.mxu0 0
    %7508 = vmatpush1.bf16.msra.mxu0 %v5598
    %7509 = vmatprep.subr.bf16.mxu0 0
    %7510 = vmatpush1.bf16.msra.mxu0 %v5599
    %7511 = vmatprep.subr.bf16.mxu0 0
    %7512 = vmatpush1.bf16.msra.mxu0 %v5600
    %7513 = vmatprep.mubr.bf16.mxu0 %v1784
    %7514 = vmatmul.mubr.bf16.gmra.mrb[0].mxu0 %v1782
    %v7515 = vpop.f32.mrb[0].mxu0
    %v7516 = vadd.f32 %v7476, %v7515
    %v7517 = vpop.f32.mrb[0].mxu0
    %v7518 = vpop.f32.mrb[0].mxu0
    %v7519 = vpop.f32.mrb[0].mxu0
    %7520 = vdwg.mxu0
    %7521 = vmatprep.subr.bf16.mxu0 0
    %7522 = vmatpush1.bf16.msra.mxu0 %v5601
    %7523 = vmatprep.subr.bf16.mxu0 0
    %7524 = vmatpush1.bf16.msra.mxu0 %v5602
    %7525 = vmatprep.subr.bf16.mxu0 0
    %7526 = vmatpush1.bf16.msra.mxu0 %v5603
    %7527 = vmatprep.subr.bf16.mxu0 0
    %7528 = vmatpush1.bf16.msra.mxu0 %v5604
    %7529 = vmatprep.subr.bf16.mxu0 0
    %7530 = vmatpush1.bf16.msra.mxu0 %v5605
    %7531 = vmatprep.subr.bf16.mxu0 0
    %7532 = vmatpush1.bf16.msra.mxu0 %v5606
    %7533 = vmatprep.subr.bf16.mxu0 0
    %7534 = vmatpush1.bf16.msra.mxu0 %v5607
    %7535 = vmatprep.subr.bf16.mxu0 0
    %7536 = vmatpush1.bf16.msra.mxu0 %v5608
    %7537 = vmatprep.subr.bf16.mxu0 0
    %7538 = vmatpush1.bf16.msra.mxu0 %v5609
    %7539 = vmatprep.subr.bf16.mxu0 0
    %7540 = vmatpush1.bf16.msra.mxu0 %v5610
    %7541 = vmatprep.subr.bf16.mxu0 0
    %7542 = vmatpush1.bf16.msra.mxu0 %v5611
    %7543 = vmatprep.subr.bf16.mxu0 0
    %7544 = vmatpush1.bf16.msra.mxu0 %v5612
    %7545 = vmatprep.subr.bf16.mxu0 0
    %7546 = vmatpush1.bf16.msra.mxu0 %v5613
    %7547 = vmatprep.subr.bf16.mxu0 0
    %7548 = vmatpush1.bf16.msra.mxu0 %v5614
    %7549 = vmatprep.subr.bf16.mxu0 0
    %7550 = vmatpush1.bf16.msra.mxu0 %v5615
    %7551 = vmatprep.subr.bf16.mxu0 0
    %7552 = vmatpush1.bf16.msra.mxu0 %v5616
    %7553 = vmatprep.mubr.bf16.mxu0 %v1822
    %7554 = vmatmul.mubr.bf16.gmra.mrb[0].mxu0 %v1808
    %v7555 = vpop.f32.mrb[0].mxu0
    %v7556 = vadd.f32 %v7516, %v7555
    %v7557 = vpop.f32.mrb[0].mxu0
    %v7558 = vpop.f32.mrb[0].mxu0
    %v7559 = vpop.f32.mrb[0].mxu0
    %7560 = vdwg.mxu0
    %7561 = vmatprep.subr.bf16.mxu0 0
    %7562 = vmatpush1.bf16.msra.mxu0 %v5617
    %7563 = vmatprep.subr.bf16.mxu0 0
    %7564 = vmatpush1.bf16.msra.mxu0 %v5618
    %7565 = vmatprep.subr.bf16.mxu0 0
    %7566 = vmatpush1.bf16.msra.mxu0 %v5619
    %7567 = vmatprep.subr.bf16.mxu0 0
    %7568 = vmatpush1.bf16.msra.mxu0 %v5620
    %7569 = vmatprep.subr.bf16.mxu0 0
    %7570 = vmatpush1.bf16.msra.mxu0 %v5621
    %7571 = vmatprep.subr.bf16.mxu0 0
    %7572 = vmatpush1.bf16.msra.mxu0 %v5622
    %7573 = vmatprep.subr.bf16.mxu0 0
    %7574 = vmatpush1.bf16.msra.mxu0 %v5623
    %7575 = vmatprep.subr.bf16.mxu0 0
    %7576 = vmatpush1.bf16.msra.mxu0 %v5624
    %7577 = vmatprep.subr.bf16.mxu0 0
    %7578 = vmatpush1.bf16.msra.mxu0 %v5625
    %7579 = vmatprep.subr.bf16.mxu0 0
    %7580 = vmatpush1.bf16.msra.mxu0 %v5626
    %7581 = vmatprep.subr.bf16.mxu0 0
    %7582 = vmatpush1.bf16.msra.mxu0 %v5627
    %7583 = vmatprep.subr.bf16.mxu0 0
    %7584 = vmatpush1.bf16.msra.mxu0 %v5628
    %7585 = vmatprep.subr.bf16.mxu0 0
    %7586 = vmatpush1.bf16.msra.mxu0 %v5629
    %7587 = vmatprep.subr.bf16.mxu0 0
    %7588 = vmatpush1.bf16.msra.mxu0 %v5630
    %7589 = vmatprep.subr.bf16.mxu0 0
    %7590 = vmatpush1.bf16.msra.mxu0 %v5631
    %7591 = vmatprep.subr.bf16.mxu0 0
    %7592 = vmatpush1.bf16.msra.mxu0 %v5632
    %7593 = vmatprep.mubr.bf16.mxu0 %v1832
    %7594 = vmatmul.mubr.bf16.gmra.mrb[0].mxu0 %v1830
    %v7595 = vpop.f32.mrb[0].mxu0
    %v7596 = vadd.f32 %v7556, %v7595
    %v7597 = vpop.f32.mrb[0].mxu0
    %v7598 = vpop.f32.mrb[0].mxu0
    %v7599 = vpop.f32.mrb[0].mxu0
    %7600 = vdwg.mxu0
    %7601 = vmatprep.subr.bf16.mxu0 0
    %7602 = vmatpush1.bf16.msra.mxu0 %v5633
    %7603 = vmatprep.subr.bf16.mxu0 0
    %7604 = vmatpush1.bf16.msra.mxu0 %v5634
    %7605 = vmatprep.subr.bf16.mxu0 0
    %7606 = vmatpush1.bf16.msra.mxu0 %v5635
    %7607 = vmatprep.subr.bf16.mxu0 0
    %7608 = vmatpush1.bf16.msra.mxu0 %v5636
    %7609 = vmatprep.subr.bf16.mxu0 0
    %7610 = vmatpush1.bf16.msra.mxu0 %v5637
    %7611 = vmatprep.subr.bf16.mxu0 0
    %7612 = vmatpush1.bf16.msra.mxu0 %v5638
    %7613 = vmatprep.subr.bf16.mxu0 0
    %7614 = vmatpush1.bf16.msra.mxu0 %v5639
    %7615 = vmatprep.subr.bf16.mxu0 0
    %7616 = vmatpush1.bf16.msra.mxu0 %v5640
    %7617 = vmatprep.subr.bf16.mxu0 0
    %7618 = vmatpush1.bf16.msra.mxu0 %v5641
    %7619 = vmatprep.subr.bf16.mxu0 0
    %7620 = vmatpush1.bf16.msra.mxu0 %v5642
    %7621 = vmatprep.subr.bf16.mxu0 0
    %7622 = vmatpush1.bf16.msra.mxu0 %v5643
    %7623 = vmatprep.subr.bf16.mxu0 0
    %7624 = vmatpush1.bf16.msra.mxu0 %v5644
    %7625 = vmatprep.subr.bf16.mxu0 0
    %7626 = vmatpush1.bf16.msra.mxu0 %v5645
    %7627 = vmatprep.subr.bf16.mxu0 0
    %7628 = vmatpush1.bf16.msra.mxu0 %v5646
    %7629 = vmatprep.subr.bf16.mxu0 0
    %7630 = vmatpush1.bf16.msra.mxu0 %v5647
    %7631 = vmatprep.subr.bf16.mxu0 0
    %7632 = vmatpush1.bf16.msra.mxu0 %v5648
    %7633 = vmatprep.mubr.bf16.mxu0 %v1829
    %7634 = vmatmul.mubr.bf16.gmra.mrb[0].mxu0 %v1815
    %v7635 = vpop.f32.mrb[0].mxu0
    %v7636 = vadd.f32 %v7596, %v7635
    %v7637 = vpop.f32.mrb[0].mxu0
    %v7638 = vpop.f32.mrb[0].mxu0
    %v7639 = vpop.f32.mrb[0].mxu0
    %7640 = vdwg.mxu0
    %7641 = vmatprep.subr.bf16.mxu0 0
    %7642 = vmatpush1.bf16.msra.mxu0 %v5649
    %7643 = vmatprep.subr.bf16.mxu0 0
    %7644 = vmatpush1.bf16.msra.mxu0 %v5650
    %7645 = vmatprep.subr.bf16.mxu0 0
    %7646 = vmatpush1.bf16.msra.mxu0 %v5651
    %7647 = vmatprep.subr.bf16.mxu0 0
    %7648 = vmatpush1.bf16.msra.mxu0 %v5652
    %7649 = vmatprep.subr.bf16.mxu0 0
    %7650 = vmatpush1.bf16.msra.mxu0 %v5653
    %7651 = vmatprep.subr.bf16.mxu0 0
    %7652 = vmatpush1.bf16.msra.mxu0 %v5654
    %7653 = vmatprep.subr.bf16.mxu0 0
    %7654 = vmatpush1.bf16.msra.mxu0 %v5655
    %7655 = vmatprep.subr.bf16.mxu0 0
    %7656 = vmatpush1.bf16.msra.mxu0 %v5656
    %7657 = vmatprep.subr.bf16.mxu0 0
    %7658 = vmatpush1.bf16.msra.mxu0 %v5657
    %7659 = vmatprep.subr.bf16.mxu0 0
    %7660 = vmatpush1.bf16.msra.mxu0 %v5658
    %7661 = vmatprep.subr.bf16.mxu0 0
    %7662 = vmatpush1.bf16.msra.mxu0 %v5659
    %7663 = vmatprep.subr.bf16.mxu0 0
    %7664 = vmatpush1.bf16.msra.mxu0 %v5660
    %7665 = vmatprep.subr.bf16.mxu0 0
    %7666 = vmatpush1.bf16.msra.mxu0 %v5661
    %7667 = vmatprep.subr.bf16.mxu0 0
    %7668 = vmatpush1.bf16.msra.mxu0 %v5662
    %7669 = vmatprep.subr.bf16.mxu0 0
    %7670 = vmatpush1.bf16.msra.mxu0 %v5663
    %7671 = vmatprep.subr.bf16.mxu0 0
    %7672 = vmatpush1.bf16.msra.mxu0 %v5664
    %7673 = vmatprep.mubr.bf16.mxu0 %v1833
    %7674 = vmatmul.mubr.bf16.gmra.mrb[0].mxu0 %v1831
    %v7675 = vpop.f32.mrb[0].mxu0
    %v7676 = vadd.f32 %v7636, %v7675
    %v7677 = vpop.f32.mrb[0].mxu0
    %v7678 = vpop.f32.mrb[0].mxu0
    %v7679 = vpop.f32.mrb[0].mxu0
    %7680 = vdwg.mxu0
    %7681 = vmatprep.subr.bf16.mxu0 0
    %7682 = vmatpush1.bf16.msra.mxu0 %v5665
    %7683 = vmatprep.subr.bf16.mxu0 0
    %7684 = vmatpush1.bf16.msra.mxu0 %v5666
    %7685 = vmatprep.subr.bf16.mxu0 0
    %7686 = vmatpush1.bf16.msra.mxu0 %v5667
    %7687 = vmatprep.subr.bf16.mxu0 0
    %7688 = vmatpush1.bf16.msra.mxu0 %v5668
    %7689 = vmatprep.subr.bf16.mxu0 0
    %7690 = vmatpush1.bf16.msra.mxu0 %v5669
    %7691 = vmatprep.subr.bf16.mxu0 0
    %7692 = vmatpush1.bf16.msra.mxu0 %v5670
    %7693 = vmatprep.subr.bf16.mxu0 0
    %7694 = vmatpush1.bf16.msra.mxu0 %v5671
    %7695 = vmatprep.subr.bf16.mxu0 0
    %7696 = vmatpush1.bf16.msra.mxu0 %v5672
    %7697 = vmatprep.subr.bf16.mxu0 0
    %7698 = vmatpush1.bf16.msra.mxu0 %v5673
    %7699 = vmatprep.subr.bf16.mxu0 0
    %7700 = vmatpush1.bf16.msra.mxu0 %v5674
    %7701 = vmatprep.subr.bf16.mxu0 0
    %7702 = vmatpush1.bf16.msra.mxu0 %v5675
    %7703 = vmatprep.subr.bf16.mxu0 0
    %7704 = vmatpush1.bf16.msra.mxu0 %v5676
    %7705 = vmatprep.subr.bf16.mxu0 0
    %7706 = vmatpush1.bf16.msra.mxu0 %v5677
    %7707 = vmatprep.subr.bf16.mxu0 0
    %7708 = vmatpush1.bf16.msra.mxu0 %v5678
    %7709 = vmatprep.subr.bf16.mxu0 0
    %7710 = vmatpush1.bf16.msra.mxu0 %v5679
    %7711 = vmatprep.subr.bf16.mxu0 0
    %7712 = vmatpush1.bf16.msra.mxu0 %v5680
    %7713 = vmatprep.mubr.bf16.mxu0 %v1871
    %7714 = vmatmul.mubr.bf16.gmra.mrb[0].mxu0 %v1857
    %v7715 = vpop.f32.mrb[0].mxu0
    %v7716 = vadd.f32 %v7676, %v7715
    %v7717 = vpop.f32.mrb[0].mxu0
    %v7718 = vpop.f32.mrb[0].mxu0
    %v7719 = vpop.f32.mrb[0].mxu0
    %7720 = vdwg.mxu0
    %7721 = vmatprep.subr.bf16.mxu0 0
    %7722 = vmatpush1.bf16.msra.mxu0 %v5681
    %7723 = vmatprep.subr.bf16.mxu0 0
    %7724 = vmatpush1.bf16.msra.mxu0 %v5682
    %7725 = vmatprep.subr.bf16.mxu0 0
    %7726 = vmatpush1.bf16.msra.mxu0 %v5683
    %7727 = vmatprep.subr.bf16.mxu0 0
    %7728 = vmatpush1.bf16.msra.mxu0 %v5684
    %7729 = vmatprep.subr.bf16.mxu0 0
    %7730 = vmatpush1.bf16.msra.mxu0 %v5685
    %7731 = vmatprep.subr.bf16.mxu0 0
    %7732 = vmatpush1.bf16.msra.mxu0 %v5686
    %7733 = vmatprep.subr.bf16.mxu0 0
    %7734 = vmatpush1.bf16.msra.mxu0 %v5687
    %7735 = vmatprep.subr.bf16.mxu0 0
    %7736 = vmatpush1.bf16.msra.mxu0 %v5688
    %7737 = vmatprep.subr.bf16.mxu0 0
    %7738 = vmatpush1.bf16.msra.mxu0 %v5689
    %7739 = vmatprep.subr.bf16.mxu0 0
    %7740 = vmatpush1.bf16.msra.mxu0 %v5690
    %7741 = vmatprep.subr.bf16.mxu0 0
    %7742 = vmatpush1.bf16.msra.mxu0 %v5691
    %7743 = vmatprep.subr.bf16.mxu0 0
    %7744 = vmatpush1.bf16.msra.mxu0 %v5692
    %7745 = vmatprep.subr.bf16.mxu0 0
    %7746 = vmatpush1.bf16.msra.mxu0 %v5693
    %7747 = vmatprep.subr.bf16.mxu0 0
    %7748 = vmatpush1.bf16.msra.mxu0 %v5694
    %7749 = vmatprep.subr.bf16.mxu0 0
    %7750 = vmatpush1.bf16.msra.mxu0 %v5695
    %7751 = vmatprep.subr.bf16.mxu0 0
    %7752 = vmatpush1.bf16.msra.mxu0 %v5696
    %7753 = vmatprep.mubr.bf16.mxu0 %v1881
    %7754 = vmatmul.mubr.bf16.gmra.mrb[0].mxu0 %v1879
    %v7755 = vpop.f32.mrb[0].mxu0
    %v7756 = vadd.f32 %v7716, %v7755
    %v7757 = vpop.f32.mrb[0].mxu0
    %v7758 = vpop.f32.mrb[0].mxu0
    %v7759 = vpop.f32.mrb[0].mxu0
    %7760 = vdwg.mxu0
    %7761 = vmatprep.subr.bf16.mxu0 0
    %7762 = vmatpush1.bf16.msra.mxu0 %v5697
    %7763 = vmatprep.subr.bf16.mxu0 0
    %7764 = vmatpush1.bf16.msra.mxu0 %v5698
    %7765 = vmatprep.subr.bf16.mxu0 0
    %7766 = vmatpush1.bf16.msra.mxu0 %v5699
    %7767 = vmatprep.subr.bf16.mxu0 0
    %7768 = vmatpush1.bf16.msra.mxu0 %v5700
    %7769 = vmatprep.subr.bf16.mxu0 0
    %7770 = vmatpush1.bf16.msra.mxu0 %v5701
    %7771 = vmatprep.subr.bf16.mxu0 0
    %7772 = vmatpush1.bf16.msra.mxu0 %v5702
    %7773 = vmatprep.subr.bf16.mxu0 0
    %7774 = vmatpush1.bf16.msra.mxu0 %v5703
    %7775 = vmatprep.subr.bf16.mxu0 0
    %7776 = vmatpush1.bf16.msra.mxu0 %v5704
    %7777 = vmatprep.subr.bf16.mxu0 0
    %7778 = vmatpush1.bf16.msra.mxu0 %v5705
    %7779 = vmatprep.subr.bf16.mxu0 0
    %7780 = vmatpush1.bf16.msra.mxu0 %v5706
    %7781 = vmatprep.subr.bf16.mxu0 0
    %7782 = vmatpush1.bf16.msra.mxu0 %v5707
    %7783 = vmatprep.subr.bf16.mxu0 0
    %7784 = vmatpush1.bf16.msra.mxu0 %v5708
    %7785 = vmatprep.subr.bf16.mxu0 0
    %7786 = vmatpush1.bf16.msra.mxu0 %v5709
    %7787 = vmatprep.subr.bf16.mxu0 0
    %7788 = vmatpush1.bf16.msra.mxu0 %v5710
    %7789 = vmatprep.subr.bf16.mxu0 0
    %7790 = vmatpush1.bf16.msra.mxu0 %v5711
    %7791 = vmatprep.subr.bf16.mxu0 0
    %7792 = vmatpush1.bf16.msra.mxu0 %v5712
    %7793 = vmatprep.mubr.bf16.mxu0 %v1878
    %7794 = vmatmul.mubr.bf16.gmra.mrb[0].mxu0 %v1864
    %v7795 = vpop.f32.mrb[0].mxu0
    %v7796 = vadd.f32 %v7756, %v7795
    %v7797 = vpop.f32.mrb[0].mxu0
    %v7798 = vpop.f32.mrb[0].mxu0
    %v7799 = vpop.f32.mrb[0].mxu0
    %7800 = vdwg.mxu0
    %7801 = vmatprep.subr.bf16.mxu0 0
    %7802 = vmatpush1.bf16.msra.mxu0 %v5713
    %7803 = vmatprep.subr.bf16.mxu0 0
    %7804 = vmatpush1.bf16.msra.mxu0 %v5714
    %7805 = vmatprep.subr.bf16.mxu0 0
    %7806 = vmatpush1.bf16.msra.mxu0 %v5715
    %7807 = vmatprep.subr.bf16.mxu0 0
    %7808 = vmatpush1.bf16.msra.mxu0 %v5716
    %7809 = vmatprep.subr.bf16.mxu0 0
    %7810 = vmatpush1.bf16.msra.mxu0 %v5717
    %7811 = vmatprep.subr.bf16.mxu0 0
    %7812 = vmatpush1.bf16.msra.mxu0 %v5718
    %7813 = vmatprep.subr.bf16.mxu0 0
    %7814 = vmatpush1.bf16.msra.mxu0 %v5719
    %7815 = vmatprep.subr.bf16.mxu0 0
    %7816 = vmatpush1.bf16.msra.mxu0 %v5720
    %7817 = vmatprep.subr.bf16.mxu0 0
    %7818 = vmatpush1.bf16.msra.mxu0 %v5721
    %7819 = vmatprep.subr.bf16.mxu0 0
    %7820 = vmatpush1.bf16.msra.mxu0 %v5722
    %7821 = vmatprep.subr.bf16.mxu0 0
    %7822 = vmatpush1.bf16.msra.mxu0 %v5723
    %7823 = vmatprep.subr.bf16.mxu0 0
    %7824 = vmatpush1.bf16.msra.mxu0 %v5724
    %7825 = vmatprep.subr.bf16.mxu0 0
    %7826 = vmatpush1.bf16.msra.mxu0 %v5725
    %7827 = vmatprep.subr.bf16.mxu0 0
    %7828 = vmatpush1.bf16.msra.mxu0 %v5726
    %7829 = vmatprep.subr.bf16.mxu0 0
    %7830 = vmatpush1.bf16.msra.mxu0 %v5727
    %7831 = vmatprep.subr.bf16.mxu0 0
    %7832 = vmatpush1.bf16.msra.mxu0 %v5728
    %7833 = vmatprep.mubr.bf16.mxu0 %v1882
    %7834 = vmatmul.mubr.bf16.gmra.mrb[0].mxu0 %v1880
    %v7835 = vpop.f32.mrb[0].mxu0
    %v7836 = vadd.f32 %v7796, %v7835
    %v7837 = vpop.f32.mrb[0].mxu0
    %v7838 = vpop.f32.mrb[0].mxu0
    %v7839 = vpop.f32.mrb[0].mxu0
    %7840 = vdwg.mxu0
    %7841 = vmatprep.subr.bf16.mxu0 0
    %7842 = vmatpush1.bf16.msra.mxu0 %v5729
    %7843 = vmatprep.subr.bf16.mxu0 0
    %7844 = vmatpush1.bf16.msra.mxu0 %v5730
    %7845 = vmatprep.subr.bf16.mxu0 0
    %7846 = vmatpush1.bf16.msra.mxu0 %v5731
    %7847 = vmatprep.subr.bf16.mxu0 0
    %7848 = vmatpush1.bf16.msra.mxu0 %v5732
    %7849 = vmatprep.subr.bf16.mxu0 0
    %7850 = vmatpush1.bf16.msra.mxu0 %v5733
    %7851 = vmatprep.subr.bf16.mxu0 0
    %7852 = vmatpush1.bf16.msra.mxu0 %v5734
    %7853 = vmatprep.subr.bf16.mxu0 0
    %7854 = vmatpush1.bf16.msra.mxu0 %v5735
    %7855 = vmatprep.subr.bf16.mxu0 0
    %7856 = vmatpush1.bf16.msra.mxu0 %v5736
    %7857 = vmatprep.subr.bf16.mxu0 0
    %7858 = vmatpush1.bf16.msra.mxu0 %v5737
    %7859 = vmatprep.subr.bf16.mxu0 0
    %7860 = vmatpush1.bf16.msra.mxu0 %v5738
    %7861 = vmatprep.subr.bf16.mxu0 0
    %7862 = vmatpush1.bf16.msra.mxu0 %v5739
    %7863 = vmatprep.subr.bf16.mxu0 0
    %7864 = vmatpush1.bf16.msra.mxu0 %v5740
    %7865 = vmatprep.subr.bf16.mxu0 0
    %7866 = vmatpush1.bf16.msra.mxu0 %v5741
    %7867 = vmatprep.subr.bf16.mxu0 0
    %7868 = vmatpush1.bf16.msra.mxu0 %v5742
    %7869 = vmatprep.subr.bf16.mxu0 0
    %7870 = vmatpush1.bf16.msra.mxu0 %v5743
    %7871 = vmatprep.subr.bf16.mxu0 0
    %7872 = vmatpush1.bf16.msra.mxu0 %v5744
    %7873 = vmatprep.mubr.bf16.mxu0 %v1920
    %7874 = vmatmul.mubr.bf16.gmra.mrb[0].mxu0 %v1906
    %v7875 = vpop.f32.mrb[0].mxu0
    %v7876 = vadd.f32 %v7836, %v7875
    %v7877 = vpop.f32.mrb[0].mxu0
    %v7878 = vpop.f32.mrb[0].mxu0
    %v7879 = vpop.f32.mrb[0].mxu0
    %7880 = vdwg.mxu0
    %7881 = vmatprep.subr.bf16.mxu0 0
    %7882 = vmatpush1.bf16.msra.mxu0 %v5745
    %7883 = vmatprep.subr.bf16.mxu0 0
    %7884 = vmatpush1.bf16.msra.mxu0 %v5746
    %7885 = vmatprep.subr.bf16.mxu0 0
    %7886 = vmatpush1.bf16.msra.mxu0 %v5747
    %7887 = vmatprep.subr.bf16.mxu0 0
    %7888 = vmatpush1.bf16.msra.mxu0 %v5748
    %7889 = vmatprep.subr.bf16.mxu0 0
    %7890 = vmatpush1.bf16.msra.mxu0 %v5749
    %7891 = vmatprep.subr.bf16.mxu0 0
    %7892 = vmatpush1.bf16.msra.mxu0 %v5750
    %7893 = vmatprep.subr.bf16.mxu0 0
    %7894 = vmatpush1.bf16.msra.mxu0 %v5751
    %7895 = vmatprep.subr.bf16.mxu0 0
    %7896 = vmatpush1.bf16.msra.mxu0 %v5752
    %7897 = vmatprep.subr.bf16.mxu0 0
    %7898 = vmatpush1.bf16.msra.mxu0 %v5753
    %7899 = vmatprep.subr.bf16.mxu0 0
    %7900 = vmatpush1.bf16.msra.mxu0 %v5754
    %7901 = vmatprep.subr.bf16.mxu0 0
    %7902 = vmatpush1.bf16.msra.mxu0 %v5755
    %7903 = vmatprep.subr.bf16.mxu0 0
    %7904 = vmatpush1.bf16.msra.mxu0 %v5756
    %7905 = vmatprep.subr.bf16.mxu0 0
    %7906 = vmatpush1.bf16.msra.mxu0 %v5757
    %7907 = vmatprep.subr.bf16.mxu0 0
    %7908 = vmatpush1.bf16.msra.mxu0 %v5758
    %7909 = vmatprep.subr.bf16.mxu0 0
    %7910 = vmatpush1.bf16.msra.mxu0 %v5759
    %7911 = vmatprep.subr.bf16.mxu0 0
    %7912 = vmatpush1.bf16.msra.mxu0 %v5760
    %7913 = vmatprep.mubr.bf16.mxu0 %v1930
    %7914 = vmatmul.mubr.bf16.gmra.mrb[0].mxu0 %v1928
    %v7915 = vpop.f32.mrb[0].mxu0
    %v7916 = vadd.f32 %v7876, %v7915
    %v7917 = vpop.f32.mrb[0].mxu0
    %v7918 = vpop.f32.mrb[0].mxu0
    %v7919 = vpop.f32.mrb[0].mxu0
    %7920 = vdwg.mxu0
    %7921 = vmatprep.subr.bf16.mxu0 0
    %7922 = vmatpush1.bf16.msra.mxu0 %v5761
    %7923 = vmatprep.subr.bf16.mxu0 0
    %7924 = vmatpush1.bf16.msra.mxu0 %v5762
    %7925 = vmatprep.subr.bf16.mxu0 0
    %7926 = vmatpush1.bf16.msra.mxu0 %v5763
    %7927 = vmatprep.subr.bf16.mxu0 0
    %7928 = vmatpush1.bf16.msra.mxu0 %v5764
    %7929 = vmatprep.subr.bf16.mxu0 0
    %7930 = vmatpush1.bf16.msra.mxu0 %v5765
    %7931 = vmatprep.subr.bf16.mxu0 0
    %7932 = vmatpush1.bf16.msra.mxu0 %v5766
    %7933 = vmatprep.subr.bf16.mxu0 0
    %7934 = vmatpush1.bf16.msra.mxu0 %v5767
    %7935 = vmatprep.subr.bf16.mxu0 0
    %7936 = vmatpush1.bf16.msra.mxu0 %v5768
    %7937 = vmatprep.subr.bf16.mxu0 0
    %7938 = vmatpush1.bf16.msra.mxu0 %v5769
    %7939 = vmatprep.subr.bf16.mxu0 0
    %7940 = vmatpush1.bf16.msra.mxu0 %v5770
    %7941 = vmatprep.subr.bf16.mxu0 0
    %7942 = vmatpush1.bf16.msra.mxu0 %v5771
    %7943 = vmatprep.subr.bf16.mxu0 0
    %7944 = vmatpush1.bf16.msra.mxu0 %v5772
    %7945 = vmatprep.subr.bf16.mxu0 0
    %7946 = vmatpush1.bf16.msra.mxu0 %v5773
    %7947 = vmatprep.subr.bf16.mxu0 0
    %7948 = vmatpush1.bf16.msra.mxu0 %v5774
    %7949 = vmatprep.subr.bf16.mxu0 0
    %7950 = vmatpush1.bf16.msra.mxu0 %v5775
    %7951 = vmatprep.subr.bf16.mxu0 0
    %7952 = vmatpush1.bf16.msra.mxu0 %v5776
    %7953 = vmatprep.mubr.bf16.mxu0 %v1927
    %7954 = vmatmul.mubr.bf16.gmra.mrb[0].mxu0 %v1913
    %v7955 = vpop.f32.mrb[0].mxu0
    %v7956 = vadd.f32 %v7916, %v7955
    %v7957 = vpop.f32.mrb[0].mxu0
    %v7958 = vpop.f32.mrb[0].mxu0
    %v7959 = vpop.f32.mrb[0].mxu0
    %7960 = vdwg.mxu0
    %7961 = vmatprep.subr.bf16.mxu0 0
    %7962 = vmatpush1.bf16.msra.mxu0 %v5777
    %7963 = vmatprep.subr.bf16.mxu0 0
    %7964 = vmatpush1.bf16.msra.mxu0 %v5778
    %7965 = vmatprep.subr.bf16.mxu0 0
    %7966 = vmatpush1.bf16.msra.mxu0 %v5779
    %7967 = vmatprep.subr.bf16.mxu0 0
    %7968 = vmatpush1.bf16.msra.mxu0 %v5780
    %7969 = vmatprep.subr.bf16.mxu0 0
    %7970 = vmatpush1.bf16.msra.mxu0 %v5781
    %7971 = vmatprep.subr.bf16.mxu0 0
    %7972 = vmatpush1.bf16.msra.mxu0 %v5782
    %7973 = vmatprep.subr.bf16.mxu0 0
    %7974 = vmatpush1.bf16.msra.mxu0 %v5783
    %7975 = vmatprep.subr.bf16.mxu0 0
    %7976 = vmatpush1.bf16.msra.mxu0 %v5784
    %7977 = vmatprep.subr.bf16.mxu0 0
    %7978 = vmatpush1.bf16.msra.mxu0 %v5785
    %7979 = vmatprep.subr.bf16.mxu0 0
    %7980 = vmatpush1.bf16.msra.mxu0 %v5786
    %7981 = vmatprep.subr.bf16.mxu0 0
    %7982 = vmatpush1.bf16.msra.mxu0 %v5787
    %7983 = vmatprep.subr.bf16.mxu0 0
    %7984 = vmatpush1.bf16.msra.mxu0 %v5788
    %7985 = vmatprep.subr.bf16.mxu0 0
    %7986 = vmatpush1.bf16.msra.mxu0 %v5789
    %7987 = vmatprep.subr.bf16.mxu0 0
    %7988 = vmatpush1.bf16.msra.mxu0 %v5790
    %7989 = vmatprep.subr.bf16.mxu0 0
    %7990 = vmatpush1.bf16.msra.mxu0 %v5791
    %7991 = vmatprep.subr.bf16.mxu0 0
    %7992 = vmatpush1.bf16.msra.mxu0 %v5792
    %7993 = vmatprep.mubr.bf16.mxu0 %v1931
    %7994 = vmatmul.mubr.bf16.gmra.mrb[0].mxu0 %v1929
    %v7995 = vpop.f32.mrb[0].mxu0
    %v7996 = vadd.f32 %v7956, %v7995
    %v7997 = vpop.f32.mrb[0].mxu0
    %v7998 = vpop.f32.mrb[0].mxu0
    %v7999 = vpop.f32.mrb[0].mxu0
    %8000 = vdwg.mxu0
    %8001 = vmatprep.subr.bf16.mxu0 0
    %8002 = vmatpush1.bf16.msra.mxu0 %v5793
    %8003 = vmatprep.subr.bf16.mxu0 0
    %8004 = vmatpush1.bf16.msra.mxu0 %v5794
    %8005 = vmatprep.subr.bf16.mxu0 0
    %8006 = vmatpush1.bf16.msra.mxu0 %v5795
    %8007 = vmatprep.subr.bf16.mxu0 0
    %8008 = vmatpush1.bf16.msra.mxu0 %v5796
    %8009 = vmatprep.subr.bf16.mxu0 0
    %8010 = vmatpush1.bf16.msra.mxu0 %v5797
    %8011 = vmatprep.subr.bf16.mxu0 0
    %8012 = vmatpush1.bf16.msra.mxu0 %v5798
    %8013 = vmatprep.subr.bf16.mxu0 0
    %8014 = vmatpush1.bf16.msra.mxu0 %v5799
    %8015 = vmatprep.subr.bf16.mxu0 0
    %8016 = vmatpush1.bf16.msra.mxu0 %v5800
    %8017 = vmatprep.subr.bf16.mxu0 0
    %8018 = vmatpush1.bf16.msra.mxu0 %v5801
    %8019 = vmatprep.subr.bf16.mxu0 0
    %8020 = vmatpush1.bf16.msra.mxu0 %v5802
    %8021 = vmatprep.subr.bf16.mxu0 0
    %8022 = vmatpush1.bf16.msra.mxu0 %v5803
    %8023 = vmatprep.subr.bf16.mxu0 0
    %8024 = vmatpush1.bf16.msra.mxu0 %v5804
    %8025 = vmatprep.subr.bf16.mxu0 0
    %8026 = vmatpush1.bf16.msra.mxu0 %v5805
    %8027 = vmatprep.subr.bf16.mxu0 0
    %8028 = vmatpush1.bf16.msra.mxu0 %v5806
    %8029 = vmatprep.subr.bf16.mxu0 0
    %8030 = vmatpush1.bf16.msra.mxu0 %v5807
    %8031 = vmatprep.subr.bf16.mxu0 0
    %8032 = vmatpush1.bf16.msra.mxu0 %v5808
    %8033 = vmatprep.mubr.bf16.mxu0 %v1969
    %8034 = vmatmul.mubr.bf16.gmra.mrb[0].mxu0 %v1955
    %v8035 = vpop.f32.mrb[0].mxu0
    %v8036 = vadd.f32 %v7996, %v8035
    %v8037 = vpop.f32.mrb[0].mxu0
    %v8038 = vpop.f32.mrb[0].mxu0
    %v8039 = vpop.f32.mrb[0].mxu0
    %8040 = vdwg.mxu0
    %8041 = vmatprep.subr.bf16.mxu0 0
    %8042 = vmatpush1.bf16.msra.mxu0 %v5809
    %8043 = vmatprep.subr.bf16.mxu0 0
    %8044 = vmatpush1.bf16.msra.mxu0 %v5810
    %8045 = vmatprep.subr.bf16.mxu0 0
    %8046 = vmatpush1.bf16.msra.mxu0 %v5811
    %8047 = vmatprep.subr.bf16.mxu0 0
    %8048 = vmatpush1.bf16.msra.mxu0 %v5812
    %8049 = vmatprep.subr.bf16.mxu0 0
    %8050 = vmatpush1.bf16.msra.mxu0 %v5813
    %8051 = vmatprep.subr.bf16.mxu0 0
    %8052 = vmatpush1.bf16.msra.mxu0 %v5814
    %8053 = vmatprep.subr.bf16.mxu0 0
    %8054 = vmatpush1.bf16.msra.mxu0 %v5815
    %8055 = vmatprep.subr.bf16.mxu0 0
    %8056 = vmatpush1.bf16.msra.mxu0 %v5816
    %8057 = vmatprep.subr.bf16.mxu0 0
    %8058 = vmatpush1.bf16.msra.mxu0 %v5817
    %8059 = vmatprep.subr.bf16.mxu0 0
    %8060 = vmatpush1.bf16.msra.mxu0 %v5818
    %8061 = vmatprep.subr.bf16.mxu0 0
    %8062 = vmatpush1.bf16.msra.mxu0 %v5819
    %8063 = vmatprep.subr.bf16.mxu0 0
    %8064 = vmatpush1.bf16.msra.mxu0 %v5820
    %8065 = vmatprep.subr.bf16.mxu0 0
    %8066 = vmatpush1.bf16.msra.mxu0 %v5821
    %8067 = vmatprep.subr.bf16.mxu0 0
    %8068 = vmatpush1.bf16.msra.mxu0 %v5822
    %8069 = vmatprep.subr.bf16.mxu0 0
    %8070 = vmatpush1.bf16.msra.mxu0 %v5823
    %8071 = vmatprep.subr.bf16.mxu0 0
    %8072 = vmatpush1.bf16.msra.mxu0 %v5824
    %8073 = vmatprep.mubr.bf16.mxu0 %v1979
    %8074 = vmatmul.mubr.bf16.gmra.mrb[0].mxu0 %v1977
    %v8075 = vpop.f32.mrb[0].mxu0
    %v8076 = vadd.f32 %v8036, %v8075
    %v8077 = vpop.f32.mrb[0].mxu0
    %v8078 = vpop.f32.mrb[0].mxu0
    %v8079 = vpop.f32.mrb[0].mxu0
    %8080 = vdwg.mxu0
    %8081 = vmatprep.subr.bf16.mxu0 0
    %8082 = vmatpush1.bf16.msra.mxu0 %v5825
    %8083 = vmatprep.subr.bf16.mxu0 0
    %8084 = vmatpush1.bf16.msra.mxu0 %v5826
    %8085 = vmatprep.subr.bf16.mxu0 0
    %8086 = vmatpush1.bf16.msra.mxu0 %v5827
    %8087 = vmatprep.subr.bf16.mxu0 0
    %8088 = vmatpush1.bf16.msra.mxu0 %v5828
    %8089 = vmatprep.subr.bf16.mxu0 0
    %8090 = vmatpush1.bf16.msra.mxu0 %v5829
    %8091 = vmatprep.subr.bf16.mxu0 0
    %8092 = vmatpush1.bf16.msra.mxu0 %v5830
    %8093 = vmatprep.subr.bf16.mxu0 0
    %8094 = vmatpush1.bf16.msra.mxu0 %v5831
    %8095 = vmatprep.subr.bf16.mxu0 0
    %8096 = vmatpush1.bf16.msra.mxu0 %v5832
    %8097 = vmatprep.subr.bf16.mxu0 0
    %8098 = vmatpush1.bf16.msra.mxu0 %v5833
    %8099 = vmatprep.subr.bf16.mxu0 0
    %8100 = vmatpush1.bf16.msra.mxu0 %v5834
    %8101 = vmatprep.subr.bf16.mxu0 0
    %8102 = vmatpush1.bf16.msra.mxu0 %v5835
    %8103 = vmatprep.subr.bf16.mxu0 0
    %8104 = vmatpush1.bf16.msra.mxu0 %v5836
    %8105 = vmatprep.subr.bf16.mxu0 0
    %8106 = vmatpush1.bf16.msra.mxu0 %v5837
    %8107 = vmatprep.subr.bf16.mxu0 0
    %8108 = vmatpush1.bf16.msra.mxu0 %v5838
    %8109 = vmatprep.subr.bf16.mxu0 0
    %8110 = vmatpush1.bf16.msra.mxu0 %v5839
    %8111 = vmatprep.subr.bf16.mxu0 0
    %8112 = vmatpush1.bf16.msra.mxu0 %v5840
    %8113 = vmatprep.mubr.bf16.mxu0 %v1976
    %8114 = vmatmul.mubr.bf16.gmra.mrb[0].mxu0 %v1962
    %v8115 = vpop.f32.mrb[0].mxu0
    %v8116 = vadd.f32 %v8076, %v8115
    %v8117 = vpop.f32.mrb[0].mxu0
    %v8118 = vpop.f32.mrb[0].mxu0
    %v8119 = vpop.f32.mrb[0].mxu0
    %8120 = vdwg.mxu0
    %8121 = vmatprep.subr.bf16.mxu0 0
    %8122 = vmatpush1.bf16.msra.mxu0 %v5841
    %8123 = vmatprep.subr.bf16.mxu0 0
    %8124 = vmatpush1.bf16.msra.mxu0 %v5842
    %8125 = vmatprep.subr.bf16.mxu0 0
    %8126 = vmatpush1.bf16.msra.mxu0 %v5843
    %8127 = vmatprep.subr.bf16.mxu0 0
    %8128 = vmatpush1.bf16.msra.mxu0 %v5844
    %8129 = vmatprep.subr.bf16.mxu0 0
    %8130 = vmatpush1.bf16.msra.mxu0 %v5845
    %8131 = vmatprep.subr.bf16.mxu0 0
    %8132 = vmatpush1.bf16.msra.mxu0 %v5846
    %8133 = vmatprep.subr.bf16.mxu0 0
    %8134 = vmatpush1.bf16.msra.mxu0 %v5847
    %8135 = vmatprep.subr.bf16.mxu0 0
    %8136 = vmatpush1.bf16.msra.mxu0 %v5848
    %8137 = vmatprep.subr.bf16.mxu0 0
    %8138 = vmatpush1.bf16.msra.mxu0 %v5849
    %8139 = vmatprep.subr.bf16.mxu0 0
    %8140 = vmatpush1.bf16.msra.mxu0 %v5850
    %8141 = vmatprep.subr.bf16.mxu0 0
    %8142 = vmatpush1.bf16.msra.mxu0 %v5851
    %8143 = vmatprep.subr.bf16.mxu0 0
    %8144 = vmatpush1.bf16.msra.mxu0 %v5852
    %8145 = vmatprep.subr.bf16.mxu0 0
    %8146 = vmatpush1.bf16.msra.mxu0 %v5853
    %8147 = vmatprep.subr.bf16.mxu0 0
    %8148 = vmatpush1.bf16.msra.mxu0 %v5854
    %8149 = vmatprep.subr.bf16.mxu0 0
    %8150 = vmatpush1.bf16.msra.mxu0 %v5855
    %8151 = vmatprep.subr.bf16.mxu0 0
    %8152 = vmatpush1.bf16.msra.mxu0 %v5856
    %8153 = vmatprep.mubr.bf16.mxu0 %v1980
    %8154 = vmatmul.mubr.bf16.gmra.mrb[0].mxu0 %v1978
    %v8155 = vpop.f32.mrb[0].mxu0
    %v8156 = vadd.f32 %v8116, %v8155
    %v8157 = vpop.f32.mrb[0].mxu0
    %v8158 = vpop.f32.mrb[0].mxu0
    %v8159 = vpop.f32.mrb[0].mxu0
    %8160 = vdwg.mxu0
    %8161 = vmatprep.subr.bf16.mxu0 0
    %8162 = vmatpush1.bf16.msra.mxu0 %v5857
    %8163 = vmatprep.subr.bf16.mxu0 0
    %8164 = vmatpush1.bf16.msra.mxu0 %v5858
    %8165 = vmatprep.subr.bf16.mxu0 0
    %8166 = vmatpush1.bf16.msra.mxu0 %v5859
    %8167 = vmatprep.subr.bf16.mxu0 0
    %8168 = vmatpush1.bf16.msra.mxu0 %v5860
    %8169 = vmatprep.subr.bf16.mxu0 0
    %8170 = vmatpush1.bf16.msra.mxu0 %v5861
    %8171 = vmatprep.subr.bf16.mxu0 0
    %8172 = vmatpush1.bf16.msra.mxu0 %v5862
    %8173 = vmatprep.subr.bf16.mxu0 0
    %8174 = vmatpush1.bf16.msra.mxu0 %v5863
    %8175 = vmatprep.subr.bf16.mxu0 0
    %8176 = vmatpush1.bf16.msra.mxu0 %v5864
    %8177 = vmatprep.subr.bf16.mxu0 0
    %8178 = vmatpush1.bf16.msra.mxu0 %v5865
    %8179 = vmatprep.subr.bf16.mxu0 0
    %8180 = vmatpush1.bf16.msra.mxu0 %v5866
    %8181 = vmatprep.subr.bf16.mxu0 0
    %8182 = vmatpush1.bf16.msra.mxu0 %v5867
    %8183 = vmatprep.subr.bf16.mxu0 0
    %8184 = vmatpush1.bf16.msra.mxu0 %v5868
    %8185 = vmatprep.subr.bf16.mxu0 0
    %8186 = vmatpush1.bf16.msra.mxu0 %v5869
    %8187 = vmatprep.subr.bf16.mxu0 0
    %8188 = vmatpush1.bf16.msra.mxu0 %v5870
    %8189 = vmatprep.subr.bf16.mxu0 0
    %8190 = vmatpush1.bf16.msra.mxu0 %v5871
    %8191 = vmatprep.subr.bf16.mxu0 0
    %8192 = vmatpush1.bf16.msra.mxu0 %v5872
    %8193 = vmatprep.mubr.bf16.mxu0 %v2018
    %8194 = vmatmul.mubr.bf16.gmra.mrb[0].mxu0 %v2004
    %v8195 = vpop.f32.mrb[0].mxu0
    %v8196 = vadd.f32 %v8156, %v8195
    %v8197 = vpop.f32.mrb[0].mxu0
    %v8198 = vpop.f32.mrb[0].mxu0
    %v8199 = vpop.f32.mrb[0].mxu0
    %8200 = vdwg.mxu0
    %8201 = vmatprep.subr.bf16.mxu0 0
    %8202 = vmatpush1.bf16.msra.mxu0 %v5873
    %8203 = vmatprep.subr.bf16.mxu0 0
    %8204 = vmatpush1.bf16.msra.mxu0 %v5874
    %8205 = vmatprep.subr.bf16.mxu0 0
    %8206 = vmatpush1.bf16.msra.mxu0 %v5875
    %8207 = vmatprep.subr.bf16.mxu0 0
    %8208 = vmatpush1.bf16.msra.mxu0 %v5876
    %8209 = vmatprep.subr.bf16.mxu0 0
    %8210 = vmatpush1.bf16.msra.mxu0 %v5877
    %8211 = vmatprep.subr.bf16.mxu0 0
    %8212 = vmatpush1.bf16.msra.mxu0 %v5878
    %8213 = vmatprep.subr.bf16.mxu0 0
    %8214 = vmatpush1.bf16.msra.mxu0 %v5879
    %8215 = vmatprep.subr.bf16.mxu0 0
    %8216 = vmatpush1.bf16.msra.mxu0 %v5880
    %8217 = vmatprep.subr.bf16.mxu0 0
    %8218 = vmatpush1.bf16.msra.mxu0 %v5881
    %8219 = vmatprep.subr.bf16.mxu0 0
    %8220 = vmatpush1.bf16.msra.mxu0 %v5882
    %8221 = vmatprep.subr.bf16.mxu0 0
    %8222 = vmatpush1.bf16.msra.mxu0 %v5883
    %8223 = vmatprep.subr.bf16.mxu0 0
    %8224 = vmatpush1.bf16.msra.mxu0 %v5884
    %8225 = vmatprep.subr.bf16.mxu0 0
    %8226 = vmatpush1.bf16.msra.mxu0 %v5885
    %8227 = vmatprep.subr.bf16.mxu0 0
    %8228 = vmatpush1.bf16.msra.mxu0 %v5886
    %8229 = vmatprep.subr.bf16.mxu0 0
    %8230 = vmatpush1.bf16.msra.mxu0 %v5887
    %8231 = vmatprep.subr.bf16.mxu0 0
    %8232 = vmatpush1.bf16.msra.mxu0 %v5888
    %8233 = vmatprep.mubr.bf16.mxu0 %v2028
    %8234 = vmatmul.mubr.bf16.gmra.mrb[0].mxu0 %v2026
    %v8235 = vpop.f32.mrb[0].mxu0
    %v8236 = vadd.f32 %v8196, %v8235
    %v8237 = vpop.f32.mrb[0].mxu0
    %v8238 = vpop.f32.mrb[0].mxu0
    %v8239 = vpop.f32.mrb[0].mxu0
    %8240 = vdwg.mxu0
    %8241 = vmatprep.subr.bf16.mxu0 0
    %8242 = vmatpush1.bf16.msra.mxu0 %v5889
    %8243 = vmatprep.subr.bf16.mxu0 0
    %8244 = vmatpush1.bf16.msra.mxu0 %v5890
    %8245 = vmatprep.subr.bf16.mxu0 0
    %8246 = vmatpush1.bf16.msra.mxu0 %v5891
    %8247 = vmatprep.subr.bf16.mxu0 0
    %8248 = vmatpush1.bf16.msra.mxu0 %v5892
    %8249 = vmatprep.subr.bf16.mxu0 0
    %8250 = vmatpush1.bf16.msra.mxu0 %v5893
    %8251 = vmatprep.subr.bf16.mxu0 0
    %8252 = vmatpush1.bf16.msra.mxu0 %v5894
    %8253 = vmatprep.subr.bf16.mxu0 0
    %8254 = vmatpush1.bf16.msra.mxu0 %v5895
    %8255 = vmatprep.subr.bf16.mxu0 0
    %8256 = vmatpush1.bf16.msra.mxu0 %v5896
    %8257 = vmatprep.subr.bf16.mxu0 0
    %8258 = vmatpush1.bf16.msra.mxu0 %v5897
    %8259 = vmatprep.subr.bf16.mxu0 0
    %8260 = vmatpush1.bf16.msra.mxu0 %v5898
    %8261 = vmatprep.subr.bf16.mxu0 0
    %8262 = vmatpush1.bf16.msra.mxu0 %v5899
    %8263 = vmatprep.subr.bf16.mxu0 0
    %8264 = vmatpush1.bf16.msra.mxu0 %v5900
    %8265 = vmatprep.subr.bf16.mxu0 0
    %8266 = vmatpush1.bf16.msra.mxu0 %v5901
    %8267 = vmatprep.subr.bf16.mxu0 0
    %8268 = vmatpush1.bf16.msra.mxu0 %v5902
    %8269 = vmatprep.subr.bf16.mxu0 0
    %8270 = vmatpush1.bf16.msra.mxu0 %v5903
    %8271 = vmatprep.subr.bf16.mxu0 0
    %8272 = vmatpush1.bf16.msra.mxu0 %v5904
    %8273 = vmatprep.mubr.bf16.mxu0 %v2025
    %8274 = vmatmul.mubr.bf16.gmra.mrb[0].mxu0 %v2011
    %v8275 = vpop.f32.mrb[0].mxu0
    %v8276 = vadd.f32 %v8236, %v8275
    %v8277 = vpop.f32.mrb[0].mxu0
    %v8278 = vpop.f32.mrb[0].mxu0
    %v8279 = vpop.f32.mrb[0].mxu0
    %8280 = vdwg.mxu0
    %8281 = vmatprep.subr.bf16.mxu0 0
    %8282 = vmatpush1.bf16.msra.mxu0 %v5905
    %8283 = vmatprep.subr.bf16.mxu0 0
    %8284 = vmatpush1.bf16.msra.mxu0 %v5906
    %8285 = vmatprep.subr.bf16.mxu0 0
    %8286 = vmatpush1.bf16.msra.mxu0 %v5907
    %8287 = vmatprep.subr.bf16.mxu0 0
    %8288 = vmatpush1.bf16.msra.mxu0 %v5908
    %8289 = vmatprep.subr.bf16.mxu0 0
    %8290 = vmatpush1.bf16.msra.mxu0 %v5909
    %8291 = vmatprep.subr.bf16.mxu0 0
    %8292 = vmatpush1.bf16.msra.mxu0 %v5910
    %8293 = vmatprep.subr.bf16.mxu0 0
    %8294 = vmatpush1.bf16.msra.mxu0 %v5911
    %8295 = vmatprep.subr.bf16.mxu0 0
    %8296 = vmatpush1.bf16.msra.mxu0 %v5912
    %8297 = vmatprep.subr.bf16.mxu0 0
    %8298 = vmatpush1.bf16.msra.mxu0 %v5913
    %8299 = vmatprep.subr.bf16.mxu0 0
    %8300 = vmatpush1.bf16.msra.mxu0 %v5914
    %8301 = vmatprep.subr.bf16.mxu0 0
    %8302 = vmatpush1.bf16.msra.mxu0 %v5915
    %8303 = vmatprep.subr.bf16.mxu0 0
    %8304 = vmatpush1.bf16.msra.mxu0 %v5916
    %8305 = vmatprep.subr.bf16.mxu0 0
    %8306 = vmatpush1.bf16.msra.mxu0 %v5917
    %8307 = vmatprep.subr.bf16.mxu0 0
    %8308 = vmatpush1.bf16.msra.mxu0 %v5918
    %8309 = vmatprep.subr.bf16.mxu0 0
    %8310 = vmatpush1.bf16.msra.mxu0 %v5919
    %8311 = vmatprep.subr.bf16.mxu0 0
    %8312 = vmatpush1.bf16.msra.mxu0 %v5920
    %8313 = vmatprep.mubr.bf16.mxu0 %v2029
    %8314 = vmatmul.mubr.bf16.gmra.mrb[0].mxu0 %v2027
    %v8315 = vpop.f32.mrb[0].mxu0
    %v8316 = vadd.f32 %v8276, %v8315
    %v8317 = vpop.f32.mrb[0].mxu0
    %v8318 = vpop.f32.mrb[0].mxu0
    %v8319 = vpop.f32.mrb[0].mxu0
    %8320 = vdwg.mxu0
    %8321 = vmatprep.subr.bf16.mxu0 0
    %8322 = vmatpush1.bf16.msra.mxu0 %v5921
    %8323 = vmatprep.subr.bf16.mxu0 0
    %8324 = vmatpush1.bf16.msra.mxu0 %v5922
    %8325 = vmatprep.subr.bf16.mxu0 0
    %8326 = vmatpush1.bf16.msra.mxu0 %v5923
    %8327 = vmatprep.subr.bf16.mxu0 0
    %8328 = vmatpush1.bf16.msra.mxu0 %v5924
    %8329 = vmatprep.subr.bf16.mxu0 0
    %8330 = vmatpush1.bf16.msra.mxu0 %v5925
    %8331 = vmatprep.subr.bf16.mxu0 0
    %8332 = vmatpush1.bf16.msra.mxu0 %v5926
    %8333 = vmatprep.subr.bf16.mxu0 0
    %8334 = vmatpush1.bf16.msra.mxu0 %v5927
    %8335 = vmatprep.subr.bf16.mxu0 0
    %8336 = vmatpush1.bf16.msra.mxu0 %v5928
    %8337 = vmatprep.subr.bf16.mxu0 0
    %8338 = vmatpush1.bf16.msra.mxu0 %v5929
    %8339 = vmatprep.subr.bf16.mxu0 0
    %8340 = vmatpush1.bf16.msra.mxu0 %v5930
    %8341 = vmatprep.subr.bf16.mxu0 0
    %8342 = vmatpush1.bf16.msra.mxu0 %v5931
    %8343 = vmatprep.subr.bf16.mxu0 0
    %8344 = vmatpush1.bf16.msra.mxu0 %v5932
    %8345 = vmatprep.subr.bf16.mxu0 0
    %8346 = vmatpush1.bf16.msra.mxu0 %v5933
    %8347 = vmatprep.subr.bf16.mxu0 0
    %8348 = vmatpush1.bf16.msra.mxu0 %v5934
    %8349 = vmatprep.subr.bf16.mxu0 0
    %8350 = vmatpush1.bf16.msra.mxu0 %v5935
    %8351 = vmatprep.subr.bf16.mxu0 0
    %8352 = vmatpush1.bf16.msra.mxu0 %v5936
    %8353 = vmatprep.mubr.bf16.mxu0 %v2067
    %8354 = vmatmul.mubr.bf16.gmra.mrb[0].mxu0 %v2053
    %v8355 = vpop.f32.mrb[0].mxu0
    %v8356 = vadd.f32 %v8316, %v8355
    %v8357 = vpop.f32.mrb[0].mxu0
    %v8358 = vpop.f32.mrb[0].mxu0
    %v8359 = vpop.f32.mrb[0].mxu0
    %8360 = vdwg.mxu0
    %8361 = vmatprep.subr.bf16.mxu0 0
    %8362 = vmatpush1.bf16.msra.mxu0 %v5937
    %8363 = vmatprep.subr.bf16.mxu0 0
    %8364 = vmatpush1.bf16.msra.mxu0 %v5938
    %8365 = vmatprep.subr.bf16.mxu0 0
    %8366 = vmatpush1.bf16.msra.mxu0 %v5939
    %8367 = vmatprep.subr.bf16.mxu0 0
    %8368 = vmatpush1.bf16.msra.mxu0 %v5940
    %8369 = vmatprep.subr.bf16.mxu0 0
    %8370 = vmatpush1.bf16.msra.mxu0 %v5941
    %8371 = vmatprep.subr.bf16.mxu0 0
    %8372 = vmatpush1.bf16.msra.mxu0 %v5942
    %8373 = vmatprep.subr.bf16.mxu0 0
    %8374 = vmatpush1.bf16.msra.mxu0 %v5943
    %8375 = vmatprep.subr.bf16.mxu0 0
    %8376 = vmatpush1.bf16.msra.mxu0 %v5944
    %8377 = vmatprep.subr.bf16.mxu0 0
    %8378 = vmatpush1.bf16.msra.mxu0 %v5945
    %8379 = vmatprep.subr.bf16.mxu0 0
    %8380 = vmatpush1.bf16.msra.mxu0 %v5946
    %8381 = vmatprep.subr.bf16.mxu0 0
    %8382 = vmatpush1.bf16.msra.mxu0 %v5947
    %8383 = vmatprep.subr.bf16.mxu0 0
    %8384 = vmatpush1.bf16.msra.mxu0 %v5948
    %8385 = vmatprep.subr.bf16.mxu0 0
    %8386 = vmatpush1.bf16.msra.mxu0 %v5949
    %8387 = vmatprep.subr.bf16.mxu0 0
    %8388 = vmatpush1.bf16.msra.mxu0 %v5950
    %8389 = vmatprep.subr.bf16.mxu0 0
    %8390 = vmatpush1.bf16.msra.mxu0 %v5951
    %8391 = vmatprep.subr.bf16.mxu0 0
    %8392 = vmatpush1.bf16.msra.mxu0 %v5952
    %8393 = vmatprep.mubr.bf16.mxu0 %v2077
    %8394 = vmatmul.mubr.bf16.gmra.mrb[0].mxu0 %v2075
    %v8395 = vpop.f32.mrb[0].mxu0
    %v8396 = vadd.f32 %v8356, %v8395
    %v8397 = vpop.f32.mrb[0].mxu0
    %v8398 = vpop.f32.mrb[0].mxu0
    %v8399 = vpop.f32.mrb[0].mxu0
    %8400 = vdwg.mxu0
    %8401 = vmatprep.subr.bf16.mxu0 0
    %8402 = vmatpush1.bf16.msra.mxu0 %v5953
    %8403 = vmatprep.subr.bf16.mxu0 0
    %8404 = vmatpush1.bf16.msra.mxu0 %v5954
    %8405 = vmatprep.subr.bf16.mxu0 0
    %8406 = vmatpush1.bf16.msra.mxu0 %v5955
    %8407 = vmatprep.subr.bf16.mxu0 0
    %8408 = vmatpush1.bf16.msra.mxu0 %v5956
    %8409 = vmatprep.subr.bf16.mxu0 0
    %8410 = vmatpush1.bf16.msra.mxu0 %v5957
    %8411 = vmatprep.subr.bf16.mxu0 0
    %8412 = vmatpush1.bf16.msra.mxu0 %v5958
    %8413 = vmatprep.subr.bf16.mxu0 0
    %8414 = vmatpush1.bf16.msra.mxu0 %v5959
    %8415 = vmatprep.subr.bf16.mxu0 0
    %8416 = vmatpush1.bf16.msra.mxu0 %v5960
    %8417 = vmatprep.subr.bf16.mxu0 0
    %8418 = vmatpush1.bf16.msra.mxu0 %v5961
    %8419 = vmatprep.subr.bf16.mxu0 0
    %8420 = vmatpush1.bf16.msra.mxu0 %v5962
    %8421 = vmatprep.subr.bf16.mxu0 0
    %8422 = vmatpush1.bf16.msra.mxu0 %v5963
    %8423 = vmatprep.subr.bf16.mxu0 0
    %8424 = vmatpush1.bf16.msra.mxu0 %v5964
    %8425 = vmatprep.subr.bf16.mxu0 0
    %8426 = vmatpush1.bf16.msra.mxu0 %v5965
    %8427 = vmatprep.subr.bf16.mxu0 0
    %8428 = vmatpush1.bf16.msra.mxu0 %v5966
    %8429 = vmatprep.subr.bf16.mxu0 0
    %8430 = vmatpush1.bf16.msra.mxu0 %v5967
    %8431 = vmatprep.subr.bf16.mxu0 0
    %8432 = vmatpush1.bf16.msra.mxu0 %v5968
    %8433 = vmatprep.mubr.bf16.mxu0 %v2074
    %8434 = vmatmul.mubr.bf16.gmra.mrb[0].mxu0 %v2060
    %v8435 = vpop.f32.mrb[0].mxu0
    %v8436 = vadd.f32 %v8396, %v8435
    %v8437 = vpop.f32.mrb[0].mxu0
    %v8438 = vpop.f32.mrb[0].mxu0
    %v8439 = vpop.f32.mrb[0].mxu0
    %8440 = vdwg.mxu0
    %8441 = vmatprep.subr.bf16.mxu0 0
    %8442 = vmatpush1.bf16.msra.mxu0 %v5969
    %8443 = vmatprep.subr.bf16.mxu0 0
    %8444 = vmatpush1.bf16.msra.mxu0 %v5970
    %8445 = vmatprep.subr.bf16.mxu0 0
    %8446 = vmatpush1.bf16.msra.mxu0 %v5971
    %8447 = vmatprep.subr.bf16.mxu0 0
    %8448 = vmatpush1.bf16.msra.mxu0 %v5972
    %8449 = vmatprep.subr.bf16.mxu0 0
    %8450 = vmatpush1.bf16.msra.mxu0 %v5973
    %8451 = vmatprep.subr.bf16.mxu0 0
    %8452 = vmatpush1.bf16.msra.mxu0 %v5974
    %8453 = vmatprep.subr.bf16.mxu0 0
    %8454 = vmatpush1.bf16.msra.mxu0 %v5975
    %8455 = vmatprep.subr.bf16.mxu0 0
    %8456 = vmatpush1.bf16.msra.mxu0 %v5976
    %8457 = vmatprep.subr.bf16.mxu0 0
    %8458 = vmatpush1.bf16.msra.mxu0 %v5977
    %8459 = vmatprep.subr.bf16.mxu0 0
    %8460 = vmatpush1.bf16.msra.mxu0 %v5978
    %8461 = vmatprep.subr.bf16.mxu0 0
    %8462 = vmatpush1.bf16.msra.mxu0 %v5979
    %8463 = vmatprep.subr.bf16.mxu0 0
    %8464 = vmatpush1.bf16.msra.mxu0 %v5980
    %8465 = vmatprep.subr.bf16.mxu0 0
    %8466 = vmatpush1.bf16.msra.mxu0 %v5981
    %8467 = vmatprep.subr.bf16.mxu0 0
    %8468 = vmatpush1.bf16.msra.mxu0 %v5982
    %8469 = vmatprep.subr.bf16.mxu0 0
    %8470 = vmatpush1.bf16.msra.mxu0 %v5983
    %8471 = vmatprep.subr.bf16.mxu0 0
    %8472 = vmatpush1.bf16.msra.mxu0 %v5984
    %8473 = vmatprep.mubr.bf16.mxu0 %v2078
    %8474 = vmatmul.mubr.bf16.gmra.mrb[0].mxu0 %v2076
    %v8475 = vpop.f32.mrb[0].mxu0
    %v8476 = vadd.f32 %v8436, %v8475
    %v8477 = vpop.f32.mrb[0].mxu0
    %v8478 = vpop.f32.mrb[0].mxu0
    %v8479 = vpop.f32.mrb[0].mxu0
    %8480 = vdwg.mxu0
    %8481 = vmatprep.subr.bf16.mxu0 0
    %8482 = vmatpush1.bf16.msra.mxu0 %v5985
    %8483 = vmatprep.subr.bf16.mxu0 0
    %8484 = vmatpush1.bf16.msra.mxu0 %v5986
    %8485 = vmatprep.subr.bf16.mxu0 0
    %8486 = vmatpush1.bf16.msra.mxu0 %v5987
    %8487 = vmatprep.subr.bf16.mxu0 0
    %8488 = vmatpush1.bf16.msra.mxu0 %v5988
    %8489 = vmatprep.subr.bf16.mxu0 0
    %8490 = vmatpush1.bf16.msra.mxu0 %v5989
    %8491 = vmatprep.subr.bf16.mxu0 0
    %8492 = vmatpush1.bf16.msra.mxu0 %v5990
    %8493 = vmatprep.subr.bf16.mxu0 0
    %8494 = vmatpush1.bf16.msra.mxu0 %v5991
    %8495 = vmatprep.subr.bf16.mxu0 0
    %8496 = vmatpush1.bf16.msra.mxu0 %v5992
    %8497 = vmatprep.subr.bf16.mxu0 0
    %8498 = vmatpush1.bf16.msra.mxu0 %v5993
    %8499 = vmatprep.subr.bf16.mxu0 0
    %8500 = vmatpush1.bf16.msra.mxu0 %v5994
    %8501 = vmatprep.subr.bf16.mxu0 0
    %8502 = vmatpush1.bf16.msra.mxu0 %v5995
    %8503 = vmatprep.subr.bf16.mxu0 0
    %8504 = vmatpush1.bf16.msra.mxu0 %v5996
    %8505 = vmatprep.subr.bf16.mxu0 0
    %8506 = vmatpush1.bf16.msra.mxu0 %v5997
    %8507 = vmatprep.subr.bf16.mxu0 0
    %8508 = vmatpush1.bf16.msra.mxu0 %v5998
    %8509 = vmatprep.subr.bf16.mxu0 0
    %8510 = vmatpush1.bf16.msra.mxu0 %v5999
    %8511 = vmatprep.subr.bf16.mxu0 0
    %8512 = vmatpush1.bf16.msra.mxu0 %v6000
    %8513 = vmatprep.mubr.bf16.mxu0 %v2116
    %8514 = vmatmul.mubr.bf16.gmra.mrb[0].mxu0 %v2102
    %v8515 = vpop.f32.mrb[0].mxu0
    %v8516 = vadd.f32 %v8476, %v8515
    %v8517 = vpop.f32.mrb[0].mxu0
    %v8518 = vpop.f32.mrb[0].mxu0
    %v8519 = vpop.f32.mrb[0].mxu0
    %8520 = vdwg.mxu0
    %8521 = vmatprep.subr.bf16.mxu0 0
    %8522 = vmatpush1.bf16.msra.mxu0 %v6001
    %8523 = vmatprep.subr.bf16.mxu0 0
    %8524 = vmatpush1.bf16.msra.mxu0 %v6002
    %8525 = vmatprep.subr.bf16.mxu0 0
    %8526 = vmatpush1.bf16.msra.mxu0 %v6003
    %8527 = vmatprep.subr.bf16.mxu0 0
    %8528 = vmatpush1.bf16.msra.mxu0 %v6004
    %8529 = vmatprep.subr.bf16.mxu0 0
    %8530 = vmatpush1.bf16.msra.mxu0 %v6005
    %8531 = vmatprep.subr.bf16.mxu0 0
    %8532 = vmatpush1.bf16.msra.mxu0 %v6006
    %8533 = vmatprep.subr.bf16.mxu0 0
    %8534 = vmatpush1.bf16.msra.mxu0 %v6007
    %8535 = vmatprep.subr.bf16.mxu0 0
    %8536 = vmatpush1.bf16.msra.mxu0 %v6008
    %8537 = vmatprep.subr.bf16.mxu0 0
    %8538 = vmatpush1.bf16.msra.mxu0 %v6009
    %8539 = vmatprep.subr.bf16.mxu0 0
    %8540 = vmatpush1.bf16.msra.mxu0 %v6010
    %8541 = vmatprep.subr.bf16.mxu0 0
    %8542 = vmatpush1.bf16.msra.mxu0 %v6011
    %8543 = vmatprep.subr.bf16.mxu0 0
    %8544 = vmatpush1.bf16.msra.mxu0 %v6012
    %8545 = vmatprep.subr.bf16.mxu0 0
    %8546 = vmatpush1.bf16.msra.mxu0 %v6013
    %8547 = vmatprep.subr.bf16.mxu0 0
    %8548 = vmatpush1.bf16.msra.mxu0 %v6014
    %8549 = vmatprep.subr.bf16.mxu0 0
    %8550 = vmatpush1.bf16.msra.mxu0 %v6015
    %8551 = vmatprep.subr.bf16.mxu0 0
    %8552 = vmatpush1.bf16.msra.mxu0 %v6016
    %8553 = vmatprep.mubr.bf16.mxu0 %v2126
    %8554 = vmatmul.mubr.bf16.gmra.mrb[0].mxu0 %v2124
    %v8555 = vpop.f32.mrb[0].mxu0
    %v8556 = vadd.f32 %v8516, %v8555
    %v8557 = vpop.f32.mrb[0].mxu0
    %v8558 = vpop.f32.mrb[0].mxu0
    %v8559 = vpop.f32.mrb[0].mxu0
    %8560 = vdwg.mxu0
    %8561 = vmatprep.subr.bf16.mxu0 0
    %8562 = vmatpush1.bf16.msra.mxu0 %v6017
    %8563 = vmatprep.subr.bf16.mxu0 0
    %8564 = vmatpush1.bf16.msra.mxu0 %v6018
    %8565 = vmatprep.subr.bf16.mxu0 0
    %8566 = vmatpush1.bf16.msra.mxu0 %v6019
    %8567 = vmatprep.subr.bf16.mxu0 0
    %8568 = vmatpush1.bf16.msra.mxu0 %v6020
    %8569 = vmatprep.subr.bf16.mxu0 0
    %8570 = vmatpush1.bf16.msra.mxu0 %v6021
    %8571 = vmatprep.subr.bf16.mxu0 0
    %8572 = vmatpush1.bf16.msra.mxu0 %v6022
    %8573 = vmatprep.subr.bf16.mxu0 0
    %8574 = vmatpush1.bf16.msra.mxu0 %v6023
    %8575 = vmatprep.subr.bf16.mxu0 0
    %8576 = vmatpush1.bf16.msra.mxu0 %v6024
    %8577 = vmatprep.subr.bf16.mxu0 0
    %8578 = vmatpush1.bf16.msra.mxu0 %v6025
    %8579 = vmatprep.subr.bf16.mxu0 0
    %8580 = vmatpush1.bf16.msra.mxu0 %v6026
    %8581 = vmatprep.subr.bf16.mxu0 0
    %8582 = vmatpush1.bf16.msra.mxu0 %v6027
    %8583 = vmatprep.subr.bf16.mxu0 0
    %8584 = vmatpush1.bf16.msra.mxu0 %v6028
    %8585 = vmatprep.subr.bf16.mxu0 0
    %8586 = vmatpush1.bf16.msra.mxu0 %v6029
    %8587 = vmatprep.subr.bf16.mxu0 0
    %8588 = vmatpush1.bf16.msra.mxu0 %v6030
    %8589 = vmatprep.subr.bf16.mxu0 0
    %8590 = vmatpush1.bf16.msra.mxu0 %v6031
    %8591 = vmatprep.subr.bf16.mxu0 0
    %8592 = vmatpush1.bf16.msra.mxu0 %v6032
    %8593 = vmatprep.mubr.bf16.mxu0 %v2123
    %8594 = vmatmul.mubr.bf16.gmra.mrb[0].mxu0 %v2109
    %v8595 = vpop.f32.mrb[0].mxu0
    %v8596 = vadd.f32 %v8556, %v8595
    %v8597 = vpop.f32.mrb[0].mxu0
    %v8598 = vpop.f32.mrb[0].mxu0
    %v8599 = vpop.f32.mrb[0].mxu0
    %8600 = vdwg.mxu0
    %8601 = vmatprep.subr.bf16.mxu0 0
    %8602 = vmatpush1.bf16.msra.mxu0 %v6033
    %8603 = vmatprep.subr.bf16.mxu0 0
    %8604 = vmatpush1.bf16.msra.mxu0 %v6034
    %8605 = vmatprep.subr.bf16.mxu0 0
    %8606 = vmatpush1.bf16.msra.mxu0 %v6035
    %8607 = vmatprep.subr.bf16.mxu0 0
    %8608 = vmatpush1.bf16.msra.mxu0 %v6036
    %8609 = vmatprep.subr.bf16.mxu0 0
    %8610 = vmatpush1.bf16.msra.mxu0 %v6037
    %8611 = vmatprep.subr.bf16.mxu0 0
    %8612 = vmatpush1.bf16.msra.mxu0 %v6038
    %8613 = vmatprep.subr.bf16.mxu0 0
    %8614 = vmatpush1.bf16.msra.mxu0 %v6039
    %8615 = vmatprep.subr.bf16.mxu0 0
    %8616 = vmatpush1.bf16.msra.mxu0 %v6040
    %8617 = vmatprep.subr.bf16.mxu0 0
    %8618 = vmatpush1.bf16.msra.mxu0 %v6041
    %8619 = vmatprep.subr.bf16.mxu0 0
    %8620 = vmatpush1.bf16.msra.mxu0 %v6042
    %8621 = vmatprep.subr.bf16.mxu0 0
    %8622 = vmatpush1.bf16.msra.mxu0 %v6043
    %8623 = vmatprep.subr.bf16.mxu0 0
    %8624 = vmatpush1.bf16.msra.mxu0 %v6044
    %8625 = vmatprep.subr.bf16.mxu0 0
    %8626 = vmatpush1.bf16.msra.mxu0 %v6045
    %8627 = vmatprep.subr.bf16.mxu0 0
    %8628 = vmatpush1.bf16.msra.mxu0 %v6046
    %8629 = vmatprep.subr.bf16.mxu0 0
    %8630 = vmatpush1.bf16.msra.mxu0 %v6047
    %8631 = vmatprep.subr.bf16.mxu0 0
    %8632 = vmatpush1.bf16.msra.mxu0 %v6048
    %8633 = vmatprep.mubr.bf16.mxu0 %v2127
    %8634 = vmatmul.mubr.bf16.gmra.mrb[0].mxu0 %v2125
    %v8635 = vpop.f32.mrb[0].mxu0
    %v8636 = vadd.f32 %v8596, %v8635
    %v8637 = vpop.f32.mrb[0].mxu0
    %v8638 = vpop.f32.mrb[0].mxu0
    %v8639 = vpop.f32.mrb[0].mxu0
    %8640 = vdwg.mxu0
    %8641 = vmatprep.subr.bf16.mxu0 0
    %8642 = vmatpush1.bf16.msra.mxu0 %v6049
    %8643 = vmatprep.subr.bf16.mxu0 0
    %8644 = vmatpush1.bf16.msra.mxu0 %v6050
    %8645 = vmatprep.subr.bf16.mxu0 0
    %8646 = vmatpush1.bf16.msra.mxu0 %v6051
    %8647 = vmatprep.subr.bf16.mxu0 0
    %8648 = vmatpush1.bf16.msra.mxu0 %v6052
    %8649 = vmatprep.subr.bf16.mxu0 0
    %8650 = vmatpush1.bf16.msra.mxu0 %v6053
    %8651 = vmatprep.subr.bf16.mxu0 0
    %8652 = vmatpush1.bf16.msra.mxu0 %v6054
    %8653 = vmatprep.subr.bf16.mxu0 0
    %8654 = vmatpush1.bf16.msra.mxu0 %v6055
    %8655 = vmatprep.subr.bf16.mxu0 0
    %8656 = vmatpush1.bf16.msra.mxu0 %v6056
    %8657 = vmatprep.subr.bf16.mxu0 0
    %8658 = vmatpush1.bf16.msra.mxu0 %v6057
    %8659 = vmatprep.subr.bf16.mxu0 0
    %8660 = vmatpush1.bf16.msra.mxu0 %v6058
    %8661 = vmatprep.subr.bf16.mxu0 0
    %8662 = vmatpush1.bf16.msra.mxu0 %v6059
    %8663 = vmatprep.subr.bf16.mxu0 0
    %8664 = vmatpush1.bf16.msra.mxu0 %v6060
    %8665 = vmatprep.subr.bf16.mxu0 0
    %8666 = vmatpush1.bf16.msra.mxu0 %v6061
    %8667 = vmatprep.subr.bf16.mxu0 0
    %8668 = vmatpush1.bf16.msra.mxu0 %v6062
    %8669 = vmatprep.subr.bf16.mxu0 0
    %8670 = vmatpush1.bf16.msra.mxu0 %v6063
    %8671 = vmatprep.subr.bf16.mxu0 0
    %8672 = vmatpush1.bf16.msra.mxu0 %v6064
    %8673 = vmatprep.mubr.bf16.mxu0 %v2165
    %8674 = vmatmul.mubr.bf16.gmra.mrb[0].mxu0 %v2151
    %v8675 = vpop.f32.mrb[0].mxu0
    %v8676 = vadd.f32 %v8636, %v8675
    %v8677 = vpop.f32.mrb[0].mxu0
    %v8678 = vpop.f32.mrb[0].mxu0
    %v8679 = vpop.f32.mrb[0].mxu0
    %8680 = vdwg.mxu0
    %8681 = vmatprep.subr.bf16.mxu0 0
    %8682 = vmatpush1.bf16.msra.mxu0 %v6065
    %8683 = vmatprep.subr.bf16.mxu0 0
    %8684 = vmatpush1.bf16.msra.mxu0 %v6066
    %8685 = vmatprep.subr.bf16.mxu0 0
    %8686 = vmatpush1.bf16.msra.mxu0 %v6067
    %8687 = vmatprep.subr.bf16.mxu0 0
    %8688 = vmatpush1.bf16.msra.mxu0 %v6068
    %8689 = vmatprep.subr.bf16.mxu0 0
    %8690 = vmatpush1.bf16.msra.mxu0 %v6069
    %8691 = vmatprep.subr.bf16.mxu0 0
    %8692 = vmatpush1.bf16.msra.mxu0 %v6070
    %8693 = vmatprep.subr.bf16.mxu0 0
    %8694 = vmatpush1.bf16.msra.mxu0 %v6071
    %8695 = vmatprep.subr.bf16.mxu0 0
    %8696 = vmatpush1.bf16.msra.mxu0 %v6072
    %8697 = vmatprep.subr.bf16.mxu0 0
    %8698 = vmatpush1.bf16.msra.mxu0 %v6073
    %8699 = vmatprep.subr.bf16.mxu0 0
    %8700 = vmatpush1.bf16.msra.mxu0 %v6074
    %8701 = vmatprep.subr.bf16.mxu0 0
    %8702 = vmatpush1.bf16.msra.mxu0 %v6075
    %8703 = vmatprep.subr.bf16.mxu0 0
    %8704 = vmatpush1.bf16.msra.mxu0 %v6076
    %8705 = vmatprep.subr.bf16.mxu0 0
    %8706 = vmatpush1.bf16.msra.mxu0 %v6077
    %8707 = vmatprep.subr.bf16.mxu0 0
    %8708 = vmatpush1.bf16.msra.mxu0 %v6078
    %8709 = vmatprep.subr.bf16.mxu0 0
    %8710 = vmatpush1.bf16.msra.mxu0 %v6079
    %8711 = vmatprep.subr.bf16.mxu0 0
    %8712 = vmatpush1.bf16.msra.mxu0 %v6080
    %8713 = vmatprep.mubr.bf16.mxu0 %v2175
    %8714 = vmatmul.mubr.bf16.gmra.mrb[0].mxu0 %v2173
    %v8715 = vpop.f32.mrb[0].mxu0
    %v8716 = vadd.f32 %v8676, %v8715
    %v8717 = vpop.f32.mrb[0].mxu0
    %v8718 = vpop.f32.mrb[0].mxu0
    %v8719 = vpop.f32.mrb[0].mxu0
    %8720 = vdwg.mxu0
    %8721 = vmatprep.subr.bf16.mxu0 0
    %8722 = vmatpush1.bf16.msra.mxu0 %v6081
    %8723 = vmatprep.subr.bf16.mxu0 0
    %8724 = vmatpush1.bf16.msra.mxu0 %v6082
    %8725 = vmatprep.subr.bf16.mxu0 0
    %8726 = vmatpush1.bf16.msra.mxu0 %v6083
    %8727 = vmatprep.subr.bf16.mxu0 0
    %8728 = vmatpush1.bf16.msra.mxu0 %v6084
    %8729 = vmatprep.subr.bf16.mxu0 0
    %8730 = vmatpush1.bf16.msra.mxu0 %v6085
    %8731 = vmatprep.subr.bf16.mxu0 0
    %8732 = vmatpush1.bf16.msra.mxu0 %v6086
    %8733 = vmatprep.subr.bf16.mxu0 0
    %8734 = vmatpush1.bf16.msra.mxu0 %v6087
    %8735 = vmatprep.subr.bf16.mxu0 0
    %8736 = vmatpush1.bf16.msra.mxu0 %v6088
    %8737 = vmatprep.subr.bf16.mxu0 0
    %8738 = vmatpush1.bf16.msra.mxu0 %v6089
    %8739 = vmatprep.subr.bf16.mxu0 0
    %8740 = vmatpush1.bf16.msra.mxu0 %v6090
    %8741 = vmatprep.subr.bf16.mxu0 0
    %8742 = vmatpush1.bf16.msra.mxu0 %v6091
    %8743 = vmatprep.subr.bf16.mxu0 0
    %8744 = vmatpush1.bf16.msra.mxu0 %v6092
    %8745 = vmatprep.subr.bf16.mxu0 0
    %8746 = vmatpush1.bf16.msra.mxu0 %v6093
    %8747 = vmatprep.subr.bf16.mxu0 0
    %8748 = vmatpush1.bf16.msra.mxu0 %v6094
    %8749 = vmatprep.subr.bf16.mxu0 0
    %8750 = vmatpush1.bf16.msra.mxu0 %v6095
    %8751 = vmatprep.subr.bf16.mxu0 0
    %8752 = vmatpush1.bf16.msra.mxu0 %v6096
    %8753 = vmatprep.mubr.bf16.mxu0 %v2172
    %8754 = vmatmul.mubr.bf16.gmra.mrb[0].mxu0 %v2158
    %v8755 = vpop.f32.mrb[0].mxu0
    %v8756 = vadd.f32 %v8716, %v8755
    %v8757 = vpop.f32.mrb[0].mxu0
    %v8758 = vpop.f32.mrb[0].mxu0
    %v8759 = vpop.f32.mrb[0].mxu0
    %8760 = vdwg.mxu0
    %8761 = vmatprep.subr.bf16.mxu0 0
    %8762 = vmatpush1.bf16.msra.mxu0 %v6097
    %8763 = vmatprep.subr.bf16.mxu0 0
    %8764 = vmatpush1.bf16.msra.mxu0 %v6098
    %8765 = vmatprep.subr.bf16.mxu0 0
    %8766 = vmatpush1.bf16.msra.mxu0 %v6099
    %8767 = vmatprep.subr.bf16.mxu0 0
    %8768 = vmatpush1.bf16.msra.mxu0 %v6100
    %8769 = vmatprep.subr.bf16.mxu0 0
    %8770 = vmatpush1.bf16.msra.mxu0 %v6101
    %8771 = vmatprep.subr.bf16.mxu0 0
    %8772 = vmatpush1.bf16.msra.mxu0 %v6102
    %8773 = vmatprep.subr.bf16.mxu0 0
    %8774 = vmatpush1.bf16.msra.mxu0 %v6103
    %8775 = vmatprep.subr.bf16.mxu0 0
    %8776 = vmatpush1.bf16.msra.mxu0 %v6104
    %8777 = vmatprep.subr.bf16.mxu0 0
    %8778 = vmatpush1.bf16.msra.mxu0 %v6105
    %8779 = vmatprep.subr.bf16.mxu0 0
    %8780 = vmatpush1.bf16.msra.mxu0 %v6106
    %8781 = vmatprep.subr.bf16.mxu0 0
    %8782 = vmatpush1.bf16.msra.mxu0 %v6107
    %8783 = vmatprep.subr.bf16.mxu0 0
    %8784 = vmatpush1.bf16.msra.mxu0 %v6108
    %8785 = vmatprep.subr.bf16.mxu0 0
    %8786 = vmatpush1.bf16.msra.mxu0 %v6109
    %8787 = vmatprep.subr.bf16.mxu0 0
    %8788 = vmatpush1.bf16.msra.mxu0 %v6110
    %8789 = vmatprep.subr.bf16.mxu0 0
    %8790 = vmatpush1.bf16.msra.mxu0 %v6111
    %8791 = vmatprep.subr.bf16.mxu0 0
    %8792 = vmatpush1.bf16.msra.mxu0 %v6112
    %8793 = vmatprep.mubr.bf16.mxu0 %v2176
    %8794 = vmatmul.mubr.bf16.gmra.mrb[0].mxu0 %v2174
    %v8795 = vpop.f32.mrb[0].mxu0
    %v8796 = vadd.f32 %v8756, %v8795
    %v8797 = vpop.f32.mrb[0].mxu0
    %v8798 = vpop.f32.mrb[0].mxu0
    %v8799 = vpop.f32.mrb[0].mxu0
    %8800 = vdwg.mxu0
    %v8801 = vmax.f32 %v8796, 0.0
    %v8802 = vld [vmem:[%s3] sm:$0xff]
    %v8803 = vld [vmem:[%s3 + $0x8] sm:$0xff]
    %v8804 = vld [vmem:[%s3 + $0x10] sm:$0xff]
    %v8805 = vld [vmem:[%s3 + $0x18] sm:$0xff]
    %v8806 = vld [vmem:[%s3 + $0x20] sm:$0xff]
    %v8807 = vld [vmem:[%s3 + $0x28] sm:$0xff]
    %v8808 = vld [vmem:[%s3 + $0x30] sm:$0xff]
    %v8809 = vld [vmem:[%s3 + $0x38] sm:$0xff]
    %v8810 = vld [vmem:[%s3 + $0x40] sm:$0xff]
    %v8811 = vld [vmem:[%s3 + $0x48] sm:$0xff]
    %v8812 = vld [vmem:[%s3 + $0x50] sm:$0xff]
    %v8813 = vld [vmem:[%s3 + $0x58] sm:$0xff]
    %v8814 = vld [vmem:[%s3 + $0x60] sm:$0xf]
    %v8815 = vld [vmem:[%s4] sm:$0x1]
    %v8817 = vlaneseq
    %v8818 = vshrl.u32 %v8817, 7
    %v8819 = vsub.s32 0, %v8818
    %v8820 = vrot.slane %v8815, %v8819
    %vm8822 = vcmask 818176
    %v8824 = vsel %vm8822, %v8801, 0
    %vm8826 = vcmask 1043456
    %v8828 = vsel %vm8826, %v8814, 0
    %8830 = vmatprep.subr.mxu0 0.0
    %8831 = vmatpush1.msra.mxu0 %v8802
    %8832 = vmatprep.subr.mxu0 0.0
    %8833 = vmatpush1.msra.mxu0 %v8803
    %8834 = vmatprep.subr.mxu0 0.0
    %8835 = vmatpush1.msra.mxu0 %v8804
    %8836 = vmatprep.subr.mxu0 0.0
    %8837 = vmatpush1.msra.mxu0 %v8805
    %8838 = vmatprep.subr.mxu0 0.0
    %8839 = vmatpush1.msra.mxu0 %v8806
    %8840 = vmatprep.subr.mxu0 0.0
    %8841 = vmatpush1.msra.mxu0 %v8807
    %8842 = vmatprep.subr.mxu0 0.0
    %8843 = vmatpush1.msra.mxu0 %v8808
    %8844 = vmatprep.subr.mxu0 0.0
    %8845 = vmatpush1.msra.mxu0 %v8809
    %8846 = vmatprep.subr.mxu0 0.0
    %8847 = vmatpush1.msra.mxu0 %v8810
    %8848 = vmatprep.subr.mxu0 0.0
    %8849 = vmatpush1.msra.mxu0 %v8811
    %8850 = vmatprep.subr.mxu0 0.0
    %8851 = vmatpush1.msra.mxu0 %v8812
    %8852 = vmatprep.subr.mxu0 0.0
    %8853 = vmatpush1.msra.mxu0 %v8813
    %8854 = vmatprep.subr.mxu0 0.0
    %8855 = vmatpush1.msra.mxu0 %v8828
    %8856 = vmatprep.subr.mxu0 0.0
    %8857 = vmatpush1.msra.mxu0 0.0
    %8858 = vmatprep.subr.mxu0 0.0
    %8859 = vmatpush1.msra.mxu0 0.0
    %8860 = vmatprep.subr.mxu0 0.0
    %8861 = vmatpush1.msra.mxu0 0.0
    %8862 = vmatprep.subr.mxu0 0.0
    %8863 = vmatpush1.msra.mxu0 0.0
    %8864 = vmatprep.subr.mxu0 0.0
    %8865 = vmatpush1.msra.mxu0 0.0
    %8866 = vmatprep.subr.mxu0 0.0
    %8867 = vmatpush1.msra.mxu0 0.0
    %8868 = vmatprep.subr.mxu0 0.0
    %8869 = vmatpush1.msra.mxu0 0.0
    %8870 = vmatprep.subr.mxu0 0.0
    %8871 = vmatpush1.msra.mxu0 0.0
    %8872 = vmatprep.subr.mxu0 0.0
    %8873 = vmatpush1.msra.mxu0 0.0
    %8874 = vmatprep.subr.mxu0 0.0
    %8875 = vmatpush1.msra.mxu0 0.0
    %8876 = vmatprep.subr.mxu0 0.0
    %8877 = vmatpush1.msra.mxu0 0.0
    %8878 = vmatprep.subr.mxu0 0.0
    %8879 = vmatpush1.msra.mxu0 0.0
    %8880 = vmatprep.subr.mxu0 0.0
    %8881 = vmatpush1.msra.mxu0 0.0
    %8882 = vmatprep.subr.mxu0 0.0
    %8883 = vmatpush1.msra.mxu0 0.0
    %8884 = vmatprep.subr.mxu0 0.0
    %8885 = vmatpush1.msra.mxu0 0.0
    %8886 = vmatprep.subr.mxu0 0.0
    %8887 = vmatpush1.msra.mxu0 0.0
    %8888 = vmatprep.subr.mxu0 0.0
    %8889 = vmatpush1.msra.mxu0 0.0
    %8890 = vmatprep.subr.mxu0 0.0
    %8891 = vmatpush1.msra.mxu0 0.0
    %8892 = vmatprep.subr.mxu0 0.0
    %8893 = vmatpush1.msra.mxu0 0.0
    %8894 = vmatprep.mubr.f32.mxu0 0.0
    %8895 = vmatmul.mubr.f32.gmra.mrb[0].mxu0 %v8824
    %v8896 = vpop.f32.mrb[0].mxu0
    %v8897 = vadd.f32 %v8820, %v8896
    %v8898 = vpop.f32.mrb[0].mxu0
    %8899 = vdwg.mxu0
    %vm8900 = vcmask 41984
    %8901 = vst.msk [vmem:[#allocation2] sm:$0x3] %vm8900, %v8897
    // Predicated region
    $region22: #{tpu_custom_call.1} parent=1 // pred_check
      _
    $region23: #{tpu_custom_call.1} parent=1 // pred_check_branch
      %8903 = sbr.rel (0) target = $region25
    $region24: #{tpu_custom_call.1} parent=1 // pred_region
      %s8905 = ssub.s32 32, 32
      %8906 = vsyncadd [#allocation3], %s8905
      %s8908 = sshll.u32 [#allocation2], 4
      %s8909 = int_to_ptr.vmem [resolvable:$true] %s8908
      %8911 = dma.vmem_to_hbm [thread:$0]  %s8909, 32, %s5, [#allocation3]
    $region25: #{tpu_custom_call.1} parent=1 // pred_fallthru
      _
    // Predicated region
    $region26: #{tpu_custom_call.1} parent=1 // pred_check
      _
    $region27: #{tpu_custom_call.1} parent=1 // pred_check_branch
      %8913 = sbr.rel (0) target = $region29
    $region28: #{tpu_custom_call.1} parent=1 // pred_region
      %8914 = dma.done [#allocation3], 32
    $region29: #{tpu_custom_call.1} parent=1 // pred_fallthru
      _
    %8915 = vsyncpa [#allocation3], 1

</llo_original>
